<compile_context>
chip_gen: v7x
topology: tpu7x:2x2x1
jax: 0.10.0
libtpu: 0.0.40
codegen_flags: <defaults>
</compile_context>

<pallas_src>
import functools

import jax
import jax.numpy as jnp
from jax import lax
from jax.experimental import pallas as pl
from jax.experimental.pallas import tpu as pltpu

C_IN = 3    # image channels (base / input x)
C_MID = 8   # feature channels fed into the `clean` conv (ConvLayer(8, 3, ...))
C_OUT = 3   # output image channels

LANE = 128  # TPU lane width; keep the last (W) dim a multiple of this


def _wc_idx(kh, kw, ci, o):
    """Flat index into wc.reshape(-1) for wc of shape (3, 3, C_MID, C_OUT) (HWIO)."""
    return ((kh * 3 + kw) * C_MID + ci) * C_OUT + o


def _refine_kernel(x_ref, wp_ref, bp_ref, wc_ref, bc_ref, out_ref, *,
                   H, W, TB, w_valid, compute_dtype):
    """TB frames per grid step.  NCHW layout, W on the lane axis.

    x_ref  : (TB, C_IN, H, W)   VMEM  input frames (also the residual `base`)
    wp_ref : (C_IN * C_MID,)    SMEM  stand-in backbone+convproj pointwise weight
    bp_ref : (C_MID,)           SMEM  stand-in bias
    wc_ref : (9*C_MID*C_OUT,)   SMEM  `clean` 3x3 conv weight, flattened (kh,kw,ci,o)
    bc_ref : (C_OUT,)           SMEM  `clean` conv bias
    out_ref: (TB, C_OUT, H, W)  VMEM
    """
    f32 = jnp.float32
    cdt = compute_dtype

    # ---- boundary masks for the zero-padded 3x3 halo, built once per grid step ----
    row = lax.broadcasted_iota(jnp.int32, (H, W), 0)
    col = lax.broadcasted_iota(jnp.int32, (H, W), 1)
    not_last_row = row < (H - 1)
    not_first_row = row > 0
    not_last_col = col < (W - 1)
    not_first_col = col > 0
    zero = jnp.zeros((H, W), f32)
    # Columns beyond the original (pre-pad) width must behave like zero features.
    pad_mask = (col < w_valid) if w_valid < W else None

    def shift_h(p, dh):
        """q[h, w] = p[h + dh, w], zero out of bounds (XLU roll + hoisted mask)."""
        if dh == 0:
            return p
        if dh == 1:   # read one row below; last row becomes zero
            return jnp.where(not_last_row, pltpu.roll(p, H - 1, axis=0), zero)
        return jnp.where(not_first_row, pltpu.roll(p, 1, axis=0), zero)

    def shift_w(p, dw):
        """q[h, w] = p[h, w + dw], zero out of bounds."""
        if dw == 0:
            return p
        if dw == 1:
            return jnp.where(not_last_col, pltpu.roll(p, W - 1, axis=1), zero)
        return jnp.where(not_first_col, pltpu.roll(p, 1, axis=1), zero)

    for t in range(TB):
        # Input planes; reused as the residual base (base == x in RefineNet.forward).
        base = [x_ref[t, c] for c in range(C_IN)]                 # f32 (H, W)
        xin = base if cdt == f32 else [b.astype(cdt) for b in base]

        # ---- stand-in backbone + convprojection: pointwise 3->8 + ReLU (VPU FMAs) ----
        feat = []
        for co in range(C_MID):
            f = xin[0] * wp_ref[0 * C_MID + co].astype(cdt)
            f = f + xin[1] * wp_ref[1 * C_MID + co].astype(cdt)
            f = f + xin[2] * wp_ref[2 * C_MID + co].astype(cdt)
            f = f + bp_ref[co].astype(cdt)                        # bias once, not per tap
            f = jnp.maximum(f, 0.0)
            if pad_mask is not None:
                f = jnp.where(pad_mask, f, jnp.zeros((H, W), cdt))
            feat.append(f)

        # ---- ConvLayer(8, 3, k=3, s=1, p=1) + tanh + residual, per output channel ----
        # out[o,h,w] = tanh(bc[o] + sum_{kh,kw,ci} wc[kh,kw,ci,o]*feat[ci,h+kh-1,w+kw-1])
        #              + x[o,h,w]
        # Reassociated: sum_kw shift_w( sum_kh shift_h( sum_ci ... ) ) -> 8 shifts/chan.
        for o in range(C_OUT):
            acc_o = None                                          # f32 accumulator
            for kw in range(3):
                acc_kw = None                                     # f32 accumulator
                for kh in range(3):
                    # 8-channel MAC chain in compute dtype (bf16 on v6e/v7x).
                    p = feat[0] * wc_ref[_wc_idx(kh, kw, 0, o)].astype(cdt)
                    for ci in range(1, C_MID):
                        p = p + feat[ci] * wc_ref[_wc_idx(kh, kw, ci, o)].astype(cdt)
                    p = shift_h(p.astype(f32), kh - 1)            # f32 shift + accumulate
                    acc_kw = p if acc_kw is None else acc_kw + p
                acc_kw = shift_w(acc_kw, kw - 1)
                acc_o = acc_kw if acc_o is None else acc_o + acc_kw
            acc_o = acc_o + bc_ref[o]                             # bias once per channel
            out_ref[t, o] = (jnp.tanh(acc_o) + base[o]).astype(out_ref.dtype)


def _default_compute_dtype():
    """bf16 planes only on chips with a bf16 VPU (v6e / v7x); f32 elsewhere (e.g. v5e)."""
    try:
        kind = jax.devices()[0].device_kind.lower()
    except Exception:  # defensive: unknown backend -> safe default
        return jnp.float32
    if "v6" in kind or "v7" in kind:
        return jnp.bfloat16
    return jnp.float32


def _pick_frames_per_step(B, H, W, vmem_budget_bytes=8 << 20):
    """Largest divisor of B whose per-step working set fits a modest VMEM budget."""
    # rough: double-buffered in+out blocks (f32) + feat planes + a few temporaries
    per_frame = (2 * (C_IN + C_OUT) + C_MID + 4) * H * W * 4
    tb = max(1, min(B, vmem_budget_bytes // max(per_frame, 1)))
    while B % tb:
        tb -= 1
    return tb


def refine_net_forward(x_nchw, wp, bp, wc, bc, *, compute_dtype=None,
                       frames_per_step=None):
    """Wrapper. x_nchw: (B, 3, H, W) float32 (PyTorch layout). Returns (B, 3, H, W)."""
    B, C, H, W = x_nchw.shape
    assert C == C_IN

    if compute_dtype is None:
        compute_dtype = _default_compute_dtype()

    # Lane-dense last dim: pad W up to a multiple of 128 (padded columns are masked to
    # zero inside the kernel so boundary taps still see a correct zero halo).
    W_pad = ((W + LANE - 1) // LANE) * LANE
    x_run = x_nchw if W_pad == W else jnp.pad(
        x_nchw, ((0, 0), (0, 0), (0, 0), (0, W_pad - W)))

    if frames_per_step is None:
        frames_per_step = _pick_frames_per_step(B, H, W_pad)
    TB = frames_per_step
    assert B % TB == 0, "frames_per_step must divide the batch size"

    kernel = functools.partial(_refine_kernel, H=H, W=W_pad, TB=TB, w_valid=W,
                               compute_dtype=compute_dtype)

    out = pl.pallas_call(
        kernel,
        out_shape=jax.ShapeDtypeStruct((B, C_OUT, H, W_pad), jnp.float32),
        grid_spec=pltpu.PrefetchScalarGridSpec(
            num_scalar_prefetch=0,
            grid=(B // TB,),
            in_specs=[
                # Image block: NCHW kept, W (last dim) on the lane axis.
                pl.BlockSpec((TB, C_IN, H, W_pad), lambda b: (b, 0, 0, 0)),
                # Tiny weight tables live in SMEM and are read as scalars.
                pl.BlockSpec(memory_space=pltpu.MemorySpace.SMEM),
                pl.BlockSpec(memory_space=pltpu.MemorySpace.SMEM),
                pl.BlockSpec(memory_space=pltpu.MemorySpace.SMEM),
                pl.BlockSpec(memory_space=pltpu.MemorySpace.SMEM),
            ],
            out_specs=pl.BlockSpec((TB, C_OUT, H, W_pad), lambda b: (b, 0, 0, 0)),
        ),
        compiler_params=pltpu.CompilerParams(
            dimension_semantics=("parallel",),
        ),
    )(
        x_run,
        wp.reshape(-1).astype(jnp.float32),
        bp.reshape(-1).astype(jnp.float32),
        wc.reshape(-1).astype(jnp.float32),
        bc.reshape(-1).astype(jnp.float32),
    )
    if W_pad != W:
        out = out[:, :, :, :W]
    return out


def _reference_forward(x, wp, bp, wc, bc):
    """Pure-JAX NCHW reference for sanity checking."""
    B, C, H, W = x.shape
    feat = jax.nn.relu(jnp.einsum('bchw,cd->bdhw', x, wp) + bp[None, :, None, None])
    featp = jnp.pad(feat, ((0, 0), (0, 0), (1, 1), (1, 1)))
    acc = jnp.zeros((B, C_OUT, H, W), jnp.float32)
    for kh in range(3):
        for kw in range(3):
            acc = acc + jnp.einsum('bchw,cd->bdhw',
                                   featp[:, :, kh:kh + H, kw:kw + W], wc[kh, kw])
    acc = acc + bc[None, :, None, None]
    return jnp.tanh(acc) + x


if __name__ == "__main__":
    key = jax.random.PRNGKey(0)
    k_x, k_wp, k_bp, k_wc, k_bc = jax.random.split(key, 5)

    # Small shapes consistent with the module: B*T=2 frames, 3-channel images,
    # H=16 rows, W=128 columns (lane-dense last dim).
    B, T, H, W = 2, 1, 16, 128
    x = jax.random.normal(k_x, (B * T, C_IN, H, W), jnp.float32) * 0.5

    # Deterministic synthetic parameters (no checkpoint load).
    wp = jax.random.normal(k_wp, (C_IN, C_MID), jnp.float32) * 0.2
    bp = jax.random.normal(k_bp, (C_MID,), jnp.float32) * 0.05
    # `clean` conv: PyTorch weight is (C_OUT, C_MID, 3, 3); stored here in HWIO.
    wc = jax.random.normal(k_wc, (3, 3, C_MID, C_OUT), jnp.float32) * 0.1
    bc = jax.random.normal(k_bc, (C_OUT,), jnp.float32) * 0.05

    ref = _reference_forward(x, wp, bp, wc, bc)

    # 1) f32 planes (valid on every TPU generation) -- tight tolerance.
    out_f32 = refine_net_forward(x, wp, bp, wc, bc, compute_dtype=jnp.float32)
    out_f32 = jax.block_until_ready(out_f32)
    assert out_f32.shape == (B * T, C_OUT, H, W)
    assert jnp.allclose(out_f32, ref, atol=1e-4, rtol=1e-4), "f32 mismatch vs reference"

    # 2) auto dtype: bf16 plane math on v6e/v7x (f32-accumulated taps), f32 elsewhere.
    auto_dtype = _default_compute_dtype()
    out_auto = jax.block_until_ready(refine_net_forward(x, wp, bp, wc, bc))
    tol = 1e-4 if auto_dtype == jnp.float32 else 1e-1
    assert jnp.allclose(out_auto, ref, atol=tol, rtol=tol), "auto-dtype mismatch vs reference"

    print("KERNEL_OK")
</pallas_src>

<mosaic_0001>
module attributes {stable_mosaic.version = 11 : i64} {
  func.func @_refine_kernel(%arg0: i32, %arg1: memref<2x3x16x128xf32, #tpu.memory_space<vmem>>, %arg2: memref<24xf32, #tpu.memory_space<smem>>, %arg3: memref<8xf32, #tpu.memory_space<smem>>, %arg4: memref<216xf32, #tpu.memory_space<smem>>, %arg5: memref<3xf32, #tpu.memory_space<smem>>, %arg6: memref<2x3x16x128xf32, #tpu.memory_space<vmem>>) attributes {dimension_semantics = [#tpu.dimension_semantics<parallel>], iteration_bounds = array<i64: 1>, scalar_prefetch = 0 : i64, scratch_operands = 0 : i64, tpu.core_type = #tpu.core_type<tc>, window_params = [{transform_indices = @transform_0, window_bounds = array<i64: 2, 3, 16, 128>}, {transform_indices = @transform_1, window_bounds = array<i64: 24>}, {transform_indices = @transform_2, window_bounds = array<i64: 8>}, {transform_indices = @transform_3, window_bounds = array<i64: 216>}, {transform_indices = @transform_4, window_bounds = array<i64: 3>}, {transform_indices = @transform_5, window_bounds = array<i64: 2, 3, 16, 128>}]} {
    %0 = tpu.iota {dimensions = array<i32: 0>} : vector<16x128xi32>
    %1 = tpu.iota {dimensions = array<i32: 1>} : vector<16x128xi32>
    %c15_i32 = arith.constant 15 : i32
    %2 = vector.broadcast %c15_i32 : i32 to vector<16x128xi32>
    %3 = arith.cmpi slt, %0, %2 : vector<16x128xi32>
    %c0_i32 = arith.constant 0 : i32
    %4 = vector.broadcast %c0_i32 : i32 to vector<16x128xi32>
    %5 = arith.cmpi sgt, %0, %4 : vector<16x128xi32>
    %c127_i32 = arith.constant 127 : i32
    %6 = vector.broadcast %c127_i32 : i32 to vector<16x128xi32>
    %7 = arith.cmpi slt, %1, %6 : vector<16x128xi32>
    %c0_i32_0 = arith.constant 0 : i32
    %8 = vector.broadcast %c0_i32_0 : i32 to vector<16x128xi32>
    %9 = arith.cmpi sgt, %1, %8 : vector<16x128xi32>
    %cst = arith.constant 0.000000e+00 : f32
    %10 = vector.broadcast %cst : f32 to vector<16x128xf32>
    %c0 = arith.constant 0 : index
    %c0_1 = arith.constant 0 : index
    %c0_2 = arith.constant 0 : index
    %c0_3 = arith.constant 0 : index
    %11 = vector.load %arg1[%c0, %c0_1, %c0_2, %c0_3] : memref<2x3x16x128xf32, #tpu.memory_space<vmem>>, vector<1x1x16x128xf32>
    %12 = vector.shape_cast %11 : vector<1x1x16x128xf32> to vector<16x128xf32>
    %c0_4 = arith.constant 0 : index
    %c1 = arith.constant 1 : index
    %c0_5 = arith.constant 0 : index
    %c0_6 = arith.constant 0 : index
    %13 = vector.load %arg1[%c0_4, %c1, %c0_5, %c0_6] : memref<2x3x16x128xf32, #tpu.memory_space<vmem>>, vector<1x1x16x128xf32>
    %14 = vector.shape_cast %13 : vector<1x1x16x128xf32> to vector<16x128xf32>
    %c0_7 = arith.constant 0 : index
    %c2 = arith.constant 2 : index
    %c0_8 = arith.constant 0 : index
    %c0_9 = arith.constant 0 : index
    %15 = vector.load %arg1[%c0_7, %c2, %c0_8, %c0_9] : memref<2x3x16x128xf32, #tpu.memory_space<vmem>>, vector<1x1x16x128xf32>
    %16 = vector.shape_cast %15 : vector<1x1x16x128xf32> to vector<16x128xf32>
    %c0_10 = arith.constant 0 : index
    %17 = memref.load %arg2[%c0_10] : memref<24xf32, #tpu.memory_space<smem>>
    %18 = vector.broadcast %17 : f32 to vector<16x128xf32>
    %19 = arith.mulf %12, %18 : vector<16x128xf32>
    %c8 = arith.constant 8 : index
    %20 = memref.load %arg2[%c8] : memref<24xf32, #tpu.memory_space<smem>>
    %21 = vector.broadcast %20 : f32 to vector<16x128xf32>
    %22 = arith.mulf %14, %21 : vector<16x128xf32>
    %23 = arith.addf %19, %22 : vector<16x128xf32>
    %c16 = arith.constant 16 : index
    %24 = memref.load %arg2[%c16] : memref<24xf32, #tpu.memory_space<smem>>
    %25 = vector.broadcast %24 : f32 to vector<16x128xf32>
    %26 = arith.mulf %16, %25 : vector<16x128xf32>
    %27 = arith.addf %23, %26 : vector<16x128xf32>
    %c0_11 = arith.constant 0 : index
    %28 = memref.load %arg3[%c0_11] : memref<8xf32, #tpu.memory_space<smem>>
    %29 = vector.broadcast %28 : f32 to vector<16x128xf32>
    %30 = arith.addf %27, %29 : vector<16x128xf32>
    %cst_12 = arith.constant 0.000000e+00 : f32
    %31 = vector.broadcast %cst_12 : f32 to vector<16x128xf32>
    %32 = arith.maximumf %30, %31 : vector<16x128xf32>
    %c1_13 = arith.constant 1 : index
    %33 = memref.load %arg2[%c1_13] : memref<24xf32, #tpu.memory_space<smem>>
    %34 = vector.broadcast %33 : f32 to vector<16x128xf32>
    %35 = arith.mulf %12, %34 : vector<16x128xf32>
    %c9 = arith.constant 9 : index
    %36 = memref.load %arg2[%c9] : memref<24xf32, #tpu.memory_space<smem>>
    %37 = vector.broadcast %36 : f32 to vector<16x128xf32>
    %38 = arith.mulf %14, %37 : vector<16x128xf32>
    %39 = arith.addf %35, %38 : vector<16x128xf32>
    %c17 = arith.constant 17 : index
    %40 = memref.load %arg2[%c17] : memref<24xf32, #tpu.memory_space<smem>>
    %41 = vector.broadcast %40 : f32 to vector<16x128xf32>
    %42 = arith.mulf %16, %41 : vector<16x128xf32>
    %43 = arith.addf %39, %42 : vector<16x128xf32>
    %c1_14 = arith.constant 1 : index
    %44 = memref.load %arg3[%c1_14] : memref<8xf32, #tpu.memory_space<smem>>
    %45 = vector.broadcast %44 : f32 to vector<16x128xf32>
    %46 = arith.addf %43, %45 : vector<16x128xf32>
    %cst_15 = arith.constant 0.000000e+00 : f32
    %47 = vector.broadcast %cst_15 : f32 to vector<16x128xf32>
    %48 = arith.maximumf %46, %47 : vector<16x128xf32>
    %c2_16 = arith.constant 2 : index
    %49 = memref.load %arg2[%c2_16] : memref<24xf32, #tpu.memory_space<smem>>
    %50 = vector.broadcast %49 : f32 to vector<16x128xf32>
    %51 = arith.mulf %12, %50 : vector<16x128xf32>
    %c10 = arith.constant 10 : index
    %52 = memref.load %arg2[%c10] : memref<24xf32, #tpu.memory_space<smem>>
    %53 = vector.broadcast %52 : f32 to vector<16x128xf32>
    %54 = arith.mulf %14, %53 : vector<16x128xf32>
    %55 = arith.addf %51, %54 : vector<16x128xf32>
    %c18 = arith.constant 18 : index
    %56 = memref.load %arg2[%c18] : memref<24xf32, #tpu.memory_space<smem>>
    %57 = vector.broadcast %56 : f32 to vector<16x128xf32>
    %58 = arith.mulf %16, %57 : vector<16x128xf32>
    %59 = arith.addf %55, %58 : vector<16x128xf32>
    %c2_17 = arith.constant 2 : index
    %60 = memref.load %arg3[%c2_17] : memref<8xf32, #tpu.memory_space<smem>>
    %61 = vector.broadcast %60 : f32 to vector<16x128xf32>
    %62 = arith.addf %59, %61 : vector<16x128xf32>
    %cst_18 = arith.constant 0.000000e+00 : f32
    %63 = vector.broadcast %cst_18 : f32 to vector<16x128xf32>
    %64 = arith.maximumf %62, %63 : vector<16x128xf32>
    %c3 = arith.constant 3 : index
    %65 = memref.load %arg2[%c3] : memref<24xf32, #tpu.memory_space<smem>>
    %66 = vector.broadcast %65 : f32 to vector<16x128xf32>
    %67 = arith.mulf %12, %66 : vector<16x128xf32>
    %c11 = arith.constant 11 : index
    %68 = memref.load %arg2[%c11] : memref<24xf32, #tpu.memory_space<smem>>
    %69 = vector.broadcast %68 : f32 to vector<16x128xf32>
    %70 = arith.mulf %14, %69 : vector<16x128xf32>
    %71 = arith.addf %67, %70 : vector<16x128xf32>
    %c19 = arith.constant 19 : index
    %72 = memref.load %arg2[%c19] : memref<24xf32, #tpu.memory_space<smem>>
    %73 = vector.broadcast %72 : f32 to vector<16x128xf32>
    %74 = arith.mulf %16, %73 : vector<16x128xf32>
    %75 = arith.addf %71, %74 : vector<16x128xf32>
    %c3_19 = arith.constant 3 : index
    %76 = memref.load %arg3[%c3_19] : memref<8xf32, #tpu.memory_space<smem>>
    %77 = vector.broadcast %76 : f32 to vector<16x128xf32>
    %78 = arith.addf %75, %77 : vector<16x128xf32>
    %cst_20 = arith.constant 0.000000e+00 : f32
    %79 = vector.broadcast %cst_20 : f32 to vector<16x128xf32>
    %80 = arith.maximumf %78, %79 : vector<16x128xf32>
    %c4 = arith.constant 4 : index
    %81 = memref.load %arg2[%c4] : memref<24xf32, #tpu.memory_space<smem>>
    %82 = vector.broadcast %81 : f32 to vector<16x128xf32>
    %83 = arith.mulf %12, %82 : vector<16x128xf32>
    %c12 = arith.constant 12 : index
    %84 = memref.load %arg2[%c12] : memref<24xf32, #tpu.memory_space<smem>>
    %85 = vector.broadcast %84 : f32 to vector<16x128xf32>
    %86 = arith.mulf %14, %85 : vector<16x128xf32>
    %87 = arith.addf %83, %86 : vector<16x128xf32>
    %c20 = arith.constant 20 : index
    %88 = memref.load %arg2[%c20] : memref<24xf32, #tpu.memory_space<smem>>
    %89 = vector.broadcast %88 : f32 to vector<16x128xf32>
    %90 = arith.mulf %16, %89 : vector<16x128xf32>
    %91 = arith.addf %87, %90 : vector<16x128xf32>
    %c4_21 = arith.constant 4 : index
    %92 = memref.load %arg3[%c4_21] : memref<8xf32, #tpu.memory_space<smem>>
    %93 = vector.broadcast %92 : f32 to vector<16x128xf32>
    %94 = arith.addf %91, %93 : vector<16x128xf32>
    %cst_22 = arith.constant 0.000000e+00 : f32
    %95 = vector.broadcast %cst_22 : f32 to vector<16x128xf32>
    %96 = arith.maximumf %94, %95 : vector<16x128xf32>
    %c5 = arith.constant 5 : index
    %97 = memref.load %arg2[%c5] : memref<24xf32, #tpu.memory_space<smem>>
    %98 = vector.broadcast %97 : f32 to vector<16x128xf32>
    %99 = arith.mulf %12, %98 : vector<16x128xf32>
    %c13 = arith.constant 13 : index
    %100 = memref.load %arg2[%c13] : memref<24xf32, #tpu.memory_space<smem>>
    %101 = vector.broadcast %100 : f32 to vector<16x128xf32>
    %102 = arith.mulf %14, %101 : vector<16x128xf32>
    %103 = arith.addf %99, %102 : vector<16x128xf32>
    %c21 = arith.constant 21 : index
    %104 = memref.load %arg2[%c21] : memref<24xf32, #tpu.memory_space<smem>>
    %105 = vector.broadcast %104 : f32 to vector<16x128xf32>
    %106 = arith.mulf %16, %105 : vector<16x128xf32>
    %107 = arith.addf %103, %106 : vector<16x128xf32>
    %c5_23 = arith.constant 5 : index
    %108 = memref.load %arg3[%c5_23] : memref<8xf32, #tpu.memory_space<smem>>
    %109 = vector.broadcast %108 : f32 to vector<16x128xf32>
    %110 = arith.addf %107, %109 : vector<16x128xf32>
    %cst_24 = arith.constant 0.000000e+00 : f32
    %111 = vector.broadcast %cst_24 : f32 to vector<16x128xf32>
    %112 = arith.maximumf %110, %111 : vector<16x128xf32>
    %c6 = arith.constant 6 : index
    %113 = memref.load %arg2[%c6] : memref<24xf32, #tpu.memory_space<smem>>
    %114 = vector.broadcast %113 : f32 to vector<16x128xf32>
    %115 = arith.mulf %12, %114 : vector<16x128xf32>
    %c14 = arith.constant 14 : index
    %116 = memref.load %arg2[%c14] : memref<24xf32, #tpu.memory_space<smem>>
    %117 = vector.broadcast %116 : f32 to vector<16x128xf32>
    %118 = arith.mulf %14, %117 : vector<16x128xf32>
    %119 = arith.addf %115, %118 : vector<16x128xf32>
    %c22 = arith.constant 22 : index
    %120 = memref.load %arg2[%c22] : memref<24xf32, #tpu.memory_space<smem>>
    %121 = vector.broadcast %120 : f32 to vector<16x128xf32>
    %122 = arith.mulf %16, %121 : vector<16x128xf32>
    %123 = arith.addf %119, %122 : vector<16x128xf32>
    %c6_25 = arith.constant 6 : index
    %124 = memref.load %arg3[%c6_25] : memref<8xf32, #tpu.memory_space<smem>>
    %125 = vector.broadcast %124 : f32 to vector<16x128xf32>
    %126 = arith.addf %123, %125 : vector<16x128xf32>
    %cst_26 = arith.constant 0.000000e+00 : f32
    %127 = vector.broadcast %cst_26 : f32 to vector<16x128xf32>
    %128 = arith.maximumf %126, %127 : vector<16x128xf32>
    %c7 = arith.constant 7 : index
    %129 = memref.load %arg2[%c7] : memref<24xf32, #tpu.memory_space<smem>>
    %130 = vector.broadcast %129 : f32 to vector<16x128xf32>
    %131 = arith.mulf %12, %130 : vector<16x128xf32>
    %c15 = arith.constant 15 : index
    %132 = memref.load %arg2[%c15] : memref<24xf32, #tpu.memory_space<smem>>
    %133 = vector.broadcast %132 : f32 to vector<16x128xf32>
    %134 = arith.mulf %14, %133 : vector<16x128xf32>
    %135 = arith.addf %131, %134 : vector<16x128xf32>
    %c23 = arith.constant 23 : index
    %136 = memref.load %arg2[%c23] : memref<24xf32, #tpu.memory_space<smem>>
    %137 = vector.broadcast %136 : f32 to vector<16x128xf32>
    %138 = arith.mulf %16, %137 : vector<16x128xf32>
    %139 = arith.addf %135, %138 : vector<16x128xf32>
    %c7_27 = arith.constant 7 : index
    %140 = memref.load %arg3[%c7_27] : memref<8xf32, #tpu.memory_space<smem>>
    %141 = vector.broadcast %140 : f32 to vector<16x128xf32>
    %142 = arith.addf %139, %141 : vector<16x128xf32>
    %cst_28 = arith.constant 0.000000e+00 : f32
    %143 = vector.broadcast %cst_28 : f32 to vector<16x128xf32>
    %144 = arith.maximumf %142, %143 : vector<16x128xf32>
    %c0_29 = arith.constant 0 : index
    %145 = memref.load %arg4[%c0_29] : memref<216xf32, #tpu.memory_space<smem>>
    %146 = vector.broadcast %145 : f32 to vector<16x128xf32>
    %147 = arith.mulf %32, %146 : vector<16x128xf32>
    %c3_30 = arith.constant 3 : index
    %148 = memref.load %arg4[%c3_30] : memref<216xf32, #tpu.memory_space<smem>>
    %149 = vector.broadcast %148 : f32 to vector<16x128xf32>
    %150 = arith.mulf %48, %149 : vector<16x128xf32>
    %151 = arith.addf %147, %150 : vector<16x128xf32>
    %c6_31 = arith.constant 6 : index
    %152 = memref.load %arg4[%c6_31] : memref<216xf32, #tpu.memory_space<smem>>
    %153 = vector.broadcast %152 : f32 to vector<16x128xf32>
    %154 = arith.mulf %64, %153 : vector<16x128xf32>
    %155 = arith.addf %151, %154 : vector<16x128xf32>
    %c9_32 = arith.constant 9 : index
    %156 = memref.load %arg4[%c9_32] : memref<216xf32, #tpu.memory_space<smem>>
    %157 = vector.broadcast %156 : f32 to vector<16x128xf32>
    %158 = arith.mulf %80, %157 : vector<16x128xf32>
    %159 = arith.addf %155, %158 : vector<16x128xf32>
    %c12_33 = arith.constant 12 : index
    %160 = memref.load %arg4[%c12_33] : memref<216xf32, #tpu.memory_space<smem>>
    %161 = vector.broadcast %160 : f32 to vector<16x128xf32>
    %162 = arith.mulf %96, %161 : vector<16x128xf32>
    %163 = arith.addf %159, %162 : vector<16x128xf32>
    %c15_34 = arith.constant 15 : index
    %164 = memref.load %arg4[%c15_34] : memref<216xf32, #tpu.memory_space<smem>>
    %165 = vector.broadcast %164 : f32 to vector<16x128xf32>
    %166 = arith.mulf %112, %165 : vector<16x128xf32>
    %167 = arith.addf %163, %166 : vector<16x128xf32>
    %c18_35 = arith.constant 18 : index
    %168 = memref.load %arg4[%c18_35] : memref<216xf32, #tpu.memory_space<smem>>
    %169 = vector.broadcast %168 : f32 to vector<16x128xf32>
    %170 = arith.mulf %128, %169 : vector<16x128xf32>
    %171 = arith.addf %167, %170 : vector<16x128xf32>
    %c21_36 = arith.constant 21 : index
    %172 = memref.load %arg4[%c21_36] : memref<216xf32, #tpu.memory_space<smem>>
    %173 = vector.broadcast %172 : f32 to vector<16x128xf32>
    %174 = arith.mulf %144, %173 : vector<16x128xf32>
    %175 = arith.addf %171, %174 : vector<16x128xf32>
    %c1_i32 = arith.constant 1 : i32
    %176 = tpu.dynamic_rotate %175 by %c1_i32 dim 0 : vector<16x128xf32>, i32 -> vector<16x128xf32>
    %177 = arith.select %5, %176, %10 : vector<16x128xi1>, vector<16x128xf32>
    %c72 = arith.constant 72 : index
    %178 = memref.load %arg4[%c72] : memref<216xf32, #tpu.memory_space<smem>>
    %179 = vector.broadcast %178 : f32 to vector<16x128xf32>
    %180 = arith.mulf %32, %179 : vector<16x128xf32>
    %c75 = arith.constant 75 : index
    %181 = memref.load %arg4[%c75] : memref<216xf32, #tpu.memory_space<smem>>
    %182 = vector.broadcast %181 : f32 to vector<16x128xf32>
    %183 = arith.mulf %48, %182 : vector<16x128xf32>
    %184 = arith.addf %180, %183 : vector<16x128xf32>
    %c78 = arith.constant 78 : index
    %185 = memref.load %arg4[%c78] : memref<216xf32, #tpu.memory_space<smem>>
    %186 = vector.broadcast %185 : f32 to vector<16x128xf32>
    %187 = arith.mulf %64, %186 : vector<16x128xf32>
    %188 = arith.addf %184, %187 : vector<16x128xf32>
    %c81 = arith.constant 81 : index
    %189 = memref.load %arg4[%c81] : memref<216xf32, #tpu.memory_space<smem>>
    %190 = vector.broadcast %189 : f32 to vector<16x128xf32>
    %191 = arith.mulf %80, %190 : vector<16x128xf32>
    %192 = arith.addf %188, %191 : vector<16x128xf32>
    %c84 = arith.constant 84 : index
    %193 = memref.load %arg4[%c84] : memref<216xf32, #tpu.memory_space<smem>>
    %194 = vector.broadcast %193 : f32 to vector<16x128xf32>
    %195 = arith.mulf %96, %194 : vector<16x128xf32>
    %196 = arith.addf %192, %195 : vector<16x128xf32>
    %c87 = arith.constant 87 : index
    %197 = memref.load %arg4[%c87] : memref<216xf32, #tpu.memory_space<smem>>
    %198 = vector.broadcast %197 : f32 to vector<16x128xf32>
    %199 = arith.mulf %112, %198 : vector<16x128xf32>
    %200 = arith.addf %196, %199 : vector<16x128xf32>
    %c90 = arith.constant 90 : index
    %201 = memref.load %arg4[%c90] : memref<216xf32, #tpu.memory_space<smem>>
    %202 = vector.broadcast %201 : f32 to vector<16x128xf32>
    %203 = arith.mulf %128, %202 : vector<16x128xf32>
    %204 = arith.addf %200, %203 : vector<16x128xf32>
    %c93 = arith.constant 93 : index
    %205 = memref.load %arg4[%c93] : memref<216xf32, #tpu.memory_space<smem>>
    %206 = vector.broadcast %205 : f32 to vector<16x128xf32>
    %207 = arith.mulf %144, %206 : vector<16x128xf32>
    %208 = arith.addf %204, %207 : vector<16x128xf32>
    %209 = arith.addf %177, %208 : vector<16x128xf32>
    %c144 = arith.constant 144 : index
    %210 = memref.load %arg4[%c144] : memref<216xf32, #tpu.memory_space<smem>>
    %211 = vector.broadcast %210 : f32 to vector<16x128xf32>
    %212 = arith.mulf %32, %211 : vector<16x128xf32>
    %c147 = arith.constant 147 : index
    %213 = memref.load %arg4[%c147] : memref<216xf32, #tpu.memory_space<smem>>
    %214 = vector.broadcast %213 : f32 to vector<16x128xf32>
    %215 = arith.mulf %48, %214 : vector<16x128xf32>
    %216 = arith.addf %212, %215 : vector<16x128xf32>
    %c150 = arith.constant 150 : index
    %217 = memref.load %arg4[%c150] : memref<216xf32, #tpu.memory_space<smem>>
    %218 = vector.broadcast %217 : f32 to vector<16x128xf32>
    %219 = arith.mulf %64, %218 : vector<16x128xf32>
    %220 = arith.addf %216, %219 : vector<16x128xf32>
    %c153 = arith.constant 153 : index
    %221 = memref.load %arg4[%c153] : memref<216xf32, #tpu.memory_space<smem>>
    %222 = vector.broadcast %221 : f32 to vector<16x128xf32>
    %223 = arith.mulf %80, %222 : vector<16x128xf32>
    %224 = arith.addf %220, %223 : vector<16x128xf32>
    %c156 = arith.constant 156 : index
    %225 = memref.load %arg4[%c156] : memref<216xf32, #tpu.memory_space<smem>>
    %226 = vector.broadcast %225 : f32 to vector<16x128xf32>
    %227 = arith.mulf %96, %226 : vector<16x128xf32>
    %228 = arith.addf %224, %227 : vector<16x128xf32>
    %c159 = arith.constant 159 : index
    %229 = memref.load %arg4[%c159] : memref<216xf32, #tpu.memory_space<smem>>
    %230 = vector.broadcast %229 : f32 to vector<16x128xf32>
    %231 = arith.mulf %112, %230 : vector<16x128xf32>
    %232 = arith.addf %228, %231 : vector<16x128xf32>
    %c162 = arith.constant 162 : index
    %233 = memref.load %arg4[%c162] : memref<216xf32, #tpu.memory_space<smem>>
    %234 = vector.broadcast %233 : f32 to vector<16x128xf32>
    %235 = arith.mulf %128, %234 : vector<16x128xf32>
    %236 = arith.addf %232, %235 : vector<16x128xf32>
    %c165 = arith.constant 165 : index
    %237 = memref.load %arg4[%c165] : memref<216xf32, #tpu.memory_space<smem>>
    %238 = vector.broadcast %237 : f32 to vector<16x128xf32>
    %239 = arith.mulf %144, %238 : vector<16x128xf32>
    %240 = arith.addf %236, %239 : vector<16x128xf32>
    %c15_i32_37 = arith.constant 15 : i32
    %241 = tpu.dynamic_rotate %240 by %c15_i32_37 dim 0 : vector<16x128xf32>, i32 -> vector<16x128xf32>
    %242 = arith.select %3, %241, %10 : vector<16x128xi1>, vector<16x128xf32>
    %243 = arith.addf %209, %242 : vector<16x128xf32>
    %c1_i32_38 = arith.constant 1 : i32
    %244 = tpu.dynamic_rotate %243 by %c1_i32_38 dim 1 : vector<16x128xf32>, i32 -> vector<16x128xf32>
    %245 = arith.select %9, %244, %10 : vector<16x128xi1>, vector<16x128xf32>
    %c24 = arith.constant 24 : index
    %246 = memref.load %arg4[%c24] : memref<216xf32, #tpu.memory_space<smem>>
    %247 = vector.broadcast %246 : f32 to vector<16x128xf32>
    %248 = arith.mulf %32, %247 : vector<16x128xf32>
    %c27 = arith.constant 27 : index
    %249 = memref.load %arg4[%c27] : memref<216xf32, #tpu.memory_space<smem>>
    %250 = vector.broadcast %249 : f32 to vector<16x128xf32>
    %251 = arith.mulf %48, %250 : vector<16x128xf32>
    %252 = arith.addf %248, %251 : vector<16x128xf32>
    %c30 = arith.constant 30 : index
    %253 = memref.load %arg4[%c30] : memref<216xf32, #tpu.memory_space<smem>>
    %254 = vector.broadcast %253 : f32 to vector<16x128xf32>
    %255 = arith.mulf %64, %254 : vector<16x128xf32>
    %256 = arith.addf %252, %255 : vector<16x128xf32>
    %c33 = arith.constant 33 : index
    %257 = memref.load %arg4[%c33] : memref<216xf32, #tpu.memory_space<smem>>
    %258 = vector.broadcast %257 : f32 to vector<16x128xf32>
    %259 = arith.mulf %80, %258 : vector<16x128xf32>
    %260 = arith.addf %256, %259 : vector<16x128xf32>
    %c36 = arith.constant 36 : index
    %261 = memref.load %arg4[%c36] : memref<216xf32, #tpu.memory_space<smem>>
    %262 = vector.broadcast %261 : f32 to vector<16x128xf32>
    %263 = arith.mulf %96, %262 : vector<16x128xf32>
    %264 = arith.addf %260, %263 : vector<16x128xf32>
    %c39 = arith.constant 39 : index
    %265 = memref.load %arg4[%c39] : memref<216xf32, #tpu.memory_space<smem>>
    %266 = vector.broadcast %265 : f32 to vector<16x128xf32>
    %267 = arith.mulf %112, %266 : vector<16x128xf32>
    %268 = arith.addf %264, %267 : vector<16x128xf32>
    %c42 = arith.constant 42 : index
    %269 = memref.load %arg4[%c42] : memref<216xf32, #tpu.memory_space<smem>>
    %270 = vector.broadcast %269 : f32 to vector<16x128xf32>
    %271 = arith.mulf %128, %270 : vector<16x128xf32>
    %272 = arith.addf %268, %271 : vector<16x128xf32>
    %c45 = arith.constant 45 : index
    %273 = memref.load %arg4[%c45] : memref<216xf32, #tpu.memory_space<smem>>
    %274 = vector.broadcast %273 : f32 to vector<16x128xf32>
    %275 = arith.mulf %144, %274 : vector<16x128xf32>
    %276 = arith.addf %272, %275 : vector<16x128xf32>
    %c1_i32_39 = arith.constant 1 : i32
    %277 = tpu.dynamic_rotate %276 by %c1_i32_39 dim 0 : vector<16x128xf32>, i32 -> vector<16x128xf32>
    %278 = arith.select %5, %277, %10 : vector<16x128xi1>, vector<16x128xf32>
    %c96 = arith.constant 96 : index
    %279 = memref.load %arg4[%c96] : memref<216xf32, #tpu.memory_space<smem>>
    %280 = vector.broadcast %279 : f32 to vector<16x128xf32>
    %281 = arith.mulf %32, %280 : vector<16x128xf32>
    %c99 = arith.constant 99 : index
    %282 = memref.load %arg4[%c99] : memref<216xf32, #tpu.memory_space<smem>>
    %283 = vector.broadcast %282 : f32 to vector<16x128xf32>
    %284 = arith.mulf %48, %283 : vector<16x128xf32>
    %285 = arith.addf %281, %284 : vector<16x128xf32>
    %c102 = arith.constant 102 : index
    %286 = memref.load %arg4[%c102] : memref<216xf32, #tpu.memory_space<smem>>
    %287 = vector.broadcast %286 : f32 to vector<16x128xf32>
    %288 = arith.mulf %64, %287 : vector<16x128xf32>
    %289 = arith.addf %285, %288 : vector<16x128xf32>
    %c105 = arith.constant 105 : index
    %290 = memref.load %arg4[%c105] : memref<216xf32, #tpu.memory_space<smem>>
    %291 = vector.broadcast %290 : f32 to vector<16x128xf32>
    %292 = arith.mulf %80, %291 : vector<16x128xf32>
    %293 = arith.addf %289, %292 : vector<16x128xf32>
    %c108 = arith.constant 108 : index
    %294 = memref.load %arg4[%c108] : memref<216xf32, #tpu.memory_space<smem>>
    %295 = vector.broadcast %294 : f32 to vector<16x128xf32>
    %296 = arith.mulf %96, %295 : vector<16x128xf32>
    %297 = arith.addf %293, %296 : vector<16x128xf32>
    %c111 = arith.constant 111 : index
    %298 = memref.load %arg4[%c111] : memref<216xf32, #tpu.memory_space<smem>>
    %299 = vector.broadcast %298 : f32 to vector<16x128xf32>
    %300 = arith.mulf %112, %299 : vector<16x128xf32>
    %301 = arith.addf %297, %300 : vector<16x128xf32>
    %c114 = arith.constant 114 : index
    %302 = memref.load %arg4[%c114] : memref<216xf32, #tpu.memory_space<smem>>
    %303 = vector.broadcast %302 : f32 to vector<16x128xf32>
    %304 = arith.mulf %128, %303 : vector<16x128xf32>
    %305 = arith.addf %301, %304 : vector<16x128xf32>
    %c117 = arith.constant 117 : index
    %306 = memref.load %arg4[%c117] : memref<216xf32, #tpu.memory_space<smem>>
    %307 = vector.broadcast %306 : f32 to vector<16x128xf32>
    %308 = arith.mulf %144, %307 : vector<16x128xf32>
    %309 = arith.addf %305, %308 : vector<16x128xf32>
    %310 = arith.addf %278, %309 : vector<16x128xf32>
    %c168 = arith.constant 168 : index
    %311 = memref.load %arg4[%c168] : memref<216xf32, #tpu.memory_space<smem>>
    %312 = vector.broadcast %311 : f32 to vector<16x128xf32>
    %313 = arith.mulf %32, %312 : vector<16x128xf32>
    %c171 = arith.constant 171 : index
    %314 = memref.load %arg4[%c171] : memref<216xf32, #tpu.memory_space<smem>>
    %315 = vector.broadcast %314 : f32 to vector<16x128xf32>
    %316 = arith.mulf %48, %315 : vector<16x128xf32>
    %317 = arith.addf %313, %316 : vector<16x128xf32>
    %c174 = arith.constant 174 : index
    %318 = memref.load %arg4[%c174] : memref<216xf32, #tpu.memory_space<smem>>
    %319 = vector.broadcast %318 : f32 to vector<16x128xf32>
    %320 = arith.mulf %64, %319 : vector<16x128xf32>
    %321 = arith.addf %317, %320 : vector<16x128xf32>
    %c177 = arith.constant 177 : index
    %322 = memref.load %arg4[%c177] : memref<216xf32, #tpu.memory_space<smem>>
    %323 = vector.broadcast %322 : f32 to vector<16x128xf32>
    %324 = arith.mulf %80, %323 : vector<16x128xf32>
    %325 = arith.addf %321, %324 : vector<16x128xf32>
    %c180 = arith.constant 180 : index
    %326 = memref.load %arg4[%c180] : memref<216xf32, #tpu.memory_space<smem>>
    %327 = vector.broadcast %326 : f32 to vector<16x128xf32>
    %328 = arith.mulf %96, %327 : vector<16x128xf32>
    %329 = arith.addf %325, %328 : vector<16x128xf32>
    %c183 = arith.constant 183 : index
    %330 = memref.load %arg4[%c183] : memref<216xf32, #tpu.memory_space<smem>>
    %331 = vector.broadcast %330 : f32 to vector<16x128xf32>
    %332 = arith.mulf %112, %331 : vector<16x128xf32>
    %333 = arith.addf %329, %332 : vector<16x128xf32>
    %c186 = arith.constant 186 : index
    %334 = memref.load %arg4[%c186] : memref<216xf32, #tpu.memory_space<smem>>
    %335 = vector.broadcast %334 : f32 to vector<16x128xf32>
    %336 = arith.mulf %128, %335 : vector<16x128xf32>
    %337 = arith.addf %333, %336 : vector<16x128xf32>
    %c189 = arith.constant 189 : index
    %338 = memref.load %arg4[%c189] : memref<216xf32, #tpu.memory_space<smem>>
    %339 = vector.broadcast %338 : f32 to vector<16x128xf32>
    %340 = arith.mulf %144, %339 : vector<16x128xf32>
    %341 = arith.addf %337, %340 : vector<16x128xf32>
    %c15_i32_40 = arith.constant 15 : i32
    %342 = tpu.dynamic_rotate %341 by %c15_i32_40 dim 0 : vector<16x128xf32>, i32 -> vector<16x128xf32>
    %343 = arith.select %3, %342, %10 : vector<16x128xi1>, vector<16x128xf32>
    %344 = arith.addf %310, %343 : vector<16x128xf32>
    %345 = arith.addf %245, %344 : vector<16x128xf32>
    %c48 = arith.constant 48 : index
    %346 = memref.load %arg4[%c48] : memref<216xf32, #tpu.memory_space<smem>>
    %347 = vector.broadcast %346 : f32 to vector<16x128xf32>
    %348 = arith.mulf %32, %347 : vector<16x128xf32>
    %c51 = arith.constant 51 : index
    %349 = memref.load %arg4[%c51] : memref<216xf32, #tpu.memory_space<smem>>
    %350 = vector.broadcast %349 : f32 to vector<16x128xf32>
    %351 = arith.mulf %48, %350 : vector<16x128xf32>
    %352 = arith.addf %348, %351 : vector<16x128xf32>
    %c54 = arith.constant 54 : index
    %353 = memref.load %arg4[%c54] : memref<216xf32, #tpu.memory_space<smem>>
    %354 = vector.broadcast %353 : f32 to vector<16x128xf32>
    %355 = arith.mulf %64, %354 : vector<16x128xf32>
    %356 = arith.addf %352, %355 : vector<16x128xf32>
    %c57 = arith.constant 57 : index
    %357 = memref.load %arg4[%c57] : memref<216xf32, #tpu.memory_space<smem>>
    %358 = vector.broadcast %357 : f32 to vector<16x128xf32>
    %359 = arith.mulf %80, %358 : vector<16x128xf32>
    %360 = arith.addf %356, %359 : vector<16x128xf32>
    %c60 = arith.constant 60 : index
    %361 = memref.load %arg4[%c60] : memref<216xf32, #tpu.memory_space<smem>>
    %362 = vector.broadcast %361 : f32 to vector<16x128xf32>
    %363 = arith.mulf %96, %362 : vector<16x128xf32>
    %364 = arith.addf %360, %363 : vector<16x128xf32>
    %c63 = arith.constant 63 : index
    %365 = memref.load %arg4[%c63] : memref<216xf32, #tpu.memory_space<smem>>
    %366 = vector.broadcast %365 : f32 to vector<16x128xf32>
    %367 = arith.mulf %112, %366 : vector<16x128xf32>
    %368 = arith.addf %364, %367 : vector<16x128xf32>
    %c66 = arith.constant 66 : index
    %369 = memref.load %arg4[%c66] : memref<216xf32, #tpu.memory_space<smem>>
    %370 = vector.broadcast %369 : f32 to vector<16x128xf32>
    %371 = arith.mulf %128, %370 : vector<16x128xf32>
    %372 = arith.addf %368, %371 : vector<16x128xf32>
    %c69 = arith.constant 69 : index
    %373 = memref.load %arg4[%c69] : memref<216xf32, #tpu.memory_space<smem>>
    %374 = vector.broadcast %373 : f32 to vector<16x128xf32>
    %375 = arith.mulf %144, %374 : vector<16x128xf32>
    %376 = arith.addf %372, %375 : vector<16x128xf32>
    %c1_i32_41 = arith.constant 1 : i32
    %377 = tpu.dynamic_rotate %376 by %c1_i32_41 dim 0 : vector<16x128xf32>, i32 -> vector<16x128xf32>
    %378 = arith.select %5, %377, %10 : vector<16x128xi1>, vector<16x128xf32>
    %c120 = arith.constant 120 : index
    %379 = memref.load %arg4[%c120] : memref<216xf32, #tpu.memory_space<smem>>
    %380 = vector.broadcast %379 : f32 to vector<16x128xf32>
    %381 = arith.mulf %32, %380 : vector<16x128xf32>
    %c123 = arith.constant 123 : index
    %382 = memref.load %arg4[%c123] : memref<216xf32, #tpu.memory_space<smem>>
    %383 = vector.broadcast %382 : f32 to vector<16x128xf32>
    %384 = arith.mulf %48, %383 : vector<16x128xf32>
    %385 = arith.addf %381, %384 : vector<16x128xf32>
    %c126 = arith.constant 126 : index
    %386 = memref.load %arg4[%c126] : memref<216xf32, #tpu.memory_space<smem>>
    %387 = vector.broadcast %386 : f32 to vector<16x128xf32>
    %388 = arith.mulf %64, %387 : vector<16x128xf32>
    %389 = arith.addf %385, %388 : vector<16x128xf32>
    %c129 = arith.constant 129 : index
    %390 = memref.load %arg4[%c129] : memref<216xf32, #tpu.memory_space<smem>>
    %391 = vector.broadcast %390 : f32 to vector<16x128xf32>
    %392 = arith.mulf %80, %391 : vector<16x128xf32>
    %393 = arith.addf %389, %392 : vector<16x128xf32>
    %c132 = arith.constant 132 : index
    %394 = memref.load %arg4[%c132] : memref<216xf32, #tpu.memory_space<smem>>
    %395 = vector.broadcast %394 : f32 to vector<16x128xf32>
    %396 = arith.mulf %96, %395 : vector<16x128xf32>
    %397 = arith.addf %393, %396 : vector<16x128xf32>
    %c135 = arith.constant 135 : index
    %398 = memref.load %arg4[%c135] : memref<216xf32, #tpu.memory_space<smem>>
    %399 = vector.broadcast %398 : f32 to vector<16x128xf32>
    %400 = arith.mulf %112, %399 : vector<16x128xf32>
    %401 = arith.addf %397, %400 : vector<16x128xf32>
    %c138 = arith.constant 138 : index
    %402 = memref.load %arg4[%c138] : memref<216xf32, #tpu.memory_space<smem>>
    %403 = vector.broadcast %402 : f32 to vector<16x128xf32>
    %404 = arith.mulf %128, %403 : vector<16x128xf32>
    %405 = arith.addf %401, %404 : vector<16x128xf32>
    %c141 = arith.constant 141 : index
    %406 = memref.load %arg4[%c141] : memref<216xf32, #tpu.memory_space<smem>>
    %407 = vector.broadcast %406 : f32 to vector<16x128xf32>
    %408 = arith.mulf %144, %407 : vector<16x128xf32>
    %409 = arith.addf %405, %408 : vector<16x128xf32>
    %410 = arith.addf %378, %409 : vector<16x128xf32>
    %c192 = arith.constant 192 : index
    %411 = memref.load %arg4[%c192] : memref<216xf32, #tpu.memory_space<smem>>
    %412 = vector.broadcast %411 : f32 to vector<16x128xf32>
    %413 = arith.mulf %32, %412 : vector<16x128xf32>
    %c195 = arith.constant 195 : index
    %414 = memref.load %arg4[%c195] : memref<216xf32, #tpu.memory_space<smem>>
    %415 = vector.broadcast %414 : f32 to vector<16x128xf32>
    %416 = arith.mulf %48, %415 : vector<16x128xf32>
    %417 = arith.addf %413, %416 : vector<16x128xf32>
    %c198 = arith.constant 198 : index
    %418 = memref.load %arg4[%c198] : memref<216xf32, #tpu.memory_space<smem>>
    %419 = vector.broadcast %418 : f32 to vector<16x128xf32>
    %420 = arith.mulf %64, %419 : vector<16x128xf32>
    %421 = arith.addf %417, %420 : vector<16x128xf32>
    %c201 = arith.constant 201 : index
    %422 = memref.load %arg4[%c201] : memref<216xf32, #tpu.memory_space<smem>>
    %423 = vector.broadcast %422 : f32 to vector<16x128xf32>
    %424 = arith.mulf %80, %423 : vector<16x128xf32>
    %425 = arith.addf %421, %424 : vector<16x128xf32>
    %c204 = arith.constant 204 : index
    %426 = memref.load %arg4[%c204] : memref<216xf32, #tpu.memory_space<smem>>
    %427 = vector.broadcast %426 : f32 to vector<16x128xf32>
    %428 = arith.mulf %96, %427 : vector<16x128xf32>
    %429 = arith.addf %425, %428 : vector<16x128xf32>
    %c207 = arith.constant 207 : index
    %430 = memref.load %arg4[%c207] : memref<216xf32, #tpu.memory_space<smem>>
    %431 = vector.broadcast %430 : f32 to vector<16x128xf32>
    %432 = arith.mulf %112, %431 : vector<16x128xf32>
    %433 = arith.addf %429, %432 : vector<16x128xf32>
    %c210 = arith.constant 210 : index
    %434 = memref.load %arg4[%c210] : memref<216xf32, #tpu.memory_space<smem>>
    %435 = vector.broadcast %434 : f32 to vector<16x128xf32>
    %436 = arith.mulf %128, %435 : vector<16x128xf32>
    %437 = arith.addf %433, %436 : vector<16x128xf32>
    %c213 = arith.constant 213 : index
    %438 = memref.load %arg4[%c213] : memref<216xf32, #tpu.memory_space<smem>>
    %439 = vector.broadcast %438 : f32 to vector<16x128xf32>
    %440 = arith.mulf %144, %439 : vector<16x128xf32>
    %441 = arith.addf %437, %440 : vector<16x128xf32>
    %c15_i32_42 = arith.constant 15 : i32
    %442 = tpu.dynamic_rotate %441 by %c15_i32_42 dim 0 : vector<16x128xf32>, i32 -> vector<16x128xf32>
    %443 = arith.select %3, %442, %10 : vector<16x128xi1>, vector<16x128xf32>
    %444 = arith.addf %410, %443 : vector<16x128xf32>
    %c127_i32_43 = arith.constant 127 : i32
    %445 = tpu.dynamic_rotate %444 by %c127_i32_43 dim 1 : vector<16x128xf32>, i32 -> vector<16x128xf32>
    %446 = arith.select %7, %445, %10 : vector<16x128xi1>, vector<16x128xf32>
    %447 = arith.addf %345, %446 : vector<16x128xf32>
    %c0_44 = arith.constant 0 : index
    %448 = memref.load %arg5[%c0_44] : memref<3xf32, #tpu.memory_space<smem>>
    %449 = vector.broadcast %448 : f32 to vector<16x128xf32>
    %450 = arith.addf %447, %449 : vector<16x128xf32>
    %451 = math.tanh %450 : vector<16x128xf32>
    %452 = arith.addf %451, %12 : vector<16x128xf32>
    %c0_45 = arith.constant 0 : index
    %c0_46 = arith.constant 0 : index
    %c0_47 = arith.constant 0 : index
    %c0_48 = arith.constant 0 : index
    %453 = vector.load %arg6[%c0_45, %c0_46, %c0_47, %c0_48] : memref<2x3x16x128xf32, #tpu.memory_space<vmem>>, vector<1x1x16x128xf32>
    %454 = vector.shape_cast %453 : vector<1x1x16x128xf32> to vector<16x128xf32>
    %455 = vector.shape_cast %452 : vector<16x128xf32> to vector<1x1x16x128xf32>
    tpu.vector_store %arg6[%c0_45, %c0_46, %c0_47, %c0_48], %455 {strides = array<i32>} : memref<2x3x16x128xf32, #tpu.memory_space<vmem>>, vector<1x1x16x128xf32>,
    %c1_49 = arith.constant 1 : index
    %456 = memref.load %arg4[%c1_49] : memref<216xf32, #tpu.memory_space<smem>>
    %457 = vector.broadcast %456 : f32 to vector<16x128xf32>
    %458 = arith.mulf %32, %457 : vector<16x128xf32>
    %c4_50 = arith.constant 4 : index
    %459 = memref.load %arg4[%c4_50] : memref<216xf32, #tpu.memory_space<smem>>
    %460 = vector.broadcast %459 : f32 to vector<16x128xf32>
    %461 = arith.mulf %48, %460 : vector<16x128xf32>
    %462 = arith.addf %458, %461 : vector<16x128xf32>
    %c7_51 = arith.constant 7 : index
    %463 = memref.load %arg4[%c7_51] : memref<216xf32, #tpu.memory_space<smem>>
    %464 = vector.broadcast %463 : f32 to vector<16x128xf32>
    %465 = arith.mulf %64, %464 : vector<16x128xf32>
    %466 = arith.addf %462, %465 : vector<16x128xf32>
    %c10_52 = arith.constant 10 : index
    %467 = memref.load %arg4[%c10_52] : memref<216xf32, #tpu.memory_space<smem>>
    %468 = vector.broadcast %467 : f32 to vector<16x128xf32>
    %469 = arith.mulf %80, %468 : vector<16x128xf32>
    %470 = arith.addf %466, %469 : vector<16x128xf32>
    %c13_53 = arith.constant 13 : index
    %471 = memref.load %arg4[%c13_53] : memref<216xf32, #tpu.memory_space<smem>>
    %472 = vector.broadcast %471 : f32 to vector<16x128xf32>
    %473 = arith.mulf %96, %472 : vector<16x128xf32>
    %474 = arith.addf %470, %473 : vector<16x128xf32>
    %c16_54 = arith.constant 16 : index
    %475 = memref.load %arg4[%c16_54] : memref<216xf32, #tpu.memory_space<smem>>
    %476 = vector.broadcast %475 : f32 to vector<16x128xf32>
    %477 = arith.mulf %112, %476 : vector<16x128xf32>
    %478 = arith.addf %474, %477 : vector<16x128xf32>
    %c19_55 = arith.constant 19 : index
    %479 = memref.load %arg4[%c19_55] : memref<216xf32, #tpu.memory_space<smem>>
    %480 = vector.broadcast %479 : f32 to vector<16x128xf32>
    %481 = arith.mulf %128, %480 : vector<16x128xf32>
    %482 = arith.addf %478, %481 : vector<16x128xf32>
    %c22_56 = arith.constant 22 : index
    %483 = memref.load %arg4[%c22_56] : memref<216xf32, #tpu.memory_space<smem>>
    %484 = vector.broadcast %483 : f32 to vector<16x128xf32>
    %485 = arith.mulf %144, %484 : vector<16x128xf32>
    %486 = arith.addf %482, %485 : vector<16x128xf32>
    %c1_i32_57 = arith.constant 1 : i32
    %487 = tpu.dynamic_rotate %486 by %c1_i32_57 dim 0 : vector<16x128xf32>, i32 -> vector<16x128xf32>
    %488 = arith.select %5, %487, %10 : vector<16x128xi1>, vector<16x128xf32>
    %c73 = arith.constant 73 : index
    %489 = memref.load %arg4[%c73] : memref<216xf32, #tpu.memory_space<smem>>
    %490 = vector.broadcast %489 : f32 to vector<16x128xf32>
    %491 = arith.mulf %32, %490 : vector<16x128xf32>
    %c76 = arith.constant 76 : index
    %492 = memref.load %arg4[%c76] : memref<216xf32, #tpu.memory_space<smem>>
    %493 = vector.broadcast %492 : f32 to vector<16x128xf32>
    %494 = arith.mulf %48, %493 : vector<16x128xf32>
    %495 = arith.addf %491, %494 : vector<16x128xf32>
    %c79 = arith.constant 79 : index
    %496 = memref.load %arg4[%c79] : memref<216xf32, #tpu.memory_space<smem>>
    %497 = vector.broadcast %496 : f32 to vector<16x128xf32>
    %498 = arith.mulf %64, %497 : vector<16x128xf32>
    %499 = arith.addf %495, %498 : vector<16x128xf32>
    %c82 = arith.constant 82 : index
    %500 = memref.load %arg4[%c82] : memref<216xf32, #tpu.memory_space<smem>>
    %501 = vector.broadcast %500 : f32 to vector<16x128xf32>
    %502 = arith.mulf %80, %501 : vector<16x128xf32>
    %503 = arith.addf %499, %502 : vector<16x128xf32>
    %c85 = arith.constant 85 : index
    %504 = memref.load %arg4[%c85] : memref<216xf32, #tpu.memory_space<smem>>
    %505 = vector.broadcast %504 : f32 to vector<16x128xf32>
    %506 = arith.mulf %96, %505 : vector<16x128xf32>
    %507 = arith.addf %503, %506 : vector<16x128xf32>
    %c88 = arith.constant 88 : index
    %508 = memref.load %arg4[%c88] : memref<216xf32, #tpu.memory_space<smem>>
    %509 = vector.broadcast %508 : f32 to vector<16x128xf32>
    %510 = arith.mulf %112, %509 : vector<16x128xf32>
    %511 = arith.addf %507, %510 : vector<16x128xf32>
    %c91 = arith.constant 91 : index
    %512 = memref.load %arg4[%c91] : memref<216xf32, #tpu.memory_space<smem>>
    %513 = vector.broadcast %512 : f32 to vector<16x128xf32>
    %514 = arith.mulf %128, %513 : vector<16x128xf32>
    %515 = arith.addf %511, %514 : vector<16x128xf32>
    %c94 = arith.constant 94 : index
    %516 = memref.load %arg4[%c94] : memref<216xf32, #tpu.memory_space<smem>>
    %517 = vector.broadcast %516 : f32 to vector<16x128xf32>
    %518 = arith.mulf %144, %517 : vector<16x128xf32>
    %519 = arith.addf %515, %518 : vector<16x128xf32>
    %520 = arith.addf %488, %519 : vector<16x128xf32>
    %c145 = arith.constant 145 : index
    %521 = memref.load %arg4[%c145] : memref<216xf32, #tpu.memory_space<smem>>
    %522 = vector.broadcast %521 : f32 to vector<16x128xf32>
    %523 = arith.mulf %32, %522 : vector<16x128xf32>
    %c148 = arith.constant 148 : index
    %524 = memref.load %arg4[%c148] : memref<216xf32, #tpu.memory_space<smem>>
    %525 = vector.broadcast %524 : f32 to vector<16x128xf32>
    %526 = arith.mulf %48, %525 : vector<16x128xf32>
    %527 = arith.addf %523, %526 : vector<16x128xf32>
    %c151 = arith.constant 151 : index
    %528 = memref.load %arg4[%c151] : memref<216xf32, #tpu.memory_space<smem>>
    %529 = vector.broadcast %528 : f32 to vector<16x128xf32>
    %530 = arith.mulf %64, %529 : vector<16x128xf32>
    %531 = arith.addf %527, %530 : vector<16x128xf32>
    %c154 = arith.constant 154 : index
    %532 = memref.load %arg4[%c154] : memref<216xf32, #tpu.memory_space<smem>>
    %533 = vector.broadcast %532 : f32 to vector<16x128xf32>
    %534 = arith.mulf %80, %533 : vector<16x128xf32>
    %535 = arith.addf %531, %534 : vector<16x128xf32>
    %c157 = arith.constant 157 : index
    %536 = memref.load %arg4[%c157] : memref<216xf32, #tpu.memory_space<smem>>
    %537 = vector.broadcast %536 : f32 to vector<16x128xf32>
    %538 = arith.mulf %96, %537 : vector<16x128xf32>
    %539 = arith.addf %535, %538 : vector<16x128xf32>
    %c160 = arith.constant 160 : index
    %540 = memref.load %arg4[%c160] : memref<216xf32, #tpu.memory_space<smem>>
    %541 = vector.broadcast %540 : f32 to vector<16x128xf32>
    %542 = arith.mulf %112, %541 : vector<16x128xf32>
    %543 = arith.addf %539, %542 : vector<16x128xf32>
    %c163 = arith.constant 163 : index
    %544 = memref.load %arg4[%c163] : memref<216xf32, #tpu.memory_space<smem>>
    %545 = vector.broadcast %544 : f32 to vector<16x128xf32>
    %546 = arith.mulf %128, %545 : vector<16x128xf32>
    %547 = arith.addf %543, %546 : vector<16x128xf32>
    %c166 = arith.constant 166 : index
    %548 = memref.load %arg4[%c166] : memref<216xf32, #tpu.memory_space<smem>>
    %549 = vector.broadcast %548 : f32 to vector<16x128xf32>
    %550 = arith.mulf %144, %549 : vector<16x128xf32>
    %551 = arith.addf %547, %550 : vector<16x128xf32>
    %c15_i32_58 = arith.constant 15 : i32
    %552 = tpu.dynamic_rotate %551 by %c15_i32_58 dim 0 : vector<16x128xf32>, i32 -> vector<16x128xf32>
    %553 = arith.select %3, %552, %10 : vector<16x128xi1>, vector<16x128xf32>
    %554 = arith.addf %520, %553 : vector<16x128xf32>
    %c1_i32_59 = arith.constant 1 : i32
    %555 = tpu.dynamic_rotate %554 by %c1_i32_59 dim 1 : vector<16x128xf32>, i32 -> vector<16x128xf32>
    %556 = arith.select %9, %555, %10 : vector<16x128xi1>, vector<16x128xf32>
    %c25 = arith.constant 25 : index
    %557 = memref.load %arg4[%c25] : memref<216xf32, #tpu.memory_space<smem>>
    %558 = vector.broadcast %557 : f32 to vector<16x128xf32>
    %559 = arith.mulf %32, %558 : vector<16x128xf32>
    %c28 = arith.constant 28 : index
    %560 = memref.load %arg4[%c28] : memref<216xf32, #tpu.memory_space<smem>>
    %561 = vector.broadcast %560 : f32 to vector<16x128xf32>
    %562 = arith.mulf %48, %561 : vector<16x128xf32>
    %563 = arith.addf %559, %562 : vector<16x128xf32>
    %c31 = arith.constant 31 : index
    %564 = memref.load %arg4[%c31] : memref<216xf32, #tpu.memory_space<smem>>
    %565 = vector.broadcast %564 : f32 to vector<16x128xf32>
    %566 = arith.mulf %64, %565 : vector<16x128xf32>
    %567 = arith.addf %563, %566 : vector<16x128xf32>
    %c34 = arith.constant 34 : index
    %568 = memref.load %arg4[%c34] : memref<216xf32, #tpu.memory_space<smem>>
    %569 = vector.broadcast %568 : f32 to vector<16x128xf32>
    %570 = arith.mulf %80, %569 : vector<16x128xf32>
    %571 = arith.addf %567, %570 : vector<16x128xf32>
    %c37 = arith.constant 37 : index
    %572 = memref.load %arg4[%c37] : memref<216xf32, #tpu.memory_space<smem>>
    %573 = vector.broadcast %572 : f32 to vector<16x128xf32>
    %574 = arith.mulf %96, %573 : vector<16x128xf32>
    %575 = arith.addf %571, %574 : vector<16x128xf32>
    %c40 = arith.constant 40 : index
    %576 = memref.load %arg4[%c40] : memref<216xf32, #tpu.memory_space<smem>>
    %577 = vector.broadcast %576 : f32 to vector<16x128xf32>
    %578 = arith.mulf %112, %577 : vector<16x128xf32>
    %579 = arith.addf %575, %578 : vector<16x128xf32>
    %c43 = arith.constant 43 : index
    %580 = memref.load %arg4[%c43] : memref<216xf32, #tpu.memory_space<smem>>
    %581 = vector.broadcast %580 : f32 to vector<16x128xf32>
    %582 = arith.mulf %128, %581 : vector<16x128xf32>
    %583 = arith.addf %579, %582 : vector<16x128xf32>
    %c46 = arith.constant 46 : index
    %584 = memref.load %arg4[%c46] : memref<216xf32, #tpu.memory_space<smem>>
    %585 = vector.broadcast %584 : f32 to vector<16x128xf32>
    %586 = arith.mulf %144, %585 : vector<16x128xf32>
    %587 = arith.addf %583, %586 : vector<16x128xf32>
    %c1_i32_60 = arith.constant 1 : i32
    %588 = tpu.dynamic_rotate %587 by %c1_i32_60 dim 0 : vector<16x128xf32>, i32 -> vector<16x128xf32>
    %589 = arith.select %5, %588, %10 : vector<16x128xi1>, vector<16x128xf32>
    %c97 = arith.constant 97 : index
    %590 = memref.load %arg4[%c97] : memref<216xf32, #tpu.memory_space<smem>>
    %591 = vector.broadcast %590 : f32 to vector<16x128xf32>
    %592 = arith.mulf %32, %591 : vector<16x128xf32>
    %c100 = arith.constant 100 : index
    %593 = memref.load %arg4[%c100] : memref<216xf32, #tpu.memory_space<smem>>
    %594 = vector.broadcast %593 : f32 to vector<16x128xf32>
    %595 = arith.mulf %48, %594 : vector<16x128xf32>
    %596 = arith.addf %592, %595 : vector<16x128xf32>
    %c103 = arith.constant 103 : index
    %597 = memref.load %arg4[%c103] : memref<216xf32, #tpu.memory_space<smem>>
    %598 = vector.broadcast %597 : f32 to vector<16x128xf32>
    %599 = arith.mulf %64, %598 : vector<16x128xf32>
    %600 = arith.addf %596, %599 : vector<16x128xf32>
    %c106 = arith.constant 106 : index
    %601 = memref.load %arg4[%c106] : memref<216xf32, #tpu.memory_space<smem>>
    %602 = vector.broadcast %601 : f32 to vector<16x128xf32>
    %603 = arith.mulf %80, %602 : vector<16x128xf32>
    %604 = arith.addf %600, %603 : vector<16x128xf32>
    %c109 = arith.constant 109 : index
    %605 = memref.load %arg4[%c109] : memref<216xf32, #tpu.memory_space<smem>>
    %606 = vector.broadcast %605 : f32 to vector<16x128xf32>
    %607 = arith.mulf %96, %606 : vector<16x128xf32>
    %608 = arith.addf %604, %607 : vector<16x128xf32>
    %c112 = arith.constant 112 : index
    %609 = memref.load %arg4[%c112] : memref<216xf32, #tpu.memory_space<smem>>
    %610 = vector.broadcast %609 : f32 to vector<16x128xf32>
    %611 = arith.mulf %112, %610 : vector<16x128xf32>
    %612 = arith.addf %608, %611 : vector<16x128xf32>
    %c115 = arith.constant 115 : index
    %613 = memref.load %arg4[%c115] : memref<216xf32, #tpu.memory_space<smem>>
    %614 = vector.broadcast %613 : f32 to vector<16x128xf32>
    %615 = arith.mulf %128, %614 : vector<16x128xf32>
    %616 = arith.addf %612, %615 : vector<16x128xf32>
    %c118 = arith.constant 118 : index
    %617 = memref.load %arg4[%c118] : memref<216xf32, #tpu.memory_space<smem>>
    %618 = vector.broadcast %617 : f32 to vector<16x128xf32>
    %619 = arith.mulf %144, %618 : vector<16x128xf32>
    %620 = arith.addf %616, %619 : vector<16x128xf32>
    %621 = arith.addf %589, %620 : vector<16x128xf32>
    %c169 = arith.constant 169 : index
    %622 = memref.load %arg4[%c169] : memref<216xf32, #tpu.memory_space<smem>>
    %623 = vector.broadcast %622 : f32 to vector<16x128xf32>
    %624 = arith.mulf %32, %623 : vector<16x128xf32>
    %c172 = arith.constant 172 : index
    %625 = memref.load %arg4[%c172] : memref<216xf32, #tpu.memory_space<smem>>
    %626 = vector.broadcast %625 : f32 to vector<16x128xf32>
    %627 = arith.mulf %48, %626 : vector<16x128xf32>
    %628 = arith.addf %624, %627 : vector<16x128xf32>
    %c175 = arith.constant 175 : index
    %629 = memref.load %arg4[%c175] : memref<216xf32, #tpu.memory_space<smem>>
    %630 = vector.broadcast %629 : f32 to vector<16x128xf32>
    %631 = arith.mulf %64, %630 : vector<16x128xf32>
    %632 = arith.addf %628, %631 : vector<16x128xf32>
    %c178 = arith.constant 178 : index
    %633 = memref.load %arg4[%c178] : memref<216xf32, #tpu.memory_space<smem>>
    %634 = vector.broadcast %633 : f32 to vector<16x128xf32>
    %635 = arith.mulf %80, %634 : vector<16x128xf32>
    %636 = arith.addf %632, %635 : vector<16x128xf32>
    %c181 = arith.constant 181 : index
    %637 = memref.load %arg4[%c181] : memref<216xf32, #tpu.memory_space<smem>>
    %638 = vector.broadcast %637 : f32 to vector<16x128xf32>
    %639 = arith.mulf %96, %638 : vector<16x128xf32>
    %640 = arith.addf %636, %639 : vector<16x128xf32>
    %c184 = arith.constant 184 : index
    %641 = memref.load %arg4[%c184] : memref<216xf32, #tpu.memory_space<smem>>
    %642 = vector.broadcast %641 : f32 to vector<16x128xf32>
    %643 = arith.mulf %112, %642 : vector<16x128xf32>
    %644 = arith.addf %640, %643 : vector<16x128xf32>
    %c187 = arith.constant 187 : index
    %645 = memref.load %arg4[%c187] : memref<216xf32, #tpu.memory_space<smem>>
    %646 = vector.broadcast %645 : f32 to vector<16x128xf32>
    %647 = arith.mulf %128, %646 : vector<16x128xf32>
    %648 = arith.addf %644, %647 : vector<16x128xf32>
    %c190 = arith.constant 190 : index
    %649 = memref.load %arg4[%c190] : memref<216xf32, #tpu.memory_space<smem>>
    %650 = vector.broadcast %649 : f32 to vector<16x128xf32>
    %651 = arith.mulf %144, %650 : vector<16x128xf32>
    %652 = arith.addf %648, %651 : vector<16x128xf32>
    %c15_i32_61 = arith.constant 15 : i32
    %653 = tpu.dynamic_rotate %652 by %c15_i32_61 dim 0 : vector<16x128xf32>, i32 -> vector<16x128xf32>
    %654 = arith.select %3, %653, %10 : vector<16x128xi1>, vector<16x128xf32>
    %655 = arith.addf %621, %654 : vector<16x128xf32>
    %656 = arith.addf %556, %655 : vector<16x128xf32>
    %c49 = arith.constant 49 : index
    %657 = memref.load %arg4[%c49] : memref<216xf32, #tpu.memory_space<smem>>
    %658 = vector.broadcast %657 : f32 to vector<16x128xf32>
    %659 = arith.mulf %32, %658 : vector<16x128xf32>
    %c52 = arith.constant 52 : index
    %660 = memref.load %arg4[%c52] : memref<216xf32, #tpu.memory_space<smem>>
    %661 = vector.broadcast %660 : f32 to vector<16x128xf32>
    %662 = arith.mulf %48, %661 : vector<16x128xf32>
    %663 = arith.addf %659, %662 : vector<16x128xf32>
    %c55 = arith.constant 55 : index
    %664 = memref.load %arg4[%c55] : memref<216xf32, #tpu.memory_space<smem>>
    %665 = vector.broadcast %664 : f32 to vector<16x128xf32>
    %666 = arith.mulf %64, %665 : vector<16x128xf32>
    %667 = arith.addf %663, %666 : vector<16x128xf32>
    %c58 = arith.constant 58 : index
    %668 = memref.load %arg4[%c58] : memref<216xf32, #tpu.memory_space<smem>>
    %669 = vector.broadcast %668 : f32 to vector<16x128xf32>
    %670 = arith.mulf %80, %669 : vector<16x128xf32>
    %671 = arith.addf %667, %670 : vector<16x128xf32>
    %c61 = arith.constant 61 : index
    %672 = memref.load %arg4[%c61] : memref<216xf32, #tpu.memory_space<smem>>
    %673 = vector.broadcast %672 : f32 to vector<16x128xf32>
    %674 = arith.mulf %96, %673 : vector<16x128xf32>
    %675 = arith.addf %671, %674 : vector<16x128xf32>
    %c64 = arith.constant 64 : index
    %676 = memref.load %arg4[%c64] : memref<216xf32, #tpu.memory_space<smem>>
    %677 = vector.broadcast %676 : f32 to vector<16x128xf32>
    %678 = arith.mulf %112, %677 : vector<16x128xf32>
    %679 = arith.addf %675, %678 : vector<16x128xf32>
    %c67 = arith.constant 67 : index
    %680 = memref.load %arg4[%c67] : memref<216xf32, #tpu.memory_space<smem>>
    %681 = vector.broadcast %680 : f32 to vector<16x128xf32>
    %682 = arith.mulf %128, %681 : vector<16x128xf32>
    %683 = arith.addf %679, %682 : vector<16x128xf32>
    %c70 = arith.constant 70 : index
    %684 = memref.load %arg4[%c70] : memref<216xf32, #tpu.memory_space<smem>>
    %685 = vector.broadcast %684 : f32 to vector<16x128xf32>
    %686 = arith.mulf %144, %685 : vector<16x128xf32>
    %687 = arith.addf %683, %686 : vector<16x128xf32>
    %c1_i32_62 = arith.constant 1 : i32
    %688 = tpu.dynamic_rotate %687 by %c1_i32_62 dim 0 : vector<16x128xf32>, i32 -> vector<16x128xf32>
    %689 = arith.select %5, %688, %10 : vector<16x128xi1>, vector<16x128xf32>
    %c121 = arith.constant 121 : index
    %690 = memref.load %arg4[%c121] : memref<216xf32, #tpu.memory_space<smem>>
    %691 = vector.broadcast %690 : f32 to vector<16x128xf32>
    %692 = arith.mulf %32, %691 : vector<16x128xf32>
    %c124 = arith.constant 124 : index
    %693 = memref.load %arg4[%c124] : memref<216xf32, #tpu.memory_space<smem>>
    %694 = vector.broadcast %693 : f32 to vector<16x128xf32>
    %695 = arith.mulf %48, %694 : vector<16x128xf32>
    %696 = arith.addf %692, %695 : vector<16x128xf32>
    %c127 = arith.constant 127 : index
    %697 = memref.load %arg4[%c127] : memref<216xf32, #tpu.memory_space<smem>>
    %698 = vector.broadcast %697 : f32 to vector<16x128xf32>
    %699 = arith.mulf %64, %698 : vector<16x128xf32>
    %700 = arith.addf %696, %699 : vector<16x128xf32>
    %c130 = arith.constant 130 : index
    %701 = memref.load %arg4[%c130] : memref<216xf32, #tpu.memory_space<smem>>
    %702 = vector.broadcast %701 : f32 to vector<16x128xf32>
    %703 = arith.mulf %80, %702 : vector<16x128xf32>
    %704 = arith.addf %700, %703 : vector<16x128xf32>
    %c133 = arith.constant 133 : index
    %705 = memref.load %arg4[%c133] : memref<216xf32, #tpu.memory_space<smem>>
    %706 = vector.broadcast %705 : f32 to vector<16x128xf32>
    %707 = arith.mulf %96, %706 : vector<16x128xf32>
    %708 = arith.addf %704, %707 : vector<16x128xf32>
    %c136 = arith.constant 136 : index
    %709 = memref.load %arg4[%c136] : memref<216xf32, #tpu.memory_space<smem>>
    %710 = vector.broadcast %709 : f32 to vector<16x128xf32>
    %711 = arith.mulf %112, %710 : vector<16x128xf32>
    %712 = arith.addf %708, %711 : vector<16x128xf32>
    %c139 = arith.constant 139 : index
    %713 = memref.load %arg4[%c139] : memref<216xf32, #tpu.memory_space<smem>>
    %714 = vector.broadcast %713 : f32 to vector<16x128xf32>
    %715 = arith.mulf %128, %714 : vector<16x128xf32>
    %716 = arith.addf %712, %715 : vector<16x128xf32>
    %c142 = arith.constant 142 : index
    %717 = memref.load %arg4[%c142] : memref<216xf32, #tpu.memory_space<smem>>
    %718 = vector.broadcast %717 : f32 to vector<16x128xf32>
    %719 = arith.mulf %144, %718 : vector<16x128xf32>
    %720 = arith.addf %716, %719 : vector<16x128xf32>
    %721 = arith.addf %689, %720 : vector<16x128xf32>
    %c193 = arith.constant 193 : index
    %722 = memref.load %arg4[%c193] : memref<216xf32, #tpu.memory_space<smem>>
    %723 = vector.broadcast %722 : f32 to vector<16x128xf32>
    %724 = arith.mulf %32, %723 : vector<16x128xf32>
    %c196 = arith.constant 196 : index
    %725 = memref.load %arg4[%c196] : memref<216xf32, #tpu.memory_space<smem>>
    %726 = vector.broadcast %725 : f32 to vector<16x128xf32>
    %727 = arith.mulf %48, %726 : vector<16x128xf32>
    %728 = arith.addf %724, %727 : vector<16x128xf32>
    %c199 = arith.constant 199 : index
    %729 = memref.load %arg4[%c199] : memref<216xf32, #tpu.memory_space<smem>>
    %730 = vector.broadcast %729 : f32 to vector<16x128xf32>
    %731 = arith.mulf %64, %730 : vector<16x128xf32>
    %732 = arith.addf %728, %731 : vector<16x128xf32>
    %c202 = arith.constant 202 : index
    %733 = memref.load %arg4[%c202] : memref<216xf32, #tpu.memory_space<smem>>
    %734 = vector.broadcast %733 : f32 to vector<16x128xf32>
    %735 = arith.mulf %80, %734 : vector<16x128xf32>
    %736 = arith.addf %732, %735 : vector<16x128xf32>
    %c205 = arith.constant 205 : index
    %737 = memref.load %arg4[%c205] : memref<216xf32, #tpu.memory_space<smem>>
    %738 = vector.broadcast %737 : f32 to vector<16x128xf32>
    %739 = arith.mulf %96, %738 : vector<16x128xf32>
    %740 = arith.addf %736, %739 : vector<16x128xf32>
    %c208 = arith.constant 208 : index
    %741 = memref.load %arg4[%c208] : memref<216xf32, #tpu.memory_space<smem>>
    %742 = vector.broadcast %741 : f32 to vector<16x128xf32>
    %743 = arith.mulf %112, %742 : vector<16x128xf32>
    %744 = arith.addf %740, %743 : vector<16x128xf32>
    %c211 = arith.constant 211 : index
    %745 = memref.load %arg4[%c211] : memref<216xf32, #tpu.memory_space<smem>>
    %746 = vector.broadcast %745 : f32 to vector<16x128xf32>
    %747 = arith.mulf %128, %746 : vector<16x128xf32>
    %748 = arith.addf %744, %747 : vector<16x128xf32>
    %c214 = arith.constant 214 : index
    %749 = memref.load %arg4[%c214] : memref<216xf32, #tpu.memory_space<smem>>
    %750 = vector.broadcast %749 : f32 to vector<16x128xf32>
    %751 = arith.mulf %144, %750 : vector<16x128xf32>
    %752 = arith.addf %748, %751 : vector<16x128xf32>
    %c15_i32_63 = arith.constant 15 : i32
    %753 = tpu.dynamic_rotate %752 by %c15_i32_63 dim 0 : vector<16x128xf32>, i32 -> vector<16x128xf32>
    %754 = arith.select %3, %753, %10 : vector<16x128xi1>, vector<16x128xf32>
    %755 = arith.addf %721, %754 : vector<16x128xf32>
    %c127_i32_64 = arith.constant 127 : i32
    %756 = tpu.dynamic_rotate %755 by %c127_i32_64 dim 1 : vector<16x128xf32>, i32 -> vector<16x128xf32>
    %757 = arith.select %7, %756, %10 : vector<16x128xi1>, vector<16x128xf32>
    %758 = arith.addf %656, %757 : vector<16x128xf32>
    %c1_65 = arith.constant 1 : index
    %759 = memref.load %arg5[%c1_65] : memref<3xf32, #tpu.memory_space<smem>>
    %760 = vector.broadcast %759 : f32 to vector<16x128xf32>
    %761 = arith.addf %758, %760 : vector<16x128xf32>
    %762 = math.tanh %761 : vector<16x128xf32>
    %763 = arith.addf %762, %14 : vector<16x128xf32>
    %c0_66 = arith.constant 0 : index
    %c1_67 = arith.constant 1 : index
    %c0_68 = arith.constant 0 : index
    %c0_69 = arith.constant 0 : index
    %764 = vector.load %arg6[%c0_66, %c1_67, %c0_68, %c0_69] : memref<2x3x16x128xf32, #tpu.memory_space<vmem>>, vector<1x1x16x128xf32>
    %765 = vector.shape_cast %764 : vector<1x1x16x128xf32> to vector<16x128xf32>
    %766 = vector.shape_cast %763 : vector<16x128xf32> to vector<1x1x16x128xf32>
    tpu.vector_store %arg6[%c0_66, %c1_67, %c0_68, %c0_69], %766 {strides = array<i32>} : memref<2x3x16x128xf32, #tpu.memory_space<vmem>>, vector<1x1x16x128xf32>,
    %c2_70 = arith.constant 2 : index
    %767 = memref.load %arg4[%c2_70] : memref<216xf32, #tpu.memory_space<smem>>
    %768 = vector.broadcast %767 : f32 to vector<16x128xf32>
    %769 = arith.mulf %32, %768 : vector<16x128xf32>
    %c5_71 = arith.constant 5 : index
    %770 = memref.load %arg4[%c5_71] : memref<216xf32, #tpu.memory_space<smem>>
    %771 = vector.broadcast %770 : f32 to vector<16x128xf32>
    %772 = arith.mulf %48, %771 : vector<16x128xf32>
    %773 = arith.addf %769, %772 : vector<16x128xf32>
    %c8_72 = arith.constant 8 : index
    %774 = memref.load %arg4[%c8_72] : memref<216xf32, #tpu.memory_space<smem>>
    %775 = vector.broadcast %774 : f32 to vector<16x128xf32>
    %776 = arith.mulf %64, %775 : vector<16x128xf32>
    %777 = arith.addf %773, %776 : vector<16x128xf32>
    %c11_73 = arith.constant 11 : index
    %778 = memref.load %arg4[%c11_73] : memref<216xf32, #tpu.memory_space<smem>>
    %779 = vector.broadcast %778 : f32 to vector<16x128xf32>
    %780 = arith.mulf %80, %779 : vector<16x128xf32>
    %781 = arith.addf %777, %780 : vector<16x128xf32>
    %c14_74 = arith.constant 14 : index
    %782 = memref.load %arg4[%c14_74] : memref<216xf32, #tpu.memory_space<smem>>
    %783 = vector.broadcast %782 : f32 to vector<16x128xf32>
    %784 = arith.mulf %96, %783 : vector<16x128xf32>
    %785 = arith.addf %781, %784 : vector<16x128xf32>
    %c17_75 = arith.constant 17 : index
    %786 = memref.load %arg4[%c17_75] : memref<216xf32, #tpu.memory_space<smem>>
    %787 = vector.broadcast %786 : f32 to vector<16x128xf32>
    %788 = arith.mulf %112, %787 : vector<16x128xf32>
    %789 = arith.addf %785, %788 : vector<16x128xf32>
    %c20_76 = arith.constant 20 : index
    %790 = memref.load %arg4[%c20_76] : memref<216xf32, #tpu.memory_space<smem>>
    %791 = vector.broadcast %790 : f32 to vector<16x128xf32>
    %792 = arith.mulf %128, %791 : vector<16x128xf32>
    %793 = arith.addf %789, %792 : vector<16x128xf32>
    %c23_77 = arith.constant 23 : index
    %794 = memref.load %arg4[%c23_77] : memref<216xf32, #tpu.memory_space<smem>>
    %795 = vector.broadcast %794 : f32 to vector<16x128xf32>
    %796 = arith.mulf %144, %795 : vector<16x128xf32>
    %797 = arith.addf %793, %796 : vector<16x128xf32>
    %c1_i32_78 = arith.constant 1 : i32
    %798 = tpu.dynamic_rotate %797 by %c1_i32_78 dim 0 : vector<16x128xf32>, i32 -> vector<16x128xf32>
    %799 = arith.select %5, %798, %10 : vector<16x128xi1>, vector<16x128xf32>
    %c74 = arith.constant 74 : index
    %800 = memref.load %arg4[%c74] : memref<216xf32, #tpu.memory_space<smem>>
    %801 = vector.broadcast %800 : f32 to vector<16x128xf32>
    %802 = arith.mulf %32, %801 : vector<16x128xf32>
    %c77 = arith.constant 77 : index
    %803 = memref.load %arg4[%c77] : memref<216xf32, #tpu.memory_space<smem>>
    %804 = vector.broadcast %803 : f32 to vector<16x128xf32>
    %805 = arith.mulf %48, %804 : vector<16x128xf32>
    %806 = arith.addf %802, %805 : vector<16x128xf32>
    %c80 = arith.constant 80 : index
    %807 = memref.load %arg4[%c80] : memref<216xf32, #tpu.memory_space<smem>>
    %808 = vector.broadcast %807 : f32 to vector<16x128xf32>
    %809 = arith.mulf %64, %808 : vector<16x128xf32>
    %810 = arith.addf %806, %809 : vector<16x128xf32>
    %c83 = arith.constant 83 : index
    %811 = memref.load %arg4[%c83] : memref<216xf32, #tpu.memory_space<smem>>
    %812 = vector.broadcast %811 : f32 to vector<16x128xf32>
    %813 = arith.mulf %80, %812 : vector<16x128xf32>
    %814 = arith.addf %810, %813 : vector<16x128xf32>
    %c86 = arith.constant 86 : index
    %815 = memref.load %arg4[%c86] : memref<216xf32, #tpu.memory_space<smem>>
    %816 = vector.broadcast %815 : f32 to vector<16x128xf32>
    %817 = arith.mulf %96, %816 : vector<16x128xf32>
    %818 = arith.addf %814, %817 : vector<16x128xf32>
    %c89 = arith.constant 89 : index
    %819 = memref.load %arg4[%c89] : memref<216xf32, #tpu.memory_space<smem>>
    %820 = vector.broadcast %819 : f32 to vector<16x128xf32>
    %821 = arith.mulf %112, %820 : vector<16x128xf32>
    %822 = arith.addf %818, %821 : vector<16x128xf32>
    %c92 = arith.constant 92 : index
    %823 = memref.load %arg4[%c92] : memref<216xf32, #tpu.memory_space<smem>>
    %824 = vector.broadcast %823 : f32 to vector<16x128xf32>
    %825 = arith.mulf %128, %824 : vector<16x128xf32>
    %826 = arith.addf %822, %825 : vector<16x128xf32>
    %c95 = arith.constant 95 : index
    %827 = memref.load %arg4[%c95] : memref<216xf32, #tpu.memory_space<smem>>
    %828 = vector.broadcast %827 : f32 to vector<16x128xf32>
    %829 = arith.mulf %144, %828 : vector<16x128xf32>
    %830 = arith.addf %826, %829 : vector<16x128xf32>
    %831 = arith.addf %799, %830 : vector<16x128xf32>
    %c146 = arith.constant 146 : index
    %832 = memref.load %arg4[%c146] : memref<216xf32, #tpu.memory_space<smem>>
    %833 = vector.broadcast %832 : f32 to vector<16x128xf32>
    %834 = arith.mulf %32, %833 : vector<16x128xf32>
    %c149 = arith.constant 149 : index
    %835 = memref.load %arg4[%c149] : memref<216xf32, #tpu.memory_space<smem>>
    %836 = vector.broadcast %835 : f32 to vector<16x128xf32>
    %837 = arith.mulf %48, %836 : vector<16x128xf32>
    %838 = arith.addf %834, %837 : vector<16x128xf32>
    %c152 = arith.constant 152 : index
    %839 = memref.load %arg4[%c152] : memref<216xf32, #tpu.memory_space<smem>>
    %840 = vector.broadcast %839 : f32 to vector<16x128xf32>
    %841 = arith.mulf %64, %840 : vector<16x128xf32>
    %842 = arith.addf %838, %841 : vector<16x128xf32>
    %c155 = arith.constant 155 : index
    %843 = memref.load %arg4[%c155] : memref<216xf32, #tpu.memory_space<smem>>
    %844 = vector.broadcast %843 : f32 to vector<16x128xf32>
    %845 = arith.mulf %80, %844 : vector<16x128xf32>
    %846 = arith.addf %842, %845 : vector<16x128xf32>
    %c158 = arith.constant 158 : index
    %847 = memref.load %arg4[%c158] : memref<216xf32, #tpu.memory_space<smem>>
    %848 = vector.broadcast %847 : f32 to vector<16x128xf32>
    %849 = arith.mulf %96, %848 : vector<16x128xf32>
    %850 = arith.addf %846, %849 : vector<16x128xf32>
    %c161 = arith.constant 161 : index
    %851 = memref.load %arg4[%c161] : memref<216xf32, #tpu.memory_space<smem>>
    %852 = vector.broadcast %851 : f32 to vector<16x128xf32>
    %853 = arith.mulf %112, %852 : vector<16x128xf32>
    %854 = arith.addf %850, %853 : vector<16x128xf32>
    %c164 = arith.constant 164 : index
    %855 = memref.load %arg4[%c164] : memref<216xf32, #tpu.memory_space<smem>>
    %856 = vector.broadcast %855 : f32 to vector<16x128xf32>
    %857 = arith.mulf %128, %856 : vector<16x128xf32>
    %858 = arith.addf %854, %857 : vector<16x128xf32>
    %c167 = arith.constant 167 : index
    %859 = memref.load %arg4[%c167] : memref<216xf32, #tpu.memory_space<smem>>
    %860 = vector.broadcast %859 : f32 to vector<16x128xf32>
    %861 = arith.mulf %144, %860 : vector<16x128xf32>
    %862 = arith.addf %858, %861 : vector<16x128xf32>
    %c15_i32_79 = arith.constant 15 : i32
    %863 = tpu.dynamic_rotate %862 by %c15_i32_79 dim 0 : vector<16x128xf32>, i32 -> vector<16x128xf32>
    %864 = arith.select %3, %863, %10 : vector<16x128xi1>, vector<16x128xf32>
    %865 = arith.addf %831, %864 : vector<16x128xf32>
    %c1_i32_80 = arith.constant 1 : i32
    %866 = tpu.dynamic_rotate %865 by %c1_i32_80 dim 1 : vector<16x128xf32>, i32 -> vector<16x128xf32>
    %867 = arith.select %9, %866, %10 : vector<16x128xi1>, vector<16x128xf32>
    %c26 = arith.constant 26 : index
    %868 = memref.load %arg4[%c26] : memref<216xf32, #tpu.memory_space<smem>>
    %869 = vector.broadcast %868 : f32 to vector<16x128xf32>
    %870 = arith.mulf %32, %869 : vector<16x128xf32>
    %c29 = arith.constant 29 : index
    %871 = memref.load %arg4[%c29] : memref<216xf32, #tpu.memory_space<smem>>
    %872 = vector.broadcast %871 : f32 to vector<16x128xf32>
    %873 = arith.mulf %48, %872 : vector<16x128xf32>
    %874 = arith.addf %870, %873 : vector<16x128xf32>
    %c32 = arith.constant 32 : index
    %875 = memref.load %arg4[%c32] : memref<216xf32, #tpu.memory_space<smem>>
    %876 = vector.broadcast %875 : f32 to vector<16x128xf32>
    %877 = arith.mulf %64, %876 : vector<16x128xf32>
    %878 = arith.addf %874, %877 : vector<16x128xf32>
    %c35 = arith.constant 35 : index
    %879 = memref.load %arg4[%c35] : memref<216xf32, #tpu.memory_space<smem>>
    %880 = vector.broadcast %879 : f32 to vector<16x128xf32>
    %881 = arith.mulf %80, %880 : vector<16x128xf32>
    %882 = arith.addf %878, %881 : vector<16x128xf32>
    %c38 = arith.constant 38 : index
    %883 = memref.load %arg4[%c38] : memref<216xf32, #tpu.memory_space<smem>>
    %884 = vector.broadcast %883 : f32 to vector<16x128xf32>
    %885 = arith.mulf %96, %884 : vector<16x128xf32>
    %886 = arith.addf %882, %885 : vector<16x128xf32>
    %c41 = arith.constant 41 : index
    %887 = memref.load %arg4[%c41] : memref<216xf32, #tpu.memory_space<smem>>
    %888 = vector.broadcast %887 : f32 to vector<16x128xf32>
    %889 = arith.mulf %112, %888 : vector<16x128xf32>
    %890 = arith.addf %886, %889 : vector<16x128xf32>
    %c44 = arith.constant 44 : index
    %891 = memref.load %arg4[%c44] : memref<216xf32, #tpu.memory_space<smem>>
    %892 = vector.broadcast %891 : f32 to vector<16x128xf32>
    %893 = arith.mulf %128, %892 : vector<16x128xf32>
    %894 = arith.addf %890, %893 : vector<16x128xf32>
    %c47 = arith.constant 47 : index
    %895 = memref.load %arg4[%c47] : memref<216xf32, #tpu.memory_space<smem>>
    %896 = vector.broadcast %895 : f32 to vector<16x128xf32>
    %897 = arith.mulf %144, %896 : vector<16x128xf32>
    %898 = arith.addf %894, %897 : vector<16x128xf32>
    %c1_i32_81 = arith.constant 1 : i32
    %899 = tpu.dynamic_rotate %898 by %c1_i32_81 dim 0 : vector<16x128xf32>, i32 -> vector<16x128xf32>
    %900 = arith.select %5, %899, %10 : vector<16x128xi1>, vector<16x128xf32>
    %c98 = arith.constant 98 : index
    %901 = memref.load %arg4[%c98] : memref<216xf32, #tpu.memory_space<smem>>
    %902 = vector.broadcast %901 : f32 to vector<16x128xf32>
    %903 = arith.mulf %32, %902 : vector<16x128xf32>
    %c101 = arith.constant 101 : index
    %904 = memref.load %arg4[%c101] : memref<216xf32, #tpu.memory_space<smem>>
    %905 = vector.broadcast %904 : f32 to vector<16x128xf32>
    %906 = arith.mulf %48, %905 : vector<16x128xf32>
    %907 = arith.addf %903, %906 : vector<16x128xf32>
    %c104 = arith.constant 104 : index
    %908 = memref.load %arg4[%c104] : memref<216xf32, #tpu.memory_space<smem>>
    %909 = vector.broadcast %908 : f32 to vector<16x128xf32>
    %910 = arith.mulf %64, %909 : vector<16x128xf32>
    %911 = arith.addf %907, %910 : vector<16x128xf32>
    %c107 = arith.constant 107 : index
    %912 = memref.load %arg4[%c107] : memref<216xf32, #tpu.memory_space<smem>>
    %913 = vector.broadcast %912 : f32 to vector<16x128xf32>
    %914 = arith.mulf %80, %913 : vector<16x128xf32>
    %915 = arith.addf %911, %914 : vector<16x128xf32>
    %c110 = arith.constant 110 : index
    %916 = memref.load %arg4[%c110] : memref<216xf32, #tpu.memory_space<smem>>
    %917 = vector.broadcast %916 : f32 to vector<16x128xf32>
    %918 = arith.mulf %96, %917 : vector<16x128xf32>
    %919 = arith.addf %915, %918 : vector<16x128xf32>
    %c113 = arith.constant 113 : index
    %920 = memref.load %arg4[%c113] : memref<216xf32, #tpu.memory_space<smem>>
    %921 = vector.broadcast %920 : f32 to vector<16x128xf32>
    %922 = arith.mulf %112, %921 : vector<16x128xf32>
    %923 = arith.addf %919, %922 : vector<16x128xf32>
    %c116 = arith.constant 116 : index
    %924 = memref.load %arg4[%c116] : memref<216xf32, #tpu.memory_space<smem>>
    %925 = vector.broadcast %924 : f32 to vector<16x128xf32>
    %926 = arith.mulf %128, %925 : vector<16x128xf32>
    %927 = arith.addf %923, %926 : vector<16x128xf32>
    %c119 = arith.constant 119 : index
    %928 = memref.load %arg4[%c119] : memref<216xf32, #tpu.memory_space<smem>>
    %929 = vector.broadcast %928 : f32 to vector<16x128xf32>
    %930 = arith.mulf %144, %929 : vector<16x128xf32>
    %931 = arith.addf %927, %930 : vector<16x128xf32>
    %932 = arith.addf %900, %931 : vector<16x128xf32>
    %c170 = arith.constant 170 : index
    %933 = memref.load %arg4[%c170] : memref<216xf32, #tpu.memory_space<smem>>
    %934 = vector.broadcast %933 : f32 to vector<16x128xf32>
    %935 = arith.mulf %32, %934 : vector<16x128xf32>
    %c173 = arith.constant 173 : index
    %936 = memref.load %arg4[%c173] : memref<216xf32, #tpu.memory_space<smem>>
    %937 = vector.broadcast %936 : f32 to vector<16x128xf32>
    %938 = arith.mulf %48, %937 : vector<16x128xf32>
    %939 = arith.addf %935, %938 : vector<16x128xf32>
    %c176 = arith.constant 176 : index
    %940 = memref.load %arg4[%c176] : memref<216xf32, #tpu.memory_space<smem>>
    %941 = vector.broadcast %940 : f32 to vector<16x128xf32>
    %942 = arith.mulf %64, %941 : vector<16x128xf32>
    %943 = arith.addf %939, %942 : vector<16x128xf32>
    %c179 = arith.constant 179 : index
    %944 = memref.load %arg4[%c179] : memref<216xf32, #tpu.memory_space<smem>>
    %945 = vector.broadcast %944 : f32 to vector<16x128xf32>
    %946 = arith.mulf %80, %945 : vector<16x128xf32>
    %947 = arith.addf %943, %946 : vector<16x128xf32>
    %c182 = arith.constant 182 : index
    %948 = memref.load %arg4[%c182] : memref<216xf32, #tpu.memory_space<smem>>
    %949 = vector.broadcast %948 : f32 to vector<16x128xf32>
    %950 = arith.mulf %96, %949 : vector<16x128xf32>
    %951 = arith.addf %947, %950 : vector<16x128xf32>
    %c185 = arith.constant 185 : index
    %952 = memref.load %arg4[%c185] : memref<216xf32, #tpu.memory_space<smem>>
    %953 = vector.broadcast %952 : f32 to vector<16x128xf32>
    %954 = arith.mulf %112, %953 : vector<16x128xf32>
    %955 = arith.addf %951, %954 : vector<16x128xf32>
    %c188 = arith.constant 188 : index
    %956 = memref.load %arg4[%c188] : memref<216xf32, #tpu.memory_space<smem>>
    %957 = vector.broadcast %956 : f32 to vector<16x128xf32>
    %958 = arith.mulf %128, %957 : vector<16x128xf32>
    %959 = arith.addf %955, %958 : vector<16x128xf32>
    %c191 = arith.constant 191 : index
    %960 = memref.load %arg4[%c191] : memref<216xf32, #tpu.memory_space<smem>>
    %961 = vector.broadcast %960 : f32 to vector<16x128xf32>
    %962 = arith.mulf %144, %961 : vector<16x128xf32>
    %963 = arith.addf %959, %962 : vector<16x128xf32>
    %c15_i32_82 = arith.constant 15 : i32
    %964 = tpu.dynamic_rotate %963 by %c15_i32_82 dim 0 : vector<16x128xf32>, i32 -> vector<16x128xf32>
    %965 = arith.select %3, %964, %10 : vector<16x128xi1>, vector<16x128xf32>
    %966 = arith.addf %932, %965 : vector<16x128xf32>
    %967 = arith.addf %867, %966 : vector<16x128xf32>
    %c50 = arith.constant 50 : index
    %968 = memref.load %arg4[%c50] : memref<216xf32, #tpu.memory_space<smem>>
    %969 = vector.broadcast %968 : f32 to vector<16x128xf32>
    %970 = arith.mulf %32, %969 : vector<16x128xf32>
    %c53 = arith.constant 53 : index
    %971 = memref.load %arg4[%c53] : memref<216xf32, #tpu.memory_space<smem>>
    %972 = vector.broadcast %971 : f32 to vector<16x128xf32>
    %973 = arith.mulf %48, %972 : vector<16x128xf32>
    %974 = arith.addf %970, %973 : vector<16x128xf32>
    %c56 = arith.constant 56 : index
    %975 = memref.load %arg4[%c56] : memref<216xf32, #tpu.memory_space<smem>>
    %976 = vector.broadcast %975 : f32 to vector<16x128xf32>
    %977 = arith.mulf %64, %976 : vector<16x128xf32>
    %978 = arith.addf %974, %977 : vector<16x128xf32>
    %c59 = arith.constant 59 : index
    %979 = memref.load %arg4[%c59] : memref<216xf32, #tpu.memory_space<smem>>
    %980 = vector.broadcast %979 : f32 to vector<16x128xf32>
    %981 = arith.mulf %80, %980 : vector<16x128xf32>
    %982 = arith.addf %978, %981 : vector<16x128xf32>
    %c62 = arith.constant 62 : index
    %983 = memref.load %arg4[%c62] : memref<216xf32, #tpu.memory_space<smem>>
    %984 = vector.broadcast %983 : f32 to vector<16x128xf32>
    %985 = arith.mulf %96, %984 : vector<16x128xf32>
    %986 = arith.addf %982, %985 : vector<16x128xf32>
    %c65 = arith.constant 65 : index
    %987 = memref.load %arg4[%c65] : memref<216xf32, #tpu.memory_space<smem>>
    %988 = vector.broadcast %987 : f32 to vector<16x128xf32>
    %989 = arith.mulf %112, %988 : vector<16x128xf32>
    %990 = arith.addf %986, %989 : vector<16x128xf32>
    %c68 = arith.constant 68 : index
    %991 = memref.load %arg4[%c68] : memref<216xf32, #tpu.memory_space<smem>>
    %992 = vector.broadcast %991 : f32 to vector<16x128xf32>
    %993 = arith.mulf %128, %992 : vector<16x128xf32>
    %994 = arith.addf %990, %993 : vector<16x128xf32>
    %c71 = arith.constant 71 : index
    %995 = memref.load %arg4[%c71] : memref<216xf32, #tpu.memory_space<smem>>
    %996 = vector.broadcast %995 : f32 to vector<16x128xf32>
    %997 = arith.mulf %144, %996 : vector<16x128xf32>
    %998 = arith.addf %994, %997 : vector<16x128xf32>
    %c1_i32_83 = arith.constant 1 : i32
    %999 = tpu.dynamic_rotate %998 by %c1_i32_83 dim 0 : vector<16x128xf32>, i32 -> vector<16x128xf32>
    %1000 = arith.select %5, %999, %10 : vector<16x128xi1>, vector<16x128xf32>
    %c122 = arith.constant 122 : index
    %1001 = memref.load %arg4[%c122] : memref<216xf32, #tpu.memory_space<smem>>
    %1002 = vector.broadcast %1001 : f32 to vector<16x128xf32>
    %1003 = arith.mulf %32, %1002 : vector<16x128xf32>
    %c125 = arith.constant 125 : index
    %1004 = memref.load %arg4[%c125] : memref<216xf32, #tpu.memory_space<smem>>
    %1005 = vector.broadcast %1004 : f32 to vector<16x128xf32>
    %1006 = arith.mulf %48, %1005 : vector<16x128xf32>
    %1007 = arith.addf %1003, %1006 : vector<16x128xf32>
    %c128 = arith.constant 128 : index
    %1008 = memref.load %arg4[%c128] : memref<216xf32, #tpu.memory_space<smem>>
    %1009 = vector.broadcast %1008 : f32 to vector<16x128xf32>
    %1010 = arith.mulf %64, %1009 : vector<16x128xf32>
    %1011 = arith.addf %1007, %1010 : vector<16x128xf32>
    %c131 = arith.constant 131 : index
    %1012 = memref.load %arg4[%c131] : memref<216xf32, #tpu.memory_space<smem>>
    %1013 = vector.broadcast %1012 : f32 to vector<16x128xf32>
    %1014 = arith.mulf %80, %1013 : vector<16x128xf32>
    %1015 = arith.addf %1011, %1014 : vector<16x128xf32>
    %c134 = arith.constant 134 : index
    %1016 = memref.load %arg4[%c134] : memref<216xf32, #tpu.memory_space<smem>>
    %1017 = vector.broadcast %1016 : f32 to vector<16x128xf32>
    %1018 = arith.mulf %96, %1017 : vector<16x128xf32>
    %1019 = arith.addf %1015, %1018 : vector<16x128xf32>
    %c137 = arith.constant 137 : index
    %1020 = memref.load %arg4[%c137] : memref<216xf32, #tpu.memory_space<smem>>
    %1021 = vector.broadcast %1020 : f32 to vector<16x128xf32>
    %1022 = arith.mulf %112, %1021 : vector<16x128xf32>
    %1023 = arith.addf %1019, %1022 : vector<16x128xf32>
    %c140 = arith.constant 140 : index
    %1024 = memref.load %arg4[%c140] : memref<216xf32, #tpu.memory_space<smem>>
    %1025 = vector.broadcast %1024 : f32 to vector<16x128xf32>
    %1026 = arith.mulf %128, %1025 : vector<16x128xf32>
    %1027 = arith.addf %1023, %1026 : vector<16x128xf32>
    %c143 = arith.constant 143 : index
    %1028 = memref.load %arg4[%c143] : memref<216xf32, #tpu.memory_space<smem>>
    %1029 = vector.broadcast %1028 : f32 to vector<16x128xf32>
    %1030 = arith.mulf %144, %1029 : vector<16x128xf32>
    %1031 = arith.addf %1027, %1030 : vector<16x128xf32>
    %1032 = arith.addf %1000, %1031 : vector<16x128xf32>
    %c194 = arith.constant 194 : index
    %1033 = memref.load %arg4[%c194] : memref<216xf32, #tpu.memory_space<smem>>
    %1034 = vector.broadcast %1033 : f32 to vector<16x128xf32>
    %1035 = arith.mulf %32, %1034 : vector<16x128xf32>
    %c197 = arith.constant 197 : index
    %1036 = memref.load %arg4[%c197] : memref<216xf32, #tpu.memory_space<smem>>
    %1037 = vector.broadcast %1036 : f32 to vector<16x128xf32>
    %1038 = arith.mulf %48, %1037 : vector<16x128xf32>
    %1039 = arith.addf %1035, %1038 : vector<16x128xf32>
    %c200 = arith.constant 200 : index
    %1040 = memref.load %arg4[%c200] : memref<216xf32, #tpu.memory_space<smem>>
    %1041 = vector.broadcast %1040 : f32 to vector<16x128xf32>
    %1042 = arith.mulf %64, %1041 : vector<16x128xf32>
    %1043 = arith.addf %1039, %1042 : vector<16x128xf32>
    %c203 = arith.constant 203 : index
    %1044 = memref.load %arg4[%c203] : memref<216xf32, #tpu.memory_space<smem>>
    %1045 = vector.broadcast %1044 : f32 to vector<16x128xf32>
    %1046 = arith.mulf %80, %1045 : vector<16x128xf32>
    %1047 = arith.addf %1043, %1046 : vector<16x128xf32>
    %c206 = arith.constant 206 : index
    %1048 = memref.load %arg4[%c206] : memref<216xf32, #tpu.memory_space<smem>>
    %1049 = vector.broadcast %1048 : f32 to vector<16x128xf32>
    %1050 = arith.mulf %96, %1049 : vector<16x128xf32>
    %1051 = arith.addf %1047, %1050 : vector<16x128xf32>
    %c209 = arith.constant 209 : index
    %1052 = memref.load %arg4[%c209] : memref<216xf32, #tpu.memory_space<smem>>
    %1053 = vector.broadcast %1052 : f32 to vector<16x128xf32>
    %1054 = arith.mulf %112, %1053 : vector<16x128xf32>
    %1055 = arith.addf %1051, %1054 : vector<16x128xf32>
    %c212 = arith.constant 212 : index
    %1056 = memref.load %arg4[%c212] : memref<216xf32, #tpu.memory_space<smem>>
    %1057 = vector.broadcast %1056 : f32 to vector<16x128xf32>
    %1058 = arith.mulf %128, %1057 : vector<16x128xf32>
    %1059 = arith.addf %1055, %1058 : vector<16x128xf32>
    %c215 = arith.constant 215 : index
    %1060 = memref.load %arg4[%c215] : memref<216xf32, #tpu.memory_space<smem>>
    %1061 = vector.broadcast %1060 : f32 to vector<16x128xf32>
    %1062 = arith.mulf %144, %1061 : vector<16x128xf32>
    %1063 = arith.addf %1059, %1062 : vector<16x128xf32>
    %c15_i32_84 = arith.constant 15 : i32
    %1064 = tpu.dynamic_rotate %1063 by %c15_i32_84 dim 0 : vector<16x128xf32>, i32 -> vector<16x128xf32>
    %1065 = arith.select %3, %1064, %10 : vector<16x128xi1>, vector<16x128xf32>
    %1066 = arith.addf %1032, %1065 : vector<16x128xf32>
    %c127_i32_85 = arith.constant 127 : i32
    %1067 = tpu.dynamic_rotate %1066 by %c127_i32_85 dim 1 : vector<16x128xf32>, i32 -> vector<16x128xf32>
    %1068 = arith.select %7, %1067, %10 : vector<16x128xi1>, vector<16x128xf32>
    %1069 = arith.addf %967, %1068 : vector<16x128xf32>
    %c2_86 = arith.constant 2 : index
    %1070 = memref.load %arg5[%c2_86] : memref<3xf32, #tpu.memory_space<smem>>
    %1071 = vector.broadcast %1070 : f32 to vector<16x128xf32>
    %1072 = arith.addf %1069, %1071 : vector<16x128xf32>
    %1073 = math.tanh %1072 : vector<16x128xf32>
    %1074 = arith.addf %1073, %16 : vector<16x128xf32>
    %c0_87 = arith.constant 0 : index
    %c2_88 = arith.constant 2 : index
    %c0_89 = arith.constant 0 : index
    %c0_90 = arith.constant 0 : index
    %1075 = vector.load %arg6[%c0_87, %c2_88, %c0_89, %c0_90] : memref<2x3x16x128xf32, #tpu.memory_space<vmem>>, vector<1x1x16x128xf32>
    %1076 = vector.shape_cast %1075 : vector<1x1x16x128xf32> to vector<16x128xf32>
    %1077 = vector.shape_cast %1074 : vector<16x128xf32> to vector<1x1x16x128xf32>
    tpu.vector_store %arg6[%c0_87, %c2_88, %c0_89, %c0_90], %1077 {strides = array<i32>} : memref<2x3x16x128xf32, #tpu.memory_space<vmem>>, vector<1x1x16x128xf32>,
    %c1_91 = arith.constant 1 : index
    %c0_92 = arith.constant 0 : index
    %c0_93 = arith.constant 0 : index
    %c0_94 = arith.constant 0 : index
    %1078 = vector.load %arg1[%c1_91, %c0_92, %c0_93, %c0_94] : memref<2x3x16x128xf32, #tpu.memory_space<vmem>>, vector<1x1x16x128xf32>
    %1079 = vector.shape_cast %1078 : vector<1x1x16x128xf32> to vector<16x128xf32>
    %c1_95 = arith.constant 1 : index
    %c1_96 = arith.constant 1 : index
    %c0_97 = arith.constant 0 : index
    %c0_98 = arith.constant 0 : index
    %1080 = vector.load %arg1[%c1_95, %c1_96, %c0_97, %c0_98] : memref<2x3x16x128xf32, #tpu.memory_space<vmem>>, vector<1x1x16x128xf32>
    %1081 = vector.shape_cast %1080 : vector<1x1x16x128xf32> to vector<16x128xf32>
    %c1_99 = arith.constant 1 : index
    %c2_100 = arith.constant 2 : index
    %c0_101 = arith.constant 0 : index
    %c0_102 = arith.constant 0 : index
    %1082 = vector.load %arg1[%c1_99, %c2_100, %c0_101, %c0_102] : memref<2x3x16x128xf32, #tpu.memory_space<vmem>>, vector<1x1x16x128xf32>
    %1083 = vector.shape_cast %1082 : vector<1x1x16x128xf32> to vector<16x128xf32>
    %c0_103 = arith.constant 0 : index
    %1084 = memref.load %arg2[%c0_103] : memref<24xf32, #tpu.memory_space<smem>>
    %1085 = vector.broadcast %1084 : f32 to vector<16x128xf32>
    %1086 = arith.mulf %1079, %1085 : vector<16x128xf32>
    %c8_104 = arith.constant 8 : index
    %1087 = memref.load %arg2[%c8_104] : memref<24xf32, #tpu.memory_space<smem>>
    %1088 = vector.broadcast %1087 : f32 to vector<16x128xf32>
    %1089 = arith.mulf %1081, %1088 : vector<16x128xf32>
    %1090 = arith.addf %1086, %1089 : vector<16x128xf32>
    %c16_105 = arith.constant 16 : index
    %1091 = memref.load %arg2[%c16_105] : memref<24xf32, #tpu.memory_space<smem>>
    %1092 = vector.broadcast %1091 : f32 to vector<16x128xf32>
    %1093 = arith.mulf %1083, %1092 : vector<16x128xf32>
    %1094 = arith.addf %1090, %1093 : vector<16x128xf32>
    %c0_106 = arith.constant 0 : index
    %1095 = memref.load %arg3[%c0_106] : memref<8xf32, #tpu.memory_space<smem>>
    %1096 = vector.broadcast %1095 : f32 to vector<16x128xf32>
    %1097 = arith.addf %1094, %1096 : vector<16x128xf32>
    %cst_107 = arith.constant 0.000000e+00 : f32
    %1098 = vector.broadcast %cst_107 : f32 to vector<16x128xf32>
    %1099 = arith.maximumf %1097, %1098 : vector<16x128xf32>
    %c1_108 = arith.constant 1 : index
    %1100 = memref.load %arg2[%c1_108] : memref<24xf32, #tpu.memory_space<smem>>
    %1101 = vector.broadcast %1100 : f32 to vector<16x128xf32>
    %1102 = arith.mulf %1079, %1101 : vector<16x128xf32>
    %c9_109 = arith.constant 9 : index
    %1103 = memref.load %arg2[%c9_109] : memref<24xf32, #tpu.memory_space<smem>>
    %1104 = vector.broadcast %1103 : f32 to vector<16x128xf32>
    %1105 = arith.mulf %1081, %1104 : vector<16x128xf32>
    %1106 = arith.addf %1102, %1105 : vector<16x128xf32>
    %c17_110 = arith.constant 17 : index
    %1107 = memref.load %arg2[%c17_110] : memref<24xf32, #tpu.memory_space<smem>>
    %1108 = vector.broadcast %1107 : f32 to vector<16x128xf32>
    %1109 = arith.mulf %1083, %1108 : vector<16x128xf32>
    %1110 = arith.addf %1106, %1109 : vector<16x128xf32>
    %c1_111 = arith.constant 1 : index
    %1111 = memref.load %arg3[%c1_111] : memref<8xf32, #tpu.memory_space<smem>>
    %1112 = vector.broadcast %1111 : f32 to vector<16x128xf32>
    %1113 = arith.addf %1110, %1112 : vector<16x128xf32>
    %cst_112 = arith.constant 0.000000e+00 : f32
    %1114 = vector.broadcast %cst_112 : f32 to vector<16x128xf32>
    %1115 = arith.maximumf %1113, %1114 : vector<16x128xf32>
    %c2_113 = arith.constant 2 : index
    %1116 = memref.load %arg2[%c2_113] : memref<24xf32, #tpu.memory_space<smem>>
    %1117 = vector.broadcast %1116 : f32 to vector<16x128xf32>
    %1118 = arith.mulf %1079, %1117 : vector<16x128xf32>
    %c10_114 = arith.constant 10 : index
    %1119 = memref.load %arg2[%c10_114] : memref<24xf32, #tpu.memory_space<smem>>
    %1120 = vector.broadcast %1119 : f32 to vector<16x128xf32>
    %1121 = arith.mulf %1081, %1120 : vector<16x128xf32>
    %1122 = arith.addf %1118, %1121 : vector<16x128xf32>
    %c18_115 = arith.constant 18 : index
    %1123 = memref.load %arg2[%c18_115] : memref<24xf32, #tpu.memory_space<smem>>
    %1124 = vector.broadcast %1123 : f32 to vector<16x128xf32>
    %1125 = arith.mulf %1083, %1124 : vector<16x128xf32>
    %1126 = arith.addf %1122, %1125 : vector<16x128xf32>
    %c2_116 = arith.constant 2 : index
    %1127 = memref.load %arg3[%c2_116] : memref<8xf32, #tpu.memory_space<smem>>
    %1128 = vector.broadcast %1127 : f32 to vector<16x128xf32>
    %1129 = arith.addf %1126, %1128 : vector<16x128xf32>
    %cst_117 = arith.constant 0.000000e+00 : f32
    %1130 = vector.broadcast %cst_117 : f32 to vector<16x128xf32>
    %1131 = arith.maximumf %1129, %1130 : vector<16x128xf32>
    %c3_118 = arith.constant 3 : index
    %1132 = memref.load %arg2[%c3_118] : memref<24xf32, #tpu.memory_space<smem>>
    %1133 = vector.broadcast %1132 : f32 to vector<16x128xf32>
    %1134 = arith.mulf %1079, %1133 : vector<16x128xf32>
    %c11_119 = arith.constant 11 : index
    %1135 = memref.load %arg2[%c11_119] : memref<24xf32, #tpu.memory_space<smem>>
    %1136 = vector.broadcast %1135 : f32 to vector<16x128xf32>
    %1137 = arith.mulf %1081, %1136 : vector<16x128xf32>
    %1138 = arith.addf %1134, %1137 : vector<16x128xf32>
    %c19_120 = arith.constant 19 : index
    %1139 = memref.load %arg2[%c19_120] : memref<24xf32, #tpu.memory_space<smem>>
    %1140 = vector.broadcast %1139 : f32 to vector<16x128xf32>
    %1141 = arith.mulf %1083, %1140 : vector<16x128xf32>
    %1142 = arith.addf %1138, %1141 : vector<16x128xf32>
    %c3_121 = arith.constant 3 : index
    %1143 = memref.load %arg3[%c3_121] : memref<8xf32, #tpu.memory_space<smem>>
    %1144 = vector.broadcast %1143 : f32 to vector<16x128xf32>
    %1145 = arith.addf %1142, %1144 : vector<16x128xf32>
    %cst_122 = arith.constant 0.000000e+00 : f32
    %1146 = vector.broadcast %cst_122 : f32 to vector<16x128xf32>
    %1147 = arith.maximumf %1145, %1146 : vector<16x128xf32>
    %c4_123 = arith.constant 4 : index
    %1148 = memref.load %arg2[%c4_123] : memref<24xf32, #tpu.memory_space<smem>>
    %1149 = vector.broadcast %1148 : f32 to vector<16x128xf32>
    %1150 = arith.mulf %1079, %1149 : vector<16x128xf32>
    %c12_124 = arith.constant 12 : index
    %1151 = memref.load %arg2[%c12_124] : memref<24xf32, #tpu.memory_space<smem>>
    %1152 = vector.broadcast %1151 : f32 to vector<16x128xf32>
    %1153 = arith.mulf %1081, %1152 : vector<16x128xf32>
    %1154 = arith.addf %1150, %1153 : vector<16x128xf32>
    %c20_125 = arith.constant 20 : index
    %1155 = memref.load %arg2[%c20_125] : memref<24xf32, #tpu.memory_space<smem>>
    %1156 = vector.broadcast %1155 : f32 to vector<16x128xf32>
    %1157 = arith.mulf %1083, %1156 : vector<16x128xf32>
    %1158 = arith.addf %1154, %1157 : vector<16x128xf32>
    %c4_126 = arith.constant 4 : index
    %1159 = memref.load %arg3[%c4_126] : memref<8xf32, #tpu.memory_space<smem>>
    %1160 = vector.broadcast %1159 : f32 to vector<16x128xf32>
    %1161 = arith.addf %1158, %1160 : vector<16x128xf32>
    %cst_127 = arith.constant 0.000000e+00 : f32
    %1162 = vector.broadcast %cst_127 : f32 to vector<16x128xf32>
    %1163 = arith.maximumf %1161, %1162 : vector<16x128xf32>
    %c5_128 = arith.constant 5 : index
    %1164 = memref.load %arg2[%c5_128] : memref<24xf32, #tpu.memory_space<smem>>
    %1165 = vector.broadcast %1164 : f32 to vector<16x128xf32>
    %1166 = arith.mulf %1079, %1165 : vector<16x128xf32>
    %c13_129 = arith.constant 13 : index
    %1167 = memref.load %arg2[%c13_129] : memref<24xf32, #tpu.memory_space<smem>>
    %1168 = vector.broadcast %1167 : f32 to vector<16x128xf32>
    %1169 = arith.mulf %1081, %1168 : vector<16x128xf32>
    %1170 = arith.addf %1166, %1169 : vector<16x128xf32>
    %c21_130 = arith.constant 21 : index
    %1171 = memref.load %arg2[%c21_130] : memref<24xf32, #tpu.memory_space<smem>>
    %1172 = vector.broadcast %1171 : f32 to vector<16x128xf32>
    %1173 = arith.mulf %1083, %1172 : vector<16x128xf32>
    %1174 = arith.addf %1170, %1173 : vector<16x128xf32>
    %c5_131 = arith.constant 5 : index
    %1175 = memref.load %arg3[%c5_131] : memref<8xf32, #tpu.memory_space<smem>>
    %1176 = vector.broadcast %1175 : f32 to vector<16x128xf32>
    %1177 = arith.addf %1174, %1176 : vector<16x128xf32>
    %cst_132 = arith.constant 0.000000e+00 : f32
    %1178 = vector.broadcast %cst_132 : f32 to vector<16x128xf32>
    %1179 = arith.maximumf %1177, %1178 : vector<16x128xf32>
    %c6_133 = arith.constant 6 : index
    %1180 = memref.load %arg2[%c6_133] : memref<24xf32, #tpu.memory_space<smem>>
    %1181 = vector.broadcast %1180 : f32 to vector<16x128xf32>
    %1182 = arith.mulf %1079, %1181 : vector<16x128xf32>
    %c14_134 = arith.constant 14 : index
    %1183 = memref.load %arg2[%c14_134] : memref<24xf32, #tpu.memory_space<smem>>
    %1184 = vector.broadcast %1183 : f32 to vector<16x128xf32>
    %1185 = arith.mulf %1081, %1184 : vector<16x128xf32>
    %1186 = arith.addf %1182, %1185 : vector<16x128xf32>
    %c22_135 = arith.constant 22 : index
    %1187 = memref.load %arg2[%c22_135] : memref<24xf32, #tpu.memory_space<smem>>
    %1188 = vector.broadcast %1187 : f32 to vector<16x128xf32>
    %1189 = arith.mulf %1083, %1188 : vector<16x128xf32>
    %1190 = arith.addf %1186, %1189 : vector<16x128xf32>
    %c6_136 = arith.constant 6 : index
    %1191 = memref.load %arg3[%c6_136] : memref<8xf32, #tpu.memory_space<smem>>
    %1192 = vector.broadcast %1191 : f32 to vector<16x128xf32>
    %1193 = arith.addf %1190, %1192 : vector<16x128xf32>
    %cst_137 = arith.constant 0.000000e+00 : f32
    %1194 = vector.broadcast %cst_137 : f32 to vector<16x128xf32>
    %1195 = arith.maximumf %1193, %1194 : vector<16x128xf32>
    %c7_138 = arith.constant 7 : index
    %1196 = memref.load %arg2[%c7_138] : memref<24xf32, #tpu.memory_space<smem>>
    %1197 = vector.broadcast %1196 : f32 to vector<16x128xf32>
    %1198 = arith.mulf %1079, %1197 : vector<16x128xf32>
    %c15_139 = arith.constant 15 : index
    %1199 = memref.load %arg2[%c15_139] : memref<24xf32, #tpu.memory_space<smem>>
    %1200 = vector.broadcast %1199 : f32 to vector<16x128xf32>
    %1201 = arith.mulf %1081, %1200 : vector<16x128xf32>
    %1202 = arith.addf %1198, %1201 : vector<16x128xf32>
    %c23_140 = arith.constant 23 : index
    %1203 = memref.load %arg2[%c23_140] : memref<24xf32, #tpu.memory_space<smem>>
    %1204 = vector.broadcast %1203 : f32 to vector<16x128xf32>
    %1205 = arith.mulf %1083, %1204 : vector<16x128xf32>
    %1206 = arith.addf %1202, %1205 : vector<16x128xf32>
    %c7_141 = arith.constant 7 : index
    %1207 = memref.load %arg3[%c7_141] : memref<8xf32, #tpu.memory_space<smem>>
    %1208 = vector.broadcast %1207 : f32 to vector<16x128xf32>
    %1209 = arith.addf %1206, %1208 : vector<16x128xf32>
    %cst_142 = arith.constant 0.000000e+00 : f32
    %1210 = vector.broadcast %cst_142 : f32 to vector<16x128xf32>
    %1211 = arith.maximumf %1209, %1210 : vector<16x128xf32>
    %c0_143 = arith.constant 0 : index
    %1212 = memref.load %arg4[%c0_143] : memref<216xf32, #tpu.memory_space<smem>>
    %1213 = vector.broadcast %1212 : f32 to vector<16x128xf32>
    %1214 = arith.mulf %1099, %1213 : vector<16x128xf32>
    %c3_144 = arith.constant 3 : index
    %1215 = memref.load %arg4[%c3_144] : memref<216xf32, #tpu.memory_space<smem>>
    %1216 = vector.broadcast %1215 : f32 to vector<16x128xf32>
    %1217 = arith.mulf %1115, %1216 : vector<16x128xf32>
    %1218 = arith.addf %1214, %1217 : vector<16x128xf32>
    %c6_145 = arith.constant 6 : index
    %1219 = memref.load %arg4[%c6_145] : memref<216xf32, #tpu.memory_space<smem>>
    %1220 = vector.broadcast %1219 : f32 to vector<16x128xf32>
    %1221 = arith.mulf %1131, %1220 : vector<16x128xf32>
    %1222 = arith.addf %1218, %1221 : vector<16x128xf32>
    %c9_146 = arith.constant 9 : index
    %1223 = memref.load %arg4[%c9_146] : memref<216xf32, #tpu.memory_space<smem>>
    %1224 = vector.broadcast %1223 : f32 to vector<16x128xf32>
    %1225 = arith.mulf %1147, %1224 : vector<16x128xf32>
    %1226 = arith.addf %1222, %1225 : vector<16x128xf32>
    %c12_147 = arith.constant 12 : index
    %1227 = memref.load %arg4[%c12_147] : memref<216xf32, #tpu.memory_space<smem>>
    %1228 = vector.broadcast %1227 : f32 to vector<16x128xf32>
    %1229 = arith.mulf %1163, %1228 : vector<16x128xf32>
    %1230 = arith.addf %1226, %1229 : vector<16x128xf32>
    %c15_148 = arith.constant 15 : index
    %1231 = memref.load %arg4[%c15_148] : memref<216xf32, #tpu.memory_space<smem>>
    %1232 = vector.broadcast %1231 : f32 to vector<16x128xf32>
    %1233 = arith.mulf %1179, %1232 : vector<16x128xf32>
    %1234 = arith.addf %1230, %1233 : vector<16x128xf32>
    %c18_149 = arith.constant 18 : index
    %1235 = memref.load %arg4[%c18_149] : memref<216xf32, #tpu.memory_space<smem>>
    %1236 = vector.broadcast %1235 : f32 to vector<16x128xf32>
    %1237 = arith.mulf %1195, %1236 : vector<16x128xf32>
    %1238 = arith.addf %1234, %1237 : vector<16x128xf32>
    %c21_150 = arith.constant 21 : index
    %1239 = memref.load %arg4[%c21_150] : memref<216xf32, #tpu.memory_space<smem>>
    %1240 = vector.broadcast %1239 : f32 to vector<16x128xf32>
    %1241 = arith.mulf %1211, %1240 : vector<16x128xf32>
    %1242 = arith.addf %1238, %1241 : vector<16x128xf32>
    %c1_i32_151 = arith.constant 1 : i32
    %1243 = tpu.dynamic_rotate %1242 by %c1_i32_151 dim 0 : vector<16x128xf32>, i32 -> vector<16x128xf32>
    %1244 = arith.select %5, %1243, %10 : vector<16x128xi1>, vector<16x128xf32>
    %c72_152 = arith.constant 72 : index
    %1245 = memref.load %arg4[%c72_152] : memref<216xf32, #tpu.memory_space<smem>>
    %1246 = vector.broadcast %1245 : f32 to vector<16x128xf32>
    %1247 = arith.mulf %1099, %1246 : vector<16x128xf32>
    %c75_153 = arith.constant 75 : index
    %1248 = memref.load %arg4[%c75_153] : memref<216xf32, #tpu.memory_space<smem>>
    %1249 = vector.broadcast %1248 : f32 to vector<16x128xf32>
    %1250 = arith.mulf %1115, %1249 : vector<16x128xf32>
    %1251 = arith.addf %1247, %1250 : vector<16x128xf32>
    %c78_154 = arith.constant 78 : index
    %1252 = memref.load %arg4[%c78_154] : memref<216xf32, #tpu.memory_space<smem>>
    %1253 = vector.broadcast %1252 : f32 to vector<16x128xf32>
    %1254 = arith.mulf %1131, %1253 : vector<16x128xf32>
    %1255 = arith.addf %1251, %1254 : vector<16x128xf32>
    %c81_155 = arith.constant 81 : index
    %1256 = memref.load %arg4[%c81_155] : memref<216xf32, #tpu.memory_space<smem>>
    %1257 = vector.broadcast %1256 : f32 to vector<16x128xf32>
    %1258 = arith.mulf %1147, %1257 : vector<16x128xf32>
    %1259 = arith.addf %1255, %1258 : vector<16x128xf32>
    %c84_156 = arith.constant 84 : index
    %1260 = memref.load %arg4[%c84_156] : memref<216xf32, #tpu.memory_space<smem>>
    %1261 = vector.broadcast %1260 : f32 to vector<16x128xf32>
    %1262 = arith.mulf %1163, %1261 : vector<16x128xf32>
    %1263 = arith.addf %1259, %1262 : vector<16x128xf32>
    %c87_157 = arith.constant 87 : index
    %1264 = memref.load %arg4[%c87_157] : memref<216xf32, #tpu.memory_space<smem>>
    %1265 = vector.broadcast %1264 : f32 to vector<16x128xf32>
    %1266 = arith.mulf %1179, %1265 : vector<16x128xf32>
    %1267 = arith.addf %1263, %1266 : vector<16x128xf32>
    %c90_158 = arith.constant 90 : index
    %1268 = memref.load %arg4[%c90_158] : memref<216xf32, #tpu.memory_space<smem>>
    %1269 = vector.broadcast %1268 : f32 to vector<16x128xf32>
    %1270 = arith.mulf %1195, %1269 : vector<16x128xf32>
    %1271 = arith.addf %1267, %1270 : vector<16x128xf32>
    %c93_159 = arith.constant 93 : index
    %1272 = memref.load %arg4[%c93_159] : memref<216xf32, #tpu.memory_space<smem>>
    %1273 = vector.broadcast %1272 : f32 to vector<16x128xf32>
    %1274 = arith.mulf %1211, %1273 : vector<16x128xf32>
    %1275 = arith.addf %1271, %1274 : vector<16x128xf32>
    %1276 = arith.addf %1244, %1275 : vector<16x128xf32>
    %c144_160 = arith.constant 144 : index
    %1277 = memref.load %arg4[%c144_160] : memref<216xf32, #tpu.memory_space<smem>>
    %1278 = vector.broadcast %1277 : f32 to vector<16x128xf32>
    %1279 = arith.mulf %1099, %1278 : vector<16x128xf32>
    %c147_161 = arith.constant 147 : index
    %1280 = memref.load %arg4[%c147_161] : memref<216xf32, #tpu.memory_space<smem>>
    %1281 = vector.broadcast %1280 : f32 to vector<16x128xf32>
    %1282 = arith.mulf %1115, %1281 : vector<16x128xf32>
    %1283 = arith.addf %1279, %1282 : vector<16x128xf32>
    %c150_162 = arith.constant 150 : index
    %1284 = memref.load %arg4[%c150_162] : memref<216xf32, #tpu.memory_space<smem>>
    %1285 = vector.broadcast %1284 : f32 to vector<16x128xf32>
    %1286 = arith.mulf %1131, %1285 : vector<16x128xf32>
    %1287 = arith.addf %1283, %1286 : vector<16x128xf32>
    %c153_163 = arith.constant 153 : index
    %1288 = memref.load %arg4[%c153_163] : memref<216xf32, #tpu.memory_space<smem>>
    %1289 = vector.broadcast %1288 : f32 to vector<16x128xf32>
    %1290 = arith.mulf %1147, %1289 : vector<16x128xf32>
    %1291 = arith.addf %1287, %1290 : vector<16x128xf32>
    %c156_164 = arith.constant 156 : index
    %1292 = memref.load %arg4[%c156_164] : memref<216xf32, #tpu.memory_space<smem>>
    %1293 = vector.broadcast %1292 : f32 to vector<16x128xf32>
    %1294 = arith.mulf %1163, %1293 : vector<16x128xf32>
    %1295 = arith.addf %1291, %1294 : vector<16x128xf32>
    %c159_165 = arith.constant 159 : index
    %1296 = memref.load %arg4[%c159_165] : memref<216xf32, #tpu.memory_space<smem>>
    %1297 = vector.broadcast %1296 : f32 to vector<16x128xf32>
    %1298 = arith.mulf %1179, %1297 : vector<16x128xf32>
    %1299 = arith.addf %1295, %1298 : vector<16x128xf32>
    %c162_166 = arith.constant 162 : index
    %1300 = memref.load %arg4[%c162_166] : memref<216xf32, #tpu.memory_space<smem>>
    %1301 = vector.broadcast %1300 : f32 to vector<16x128xf32>
    %1302 = arith.mulf %1195, %1301 : vector<16x128xf32>
    %1303 = arith.addf %1299, %1302 : vector<16x128xf32>
    %c165_167 = arith.constant 165 : index
    %1304 = memref.load %arg4[%c165_167] : memref<216xf32, #tpu.memory_space<smem>>
    %1305 = vector.broadcast %1304 : f32 to vector<16x128xf32>
    %1306 = arith.mulf %1211, %1305 : vector<16x128xf32>
    %1307 = arith.addf %1303, %1306 : vector<16x128xf32>
    %c15_i32_168 = arith.constant 15 : i32
    %1308 = tpu.dynamic_rotate %1307 by %c15_i32_168 dim 0 : vector<16x128xf32>, i32 -> vector<16x128xf32>
    %1309 = arith.select %3, %1308, %10 : vector<16x128xi1>, vector<16x128xf32>
    %1310 = arith.addf %1276, %1309 : vector<16x128xf32>
    %c1_i32_169 = arith.constant 1 : i32
    %1311 = tpu.dynamic_rotate %1310 by %c1_i32_169 dim 1 : vector<16x128xf32>, i32 -> vector<16x128xf32>
    %1312 = arith.select %9, %1311, %10 : vector<16x128xi1>, vector<16x128xf32>
    %c24_170 = arith.constant 24 : index
    %1313 = memref.load %arg4[%c24_170] : memref<216xf32, #tpu.memory_space<smem>>
    %1314 = vector.broadcast %1313 : f32 to vector<16x128xf32>
    %1315 = arith.mulf %1099, %1314 : vector<16x128xf32>
    %c27_171 = arith.constant 27 : index
    %1316 = memref.load %arg4[%c27_171] : memref<216xf32, #tpu.memory_space<smem>>
    %1317 = vector.broadcast %1316 : f32 to vector<16x128xf32>
    %1318 = arith.mulf %1115, %1317 : vector<16x128xf32>
    %1319 = arith.addf %1315, %1318 : vector<16x128xf32>
    %c30_172 = arith.constant 30 : index
    %1320 = memref.load %arg4[%c30_172] : memref<216xf32, #tpu.memory_space<smem>>
    %1321 = vector.broadcast %1320 : f32 to vector<16x128xf32>
    %1322 = arith.mulf %1131, %1321 : vector<16x128xf32>
    %1323 = arith.addf %1319, %1322 : vector<16x128xf32>
    %c33_173 = arith.constant 33 : index
    %1324 = memref.load %arg4[%c33_173] : memref<216xf32, #tpu.memory_space<smem>>
    %1325 = vector.broadcast %1324 : f32 to vector<16x128xf32>
    %1326 = arith.mulf %1147, %1325 : vector<16x128xf32>
    %1327 = arith.addf %1323, %1326 : vector<16x128xf32>
    %c36_174 = arith.constant 36 : index
    %1328 = memref.load %arg4[%c36_174] : memref<216xf32, #tpu.memory_space<smem>>
    %1329 = vector.broadcast %1328 : f32 to vector<16x128xf32>
    %1330 = arith.mulf %1163, %1329 : vector<16x128xf32>
    %1331 = arith.addf %1327, %1330 : vector<16x128xf32>
    %c39_175 = arith.constant 39 : index
    %1332 = memref.load %arg4[%c39_175] : memref<216xf32, #tpu.memory_space<smem>>
    %1333 = vector.broadcast %1332 : f32 to vector<16x128xf32>
    %1334 = arith.mulf %1179, %1333 : vector<16x128xf32>
    %1335 = arith.addf %1331, %1334 : vector<16x128xf32>
    %c42_176 = arith.constant 42 : index
    %1336 = memref.load %arg4[%c42_176] : memref<216xf32, #tpu.memory_space<smem>>
    %1337 = vector.broadcast %1336 : f32 to vector<16x128xf32>
    %1338 = arith.mulf %1195, %1337 : vector<16x128xf32>
    %1339 = arith.addf %1335, %1338 : vector<16x128xf32>
    %c45_177 = arith.constant 45 : index
    %1340 = memref.load %arg4[%c45_177] : memref<216xf32, #tpu.memory_space<smem>>
    %1341 = vector.broadcast %1340 : f32 to vector<16x128xf32>
    %1342 = arith.mulf %1211, %1341 : vector<16x128xf32>
    %1343 = arith.addf %1339, %1342 : vector<16x128xf32>
    %c1_i32_178 = arith.constant 1 : i32
    %1344 = tpu.dynamic_rotate %1343 by %c1_i32_178 dim 0 : vector<16x128xf32>, i32 -> vector<16x128xf32>
    %1345 = arith.select %5, %1344, %10 : vector<16x128xi1>, vector<16x128xf32>
    %c96_179 = arith.constant 96 : index
    %1346 = memref.load %arg4[%c96_179] : memref<216xf32, #tpu.memory_space<smem>>
    %1347 = vector.broadcast %1346 : f32 to vector<16x128xf32>
    %1348 = arith.mulf %1099, %1347 : vector<16x128xf32>
    %c99_180 = arith.constant 99 : index
    %1349 = memref.load %arg4[%c99_180] : memref<216xf32, #tpu.memory_space<smem>>
    %1350 = vector.broadcast %1349 : f32 to vector<16x128xf32>
    %1351 = arith.mulf %1115, %1350 : vector<16x128xf32>
    %1352 = arith.addf %1348, %1351 : vector<16x128xf32>
    %c102_181 = arith.constant 102 : index
    %1353 = memref.load %arg4[%c102_181] : memref<216xf32, #tpu.memory_space<smem>>
    %1354 = vector.broadcast %1353 : f32 to vector<16x128xf32>
    %1355 = arith.mulf %1131, %1354 : vector<16x128xf32>
    %1356 = arith.addf %1352, %1355 : vector<16x128xf32>
    %c105_182 = arith.constant 105 : index
    %1357 = memref.load %arg4[%c105_182] : memref<216xf32, #tpu.memory_space<smem>>
    %1358 = vector.broadcast %1357 : f32 to vector<16x128xf32>
    %1359 = arith.mulf %1147, %1358 : vector<16x128xf32>
    %1360 = arith.addf %1356, %1359 : vector<16x128xf32>
    %c108_183 = arith.constant 108 : index
    %1361 = memref.load %arg4[%c108_183] : memref<216xf32, #tpu.memory_space<smem>>
    %1362 = vector.broadcast %1361 : f32 to vector<16x128xf32>
    %1363 = arith.mulf %1163, %1362 : vector<16x128xf32>
    %1364 = arith.addf %1360, %1363 : vector<16x128xf32>
    %c111_184 = arith.constant 111 : index
    %1365 = memref.load %arg4[%c111_184] : memref<216xf32, #tpu.memory_space<smem>>
    %1366 = vector.broadcast %1365 : f32 to vector<16x128xf32>
    %1367 = arith.mulf %1179, %1366 : vector<16x128xf32>
    %1368 = arith.addf %1364, %1367 : vector<16x128xf32>
    %c114_185 = arith.constant 114 : index
    %1369 = memref.load %arg4[%c114_185] : memref<216xf32, #tpu.memory_space<smem>>
    %1370 = vector.broadcast %1369 : f32 to vector<16x128xf32>
    %1371 = arith.mulf %1195, %1370 : vector<16x128xf32>
    %1372 = arith.addf %1368, %1371 : vector<16x128xf32>
    %c117_186 = arith.constant 117 : index
    %1373 = memref.load %arg4[%c117_186] : memref<216xf32, #tpu.memory_space<smem>>
    %1374 = vector.broadcast %1373 : f32 to vector<16x128xf32>
    %1375 = arith.mulf %1211, %1374 : vector<16x128xf32>
    %1376 = arith.addf %1372, %1375 : vector<16x128xf32>
    %1377 = arith.addf %1345, %1376 : vector<16x128xf32>
    %c168_187 = arith.constant 168 : index
    %1378 = memref.load %arg4[%c168_187] : memref<216xf32, #tpu.memory_space<smem>>
    %1379 = vector.broadcast %1378 : f32 to vector<16x128xf32>
    %1380 = arith.mulf %1099, %1379 : vector<16x128xf32>
    %c171_188 = arith.constant 171 : index
    %1381 = memref.load %arg4[%c171_188] : memref<216xf32, #tpu.memory_space<smem>>
    %1382 = vector.broadcast %1381 : f32 to vector<16x128xf32>
    %1383 = arith.mulf %1115, %1382 : vector<16x128xf32>
    %1384 = arith.addf %1380, %1383 : vector<16x128xf32>
    %c174_189 = arith.constant 174 : index
    %1385 = memref.load %arg4[%c174_189] : memref<216xf32, #tpu.memory_space<smem>>
    %1386 = vector.broadcast %1385 : f32 to vector<16x128xf32>
    %1387 = arith.mulf %1131, %1386 : vector<16x128xf32>
    %1388 = arith.addf %1384, %1387 : vector<16x128xf32>
    %c177_190 = arith.constant 177 : index
    %1389 = memref.load %arg4[%c177_190] : memref<216xf32, #tpu.memory_space<smem>>
    %1390 = vector.broadcast %1389 : f32 to vector<16x128xf32>
    %1391 = arith.mulf %1147, %1390 : vector<16x128xf32>
    %1392 = arith.addf %1388, %1391 : vector<16x128xf32>
    %c180_191 = arith.constant 180 : index
    %1393 = memref.load %arg4[%c180_191] : memref<216xf32, #tpu.memory_space<smem>>
    %1394 = vector.broadcast %1393 : f32 to vector<16x128xf32>
    %1395 = arith.mulf %1163, %1394 : vector<16x128xf32>
    %1396 = arith.addf %1392, %1395 : vector<16x128xf32>
    %c183_192 = arith.constant 183 : index
    %1397 = memref.load %arg4[%c183_192] : memref<216xf32, #tpu.memory_space<smem>>
    %1398 = vector.broadcast %1397 : f32 to vector<16x128xf32>
    %1399 = arith.mulf %1179, %1398 : vector<16x128xf32>
    %1400 = arith.addf %1396, %1399 : vector<16x128xf32>
    %c186_193 = arith.constant 186 : index
    %1401 = memref.load %arg4[%c186_193] : memref<216xf32, #tpu.memory_space<smem>>
    %1402 = vector.broadcast %1401 : f32 to vector<16x128xf32>
    %1403 = arith.mulf %1195, %1402 : vector<16x128xf32>
    %1404 = arith.addf %1400, %1403 : vector<16x128xf32>
    %c189_194 = arith.constant 189 : index
    %1405 = memref.load %arg4[%c189_194] : memref<216xf32, #tpu.memory_space<smem>>
    %1406 = vector.broadcast %1405 : f32 to vector<16x128xf32>
    %1407 = arith.mulf %1211, %1406 : vector<16x128xf32>
    %1408 = arith.addf %1404, %1407 : vector<16x128xf32>
    %c15_i32_195 = arith.constant 15 : i32
    %1409 = tpu.dynamic_rotate %1408 by %c15_i32_195 dim 0 : vector<16x128xf32>, i32 -> vector<16x128xf32>
    %1410 = arith.select %3, %1409, %10 : vector<16x128xi1>, vector<16x128xf32>
    %1411 = arith.addf %1377, %1410 : vector<16x128xf32>
    %1412 = arith.addf %1312, %1411 : vector<16x128xf32>
    %c48_196 = arith.constant 48 : index
    %1413 = memref.load %arg4[%c48_196] : memref<216xf32, #tpu.memory_space<smem>>
    %1414 = vector.broadcast %1413 : f32 to vector<16x128xf32>
    %1415 = arith.mulf %1099, %1414 : vector<16x128xf32>
    %c51_197 = arith.constant 51 : index
    %1416 = memref.load %arg4[%c51_197] : memref<216xf32, #tpu.memory_space<smem>>
    %1417 = vector.broadcast %1416 : f32 to vector<16x128xf32>
    %1418 = arith.mulf %1115, %1417 : vector<16x128xf32>
    %1419 = arith.addf %1415, %1418 : vector<16x128xf32>
    %c54_198 = arith.constant 54 : index
    %1420 = memref.load %arg4[%c54_198] : memref<216xf32, #tpu.memory_space<smem>>
    %1421 = vector.broadcast %1420 : f32 to vector<16x128xf32>
    %1422 = arith.mulf %1131, %1421 : vector<16x128xf32>
    %1423 = arith.addf %1419, %1422 : vector<16x128xf32>
    %c57_199 = arith.constant 57 : index
    %1424 = memref.load %arg4[%c57_199] : memref<216xf32, #tpu.memory_space<smem>>
    %1425 = vector.broadcast %1424 : f32 to vector<16x128xf32>
    %1426 = arith.mulf %1147, %1425 : vector<16x128xf32>
    %1427 = arith.addf %1423, %1426 : vector<16x128xf32>
    %c60_200 = arith.constant 60 : index
    %1428 = memref.load %arg4[%c60_200] : memref<216xf32, #tpu.memory_space<smem>>
    %1429 = vector.broadcast %1428 : f32 to vector<16x128xf32>
    %1430 = arith.mulf %1163, %1429 : vector<16x128xf32>
    %1431 = arith.addf %1427, %1430 : vector<16x128xf32>
    %c63_201 = arith.constant 63 : index
    %1432 = memref.load %arg4[%c63_201] : memref<216xf32, #tpu.memory_space<smem>>
    %1433 = vector.broadcast %1432 : f32 to vector<16x128xf32>
    %1434 = arith.mulf %1179, %1433 : vector<16x128xf32>
    %1435 = arith.addf %1431, %1434 : vector<16x128xf32>
    %c66_202 = arith.constant 66 : index
    %1436 = memref.load %arg4[%c66_202] : memref<216xf32, #tpu.memory_space<smem>>
    %1437 = vector.broadcast %1436 : f32 to vector<16x128xf32>
    %1438 = arith.mulf %1195, %1437 : vector<16x128xf32>
    %1439 = arith.addf %1435, %1438 : vector<16x128xf32>
    %c69_203 = arith.constant 69 : index
    %1440 = memref.load %arg4[%c69_203] : memref<216xf32, #tpu.memory_space<smem>>
    %1441 = vector.broadcast %1440 : f32 to vector<16x128xf32>
    %1442 = arith.mulf %1211, %1441 : vector<16x128xf32>
    %1443 = arith.addf %1439, %1442 : vector<16x128xf32>
    %c1_i32_204 = arith.constant 1 : i32
    %1444 = tpu.dynamic_rotate %1443 by %c1_i32_204 dim 0 : vector<16x128xf32>, i32 -> vector<16x128xf32>
    %1445 = arith.select %5, %1444, %10 : vector<16x128xi1>, vector<16x128xf32>
    %c120_205 = arith.constant 120 : index
    %1446 = memref.load %arg4[%c120_205] : memref<216xf32, #tpu.memory_space<smem>>
    %1447 = vector.broadcast %1446 : f32 to vector<16x128xf32>
    %1448 = arith.mulf %1099, %1447 : vector<16x128xf32>
    %c123_206 = arith.constant 123 : index
    %1449 = memref.load %arg4[%c123_206] : memref<216xf32, #tpu.memory_space<smem>>
    %1450 = vector.broadcast %1449 : f32 to vector<16x128xf32>
    %1451 = arith.mulf %1115, %1450 : vector<16x128xf32>
    %1452 = arith.addf %1448, %1451 : vector<16x128xf32>
    %c126_207 = arith.constant 126 : index
    %1453 = memref.load %arg4[%c126_207] : memref<216xf32, #tpu.memory_space<smem>>
    %1454 = vector.broadcast %1453 : f32 to vector<16x128xf32>
    %1455 = arith.mulf %1131, %1454 : vector<16x128xf32>
    %1456 = arith.addf %1452, %1455 : vector<16x128xf32>
    %c129_208 = arith.constant 129 : index
    %1457 = memref.load %arg4[%c129_208] : memref<216xf32, #tpu.memory_space<smem>>
    %1458 = vector.broadcast %1457 : f32 to vector<16x128xf32>
    %1459 = arith.mulf %1147, %1458 : vector<16x128xf32>
    %1460 = arith.addf %1456, %1459 : vector<16x128xf32>
    %c132_209 = arith.constant 132 : index
    %1461 = memref.load %arg4[%c132_209] : memref<216xf32, #tpu.memory_space<smem>>
    %1462 = vector.broadcast %1461 : f32 to vector<16x128xf32>
    %1463 = arith.mulf %1163, %1462 : vector<16x128xf32>
    %1464 = arith.addf %1460, %1463 : vector<16x128xf32>
    %c135_210 = arith.constant 135 : index
    %1465 = memref.load %arg4[%c135_210] : memref<216xf32, #tpu.memory_space<smem>>
    %1466 = vector.broadcast %1465 : f32 to vector<16x128xf32>
    %1467 = arith.mulf %1179, %1466 : vector<16x128xf32>
    %1468 = arith.addf %1464, %1467 : vector<16x128xf32>
    %c138_211 = arith.constant 138 : index
    %1469 = memref.load %arg4[%c138_211] : memref<216xf32, #tpu.memory_space<smem>>
    %1470 = vector.broadcast %1469 : f32 to vector<16x128xf32>
    %1471 = arith.mulf %1195, %1470 : vector<16x128xf32>
    %1472 = arith.addf %1468, %1471 : vector<16x128xf32>
    %c141_212 = arith.constant 141 : index
    %1473 = memref.load %arg4[%c141_212] : memref<216xf32, #tpu.memory_space<smem>>
    %1474 = vector.broadcast %1473 : f32 to vector<16x128xf32>
    %1475 = arith.mulf %1211, %1474 : vector<16x128xf32>
    %1476 = arith.addf %1472, %1475 : vector<16x128xf32>
    %1477 = arith.addf %1445, %1476 : vector<16x128xf32>
    %c192_213 = arith.constant 192 : index
    %1478 = memref.load %arg4[%c192_213] : memref<216xf32, #tpu.memory_space<smem>>
    %1479 = vector.broadcast %1478 : f32 to vector<16x128xf32>
    %1480 = arith.mulf %1099, %1479 : vector<16x128xf32>
    %c195_214 = arith.constant 195 : index
    %1481 = memref.load %arg4[%c195_214] : memref<216xf32, #tpu.memory_space<smem>>
    %1482 = vector.broadcast %1481 : f32 to vector<16x128xf32>
    %1483 = arith.mulf %1115, %1482 : vector<16x128xf32>
    %1484 = arith.addf %1480, %1483 : vector<16x128xf32>
    %c198_215 = arith.constant 198 : index
    %1485 = memref.load %arg4[%c198_215] : memref<216xf32, #tpu.memory_space<smem>>
    %1486 = vector.broadcast %1485 : f32 to vector<16x128xf32>
    %1487 = arith.mulf %1131, %1486 : vector<16x128xf32>
    %1488 = arith.addf %1484, %1487 : vector<16x128xf32>
    %c201_216 = arith.constant 201 : index
    %1489 = memref.load %arg4[%c201_216] : memref<216xf32, #tpu.memory_space<smem>>
    %1490 = vector.broadcast %1489 : f32 to vector<16x128xf32>
    %1491 = arith.mulf %1147, %1490 : vector<16x128xf32>
    %1492 = arith.addf %1488, %1491 : vector<16x128xf32>
    %c204_217 = arith.constant 204 : index
    %1493 = memref.load %arg4[%c204_217] : memref<216xf32, #tpu.memory_space<smem>>
    %1494 = vector.broadcast %1493 : f32 to vector<16x128xf32>
    %1495 = arith.mulf %1163, %1494 : vector<16x128xf32>
    %1496 = arith.addf %1492, %1495 : vector<16x128xf32>
    %c207_218 = arith.constant 207 : index
    %1497 = memref.load %arg4[%c207_218] : memref<216xf32, #tpu.memory_space<smem>>
    %1498 = vector.broadcast %1497 : f32 to vector<16x128xf32>
    %1499 = arith.mulf %1179, %1498 : vector<16x128xf32>
    %1500 = arith.addf %1496, %1499 : vector<16x128xf32>
    %c210_219 = arith.constant 210 : index
    %1501 = memref.load %arg4[%c210_219] : memref<216xf32, #tpu.memory_space<smem>>
    %1502 = vector.broadcast %1501 : f32 to vector<16x128xf32>
    %1503 = arith.mulf %1195, %1502 : vector<16x128xf32>
    %1504 = arith.addf %1500, %1503 : vector<16x128xf32>
    %c213_220 = arith.constant 213 : index
    %1505 = memref.load %arg4[%c213_220] : memref<216xf32, #tpu.memory_space<smem>>
    %1506 = vector.broadcast %1505 : f32 to vector<16x128xf32>
    %1507 = arith.mulf %1211, %1506 : vector<16x128xf32>
    %1508 = arith.addf %1504, %1507 : vector<16x128xf32>
    %c15_i32_221 = arith.constant 15 : i32
    %1509 = tpu.dynamic_rotate %1508 by %c15_i32_221 dim 0 : vector<16x128xf32>, i32 -> vector<16x128xf32>
    %1510 = arith.select %3, %1509, %10 : vector<16x128xi1>, vector<16x128xf32>
    %1511 = arith.addf %1477, %1510 : vector<16x128xf32>
    %c127_i32_222 = arith.constant 127 : i32
    %1512 = tpu.dynamic_rotate %1511 by %c127_i32_222 dim 1 : vector<16x128xf32>, i32 -> vector<16x128xf32>
    %1513 = arith.select %7, %1512, %10 : vector<16x128xi1>, vector<16x128xf32>
    %1514 = arith.addf %1412, %1513 : vector<16x128xf32>
    %c0_223 = arith.constant 0 : index
    %1515 = memref.load %arg5[%c0_223] : memref<3xf32, #tpu.memory_space<smem>>
    %1516 = vector.broadcast %1515 : f32 to vector<16x128xf32>
    %1517 = arith.addf %1514, %1516 : vector<16x128xf32>
    %1518 = math.tanh %1517 : vector<16x128xf32>
    %1519 = arith.addf %1518, %1079 : vector<16x128xf32>
    %c1_224 = arith.constant 1 : index
    %c0_225 = arith.constant 0 : index
    %c0_226 = arith.constant 0 : index
    %c0_227 = arith.constant 0 : index
    %1520 = vector.load %arg6[%c1_224, %c0_225, %c0_226, %c0_227] : memref<2x3x16x128xf32, #tpu.memory_space<vmem>>, vector<1x1x16x128xf32>
    %1521 = vector.shape_cast %1520 : vector<1x1x16x128xf32> to vector<16x128xf32>
    %1522 = vector.shape_cast %1519 : vector<16x128xf32> to vector<1x1x16x128xf32>
    tpu.vector_store %arg6[%c1_224, %c0_225, %c0_226, %c0_227], %1522 {strides = array<i32>} : memref<2x3x16x128xf32, #tpu.memory_space<vmem>>, vector<1x1x16x128xf32>,
    %c1_228 = arith.constant 1 : index
    %1523 = memref.load %arg4[%c1_228] : memref<216xf32, #tpu.memory_space<smem>>
    %1524 = vector.broadcast %1523 : f32 to vector<16x128xf32>
    %1525 = arith.mulf %1099, %1524 : vector<16x128xf32>
    %c4_229 = arith.constant 4 : index
    %1526 = memref.load %arg4[%c4_229] : memref<216xf32, #tpu.memory_space<smem>>
    %1527 = vector.broadcast %1526 : f32 to vector<16x128xf32>
    %1528 = arith.mulf %1115, %1527 : vector<16x128xf32>
    %1529 = arith.addf %1525, %1528 : vector<16x128xf32>
    %c7_230 = arith.constant 7 : index
    %1530 = memref.load %arg4[%c7_230] : memref<216xf32, #tpu.memory_space<smem>>
    %1531 = vector.broadcast %1530 : f32 to vector<16x128xf32>
    %1532 = arith.mulf %1131, %1531 : vector<16x128xf32>
    %1533 = arith.addf %1529, %1532 : vector<16x128xf32>
    %c10_231 = arith.constant 10 : index
    %1534 = memref.load %arg4[%c10_231] : memref<216xf32, #tpu.memory_space<smem>>
    %1535 = vector.broadcast %1534 : f32 to vector<16x128xf32>
    %1536 = arith.mulf %1147, %1535 : vector<16x128xf32>
    %1537 = arith.addf %1533, %1536 : vector<16x128xf32>
    %c13_232 = arith.constant 13 : index
    %1538 = memref.load %arg4[%c13_232] : memref<216xf32, #tpu.memory_space<smem>>
    %1539 = vector.broadcast %1538 : f32 to vector<16x128xf32>
    %1540 = arith.mulf %1163, %1539 : vector<16x128xf32>
    %1541 = arith.addf %1537, %1540 : vector<16x128xf32>
    %c16_233 = arith.constant 16 : index
    %1542 = memref.load %arg4[%c16_233] : memref<216xf32, #tpu.memory_space<smem>>
    %1543 = vector.broadcast %1542 : f32 to vector<16x128xf32>
    %1544 = arith.mulf %1179, %1543 : vector<16x128xf32>
    %1545 = arith.addf %1541, %1544 : vector<16x128xf32>
    %c19_234 = arith.constant 19 : index
    %1546 = memref.load %arg4[%c19_234] : memref<216xf32, #tpu.memory_space<smem>>
    %1547 = vector.broadcast %1546 : f32 to vector<16x128xf32>
    %1548 = arith.mulf %1195, %1547 : vector<16x128xf32>
    %1549 = arith.addf %1545, %1548 : vector<16x128xf32>
    %c22_235 = arith.constant 22 : index
    %1550 = memref.load %arg4[%c22_235] : memref<216xf32, #tpu.memory_space<smem>>
    %1551 = vector.broadcast %1550 : f32 to vector<16x128xf32>
    %1552 = arith.mulf %1211, %1551 : vector<16x128xf32>
    %1553 = arith.addf %1549, %1552 : vector<16x128xf32>
    %c1_i32_236 = arith.constant 1 : i32
    %1554 = tpu.dynamic_rotate %1553 by %c1_i32_236 dim 0 : vector<16x128xf32>, i32 -> vector<16x128xf32>
    %1555 = arith.select %5, %1554, %10 : vector<16x128xi1>, vector<16x128xf32>
    %c73_237 = arith.constant 73 : index
    %1556 = memref.load %arg4[%c73_237] : memref<216xf32, #tpu.memory_space<smem>>
    %1557 = vector.broadcast %1556 : f32 to vector<16x128xf32>
    %1558 = arith.mulf %1099, %1557 : vector<16x128xf32>
    %c76_238 = arith.constant 76 : index
    %1559 = memref.load %arg4[%c76_238] : memref<216xf32, #tpu.memory_space<smem>>
    %1560 = vector.broadcast %1559 : f32 to vector<16x128xf32>
    %1561 = arith.mulf %1115, %1560 : vector<16x128xf32>
    %1562 = arith.addf %1558, %1561 : vector<16x128xf32>
    %c79_239 = arith.constant 79 : index
    %1563 = memref.load %arg4[%c79_239] : memref<216xf32, #tpu.memory_space<smem>>
    %1564 = vector.broadcast %1563 : f32 to vector<16x128xf32>
    %1565 = arith.mulf %1131, %1564 : vector<16x128xf32>
    %1566 = arith.addf %1562, %1565 : vector<16x128xf32>
    %c82_240 = arith.constant 82 : index
    %1567 = memref.load %arg4[%c82_240] : memref<216xf32, #tpu.memory_space<smem>>
    %1568 = vector.broadcast %1567 : f32 to vector<16x128xf32>
    %1569 = arith.mulf %1147, %1568 : vector<16x128xf32>
    %1570 = arith.addf %1566, %1569 : vector<16x128xf32>
    %c85_241 = arith.constant 85 : index
    %1571 = memref.load %arg4[%c85_241] : memref<216xf32, #tpu.memory_space<smem>>
    %1572 = vector.broadcast %1571 : f32 to vector<16x128xf32>
    %1573 = arith.mulf %1163, %1572 : vector<16x128xf32>
    %1574 = arith.addf %1570, %1573 : vector<16x128xf32>
    %c88_242 = arith.constant 88 : index
    %1575 = memref.load %arg4[%c88_242] : memref<216xf32, #tpu.memory_space<smem>>
    %1576 = vector.broadcast %1575 : f32 to vector<16x128xf32>
    %1577 = arith.mulf %1179, %1576 : vector<16x128xf32>
    %1578 = arith.addf %1574, %1577 : vector<16x128xf32>
    %c91_243 = arith.constant 91 : index
    %1579 = memref.load %arg4[%c91_243] : memref<216xf32, #tpu.memory_space<smem>>
    %1580 = vector.broadcast %1579 : f32 to vector<16x128xf32>
    %1581 = arith.mulf %1195, %1580 : vector<16x128xf32>
    %1582 = arith.addf %1578, %1581 : vector<16x128xf32>
    %c94_244 = arith.constant 94 : index
    %1583 = memref.load %arg4[%c94_244] : memref<216xf32, #tpu.memory_space<smem>>
    %1584 = vector.broadcast %1583 : f32 to vector<16x128xf32>
    %1585 = arith.mulf %1211, %1584 : vector<16x128xf32>
    %1586 = arith.addf %1582, %1585 : vector<16x128xf32>
    %1587 = arith.addf %1555, %1586 : vector<16x128xf32>
    %c145_245 = arith.constant 145 : index
    %1588 = memref.load %arg4[%c145_245] : memref<216xf32, #tpu.memory_space<smem>>
    %1589 = vector.broadcast %1588 : f32 to vector<16x128xf32>
    %1590 = arith.mulf %1099, %1589 : vector<16x128xf32>
    %c148_246 = arith.constant 148 : index
    %1591 = memref.load %arg4[%c148_246] : memref<216xf32, #tpu.memory_space<smem>>
    %1592 = vector.broadcast %1591 : f32 to vector<16x128xf32>
    %1593 = arith.mulf %1115, %1592 : vector<16x128xf32>
    %1594 = arith.addf %1590, %1593 : vector<16x128xf32>
    %c151_247 = arith.constant 151 : index
    %1595 = memref.load %arg4[%c151_247] : memref<216xf32, #tpu.memory_space<smem>>
    %1596 = vector.broadcast %1595 : f32 to vector<16x128xf32>
    %1597 = arith.mulf %1131, %1596 : vector<16x128xf32>
    %1598 = arith.addf %1594, %1597 : vector<16x128xf32>
    %c154_248 = arith.constant 154 : index
    %1599 = memref.load %arg4[%c154_248] : memref<216xf32, #tpu.memory_space<smem>>
    %1600 = vector.broadcast %1599 : f32 to vector<16x128xf32>
    %1601 = arith.mulf %1147, %1600 : vector<16x128xf32>
    %1602 = arith.addf %1598, %1601 : vector<16x128xf32>
    %c157_249 = arith.constant 157 : index
    %1603 = memref.load %arg4[%c157_249] : memref<216xf32, #tpu.memory_space<smem>>
    %1604 = vector.broadcast %1603 : f32 to vector<16x128xf32>
    %1605 = arith.mulf %1163, %1604 : vector<16x128xf32>
    %1606 = arith.addf %1602, %1605 : vector<16x128xf32>
    %c160_250 = arith.constant 160 : index
    %1607 = memref.load %arg4[%c160_250] : memref<216xf32, #tpu.memory_space<smem>>
    %1608 = vector.broadcast %1607 : f32 to vector<16x128xf32>
    %1609 = arith.mulf %1179, %1608 : vector<16x128xf32>
    %1610 = arith.addf %1606, %1609 : vector<16x128xf32>
    %c163_251 = arith.constant 163 : index
    %1611 = memref.load %arg4[%c163_251] : memref<216xf32, #tpu.memory_space<smem>>
    %1612 = vector.broadcast %1611 : f32 to vector<16x128xf32>
    %1613 = arith.mulf %1195, %1612 : vector<16x128xf32>
    %1614 = arith.addf %1610, %1613 : vector<16x128xf32>
    %c166_252 = arith.constant 166 : index
    %1615 = memref.load %arg4[%c166_252] : memref<216xf32, #tpu.memory_space<smem>>
    %1616 = vector.broadcast %1615 : f32 to vector<16x128xf32>
    %1617 = arith.mulf %1211, %1616 : vector<16x128xf32>
    %1618 = arith.addf %1614, %1617 : vector<16x128xf32>
    %c15_i32_253 = arith.constant 15 : i32
    %1619 = tpu.dynamic_rotate %1618 by %c15_i32_253 dim 0 : vector<16x128xf32>, i32 -> vector<16x128xf32>
    %1620 = arith.select %3, %1619, %10 : vector<16x128xi1>, vector<16x128xf32>
    %1621 = arith.addf %1587, %1620 : vector<16x128xf32>
    %c1_i32_254 = arith.constant 1 : i32
    %1622 = tpu.dynamic_rotate %1621 by %c1_i32_254 dim 1 : vector<16x128xf32>, i32 -> vector<16x128xf32>
    %1623 = arith.select %9, %1622, %10 : vector<16x128xi1>, vector<16x128xf32>
    %c25_255 = arith.constant 25 : index
    %1624 = memref.load %arg4[%c25_255] : memref<216xf32, #tpu.memory_space<smem>>
    %1625 = vector.broadcast %1624 : f32 to vector<16x128xf32>
    %1626 = arith.mulf %1099, %1625 : vector<16x128xf32>
    %c28_256 = arith.constant 28 : index
    %1627 = memref.load %arg4[%c28_256] : memref<216xf32, #tpu.memory_space<smem>>
    %1628 = vector.broadcast %1627 : f32 to vector<16x128xf32>
    %1629 = arith.mulf %1115, %1628 : vector<16x128xf32>
    %1630 = arith.addf %1626, %1629 : vector<16x128xf32>
    %c31_257 = arith.constant 31 : index
    %1631 = memref.load %arg4[%c31_257] : memref<216xf32, #tpu.memory_space<smem>>
    %1632 = vector.broadcast %1631 : f32 to vector<16x128xf32>
    %1633 = arith.mulf %1131, %1632 : vector<16x128xf32>
    %1634 = arith.addf %1630, %1633 : vector<16x128xf32>
    %c34_258 = arith.constant 34 : index
    %1635 = memref.load %arg4[%c34_258] : memref<216xf32, #tpu.memory_space<smem>>
    %1636 = vector.broadcast %1635 : f32 to vector<16x128xf32>
    %1637 = arith.mulf %1147, %1636 : vector<16x128xf32>
    %1638 = arith.addf %1634, %1637 : vector<16x128xf32>
    %c37_259 = arith.constant 37 : index
    %1639 = memref.load %arg4[%c37_259] : memref<216xf32, #tpu.memory_space<smem>>
    %1640 = vector.broadcast %1639 : f32 to vector<16x128xf32>
    %1641 = arith.mulf %1163, %1640 : vector<16x128xf32>
    %1642 = arith.addf %1638, %1641 : vector<16x128xf32>
    %c40_260 = arith.constant 40 : index
    %1643 = memref.load %arg4[%c40_260] : memref<216xf32, #tpu.memory_space<smem>>
    %1644 = vector.broadcast %1643 : f32 to vector<16x128xf32>
    %1645 = arith.mulf %1179, %1644 : vector<16x128xf32>
    %1646 = arith.addf %1642, %1645 : vector<16x128xf32>
    %c43_261 = arith.constant 43 : index
    %1647 = memref.load %arg4[%c43_261] : memref<216xf32, #tpu.memory_space<smem>>
    %1648 = vector.broadcast %1647 : f32 to vector<16x128xf32>
    %1649 = arith.mulf %1195, %1648 : vector<16x128xf32>
    %1650 = arith.addf %1646, %1649 : vector<16x128xf32>
    %c46_262 = arith.constant 46 : index
    %1651 = memref.load %arg4[%c46_262] : memref<216xf32, #tpu.memory_space<smem>>
    %1652 = vector.broadcast %1651 : f32 to vector<16x128xf32>
    %1653 = arith.mulf %1211, %1652 : vector<16x128xf32>
    %1654 = arith.addf %1650, %1653 : vector<16x128xf32>
    %c1_i32_263 = arith.constant 1 : i32
    %1655 = tpu.dynamic_rotate %1654 by %c1_i32_263 dim 0 : vector<16x128xf32>, i32 -> vector<16x128xf32>
    %1656 = arith.select %5, %1655, %10 : vector<16x128xi1>, vector<16x128xf32>
    %c97_264 = arith.constant 97 : index
    %1657 = memref.load %arg4[%c97_264] : memref<216xf32, #tpu.memory_space<smem>>
    %1658 = vector.broadcast %1657 : f32 to vector<16x128xf32>
    %1659 = arith.mulf %1099, %1658 : vector<16x128xf32>
    %c100_265 = arith.constant 100 : index
    %1660 = memref.load %arg4[%c100_265] : memref<216xf32, #tpu.memory_space<smem>>
    %1661 = vector.broadcast %1660 : f32 to vector<16x128xf32>
    %1662 = arith.mulf %1115, %1661 : vector<16x128xf32>
    %1663 = arith.addf %1659, %1662 : vector<16x128xf32>
    %c103_266 = arith.constant 103 : index
    %1664 = memref.load %arg4[%c103_266] : memref<216xf32, #tpu.memory_space<smem>>
    %1665 = vector.broadcast %1664 : f32 to vector<16x128xf32>
    %1666 = arith.mulf %1131, %1665 : vector<16x128xf32>
    %1667 = arith.addf %1663, %1666 : vector<16x128xf32>
    %c106_267 = arith.constant 106 : index
    %1668 = memref.load %arg4[%c106_267] : memref<216xf32, #tpu.memory_space<smem>>
    %1669 = vector.broadcast %1668 : f32 to vector<16x128xf32>
    %1670 = arith.mulf %1147, %1669 : vector<16x128xf32>
    %1671 = arith.addf %1667, %1670 : vector<16x128xf32>
    %c109_268 = arith.constant 109 : index
    %1672 = memref.load %arg4[%c109_268] : memref<216xf32, #tpu.memory_space<smem>>
    %1673 = vector.broadcast %1672 : f32 to vector<16x128xf32>
    %1674 = arith.mulf %1163, %1673 : vector<16x128xf32>
    %1675 = arith.addf %1671, %1674 : vector<16x128xf32>
    %c112_269 = arith.constant 112 : index
    %1676 = memref.load %arg4[%c112_269] : memref<216xf32, #tpu.memory_space<smem>>
    %1677 = vector.broadcast %1676 : f32 to vector<16x128xf32>
    %1678 = arith.mulf %1179, %1677 : vector<16x128xf32>
    %1679 = arith.addf %1675, %1678 : vector<16x128xf32>
    %c115_270 = arith.constant 115 : index
    %1680 = memref.load %arg4[%c115_270] : memref<216xf32, #tpu.memory_space<smem>>
    %1681 = vector.broadcast %1680 : f32 to vector<16x128xf32>
    %1682 = arith.mulf %1195, %1681 : vector<16x128xf32>
    %1683 = arith.addf %1679, %1682 : vector<16x128xf32>
    %c118_271 = arith.constant 118 : index
    %1684 = memref.load %arg4[%c118_271] : memref<216xf32, #tpu.memory_space<smem>>
    %1685 = vector.broadcast %1684 : f32 to vector<16x128xf32>
    %1686 = arith.mulf %1211, %1685 : vector<16x128xf32>
    %1687 = arith.addf %1683, %1686 : vector<16x128xf32>
    %1688 = arith.addf %1656, %1687 : vector<16x128xf32>
    %c169_272 = arith.constant 169 : index
    %1689 = memref.load %arg4[%c169_272] : memref<216xf32, #tpu.memory_space<smem>>
    %1690 = vector.broadcast %1689 : f32 to vector<16x128xf32>
    %1691 = arith.mulf %1099, %1690 : vector<16x128xf32>
    %c172_273 = arith.constant 172 : index
    %1692 = memref.load %arg4[%c172_273] : memref<216xf32, #tpu.memory_space<smem>>
    %1693 = vector.broadcast %1692 : f32 to vector<16x128xf32>
    %1694 = arith.mulf %1115, %1693 : vector<16x128xf32>
    %1695 = arith.addf %1691, %1694 : vector<16x128xf32>
    %c175_274 = arith.constant 175 : index
    %1696 = memref.load %arg4[%c175_274] : memref<216xf32, #tpu.memory_space<smem>>
    %1697 = vector.broadcast %1696 : f32 to vector<16x128xf32>
    %1698 = arith.mulf %1131, %1697 : vector<16x128xf32>
    %1699 = arith.addf %1695, %1698 : vector<16x128xf32>
    %c178_275 = arith.constant 178 : index
    %1700 = memref.load %arg4[%c178_275] : memref<216xf32, #tpu.memory_space<smem>>
    %1701 = vector.broadcast %1700 : f32 to vector<16x128xf32>
    %1702 = arith.mulf %1147, %1701 : vector<16x128xf32>
    %1703 = arith.addf %1699, %1702 : vector<16x128xf32>
    %c181_276 = arith.constant 181 : index
    %1704 = memref.load %arg4[%c181_276] : memref<216xf32, #tpu.memory_space<smem>>
    %1705 = vector.broadcast %1704 : f32 to vector<16x128xf32>
    %1706 = arith.mulf %1163, %1705 : vector<16x128xf32>
    %1707 = arith.addf %1703, %1706 : vector<16x128xf32>
    %c184_277 = arith.constant 184 : index
    %1708 = memref.load %arg4[%c184_277] : memref<216xf32, #tpu.memory_space<smem>>
    %1709 = vector.broadcast %1708 : f32 to vector<16x128xf32>
    %1710 = arith.mulf %1179, %1709 : vector<16x128xf32>
    %1711 = arith.addf %1707, %1710 : vector<16x128xf32>
    %c187_278 = arith.constant 187 : index
    %1712 = memref.load %arg4[%c187_278] : memref<216xf32, #tpu.memory_space<smem>>
    %1713 = vector.broadcast %1712 : f32 to vector<16x128xf32>
    %1714 = arith.mulf %1195, %1713 : vector<16x128xf32>
    %1715 = arith.addf %1711, %1714 : vector<16x128xf32>
    %c190_279 = arith.constant 190 : index
    %1716 = memref.load %arg4[%c190_279] : memref<216xf32, #tpu.memory_space<smem>>
    %1717 = vector.broadcast %1716 : f32 to vector<16x128xf32>
    %1718 = arith.mulf %1211, %1717 : vector<16x128xf32>
    %1719 = arith.addf %1715, %1718 : vector<16x128xf32>
    %c15_i32_280 = arith.constant 15 : i32
    %1720 = tpu.dynamic_rotate %1719 by %c15_i32_280 dim 0 : vector<16x128xf32>, i32 -> vector<16x128xf32>
    %1721 = arith.select %3, %1720, %10 : vector<16x128xi1>, vector<16x128xf32>
    %1722 = arith.addf %1688, %1721 : vector<16x128xf32>
    %1723 = arith.addf %1623, %1722 : vector<16x128xf32>
    %c49_281 = arith.constant 49 : index
    %1724 = memref.load %arg4[%c49_281] : memref<216xf32, #tpu.memory_space<smem>>
    %1725 = vector.broadcast %1724 : f32 to vector<16x128xf32>
    %1726 = arith.mulf %1099, %1725 : vector<16x128xf32>
    %c52_282 = arith.constant 52 : index
    %1727 = memref.load %arg4[%c52_282] : memref<216xf32, #tpu.memory_space<smem>>
    %1728 = vector.broadcast %1727 : f32 to vector<16x128xf32>
    %1729 = arith.mulf %1115, %1728 : vector<16x128xf32>
    %1730 = arith.addf %1726, %1729 : vector<16x128xf32>
    %c55_283 = arith.constant 55 : index
    %1731 = memref.load %arg4[%c55_283] : memref<216xf32, #tpu.memory_space<smem>>
    %1732 = vector.broadcast %1731 : f32 to vector<16x128xf32>
    %1733 = arith.mulf %1131, %1732 : vector<16x128xf32>
    %1734 = arith.addf %1730, %1733 : vector<16x128xf32>
    %c58_284 = arith.constant 58 : index
    %1735 = memref.load %arg4[%c58_284] : memref<216xf32, #tpu.memory_space<smem>>
    %1736 = vector.broadcast %1735 : f32 to vector<16x128xf32>
    %1737 = arith.mulf %1147, %1736 : vector<16x128xf32>
    %1738 = arith.addf %1734, %1737 : vector<16x128xf32>
    %c61_285 = arith.constant 61 : index
    %1739 = memref.load %arg4[%c61_285] : memref<216xf32, #tpu.memory_space<smem>>
    %1740 = vector.broadcast %1739 : f32 to vector<16x128xf32>
    %1741 = arith.mulf %1163, %1740 : vector<16x128xf32>
    %1742 = arith.addf %1738, %1741 : vector<16x128xf32>
    %c64_286 = arith.constant 64 : index
    %1743 = memref.load %arg4[%c64_286] : memref<216xf32, #tpu.memory_space<smem>>
    %1744 = vector.broadcast %1743 : f32 to vector<16x128xf32>
    %1745 = arith.mulf %1179, %1744 : vector<16x128xf32>
    %1746 = arith.addf %1742, %1745 : vector<16x128xf32>
    %c67_287 = arith.constant 67 : index
    %1747 = memref.load %arg4[%c67_287] : memref<216xf32, #tpu.memory_space<smem>>
    %1748 = vector.broadcast %1747 : f32 to vector<16x128xf32>
    %1749 = arith.mulf %1195, %1748 : vector<16x128xf32>
    %1750 = arith.addf %1746, %1749 : vector<16x128xf32>
    %c70_288 = arith.constant 70 : index
    %1751 = memref.load %arg4[%c70_288] : memref<216xf32, #tpu.memory_space<smem>>
    %1752 = vector.broadcast %1751 : f32 to vector<16x128xf32>
    %1753 = arith.mulf %1211, %1752 : vector<16x128xf32>
    %1754 = arith.addf %1750, %1753 : vector<16x128xf32>
    %c1_i32_289 = arith.constant 1 : i32
    %1755 = tpu.dynamic_rotate %1754 by %c1_i32_289 dim 0 : vector<16x128xf32>, i32 -> vector<16x128xf32>
    %1756 = arith.select %5, %1755, %10 : vector<16x128xi1>, vector<16x128xf32>
    %c121_290 = arith.constant 121 : index
    %1757 = memref.load %arg4[%c121_290] : memref<216xf32, #tpu.memory_space<smem>>
    %1758 = vector.broadcast %1757 : f32 to vector<16x128xf32>
    %1759 = arith.mulf %1099, %1758 : vector<16x128xf32>
    %c124_291 = arith.constant 124 : index
    %1760 = memref.load %arg4[%c124_291] : memref<216xf32, #tpu.memory_space<smem>>
    %1761 = vector.broadcast %1760 : f32 to vector<16x128xf32>
    %1762 = arith.mulf %1115, %1761 : vector<16x128xf32>
    %1763 = arith.addf %1759, %1762 : vector<16x128xf32>
    %c127_292 = arith.constant 127 : index
    %1764 = memref.load %arg4[%c127_292] : memref<216xf32, #tpu.memory_space<smem>>
    %1765 = vector.broadcast %1764 : f32 to vector<16x128xf32>
    %1766 = arith.mulf %1131, %1765 : vector<16x128xf32>
    %1767 = arith.addf %1763, %1766 : vector<16x128xf32>
    %c130_293 = arith.constant 130 : index
    %1768 = memref.load %arg4[%c130_293] : memref<216xf32, #tpu.memory_space<smem>>
    %1769 = vector.broadcast %1768 : f32 to vector<16x128xf32>
    %1770 = arith.mulf %1147, %1769 : vector<16x128xf32>
    %1771 = arith.addf %1767, %1770 : vector<16x128xf32>
    %c133_294 = arith.constant 133 : index
    %1772 = memref.load %arg4[%c133_294] : memref<216xf32, #tpu.memory_space<smem>>
    %1773 = vector.broadcast %1772 : f32 to vector<16x128xf32>
    %1774 = arith.mulf %1163, %1773 : vector<16x128xf32>
    %1775 = arith.addf %1771, %1774 : vector<16x128xf32>
    %c136_295 = arith.constant 136 : index
    %1776 = memref.load %arg4[%c136_295] : memref<216xf32, #tpu.memory_space<smem>>
    %1777 = vector.broadcast %1776 : f32 to vector<16x128xf32>
    %1778 = arith.mulf %1179, %1777 : vector<16x128xf32>
    %1779 = arith.addf %1775, %1778 : vector<16x128xf32>
    %c139_296 = arith.constant 139 : index
    %1780 = memref.load %arg4[%c139_296] : memref<216xf32, #tpu.memory_space<smem>>
    %1781 = vector.broadcast %1780 : f32 to vector<16x128xf32>
    %1782 = arith.mulf %1195, %1781 : vector<16x128xf32>
    %1783 = arith.addf %1779, %1782 : vector<16x128xf32>
    %c142_297 = arith.constant 142 : index
    %1784 = memref.load %arg4[%c142_297] : memref<216xf32, #tpu.memory_space<smem>>
    %1785 = vector.broadcast %1784 : f32 to vector<16x128xf32>
    %1786 = arith.mulf %1211, %1785 : vector<16x128xf32>
    %1787 = arith.addf %1783, %1786 : vector<16x128xf32>
    %1788 = arith.addf %1756, %1787 : vector<16x128xf32>
    %c193_298 = arith.constant 193 : index
    %1789 = memref.load %arg4[%c193_298] : memref<216xf32, #tpu.memory_space<smem>>
    %1790 = vector.broadcast %1789 : f32 to vector<16x128xf32>
    %1791 = arith.mulf %1099, %1790 : vector<16x128xf32>
    %c196_299 = arith.constant 196 : index
    %1792 = memref.load %arg4[%c196_299] : memref<216xf32, #tpu.memory_space<smem>>
    %1793 = vector.broadcast %1792 : f32 to vector<16x128xf32>
    %1794 = arith.mulf %1115, %1793 : vector<16x128xf32>
    %1795 = arith.addf %1791, %1794 : vector<16x128xf32>
    %c199_300 = arith.constant 199 : index
    %1796 = memref.load %arg4[%c199_300] : memref<216xf32, #tpu.memory_space<smem>>
    %1797 = vector.broadcast %1796 : f32 to vector<16x128xf32>
    %1798 = arith.mulf %1131, %1797 : vector<16x128xf32>
    %1799 = arith.addf %1795, %1798 : vector<16x128xf32>
    %c202_301 = arith.constant 202 : index
    %1800 = memref.load %arg4[%c202_301] : memref<216xf32, #tpu.memory_space<smem>>
    %1801 = vector.broadcast %1800 : f32 to vector<16x128xf32>
    %1802 = arith.mulf %1147, %1801 : vector<16x128xf32>
    %1803 = arith.addf %1799, %1802 : vector<16x128xf32>
    %c205_302 = arith.constant 205 : index
    %1804 = memref.load %arg4[%c205_302] : memref<216xf32, #tpu.memory_space<smem>>
    %1805 = vector.broadcast %1804 : f32 to vector<16x128xf32>
    %1806 = arith.mulf %1163, %1805 : vector<16x128xf32>
    %1807 = arith.addf %1803, %1806 : vector<16x128xf32>
    %c208_303 = arith.constant 208 : index
    %1808 = memref.load %arg4[%c208_303] : memref<216xf32, #tpu.memory_space<smem>>
    %1809 = vector.broadcast %1808 : f32 to vector<16x128xf32>
    %1810 = arith.mulf %1179, %1809 : vector<16x128xf32>
    %1811 = arith.addf %1807, %1810 : vector<16x128xf32>
    %c211_304 = arith.constant 211 : index
    %1812 = memref.load %arg4[%c211_304] : memref<216xf32, #tpu.memory_space<smem>>
    %1813 = vector.broadcast %1812 : f32 to vector<16x128xf32>
    %1814 = arith.mulf %1195, %1813 : vector<16x128xf32>
    %1815 = arith.addf %1811, %1814 : vector<16x128xf32>
    %c214_305 = arith.constant 214 : index
    %1816 = memref.load %arg4[%c214_305] : memref<216xf32, #tpu.memory_space<smem>>
    %1817 = vector.broadcast %1816 : f32 to vector<16x128xf32>
    %1818 = arith.mulf %1211, %1817 : vector<16x128xf32>
    %1819 = arith.addf %1815, %1818 : vector<16x128xf32>
    %c15_i32_306 = arith.constant 15 : i32
    %1820 = tpu.dynamic_rotate %1819 by %c15_i32_306 dim 0 : vector<16x128xf32>, i32 -> vector<16x128xf32>
    %1821 = arith.select %3, %1820, %10 : vector<16x128xi1>, vector<16x128xf32>
    %1822 = arith.addf %1788, %1821 : vector<16x128xf32>
    %c127_i32_307 = arith.constant 127 : i32
    %1823 = tpu.dynamic_rotate %1822 by %c127_i32_307 dim 1 : vector<16x128xf32>, i32 -> vector<16x128xf32>
    %1824 = arith.select %7, %1823, %10 : vector<16x128xi1>, vector<16x128xf32>
    %1825 = arith.addf %1723, %1824 : vector<16x128xf32>
    %c1_308 = arith.constant 1 : index
    %1826 = memref.load %arg5[%c1_308] : memref<3xf32, #tpu.memory_space<smem>>
    %1827 = vector.broadcast %1826 : f32 to vector<16x128xf32>
    %1828 = arith.addf %1825, %1827 : vector<16x128xf32>
    %1829 = math.tanh %1828 : vector<16x128xf32>
    %1830 = arith.addf %1829, %1081 : vector<16x128xf32>
    %c1_309 = arith.constant 1 : index
    %c1_310 = arith.constant 1 : index
    %c0_311 = arith.constant 0 : index
    %c0_312 = arith.constant 0 : index
    %1831 = vector.load %arg6[%c1_309, %c1_310, %c0_311, %c0_312] : memref<2x3x16x128xf32, #tpu.memory_space<vmem>>, vector<1x1x16x128xf32>
    %1832 = vector.shape_cast %1831 : vector<1x1x16x128xf32> to vector<16x128xf32>
    %1833 = vector.shape_cast %1830 : vector<16x128xf32> to vector<1x1x16x128xf32>
    tpu.vector_store %arg6[%c1_309, %c1_310, %c0_311, %c0_312], %1833 {strides = array<i32>} : memref<2x3x16x128xf32, #tpu.memory_space<vmem>>, vector<1x1x16x128xf32>,
    %c2_313 = arith.constant 2 : index
    %1834 = memref.load %arg4[%c2_313] : memref<216xf32, #tpu.memory_space<smem>>
    %1835 = vector.broadcast %1834 : f32 to vector<16x128xf32>
    %1836 = arith.mulf %1099, %1835 : vector<16x128xf32>
    %c5_314 = arith.constant 5 : index
    %1837 = memref.load %arg4[%c5_314] : memref<216xf32, #tpu.memory_space<smem>>
    %1838 = vector.broadcast %1837 : f32 to vector<16x128xf32>
    %1839 = arith.mulf %1115, %1838 : vector<16x128xf32>
    %1840 = arith.addf %1836, %1839 : vector<16x128xf32>
    %c8_315 = arith.constant 8 : index
    %1841 = memref.load %arg4[%c8_315] : memref<216xf32, #tpu.memory_space<smem>>
    %1842 = vector.broadcast %1841 : f32 to vector<16x128xf32>
    %1843 = arith.mulf %1131, %1842 : vector<16x128xf32>
    %1844 = arith.addf %1840, %1843 : vector<16x128xf32>
    %c11_316 = arith.constant 11 : index
    %1845 = memref.load %arg4[%c11_316] : memref<216xf32, #tpu.memory_space<smem>>
    %1846 = vector.broadcast %1845 : f32 to vector<16x128xf32>
    %1847 = arith.mulf %1147, %1846 : vector<16x128xf32>
    %1848 = arith.addf %1844, %1847 : vector<16x128xf32>
    %c14_317 = arith.constant 14 : index
    %1849 = memref.load %arg4[%c14_317] : memref<216xf32, #tpu.memory_space<smem>>
    %1850 = vector.broadcast %1849 : f32 to vector<16x128xf32>
    %1851 = arith.mulf %1163, %1850 : vector<16x128xf32>
    %1852 = arith.addf %1848, %1851 : vector<16x128xf32>
    %c17_318 = arith.constant 17 : index
    %1853 = memref.load %arg4[%c17_318] : memref<216xf32, #tpu.memory_space<smem>>
    %1854 = vector.broadcast %1853 : f32 to vector<16x128xf32>
    %1855 = arith.mulf %1179, %1854 : vector<16x128xf32>
    %1856 = arith.addf %1852, %1855 : vector<16x128xf32>
    %c20_319 = arith.constant 20 : index
    %1857 = memref.load %arg4[%c20_319] : memref<216xf32, #tpu.memory_space<smem>>
    %1858 = vector.broadcast %1857 : f32 to vector<16x128xf32>
    %1859 = arith.mulf %1195, %1858 : vector<16x128xf32>
    %1860 = arith.addf %1856, %1859 : vector<16x128xf32>
    %c23_320 = arith.constant 23 : index
    %1861 = memref.load %arg4[%c23_320] : memref<216xf32, #tpu.memory_space<smem>>
    %1862 = vector.broadcast %1861 : f32 to vector<16x128xf32>
    %1863 = arith.mulf %1211, %1862 : vector<16x128xf32>
    %1864 = arith.addf %1860, %1863 : vector<16x128xf32>
    %c1_i32_321 = arith.constant 1 : i32
    %1865 = tpu.dynamic_rotate %1864 by %c1_i32_321 dim 0 : vector<16x128xf32>, i32 -> vector<16x128xf32>
    %1866 = arith.select %5, %1865, %10 : vector<16x128xi1>, vector<16x128xf32>
    %c74_322 = arith.constant 74 : index
    %1867 = memref.load %arg4[%c74_322] : memref<216xf32, #tpu.memory_space<smem>>
    %1868 = vector.broadcast %1867 : f32 to vector<16x128xf32>
    %1869 = arith.mulf %1099, %1868 : vector<16x128xf32>
    %c77_323 = arith.constant 77 : index
    %1870 = memref.load %arg4[%c77_323] : memref<216xf32, #tpu.memory_space<smem>>
    %1871 = vector.broadcast %1870 : f32 to vector<16x128xf32>
    %1872 = arith.mulf %1115, %1871 : vector<16x128xf32>
    %1873 = arith.addf %1869, %1872 : vector<16x128xf32>
    %c80_324 = arith.constant 80 : index
    %1874 = memref.load %arg4[%c80_324] : memref<216xf32, #tpu.memory_space<smem>>
    %1875 = vector.broadcast %1874 : f32 to vector<16x128xf32>
    %1876 = arith.mulf %1131, %1875 : vector<16x128xf32>
    %1877 = arith.addf %1873, %1876 : vector<16x128xf32>
    %c83_325 = arith.constant 83 : index
    %1878 = memref.load %arg4[%c83_325] : memref<216xf32, #tpu.memory_space<smem>>
    %1879 = vector.broadcast %1878 : f32 to vector<16x128xf32>
    %1880 = arith.mulf %1147, %1879 : vector<16x128xf32>
    %1881 = arith.addf %1877, %1880 : vector<16x128xf32>
    %c86_326 = arith.constant 86 : index
    %1882 = memref.load %arg4[%c86_326] : memref<216xf32, #tpu.memory_space<smem>>
    %1883 = vector.broadcast %1882 : f32 to vector<16x128xf32>
    %1884 = arith.mulf %1163, %1883 : vector<16x128xf32>
    %1885 = arith.addf %1881, %1884 : vector<16x128xf32>
    %c89_327 = arith.constant 89 : index
    %1886 = memref.load %arg4[%c89_327] : memref<216xf32, #tpu.memory_space<smem>>
    %1887 = vector.broadcast %1886 : f32 to vector<16x128xf32>
    %1888 = arith.mulf %1179, %1887 : vector<16x128xf32>
    %1889 = arith.addf %1885, %1888 : vector<16x128xf32>
    %c92_328 = arith.constant 92 : index
    %1890 = memref.load %arg4[%c92_328] : memref<216xf32, #tpu.memory_space<smem>>
    %1891 = vector.broadcast %1890 : f32 to vector<16x128xf32>
    %1892 = arith.mulf %1195, %1891 : vector<16x128xf32>
    %1893 = arith.addf %1889, %1892 : vector<16x128xf32>
    %c95_329 = arith.constant 95 : index
    %1894 = memref.load %arg4[%c95_329] : memref<216xf32, #tpu.memory_space<smem>>
    %1895 = vector.broadcast %1894 : f32 to vector<16x128xf32>
    %1896 = arith.mulf %1211, %1895 : vector<16x128xf32>
    %1897 = arith.addf %1893, %1896 : vector<16x128xf32>
    %1898 = arith.addf %1866, %1897 : vector<16x128xf32>
    %c146_330 = arith.constant 146 : index
    %1899 = memref.load %arg4[%c146_330] : memref<216xf32, #tpu.memory_space<smem>>
    %1900 = vector.broadcast %1899 : f32 to vector<16x128xf32>
    %1901 = arith.mulf %1099, %1900 : vector<16x128xf32>
    %c149_331 = arith.constant 149 : index
    %1902 = memref.load %arg4[%c149_331] : memref<216xf32, #tpu.memory_space<smem>>
    %1903 = vector.broadcast %1902 : f32 to vector<16x128xf32>
    %1904 = arith.mulf %1115, %1903 : vector<16x128xf32>
    %1905 = arith.addf %1901, %1904 : vector<16x128xf32>
    %c152_332 = arith.constant 152 : index
    %1906 = memref.load %arg4[%c152_332] : memref<216xf32, #tpu.memory_space<smem>>
    %1907 = vector.broadcast %1906 : f32 to vector<16x128xf32>
    %1908 = arith.mulf %1131, %1907 : vector<16x128xf32>
    %1909 = arith.addf %1905, %1908 : vector<16x128xf32>
    %c155_333 = arith.constant 155 : index
    %1910 = memref.load %arg4[%c155_333] : memref<216xf32, #tpu.memory_space<smem>>
    %1911 = vector.broadcast %1910 : f32 to vector<16x128xf32>
    %1912 = arith.mulf %1147, %1911 : vector<16x128xf32>
    %1913 = arith.addf %1909, %1912 : vector<16x128xf32>
    %c158_334 = arith.constant 158 : index
    %1914 = memref.load %arg4[%c158_334] : memref<216xf32, #tpu.memory_space<smem>>
    %1915 = vector.broadcast %1914 : f32 to vector<16x128xf32>
    %1916 = arith.mulf %1163, %1915 : vector<16x128xf32>
    %1917 = arith.addf %1913, %1916 : vector<16x128xf32>
    %c161_335 = arith.constant 161 : index
    %1918 = memref.load %arg4[%c161_335] : memref<216xf32, #tpu.memory_space<smem>>
    %1919 = vector.broadcast %1918 : f32 to vector<16x128xf32>
    %1920 = arith.mulf %1179, %1919 : vector<16x128xf32>
    %1921 = arith.addf %1917, %1920 : vector<16x128xf32>
    %c164_336 = arith.constant 164 : index
    %1922 = memref.load %arg4[%c164_336] : memref<216xf32, #tpu.memory_space<smem>>
    %1923 = vector.broadcast %1922 : f32 to vector<16x128xf32>
    %1924 = arith.mulf %1195, %1923 : vector<16x128xf32>
    %1925 = arith.addf %1921, %1924 : vector<16x128xf32>
    %c167_337 = arith.constant 167 : index
    %1926 = memref.load %arg4[%c167_337] : memref<216xf32, #tpu.memory_space<smem>>
    %1927 = vector.broadcast %1926 : f32 to vector<16x128xf32>
    %1928 = arith.mulf %1211, %1927 : vector<16x128xf32>
    %1929 = arith.addf %1925, %1928 : vector<16x128xf32>
    %c15_i32_338 = arith.constant 15 : i32
    %1930 = tpu.dynamic_rotate %1929 by %c15_i32_338 dim 0 : vector<16x128xf32>, i32 -> vector<16x128xf32>
    %1931 = arith.select %3, %1930, %10 : vector<16x128xi1>, vector<16x128xf32>
    %1932 = arith.addf %1898, %1931 : vector<16x128xf32>
    %c1_i32_339 = arith.constant 1 : i32
    %1933 = tpu.dynamic_rotate %1932 by %c1_i32_339 dim 1 : vector<16x128xf32>, i32 -> vector<16x128xf32>
    %1934 = arith.select %9, %1933, %10 : vector<16x128xi1>, vector<16x128xf32>
    %c26_340 = arith.constant 26 : index
    %1935 = memref.load %arg4[%c26_340] : memref<216xf32, #tpu.memory_space<smem>>
    %1936 = vector.broadcast %1935 : f32 to vector<16x128xf32>
    %1937 = arith.mulf %1099, %1936 : vector<16x128xf32>
    %c29_341 = arith.constant 29 : index
    %1938 = memref.load %arg4[%c29_341] : memref<216xf32, #tpu.memory_space<smem>>
    %1939 = vector.broadcast %1938 : f32 to vector<16x128xf32>
    %1940 = arith.mulf %1115, %1939 : vector<16x128xf32>
    %1941 = arith.addf %1937, %1940 : vector<16x128xf32>
    %c32_342 = arith.constant 32 : index
    %1942 = memref.load %arg4[%c32_342] : memref<216xf32, #tpu.memory_space<smem>>
    %1943 = vector.broadcast %1942 : f32 to vector<16x128xf32>
    %1944 = arith.mulf %1131, %1943 : vector<16x128xf32>
    %1945 = arith.addf %1941, %1944 : vector<16x128xf32>
    %c35_343 = arith.constant 35 : index
    %1946 = memref.load %arg4[%c35_343] : memref<216xf32, #tpu.memory_space<smem>>
    %1947 = vector.broadcast %1946 : f32 to vector<16x128xf32>
    %1948 = arith.mulf %1147, %1947 : vector<16x128xf32>
    %1949 = arith.addf %1945, %1948 : vector<16x128xf32>
    %c38_344 = arith.constant 38 : index
    %1950 = memref.load %arg4[%c38_344] : memref<216xf32, #tpu.memory_space<smem>>
    %1951 = vector.broadcast %1950 : f32 to vector<16x128xf32>
    %1952 = arith.mulf %1163, %1951 : vector<16x128xf32>
    %1953 = arith.addf %1949, %1952 : vector<16x128xf32>
    %c41_345 = arith.constant 41 : index
    %1954 = memref.load %arg4[%c41_345] : memref<216xf32, #tpu.memory_space<smem>>
    %1955 = vector.broadcast %1954 : f32 to vector<16x128xf32>
    %1956 = arith.mulf %1179, %1955 : vector<16x128xf32>
    %1957 = arith.addf %1953, %1956 : vector<16x128xf32>
    %c44_346 = arith.constant 44 : index
    %1958 = memref.load %arg4[%c44_346] : memref<216xf32, #tpu.memory_space<smem>>
    %1959 = vector.broadcast %1958 : f32 to vector<16x128xf32>
    %1960 = arith.mulf %1195, %1959 : vector<16x128xf32>
    %1961 = arith.addf %1957, %1960 : vector<16x128xf32>
    %c47_347 = arith.constant 47 : index
    %1962 = memref.load %arg4[%c47_347] : memref<216xf32, #tpu.memory_space<smem>>
    %1963 = vector.broadcast %1962 : f32 to vector<16x128xf32>
    %1964 = arith.mulf %1211, %1963 : vector<16x128xf32>
    %1965 = arith.addf %1961, %1964 : vector<16x128xf32>
    %c1_i32_348 = arith.constant 1 : i32
    %1966 = tpu.dynamic_rotate %1965 by %c1_i32_348 dim 0 : vector<16x128xf32>, i32 -> vector<16x128xf32>
    %1967 = arith.select %5, %1966, %10 : vector<16x128xi1>, vector<16x128xf32>
    %c98_349 = arith.constant 98 : index
    %1968 = memref.load %arg4[%c98_349] : memref<216xf32, #tpu.memory_space<smem>>
    %1969 = vector.broadcast %1968 : f32 to vector<16x128xf32>
    %1970 = arith.mulf %1099, %1969 : vector<16x128xf32>
    %c101_350 = arith.constant 101 : index
    %1971 = memref.load %arg4[%c101_350] : memref<216xf32, #tpu.memory_space<smem>>
    %1972 = vector.broadcast %1971 : f32 to vector<16x128xf32>
    %1973 = arith.mulf %1115, %1972 : vector<16x128xf32>
    %1974 = arith.addf %1970, %1973 : vector<16x128xf32>
    %c104_351 = arith.constant 104 : index
    %1975 = memref.load %arg4[%c104_351] : memref<216xf32, #tpu.memory_space<smem>>
    %1976 = vector.broadcast %1975 : f32 to vector<16x128xf32>
    %1977 = arith.mulf %1131, %1976 : vector<16x128xf32>
    %1978 = arith.addf %1974, %1977 : vector<16x128xf32>
    %c107_352 = arith.constant 107 : index
    %1979 = memref.load %arg4[%c107_352] : memref<216xf32, #tpu.memory_space<smem>>
    %1980 = vector.broadcast %1979 : f32 to vector<16x128xf32>
    %1981 = arith.mulf %1147, %1980 : vector<16x128xf32>
    %1982 = arith.addf %1978, %1981 : vector<16x128xf32>
    %c110_353 = arith.constant 110 : index
    %1983 = memref.load %arg4[%c110_353] : memref<216xf32, #tpu.memory_space<smem>>
    %1984 = vector.broadcast %1983 : f32 to vector<16x128xf32>
    %1985 = arith.mulf %1163, %1984 : vector<16x128xf32>
    %1986 = arith.addf %1982, %1985 : vector<16x128xf32>
    %c113_354 = arith.constant 113 : index
    %1987 = memref.load %arg4[%c113_354] : memref<216xf32, #tpu.memory_space<smem>>
    %1988 = vector.broadcast %1987 : f32 to vector<16x128xf32>
    %1989 = arith.mulf %1179, %1988 : vector<16x128xf32>
    %1990 = arith.addf %1986, %1989 : vector<16x128xf32>
    %c116_355 = arith.constant 116 : index
    %1991 = memref.load %arg4[%c116_355] : memref<216xf32, #tpu.memory_space<smem>>
    %1992 = vector.broadcast %1991 : f32 to vector<16x128xf32>
    %1993 = arith.mulf %1195, %1992 : vector<16x128xf32>
    %1994 = arith.addf %1990, %1993 : vector<16x128xf32>
    %c119_356 = arith.constant 119 : index
    %1995 = memref.load %arg4[%c119_356] : memref<216xf32, #tpu.memory_space<smem>>
    %1996 = vector.broadcast %1995 : f32 to vector<16x128xf32>
    %1997 = arith.mulf %1211, %1996 : vector<16x128xf32>
    %1998 = arith.addf %1994, %1997 : vector<16x128xf32>
    %1999 = arith.addf %1967, %1998 : vector<16x128xf32>
    %c170_357 = arith.constant 170 : index
    %2000 = memref.load %arg4[%c170_357] : memref<216xf32, #tpu.memory_space<smem>>
    %2001 = vector.broadcast %2000 : f32 to vector<16x128xf32>
    %2002 = arith.mulf %1099, %2001 : vector<16x128xf32>
    %c173_358 = arith.constant 173 : index
    %2003 = memref.load %arg4[%c173_358] : memref<216xf32, #tpu.memory_space<smem>>
    %2004 = vector.broadcast %2003 : f32 to vector<16x128xf32>
    %2005 = arith.mulf %1115, %2004 : vector<16x128xf32>
    %2006 = arith.addf %2002, %2005 : vector<16x128xf32>
    %c176_359 = arith.constant 176 : index
    %2007 = memref.load %arg4[%c176_359] : memref<216xf32, #tpu.memory_space<smem>>
    %2008 = vector.broadcast %2007 : f32 to vector<16x128xf32>
    %2009 = arith.mulf %1131, %2008 : vector<16x128xf32>
    %2010 = arith.addf %2006, %2009 : vector<16x128xf32>
    %c179_360 = arith.constant 179 : index
    %2011 = memref.load %arg4[%c179_360] : memref<216xf32, #tpu.memory_space<smem>>
    %2012 = vector.broadcast %2011 : f32 to vector<16x128xf32>
    %2013 = arith.mulf %1147, %2012 : vector<16x128xf32>
    %2014 = arith.addf %2010, %2013 : vector<16x128xf32>
    %c182_361 = arith.constant 182 : index
    %2015 = memref.load %arg4[%c182_361] : memref<216xf32, #tpu.memory_space<smem>>
    %2016 = vector.broadcast %2015 : f32 to vector<16x128xf32>
    %2017 = arith.mulf %1163, %2016 : vector<16x128xf32>
    %2018 = arith.addf %2014, %2017 : vector<16x128xf32>
    %c185_362 = arith.constant 185 : index
    %2019 = memref.load %arg4[%c185_362] : memref<216xf32, #tpu.memory_space<smem>>
    %2020 = vector.broadcast %2019 : f32 to vector<16x128xf32>
    %2021 = arith.mulf %1179, %2020 : vector<16x128xf32>
    %2022 = arith.addf %2018, %2021 : vector<16x128xf32>
    %c188_363 = arith.constant 188 : index
    %2023 = memref.load %arg4[%c188_363] : memref<216xf32, #tpu.memory_space<smem>>
    %2024 = vector.broadcast %2023 : f32 to vector<16x128xf32>
    %2025 = arith.mulf %1195, %2024 : vector<16x128xf32>
    %2026 = arith.addf %2022, %2025 : vector<16x128xf32>
    %c191_364 = arith.constant 191 : index
    %2027 = memref.load %arg4[%c191_364] : memref<216xf32, #tpu.memory_space<smem>>
    %2028 = vector.broadcast %2027 : f32 to vector<16x128xf32>
    %2029 = arith.mulf %1211, %2028 : vector<16x128xf32>
    %2030 = arith.addf %2026, %2029 : vector<16x128xf32>
    %c15_i32_365 = arith.constant 15 : i32
    %2031 = tpu.dynamic_rotate %2030 by %c15_i32_365 dim 0 : vector<16x128xf32>, i32 -> vector<16x128xf32>
    %2032 = arith.select %3, %2031, %10 : vector<16x128xi1>, vector<16x128xf32>
    %2033 = arith.addf %1999, %2032 : vector<16x128xf32>
    %2034 = arith.addf %1934, %2033 : vector<16x128xf32>
    %c50_366 = arith.constant 50 : index
    %2035 = memref.load %arg4[%c50_366] : memref<216xf32, #tpu.memory_space<smem>>
    %2036 = vector.broadcast %2035 : f32 to vector<16x128xf32>
    %2037 = arith.mulf %1099, %2036 : vector<16x128xf32>
    %c53_367 = arith.constant 53 : index
    %2038 = memref.load %arg4[%c53_367] : memref<216xf32, #tpu.memory_space<smem>>
    %2039 = vector.broadcast %2038 : f32 to vector<16x128xf32>
    %2040 = arith.mulf %1115, %2039 : vector<16x128xf32>
    %2041 = arith.addf %2037, %2040 : vector<16x128xf32>
    %c56_368 = arith.constant 56 : index
    %2042 = memref.load %arg4[%c56_368] : memref<216xf32, #tpu.memory_space<smem>>
    %2043 = vector.broadcast %2042 : f32 to vector<16x128xf32>
    %2044 = arith.mulf %1131, %2043 : vector<16x128xf32>
    %2045 = arith.addf %2041, %2044 : vector<16x128xf32>
    %c59_369 = arith.constant 59 : index
    %2046 = memref.load %arg4[%c59_369] : memref<216xf32, #tpu.memory_space<smem>>
    %2047 = vector.broadcast %2046 : f32 to vector<16x128xf32>
    %2048 = arith.mulf %1147, %2047 : vector<16x128xf32>
    %2049 = arith.addf %2045, %2048 : vector<16x128xf32>
    %c62_370 = arith.constant 62 : index
    %2050 = memref.load %arg4[%c62_370] : memref<216xf32, #tpu.memory_space<smem>>
    %2051 = vector.broadcast %2050 : f32 to vector<16x128xf32>
    %2052 = arith.mulf %1163, %2051 : vector<16x128xf32>
    %2053 = arith.addf %2049, %2052 : vector<16x128xf32>
    %c65_371 = arith.constant 65 : index
    %2054 = memref.load %arg4[%c65_371] : memref<216xf32, #tpu.memory_space<smem>>
    %2055 = vector.broadcast %2054 : f32 to vector<16x128xf32>
    %2056 = arith.mulf %1179, %2055 : vector<16x128xf32>
    %2057 = arith.addf %2053, %2056 : vector<16x128xf32>
    %c68_372 = arith.constant 68 : index
    %2058 = memref.load %arg4[%c68_372] : memref<216xf32, #tpu.memory_space<smem>>
    %2059 = vector.broadcast %2058 : f32 to vector<16x128xf32>
    %2060 = arith.mulf %1195, %2059 : vector<16x128xf32>
    %2061 = arith.addf %2057, %2060 : vector<16x128xf32>
    %c71_373 = arith.constant 71 : index
    %2062 = memref.load %arg4[%c71_373] : memref<216xf32, #tpu.memory_space<smem>>
    %2063 = vector.broadcast %2062 : f32 to vector<16x128xf32>
    %2064 = arith.mulf %1211, %2063 : vector<16x128xf32>
    %2065 = arith.addf %2061, %2064 : vector<16x128xf32>
    %c1_i32_374 = arith.constant 1 : i32
    %2066 = tpu.dynamic_rotate %2065 by %c1_i32_374 dim 0 : vector<16x128xf32>, i32 -> vector<16x128xf32>
    %2067 = arith.select %5, %2066, %10 : vector<16x128xi1>, vector<16x128xf32>
    %c122_375 = arith.constant 122 : index
    %2068 = memref.load %arg4[%c122_375] : memref<216xf32, #tpu.memory_space<smem>>
    %2069 = vector.broadcast %2068 : f32 to vector<16x128xf32>
    %2070 = arith.mulf %1099, %2069 : vector<16x128xf32>
    %c125_376 = arith.constant 125 : index
    %2071 = memref.load %arg4[%c125_376] : memref<216xf32, #tpu.memory_space<smem>>
    %2072 = vector.broadcast %2071 : f32 to vector<16x128xf32>
    %2073 = arith.mulf %1115, %2072 : vector<16x128xf32>
    %2074 = arith.addf %2070, %2073 : vector<16x128xf32>
    %c128_377 = arith.constant 128 : index
    %2075 = memref.load %arg4[%c128_377] : memref<216xf32, #tpu.memory_space<smem>>
    %2076 = vector.broadcast %2075 : f32 to vector<16x128xf32>
    %2077 = arith.mulf %1131, %2076 : vector<16x128xf32>
    %2078 = arith.addf %2074, %2077 : vector<16x128xf32>
    %c131_378 = arith.constant 131 : index
    %2079 = memref.load %arg4[%c131_378] : memref<216xf32, #tpu.memory_space<smem>>
    %2080 = vector.broadcast %2079 : f32 to vector<16x128xf32>
    %2081 = arith.mulf %1147, %2080 : vector<16x128xf32>
    %2082 = arith.addf %2078, %2081 : vector<16x128xf32>
    %c134_379 = arith.constant 134 : index
    %2083 = memref.load %arg4[%c134_379] : memref<216xf32, #tpu.memory_space<smem>>
    %2084 = vector.broadcast %2083 : f32 to vector<16x128xf32>
    %2085 = arith.mulf %1163, %2084 : vector<16x128xf32>
    %2086 = arith.addf %2082, %2085 : vector<16x128xf32>
    %c137_380 = arith.constant 137 : index
    %2087 = memref.load %arg4[%c137_380] : memref<216xf32, #tpu.memory_space<smem>>
    %2088 = vector.broadcast %2087 : f32 to vector<16x128xf32>
    %2089 = arith.mulf %1179, %2088 : vector<16x128xf32>
    %2090 = arith.addf %2086, %2089 : vector<16x128xf32>
    %c140_381 = arith.constant 140 : index
    %2091 = memref.load %arg4[%c140_381] : memref<216xf32, #tpu.memory_space<smem>>
    %2092 = vector.broadcast %2091 : f32 to vector<16x128xf32>
    %2093 = arith.mulf %1195, %2092 : vector<16x128xf32>
    %2094 = arith.addf %2090, %2093 : vector<16x128xf32>
    %c143_382 = arith.constant 143 : index
    %2095 = memref.load %arg4[%c143_382] : memref<216xf32, #tpu.memory_space<smem>>
    %2096 = vector.broadcast %2095 : f32 to vector<16x128xf32>
    %2097 = arith.mulf %1211, %2096 : vector<16x128xf32>
    %2098 = arith.addf %2094, %2097 : vector<16x128xf32>
    %2099 = arith.addf %2067, %2098 : vector<16x128xf32>
    %c194_383 = arith.constant 194 : index
    %2100 = memref.load %arg4[%c194_383] : memref<216xf32, #tpu.memory_space<smem>>
    %2101 = vector.broadcast %2100 : f32 to vector<16x128xf32>
    %2102 = arith.mulf %1099, %2101 : vector<16x128xf32>
    %c197_384 = arith.constant 197 : index
    %2103 = memref.load %arg4[%c197_384] : memref<216xf32, #tpu.memory_space<smem>>
    %2104 = vector.broadcast %2103 : f32 to vector<16x128xf32>
    %2105 = arith.mulf %1115, %2104 : vector<16x128xf32>
    %2106 = arith.addf %2102, %2105 : vector<16x128xf32>
    %c200_385 = arith.constant 200 : index
    %2107 = memref.load %arg4[%c200_385] : memref<216xf32, #tpu.memory_space<smem>>
    %2108 = vector.broadcast %2107 : f32 to vector<16x128xf32>
    %2109 = arith.mulf %1131, %2108 : vector<16x128xf32>
    %2110 = arith.addf %2106, %2109 : vector<16x128xf32>
    %c203_386 = arith.constant 203 : index
    %2111 = memref.load %arg4[%c203_386] : memref<216xf32, #tpu.memory_space<smem>>
    %2112 = vector.broadcast %2111 : f32 to vector<16x128xf32>
    %2113 = arith.mulf %1147, %2112 : vector<16x128xf32>
    %2114 = arith.addf %2110, %2113 : vector<16x128xf32>
    %c206_387 = arith.constant 206 : index
    %2115 = memref.load %arg4[%c206_387] : memref<216xf32, #tpu.memory_space<smem>>
    %2116 = vector.broadcast %2115 : f32 to vector<16x128xf32>
    %2117 = arith.mulf %1163, %2116 : vector<16x128xf32>
    %2118 = arith.addf %2114, %2117 : vector<16x128xf32>
    %c209_388 = arith.constant 209 : index
    %2119 = memref.load %arg4[%c209_388] : memref<216xf32, #tpu.memory_space<smem>>
    %2120 = vector.broadcast %2119 : f32 to vector<16x128xf32>
    %2121 = arith.mulf %1179, %2120 : vector<16x128xf32>
    %2122 = arith.addf %2118, %2121 : vector<16x128xf32>
    %c212_389 = arith.constant 212 : index
    %2123 = memref.load %arg4[%c212_389] : memref<216xf32, #tpu.memory_space<smem>>
    %2124 = vector.broadcast %2123 : f32 to vector<16x128xf32>
    %2125 = arith.mulf %1195, %2124 : vector<16x128xf32>
    %2126 = arith.addf %2122, %2125 : vector<16x128xf32>
    %c215_390 = arith.constant 215 : index
    %2127 = memref.load %arg4[%c215_390] : memref<216xf32, #tpu.memory_space<smem>>
    %2128 = vector.broadcast %2127 : f32 to vector<16x128xf32>
    %2129 = arith.mulf %1211, %2128 : vector<16x128xf32>
    %2130 = arith.addf %2126, %2129 : vector<16x128xf32>
    %c15_i32_391 = arith.constant 15 : i32
    %2131 = tpu.dynamic_rotate %2130 by %c15_i32_391 dim 0 : vector<16x128xf32>, i32 -> vector<16x128xf32>
    %2132 = arith.select %3, %2131, %10 : vector<16x128xi1>, vector<16x128xf32>
    %2133 = arith.addf %2099, %2132 : vector<16x128xf32>
    %c127_i32_392 = arith.constant 127 : i32
    %2134 = tpu.dynamic_rotate %2133 by %c127_i32_392 dim 1 : vector<16x128xf32>, i32 -> vector<16x128xf32>
    %2135 = arith.select %7, %2134, %10 : vector<16x128xi1>, vector<16x128xf32>
    %2136 = arith.addf %2034, %2135 : vector<16x128xf32>
    %c2_393 = arith.constant 2 : index
    %2137 = memref.load %arg5[%c2_393] : memref<3xf32, #tpu.memory_space<smem>>
    %2138 = vector.broadcast %2137 : f32 to vector<16x128xf32>
    %2139 = arith.addf %2136, %2138 : vector<16x128xf32>
    %2140 = math.tanh %2139 : vector<16x128xf32>
    %2141 = arith.addf %2140, %1083 : vector<16x128xf32>
    %c1_394 = arith.constant 1 : index
    %c2_395 = arith.constant 2 : index
    %c0_396 = arith.constant 0 : index
    %c0_397 = arith.constant 0 : index
    %2142 = vector.load %arg6[%c1_394, %c2_395, %c0_396, %c0_397] : memref<2x3x16x128xf32, #tpu.memory_space<vmem>>, vector<1x1x16x128xf32>
    %2143 = vector.shape_cast %2142 : vector<1x1x16x128xf32> to vector<16x128xf32>
    %2144 = vector.shape_cast %2141 : vector<16x128xf32> to vector<1x1x16x128xf32>
    tpu.vector_store %arg6[%c1_394, %c2_395, %c0_396, %c0_397], %2144 {strides = array<i32>} : memref<2x3x16x128xf32, #tpu.memory_space<vmem>>, vector<1x1x16x128xf32>,
    return
  }
  func.func @transform_0(%arg0: i32) -> (i32, i32, i32, i32) {
    %c0_i32 = arith.constant 0 : i32
    %c0_i32_0 = arith.constant 0 : i32
    %c0_i32_1 = arith.constant 0 : i32
    %c0_i32_2 = arith.constant 0 : i32
    return %arg0, %c0_i32, %c0_i32_0, %c0_i32_1 : i32, i32, i32, i32
  }
  func.func @transform_1(%arg0: i32) -> i32 {
    %c0_i32 = arith.constant 0 : i32
    %c0_i32_0 = arith.constant 0 : i32
    return %c0_i32 : i32
  }
  func.func @transform_2(%arg0: i32) -> i32 {
    %c0_i32 = arith.constant 0 : i32
    %c0_i32_0 = arith.constant 0 : i32
    return %c0_i32 : i32
  }
  func.func @transform_3(%arg0: i32) -> i32 {
    %c0_i32 = arith.constant 0 : i32
    %c0_i32_0 = arith.constant 0 : i32
    return %c0_i32 : i32
  }
  func.func @transform_4(%arg0: i32) -> i32 {
    %c0_i32 = arith.constant 0 : i32
    %c0_i32_0 = arith.constant 0 : i32
    return %c0_i32 : i32
  }
  func.func @transform_5(%arg0: i32) -> (i32, i32, i32, i32) {
    %c0_i32 = arith.constant 0 : i32
    %c0_i32_0 = arith.constant 0 : i32
    %c0_i32_1 = arith.constant 0 : i32
    %c0_i32_2 = arith.constant 0 : i32
    return %arg0, %c0_i32, %c0_i32_0, %c0_i32_1 : i32, i32, i32, i32
  }
}

</mosaic_0001>

<llo_original>
// kernel: tpu_custom_call.1
$region0: #{tpu_custom_call.1}
  #allocation0 [shape = 'u32[]', space=smem, size = 0x4, offset = 0x4, fixed_abs, tag = 'smem constant byte address 0x4 - core index']
  #allocation1 [shape = 'u32[144,128]{1,0:T(1,128)}', space=vmem, size = 0x12000, scoped, tag = 'internal scratch']
  %s0 = inlined_call_operand.hbm [shape: f32[2,3,16,128], index: 0, kind: input, shape index: {}]
  %s1 = inlined_call_operand.vmem [shape: f32[24], index: 1, kind: input, shape index: {}]
  %s2 = inlined_call_operand.vmem [shape: f32[8], index: 2, kind: input, shape index: {}]
  %s3 = inlined_call_operand.vmem [shape: f32[216], index: 3, kind: input, shape index: {}]
  %s4 = inlined_call_operand.vmem [shape: f32[3], index: 4, kind: input, shape index: {}]
  %s5 = inlined_call_operand.hbm [shape: f32[2,3,16,128], index: 5, kind: output, shape index: {}]
  %s6 = sld [smem:[#allocation0]]
  $region50: #{tpu_custom_call.1} parent=0
    _
  %s8 = ssub.s32 1, %s6
  %s9 = scalar_select 0, %s8, %s6
  $region1: #{tpu_custom_call.1} parent=0
    #allocation2 [shape = 'u8[49152]{0}', space=vmem, size = 0xc000, scoped, tag = 'input window, operand 0, single buffered']
    #allocation3 [shape = 's32[1]{0}', space=sflag, size = 0x4, scoped, tag = 'scoped memory for tpu_custom_call.1']
    #allocation4 [shape = 's32[1]{0}', space=sflag, size = 0x4, scoped, tag = 'scoped memory for tpu_custom_call.1']
    #allocation5 [shape = 's32[1]{0}', space=sflag, size = 0x4, scoped, tag = 'scoped memory for tpu_custom_call.1']
    #allocation6 [shape = 'u8[512]{0}', space=smem, size = 0x200, scoped, tag = 'input window, operand 1, single buffered']
    #allocation7 [shape = 'u8[512]{0}', space=smem, size = 0x200, scoped, tag = 'input window, operand 2, single buffered']
    #allocation8 [shape = 's32[1]{0}', space=sflag, size = 0x4, scoped, tag = 'scoped memory for tpu_custom_call.1']
    #allocation9 [shape = 'u8[1024]{0}', space=smem, size = 0x400, scoped, tag = 'input window, operand 3, single buffered']
    #allocation10 [shape = 'u8[512]{0}', space=smem, size = 0x200, scoped, tag = 'input window, operand 4, single buffered']
    #allocation11 [shape = 's32[1]{0}', space=sflag, size = 0x4, scoped, tag = 'scoped memory for tpu_custom_call.1']
    #allocation12 [shape = 'u8[49152]{0}', space=vmem, size = 0xc000, scoped, tag = 'output window, operand 0, single buffered']
    %10 = vsyncpa [#allocation3], 0
    %11 = vsyncpa [#allocation5], 0
    %12 = vsyncpa [#allocation8], 0
    %13 = vsyncpa [#allocation11], 0
    %14 = vsyncpa [#allocation4], 0
    // Predicated region
    $region2: #{tpu_custom_call.1} parent=1 // pred_check
      _
    $region3: #{tpu_custom_call.1} parent=1 // pred_check_branch
      %16 = sbr.rel (0) target = $region5
    $region4: #{tpu_custom_call.1} parent=1 // pred_region
      %s18 = ssub.s32 1536, 1536
      %19 = vsyncadd [#allocation3], %s18
      %s20 = sshll.u32 [#allocation2], 4
      %s21 = int_to_ptr.vmem [resolvable:$true] %s20
      %26 = dma.hbm_to_vmem [thread:$0]  %s0, 1536, %s21, [#allocation3], 128, 128, 8
    $region5: #{tpu_custom_call.1} parent=1 // pred_fallthru
      _
    // Predicated region
    $region6: #{tpu_custom_call.1} parent=1 // pred_check
      _
    $region7: #{tpu_custom_call.1} parent=1 // pred_check_branch
      %28 = sbr.rel (0) target = $region9
    $region8: #{tpu_custom_call.1} parent=1 // pred_region
      %s30 = ssub.s32 16, 16
      %31 = vsyncadd [#allocation5], %s30
      %s33 = sshll.u32 %s1, 4
      %s34 = int_to_ptr.vmem [resolvable:$true] %s33
      %36 = dma.vmem_to_smem %s34, 16, [#allocation6], [#allocation5]
    $region9: #{tpu_custom_call.1} parent=1 // pred_fallthru
      _
    // Predicated region
    $region10: #{tpu_custom_call.1} parent=1 // pred_check
      _
    $region11: #{tpu_custom_call.1} parent=1 // pred_check_branch
      %38 = sbr.rel (0) target = $region13
    $region12: #{tpu_custom_call.1} parent=1 // pred_region
      %s40 = ssub.s32 16, 16
      %41 = vsyncadd [#allocation8], %s40
      %s43 = sshll.u32 %s2, 4
      %s44 = int_to_ptr.vmem [resolvable:$true] %s43
      %46 = dma.vmem_to_smem %s44, 16, [#allocation7], [#allocation8]
    $region13: #{tpu_custom_call.1} parent=1 // pred_fallthru
      _
    // Predicated region
    $region14: #{tpu_custom_call.1} parent=1 // pred_check
      _
    $region15: #{tpu_custom_call.1} parent=1 // pred_check_branch
      %48 = sbr.rel (0) target = $region17
    $region16: #{tpu_custom_call.1} parent=1 // pred_region
      %s50 = ssub.s32 32, 32
      %51 = vsyncadd [#allocation8], %s50
      %s53 = sshll.u32 %s3, 4
      %s54 = int_to_ptr.vmem [resolvable:$true] %s53
      %56 = dma.vmem_to_smem %s54, 32, [#allocation9], [#allocation8]
    $region17: #{tpu_custom_call.1} parent=1 // pred_fallthru
      _
    // Predicated region
    $region18: #{tpu_custom_call.1} parent=1 // pred_check
      _
    $region19: #{tpu_custom_call.1} parent=1 // pred_check_branch
      %58 = sbr.rel (0) target = $region21
    $region20: #{tpu_custom_call.1} parent=1 // pred_region
      %s60 = ssub.s32 16, 16
      %61 = vsyncadd [#allocation11], %s60
      %s63 = sshll.u32 %s4, 4
      %s64 = int_to_ptr.vmem [resolvable:$true] %s63
      %66 = dma.vmem_to_smem %s64, 16, [#allocation10], [#allocation11]
    $region21: #{tpu_custom_call.1} parent=1 // pred_fallthru
      _
    // Predicated region
    $region22: #{tpu_custom_call.1} parent=1 // pred_check
      _
    $region23: #{tpu_custom_call.1} parent=1 // pred_check_branch
      %68 = sbr.rel (0) target = $region25
    $region24: #{tpu_custom_call.1} parent=1 // pred_region
      %69 = dma.done [#allocation3], 1536
    $region25: #{tpu_custom_call.1} parent=1 // pred_fallthru
      _
    // Predicated region
    $region26: #{tpu_custom_call.1} parent=1 // pred_check
      _
    $region27: #{tpu_custom_call.1} parent=1 // pred_check_branch
      %71 = sbr.rel (0) target = $region29
    $region28: #{tpu_custom_call.1} parent=1 // pred_region
      %72 = dma.done [#allocation5], 16
    $region29: #{tpu_custom_call.1} parent=1 // pred_fallthru
      _
    // Predicated region
    $region30: #{tpu_custom_call.1} parent=1 // pred_check
      _
    $region31: #{tpu_custom_call.1} parent=1 // pred_check_branch
      %74 = sbr.rel (0) target = $region33
    $region32: #{tpu_custom_call.1} parent=1 // pred_region
      %75 = dma.done [#allocation8], 16
    $region33: #{tpu_custom_call.1} parent=1 // pred_fallthru
      _
    // Predicated region
    $region34: #{tpu_custom_call.1} parent=1 // pred_check
      _
    $region35: #{tpu_custom_call.1} parent=1 // pred_check_branch
      %77 = sbr.rel (0) target = $region37
    $region36: #{tpu_custom_call.1} parent=1 // pred_region
      %78 = dma.done [#allocation8], 32
    $region37: #{tpu_custom_call.1} parent=1 // pred_fallthru
      _
    // Predicated region
    $region38: #{tpu_custom_call.1} parent=1 // pred_check
      _
    $region39: #{tpu_custom_call.1} parent=1 // pred_check_branch
      %80 = sbr.rel (0) target = $region41
    $region40: #{tpu_custom_call.1} parent=1 // pred_region
      %81 = dma.done [#allocation11], 16
    $region41: #{tpu_custom_call.1} parent=1 // pred_fallthru
      _
    %82 = sfence
    %v83 = vlaneseq
    %v84 = vshrl.u32 %v83, 7
    %v85 = vadd.s32 %v84, 8
    %v86 = vlaneseq
    %v87 = vand.u32 %v86, 127
    %vm88 = vcmp.lt.s32.totalorder %v84, 15
    %vm89 = vcmp.lt.s32.totalorder %v85, 15
    %vm90 = vcmp.gt.s32.totalorder %v84, 0
    %vm91 = vcmp.gt.s32.totalorder %v85, 0
    %vm92 = vcmp.lt.s32.totalorder %v87, 127
    %vm93 = vcmp.gt.s32.totalorder %v87, 0
    %v94 = vld [vmem:[#allocation2] sm:$0xff]
    %v95 = vld [vmem:[#allocation2 + $0x8] sm:$0xff]
    %s96 = scalar_lea.vmem [#allocation2], 16
    %v97 = vld [vmem:[%s96] sm:$0xff]
    %v98 = vld [vmem:[%s96 + $0x8] sm:$0xff]
    %s99 = scalar_lea.vmem [#allocation2], 32
    %v100 = vld [vmem:[%s99] sm:$0xff]
    %v101 = vld [vmem:[%s99 + $0x8] sm:$0xff]
    %s102 = sld [smem:[#allocation6]]
    %v103 = vstv %s102
    %v104 = vmul.f32 %v94, %v103
    %v105 = vmul.f32 %v95, %v103
    %s106 = sld [smem:[#allocation6 + $0x8]]
    %v107 = vstv %s106
    %v108 = vmul.f32 %v97, %v107
    %v109 = vmul.f32 %v98, %v107
    %v110 = vadd.f32 %v104, %v108
    %v111 = vadd.f32 %v105, %v109
    %s112 = sld [smem:[#allocation6 + $0x10]]
    %v113 = vstv %s112
    %v114 = vmul.f32 %v100, %v113
    %v115 = vmul.f32 %v101, %v113
    %v116 = vadd.f32 %v110, %v114
    %v117 = vadd.f32 %v111, %v115
    %s118 = sld [smem:[#allocation7]]
    %v119 = vstv %s118
    %v120 = vadd.f32 %v116, %v119
    %v121 = vadd.f32 %v117, %v119
    %v122 = vmax.f32 %v120, 0.0
    %v123 = vmax.f32 %v121, 0.0
    %s124 = sld [smem:[#allocation6 + $0x1]]
    %v125 = vstv %s124
    %v126 = vmul.f32 %v94, %v125
    %v127 = vmul.f32 %v95, %v125
    %s128 = sld [smem:[#allocation6 + $0x9]]
    %v129 = vstv %s128
    %v130 = vmul.f32 %v97, %v129
    %v131 = vmul.f32 %v98, %v129
    %v132 = vadd.f32 %v126, %v130
    %v133 = vadd.f32 %v127, %v131
    %s134 = sld [smem:[#allocation6 + $0x11]]
    %v135 = vstv %s134
    %v136 = vmul.f32 %v100, %v135
    %v137 = vmul.f32 %v101, %v135
    %v138 = vadd.f32 %v132, %v136
    %v139 = vadd.f32 %v133, %v137
    %s140 = sld [smem:[#allocation7 + $0x1]]
    %v141 = vstv %s140
    %v142 = vadd.f32 %v138, %v141
    %v143 = vadd.f32 %v139, %v141
    %v144 = vmax.f32 %v142, 0.0
    %v145 = vmax.f32 %v143, 0.0
    %s146 = sld [smem:[#allocation6 + $0x2]]
    %v147 = vstv %s146
    %v148 = vmul.f32 %v94, %v147
    %v149 = vmul.f32 %v95, %v147
    %s150 = sld [smem:[#allocation6 + $0xa]]
    %v151 = vstv %s150
    %v152 = vmul.f32 %v97, %v151
    %v153 = vmul.f32 %v98, %v151
    %v154 = vadd.f32 %v148, %v152
    %v155 = vadd.f32 %v149, %v153
    %s156 = sld [smem:[#allocation6 + $0x12]]
    %v157 = vstv %s156
    %v158 = vmul.f32 %v100, %v157
    %v159 = vmul.f32 %v101, %v157
    %v160 = vadd.f32 %v154, %v158
    %v161 = vadd.f32 %v155, %v159
    %s162 = sld [smem:[#allocation7 + $0x2]]
    %v163 = vstv %s162
    %v164 = vadd.f32 %v160, %v163
    %v165 = vadd.f32 %v161, %v163
    %v166 = vmax.f32 %v164, 0.0
    %v167 = vmax.f32 %v165, 0.0
    %s168 = sld [smem:[#allocation6 + $0x3]]
    %v169 = vstv %s168
    %v170 = vmul.f32 %v94, %v169
    %v171 = vmul.f32 %v95, %v169
    %s172 = sld [smem:[#allocation6 + $0xb]]
    %v173 = vstv %s172
    %v174 = vmul.f32 %v97, %v173
    %v175 = vmul.f32 %v98, %v173
    %v176 = vadd.f32 %v170, %v174
    %v177 = vadd.f32 %v171, %v175
    %s178 = sld [smem:[#allocation6 + $0x13]]
    %v179 = vstv %s178
    %v180 = vmul.f32 %v100, %v179
    %v181 = vmul.f32 %v101, %v179
    %v182 = vadd.f32 %v176, %v180
    %v183 = vadd.f32 %v177, %v181
    %s184 = sld [smem:[#allocation7 + $0x3]]
    %v185 = vstv %s184
    %v186 = vadd.f32 %v182, %v185
    %v187 = vadd.f32 %v183, %v185
    %v188 = vmax.f32 %v186, 0.0
    %v189 = vmax.f32 %v187, 0.0
    %s190 = sld [smem:[#allocation6 + $0x4]]
    %v191 = vstv %s190
    %v192 = vmul.f32 %v94, %v191
    %v193 = vmul.f32 %v95, %v191
    %s194 = sld [smem:[#allocation6 + $0xc]]
    %v195 = vstv %s194
    %v196 = vmul.f32 %v97, %v195
    %v197 = vmul.f32 %v98, %v195
    %v198 = vadd.f32 %v192, %v196
    %v199 = vadd.f32 %v193, %v197
    %s200 = sld [smem:[#allocation6 + $0x14]]
    %v201 = vstv %s200
    %v202 = vmul.f32 %v100, %v201
    %v203 = vmul.f32 %v101, %v201
    %v204 = vadd.f32 %v198, %v202
    %v205 = vadd.f32 %v199, %v203
    %s206 = sld [smem:[#allocation7 + $0x4]]
    %v207 = vstv %s206
    %v208 = vadd.f32 %v204, %v207
    %v209 = vadd.f32 %v205, %v207
    %v210 = vmax.f32 %v208, 0.0
    %v211 = vmax.f32 %v209, 0.0
    %s212 = sld [smem:[#allocation6 + $0x5]]
    %v213 = vstv %s212
    %v214 = vmul.f32 %v94, %v213
    %v215 = vmul.f32 %v95, %v213
    %s216 = sld [smem:[#allocation6 + $0xd]]
    %v217 = vstv %s216
    %v218 = vmul.f32 %v97, %v217
    %v219 = vmul.f32 %v98, %v217
    %v220 = vadd.f32 %v214, %v218
    %v221 = vadd.f32 %v215, %v219
    %s222 = sld [smem:[#allocation6 + $0x15]]
    %v223 = vstv %s222
    %v224 = vmul.f32 %v100, %v223
    %v225 = vmul.f32 %v101, %v223
    %v226 = vadd.f32 %v220, %v224
    %v227 = vadd.f32 %v221, %v225
    %s228 = sld [smem:[#allocation7 + $0x5]]
    %v229 = vstv %s228
    %v230 = vadd.f32 %v226, %v229
    %v231 = vadd.f32 %v227, %v229
    %v232 = vmax.f32 %v230, 0.0
    %v233 = vmax.f32 %v231, 0.0
    %s234 = sld [smem:[#allocation6 + $0x6]]
    %v235 = vstv %s234
    %v236 = vmul.f32 %v94, %v235
    %v237 = vmul.f32 %v95, %v235
    %s238 = sld [smem:[#allocation6 + $0xe]]
    %v239 = vstv %s238
    %v240 = vmul.f32 %v97, %v239
    %v241 = vmul.f32 %v98, %v239
    %v242 = vadd.f32 %v236, %v240
    %v243 = vadd.f32 %v237, %v241
    %s244 = sld [smem:[#allocation6 + $0x16]]
    %v245 = vstv %s244
    %v246 = vmul.f32 %v100, %v245
    %v247 = vmul.f32 %v101, %v245
    %v248 = vadd.f32 %v242, %v246
    %v249 = vadd.f32 %v243, %v247
    %s250 = sld [smem:[#allocation7 + $0x6]]
    %v251 = vstv %s250
    %v252 = vadd.f32 %v248, %v251
    %v253 = vadd.f32 %v249, %v251
    %v254 = vmax.f32 %v252, 0.0
    %v255 = vmax.f32 %v253, 0.0
    %s256 = sld [smem:[#allocation6 + $0x7]]
    %v257 = vstv %s256
    %v258 = vmul.f32 %v94, %v257
    %v259 = vmul.f32 %v95, %v257
    %s260 = sld [smem:[#allocation6 + $0xf]]
    %v261 = vstv %s260
    %v262 = vmul.f32 %v97, %v261
    %v263 = vmul.f32 %v98, %v261
    %v264 = vadd.f32 %v258, %v262
    %v265 = vadd.f32 %v259, %v263
    %s266 = sld [smem:[#allocation6 + $0x17]]
    %v267 = vstv %s266
    %v268 = vmul.f32 %v100, %v267
    %v269 = vmul.f32 %v101, %v267
    %v270 = vadd.f32 %v264, %v268
    %v271 = vadd.f32 %v265, %v269
    %s272 = sld [smem:[#allocation7 + $0x7]]
    %v273 = vstv %s272
    %v274 = vadd.f32 %v270, %v273
    %v275 = vadd.f32 %v271, %v273
    %v276 = vmax.f32 %v274, 0.0
    %v277 = vmax.f32 %v275, 0.0
    %s278 = sld [smem:[#allocation9]]
    %v279 = vstv %s278
    %v280 = vmul.f32 %v122, %v279
    %v281 = vmul.f32 %v123, %v279
    %s282 = sld [smem:[#allocation9 + $0x3]]
    %v283 = vstv %s282
    %v284 = vmul.f32 %v144, %v283
    %v285 = vmul.f32 %v145, %v283
    %v286 = vadd.f32 %v280, %v284
    %v287 = vadd.f32 %v281, %v285
    %s288 = sld [smem:[#allocation9 + $0x6]]
    %v289 = vstv %s288
    %v290 = vmul.f32 %v166, %v289
    %v291 = vmul.f32 %v167, %v289
    %v292 = vadd.f32 %v286, %v290
    %v293 = vadd.f32 %v287, %v291
    %s294 = sld [smem:[#allocation9 + $0x9]]
    %v295 = vstv %s294
    %v296 = vmul.f32 %v188, %v295
    %v297 = vmul.f32 %v189, %v295
    %v298 = vadd.f32 %v292, %v296
    %v299 = vadd.f32 %v293, %v297
    %s300 = sld [smem:[#allocation9 + $0xc]]
    %v301 = vstv %s300
    %v302 = vmul.f32 %v210, %v301
    %v303 = vmul.f32 %v211, %v301
    %v304 = vadd.f32 %v298, %v302
    %v305 = vadd.f32 %v299, %v303
    %s306 = sld [smem:[#allocation9 + $0xf]]
    %v307 = vstv %s306
    %v308 = vmul.f32 %v232, %v307
    %v309 = vmul.f32 %v233, %v307
    %v310 = vadd.f32 %v304, %v308
    %v311 = vadd.f32 %v305, %v309
    %s312 = sld [smem:[#allocation9 + $0x12]]
    %v313 = vstv %s312
    %v314 = vmul.f32 %v254, %v313
    %v315 = vmul.f32 %v255, %v313
    %v316 = vadd.f32 %v310, %v314
    %v317 = vadd.f32 %v311, %v315
    %s318 = sld [smem:[#allocation9 + $0x15]]
    %v319 = vstv %s318
    %v320 = vmul.f32 %v276, %v319
    %v321 = vmul.f32 %v277, %v319
    %v322 = vadd.f32 %v316, %v320
    %v323 = vadd.f32 %v317, %v321
    %v324 = vrot.slane %v322, 7
    %v325 = vrot.slane %v323, 7
    %vm326 = vcmp.lt.s32.totalorder %v84, 1
    %v327 = vsel %vm326, %v324, %v325
    %v328 = vsel %vm326, %v325, %v324
    %v329 = vsel %vm90, %v328, 0.0
    %v330 = vsel %vm91, %v327, 0.0
    %s331 = sld [smem:[#allocation9 + $0x48]]
    %v332 = vstv %s331
    %v333 = vmul.f32 %v122, %v332
    %v334 = vmul.f32 %v123, %v332
    %s335 = sld [smem:[#allocation9 + $0x4b]]
    %v336 = vstv %s335
    %v337 = vmul.f32 %v144, %v336
    %v338 = vmul.f32 %v145, %v336
    %v339 = vadd.f32 %v333, %v337
    %v340 = vadd.f32 %v334, %v338
    %s341 = sld [smem:[#allocation9 + $0x4e]]
    %v342 = vstv %s341
    %v343 = vmul.f32 %v166, %v342
    %v344 = vmul.f32 %v167, %v342
    %v345 = vadd.f32 %v339, %v343
    %v346 = vadd.f32 %v340, %v344
    %s347 = sld [smem:[#allocation9 + $0x51]]
    %v348 = vstv %s347
    %v349 = vmul.f32 %v188, %v348
    %v350 = vmul.f32 %v189, %v348
    %v351 = vadd.f32 %v345, %v349
    %v352 = vadd.f32 %v346, %v350
    %s353 = sld [smem:[#allocation9 + $0x54]]
    %v354 = vstv %s353
    %v355 = vmul.f32 %v210, %v354
    %v356 = vmul.f32 %v211, %v354
    %v357 = vadd.f32 %v351, %v355
    %v358 = vadd.f32 %v352, %v356
    %s359 = sld [smem:[#allocation9 + $0x57]]
    %v360 = vstv %s359
    %v361 = vmul.f32 %v232, %v360
    %v362 = vmul.f32 %v233, %v360
    %v363 = vadd.f32 %v357, %v361
    %v364 = vadd.f32 %v358, %v362
    %s365 = sld [smem:[#allocation9 + $0x5a]]
    %v366 = vstv %s365
    %v367 = vmul.f32 %v254, %v366
    %v368 = vmul.f32 %v255, %v366
    %v369 = vadd.f32 %v363, %v367
    %v370 = vadd.f32 %v364, %v368
    %s371 = sld [smem:[#allocation9 + $0x5d]]
    %v372 = vstv %s371
    %v373 = vmul.f32 %v276, %v372
    %v374 = vmul.f32 %v277, %v372
    %v375 = vadd.f32 %v369, %v373
    %v376 = vadd.f32 %v370, %v374
    %v377 = vadd.f32 %v329, %v375
    %v378 = vadd.f32 %v330, %v376
    %s379 = sld [smem:[#allocation9 + $0x90]]
    %v380 = vstv %s379
    %v381 = vmul.f32 %v122, %v380
    %v382 = vmul.f32 %v123, %v380
    %s383 = sld [smem:[#allocation9 + $0x93]]
    %v384 = vstv %s383
    %v385 = vmul.f32 %v144, %v384
    %v386 = vmul.f32 %v145, %v384
    %v387 = vadd.f32 %v381, %v385
    %v388 = vadd.f32 %v382, %v386
    %s389 = sld [smem:[#allocation9 + $0x96]]
    %v390 = vstv %s389
    %v391 = vmul.f32 %v166, %v390
    %v392 = vmul.f32 %v167, %v390
    %v393 = vadd.f32 %v387, %v391
    %v394 = vadd.f32 %v388, %v392
    %s395 = sld [smem:[#allocation9 + $0x99]]
    %v396 = vstv %s395
    %v397 = vmul.f32 %v188, %v396
    %v398 = vmul.f32 %v189, %v396
    %v399 = vadd.f32 %v393, %v397
    %v400 = vadd.f32 %v394, %v398
    %s401 = sld [smem:[#allocation9 + $0x9c]]
    %v402 = vstv %s401
    %v403 = vmul.f32 %v210, %v402
    %v404 = vmul.f32 %v211, %v402
    %v405 = vadd.f32 %v399, %v403
    %v406 = vadd.f32 %v400, %v404
    %s407 = sld [smem:[#allocation9 + $0x9f]]
    %v408 = vstv %s407
    %v409 = vmul.f32 %v232, %v408
    %v410 = vmul.f32 %v233, %v408
    %v411 = vadd.f32 %v405, %v409
    %v412 = vadd.f32 %v406, %v410
    %s413 = sld [smem:[#allocation9 + $0xa2]]
    %v414 = vstv %s413
    %v415 = vmul.f32 %v254, %v414
    %v416 = vmul.f32 %v255, %v414
    %v417 = vadd.f32 %v411, %v415
    %v418 = vadd.f32 %v412, %v416
    %s419 = sld [smem:[#allocation9 + $0xa5]]
    %v420 = vstv %s419
    %v421 = vmul.f32 %v276, %v420
    %v422 = vmul.f32 %v277, %v420
    %v423 = vadd.f32 %v417, %v421
    %v424 = vadd.f32 %v418, %v422
    %v425 = vrot.slane %v423, 1
    %v426 = vrot.slane %v424, 1
    %vm427 = vcmp.lt.s32.totalorder %v84, 7
    %v428 = vsel %vm427, %v425, %v426
    %v429 = vsel %vm427, %v426, %v425
    %v430 = vsel %vm88, %v428, 0.0
    %v431 = vsel %vm89, %v429, 0.0
    %v432 = vadd.f32 %v377, %v430
    %v433 = vadd.f32 %v378, %v431
    %434 = vrot.lane.b32.xlu0 %v432, 1
    %v435 = vpop.permute.xlu0 %434
    %436 = vrot.lane.b32.xlu0 %v433, 1
    %v437 = vpop.permute.xlu0 %436
    %v438 = vsel %vm93, %v435, 0.0
    %v439 = vsel %vm93, %v437, 0.0
    %s440 = sld [smem:[#allocation9 + $0x18]]
    %v441 = vstv %s440
    %v442 = vmul.f32 %v122, %v441
    %v443 = vmul.f32 %v123, %v441
    %s444 = sld [smem:[#allocation9 + $0x1b]]
    %v445 = vstv %s444
    %v446 = vmul.f32 %v144, %v445
    %v447 = vmul.f32 %v145, %v445
    %v448 = vadd.f32 %v442, %v446
    %v449 = vadd.f32 %v443, %v447
    %s450 = sld [smem:[#allocation9 + $0x1e]]
    %v451 = vstv %s450
    %v452 = vmul.f32 %v166, %v451
    %v453 = vmul.f32 %v167, %v451
    %v454 = vadd.f32 %v448, %v452
    %v455 = vadd.f32 %v449, %v453
    %s456 = sld [smem:[#allocation9 + $0x21]]
    %v457 = vstv %s456
    %v458 = vmul.f32 %v188, %v457
    %v459 = vmul.f32 %v189, %v457
    %v460 = vadd.f32 %v454, %v458
    %v461 = vadd.f32 %v455, %v459
    %s462 = sld [smem:[#allocation9 + $0x24]]
    %v463 = vstv %s462
    %v464 = vmul.f32 %v210, %v463
    %v465 = vmul.f32 %v211, %v463
    %v466 = vadd.f32 %v460, %v464
    %v467 = vadd.f32 %v461, %v465
    %s468 = sld [smem:[#allocation9 + $0x27]]
    %v469 = vstv %s468
    %v470 = vmul.f32 %v232, %v469
    %v471 = vmul.f32 %v233, %v469
    %v472 = vadd.f32 %v466, %v470
    %v473 = vadd.f32 %v467, %v471
    %s474 = sld [smem:[#allocation9 + $0x2a]]
    %v475 = vstv %s474
    %v476 = vmul.f32 %v254, %v475
    %v477 = vmul.f32 %v255, %v475
    %v478 = vadd.f32 %v472, %v476
    %v479 = vadd.f32 %v473, %v477
    %s480 = sld [smem:[#allocation9 + $0x2d]]
    %v481 = vstv %s480
    %v482 = vmul.f32 %v276, %v481
    %v483 = vmul.f32 %v277, %v481
    %v484 = vadd.f32 %v478, %v482
    %v485 = vadd.f32 %v479, %v483
    %v486 = vrot.slane %v484, 7
    %v487 = vrot.slane %v485, 7
    %v488 = vsel %vm326, %v486, %v487
    %v489 = vsel %vm326, %v487, %v486
    %v490 = vsel %vm90, %v489, 0.0
    %v491 = vsel %vm91, %v488, 0.0
    %s492 = sld [smem:[#allocation9 + $0x60]]
    %v493 = vstv %s492
    %v494 = vmul.f32 %v122, %v493
    %v495 = vmul.f32 %v123, %v493
    %s496 = sld [smem:[#allocation9 + $0x63]]
    %v497 = vstv %s496
    %v498 = vmul.f32 %v144, %v497
    %v499 = vmul.f32 %v145, %v497
    %v500 = vadd.f32 %v494, %v498
    %v501 = vadd.f32 %v495, %v499
    %s502 = sld [smem:[#allocation9 + $0x66]]
    %v503 = vstv %s502
    %v504 = vmul.f32 %v166, %v503
    %v505 = vmul.f32 %v167, %v503
    %v506 = vadd.f32 %v500, %v504
    %v507 = vadd.f32 %v501, %v505
    %s508 = sld [smem:[#allocation9 + $0x69]]
    %v509 = vstv %s508
    %v510 = vmul.f32 %v188, %v509
    %v511 = vmul.f32 %v189, %v509
    %v512 = vadd.f32 %v506, %v510
    %v513 = vadd.f32 %v507, %v511
    %s514 = sld [smem:[#allocation9 + $0x6c]]
    %v515 = vstv %s514
    %v516 = vmul.f32 %v210, %v515
    %v517 = vmul.f32 %v211, %v515
    %v518 = vadd.f32 %v512, %v516
    %v519 = vadd.f32 %v513, %v517
    %s520 = sld [smem:[#allocation9 + $0x6f]]
    %v521 = vstv %s520
    %v522 = vmul.f32 %v232, %v521
    %v523 = vmul.f32 %v233, %v521
    %v524 = vadd.f32 %v518, %v522
    %v525 = vadd.f32 %v519, %v523
    %s526 = sld [smem:[#allocation9 + $0x72]]
    %v527 = vstv %s526
    %v528 = vmul.f32 %v254, %v527
    %v529 = vmul.f32 %v255, %v527
    %v530 = vadd.f32 %v524, %v528
    %v531 = vadd.f32 %v525, %v529
    %s532 = sld [smem:[#allocation9 + $0x75]]
    %v533 = vstv %s532
    %v534 = vmul.f32 %v276, %v533
    %v535 = vmul.f32 %v277, %v533
    %v536 = vadd.f32 %v530, %v534
    %v537 = vadd.f32 %v531, %v535
    %v538 = vadd.f32 %v490, %v536
    %v539 = vadd.f32 %v491, %v537
    %s540 = sld [smem:[#allocation9 + $0xa8]]
    %v541 = vstv %s540
    %v542 = vmul.f32 %v122, %v541
    %v543 = vmul.f32 %v123, %v541
    %s544 = sld [smem:[#allocation9 + $0xab]]
    %v545 = vstv %s544
    %v546 = vmul.f32 %v144, %v545
    %v547 = vmul.f32 %v145, %v545
    %v548 = vadd.f32 %v542, %v546
    %v549 = vadd.f32 %v543, %v547
    %s550 = sld [smem:[#allocation9 + $0xae]]
    %v551 = vstv %s550
    %v552 = vmul.f32 %v166, %v551
    %v553 = vmul.f32 %v167, %v551
    %v554 = vadd.f32 %v548, %v552
    %v555 = vadd.f32 %v549, %v553
    %s556 = sld [smem:[#allocation9 + $0xb1]]
    %v557 = vstv %s556
    %v558 = vmul.f32 %v188, %v557
    %v559 = vmul.f32 %v189, %v557
    %v560 = vadd.f32 %v554, %v558
    %v561 = vadd.f32 %v555, %v559
    %s562 = sld [smem:[#allocation9 + $0xb4]]
    %v563 = vstv %s562
    %v564 = vmul.f32 %v210, %v563
    %v565 = vmul.f32 %v211, %v563
    %v566 = vadd.f32 %v560, %v564
    %v567 = vadd.f32 %v561, %v565
    %s568 = sld [smem:[#allocation9 + $0xb7]]
    %v569 = vstv %s568
    %v570 = vmul.f32 %v232, %v569
    %v571 = vmul.f32 %v233, %v569
    %v572 = vadd.f32 %v566, %v570
    %v573 = vadd.f32 %v567, %v571
    %s574 = sld [smem:[#allocation9 + $0xba]]
    %v575 = vstv %s574
    %v576 = vmul.f32 %v254, %v575
    %v577 = vmul.f32 %v255, %v575
    %v578 = vadd.f32 %v572, %v576
    %v579 = vadd.f32 %v573, %v577
    %s580 = sld [smem:[#allocation9 + $0xbd]]
    %v581 = vstv %s580
    %v582 = vmul.f32 %v276, %v581
    %v583 = vmul.f32 %v277, %v581
    %v584 = vadd.f32 %v578, %v582
    %v585 = vadd.f32 %v579, %v583
    %v586 = vrot.slane %v584, 1
    %v587 = vrot.slane %v585, 1
    %v588 = vsel %vm427, %v586, %v587
    %v589 = vsel %vm427, %v587, %v586
    %v590 = vsel %vm88, %v588, 0.0
    %v591 = vsel %vm89, %v589, 0.0
    %v592 = vadd.f32 %v538, %v590
    %v593 = vadd.f32 %v539, %v591
    %v594 = vadd.f32 %v438, %v592
    %v595 = vadd.f32 %v439, %v593
    %s596 = sld [smem:[#allocation9 + $0x30]]
    %v597 = vstv %s596
    %v598 = vmul.f32 %v122, %v597
    %v599 = vmul.f32 %v123, %v597
    %s600 = sld [smem:[#allocation9 + $0x33]]
    %v601 = vstv %s600
    %v602 = vmul.f32 %v144, %v601
    %v603 = vmul.f32 %v145, %v601
    %v604 = vadd.f32 %v598, %v602
    %v605 = vadd.f32 %v599, %v603
    %s606 = sld [smem:[#allocation9 + $0x36]]
    %v607 = vstv %s606
    %v608 = vmul.f32 %v166, %v607
    %v609 = vmul.f32 %v167, %v607
    %v610 = vadd.f32 %v604, %v608
    %v611 = vadd.f32 %v605, %v609
    %s612 = sld [smem:[#allocation9 + $0x39]]
    %v613 = vstv %s612
    %v614 = vmul.f32 %v188, %v613
    %v615 = vmul.f32 %v189, %v613
    %v616 = vadd.f32 %v610, %v614
    %v617 = vadd.f32 %v611, %v615
    %s618 = sld [smem:[#allocation9 + $0x3c]]
    %v619 = vstv %s618
    %v620 = vmul.f32 %v210, %v619
    %v621 = vmul.f32 %v211, %v619
    %v622 = vadd.f32 %v616, %v620
    %v623 = vadd.f32 %v617, %v621
    %s624 = sld [smem:[#allocation9 + $0x3f]]
    %v625 = vstv %s624
    %v626 = vmul.f32 %v232, %v625
    %v627 = vmul.f32 %v233, %v625
    %v628 = vadd.f32 %v622, %v626
    %v629 = vadd.f32 %v623, %v627
    %s630 = sld [smem:[#allocation9 + $0x42]]
    %v631 = vstv %s630
    %v632 = vmul.f32 %v254, %v631
    %v633 = vmul.f32 %v255, %v631
    %v634 = vadd.f32 %v628, %v632
    %v635 = vadd.f32 %v629, %v633
    %s636 = sld [smem:[#allocation9 + $0x45]]
    %v637 = vstv %s636
    %v638 = vmul.f32 %v276, %v637
    %v639 = vmul.f32 %v277, %v637
    %v640 = vadd.f32 %v634, %v638
    %v641 = vadd.f32 %v635, %v639
    %v642 = vrot.slane %v640, 7
    %v643 = vrot.slane %v641, 7
    %v644 = vsel %vm326, %v642, %v643
    %v645 = vsel %vm326, %v643, %v642
    %v646 = vsel %vm90, %v645, 0.0
    %v647 = vsel %vm91, %v644, 0.0
    %s648 = sld [smem:[#allocation9 + $0x78]]
    %v649 = vstv %s648
    %v650 = vmul.f32 %v122, %v649
    %v651 = vmul.f32 %v123, %v649
    %s652 = sld [smem:[#allocation9 + $0x7b]]
    %v653 = vstv %s652
    %v654 = vmul.f32 %v144, %v653
    %v655 = vmul.f32 %v145, %v653
    %v656 = vadd.f32 %v650, %v654
    %v657 = vadd.f32 %v651, %v655
    %s658 = sld [smem:[#allocation9 + $0x7e]]
    %v659 = vstv %s658
    %v660 = vmul.f32 %v166, %v659
    %v661 = vmul.f32 %v167, %v659
    %v662 = vadd.f32 %v656, %v660
    %v663 = vadd.f32 %v657, %v661
    %s664 = sld [smem:[#allocation9 + $0x81]]
    %v665 = vstv %s664
    %v666 = vmul.f32 %v188, %v665
    %v667 = vmul.f32 %v189, %v665
    %v668 = vadd.f32 %v662, %v666
    %v669 = vadd.f32 %v663, %v667
    %s670 = sld [smem:[#allocation9 + $0x84]]
    %v671 = vstv %s670
    %v672 = vmul.f32 %v210, %v671
    %v673 = vmul.f32 %v211, %v671
    %v674 = vadd.f32 %v668, %v672
    %v675 = vadd.f32 %v669, %v673
    %s676 = sld [smem:[#allocation9 + $0x87]]
    %v677 = vstv %s676
    %v678 = vmul.f32 %v232, %v677
    %v679 = vmul.f32 %v233, %v677
    %v680 = vadd.f32 %v674, %v678
    %v681 = vadd.f32 %v675, %v679
    %s682 = sld [smem:[#allocation9 + $0x8a]]
    %v683 = vstv %s682
    %v684 = vmul.f32 %v254, %v683
    %v685 = vmul.f32 %v255, %v683
    %v686 = vadd.f32 %v680, %v684
    %v687 = vadd.f32 %v681, %v685
    %s688 = sld [smem:[#allocation9 + $0x8d]]
    %v689 = vstv %s688
    %v690 = vmul.f32 %v276, %v689
    %v691 = vmul.f32 %v277, %v689
    %v692 = vadd.f32 %v686, %v690
    %v693 = vadd.f32 %v687, %v691
    %v694 = vadd.f32 %v646, %v692
    %v695 = vadd.f32 %v647, %v693
    %s696 = sld [smem:[#allocation9 + $0xc0]]
    %v697 = vstv %s696
    %v698 = vmul.f32 %v122, %v697
    %v699 = vmul.f32 %v123, %v697
    %s700 = sld [smem:[#allocation9 + $0xc3]]
    %v701 = vstv %s700
    %v702 = vmul.f32 %v144, %v701
    %v703 = vmul.f32 %v145, %v701
    %v704 = vadd.f32 %v698, %v702
    %v705 = vadd.f32 %v699, %v703
    %s706 = sld [smem:[#allocation9 + $0xc6]]
    %v707 = vstv %s706
    %v708 = vmul.f32 %v166, %v707
    %v709 = vmul.f32 %v167, %v707
    %v710 = vadd.f32 %v704, %v708
    %v711 = vadd.f32 %v705, %v709
    %s712 = sld [smem:[#allocation9 + $0xc9]]
    %v713 = vstv %s712
    %v714 = vmul.f32 %v188, %v713
    %v715 = vmul.f32 %v189, %v713
    %v716 = vadd.f32 %v710, %v714
    %v717 = vadd.f32 %v711, %v715
    %s718 = sld [smem:[#allocation9 + $0xcc]]
    %v719 = vstv %s718
    %v720 = vmul.f32 %v210, %v719
    %v721 = vmul.f32 %v211, %v719
    %v722 = vadd.f32 %v716, %v720
    %v723 = vadd.f32 %v717, %v721
    %s724 = sld [smem:[#allocation9 + $0xcf]]
    %v725 = vstv %s724
    %v726 = vmul.f32 %v232, %v725
    %v727 = vmul.f32 %v233, %v725
    %v728 = vadd.f32 %v722, %v726
    %v729 = vadd.f32 %v723, %v727
    %s730 = sld [smem:[#allocation9 + $0xd2]]
    %v731 = vstv %s730
    %v732 = vmul.f32 %v254, %v731
    %v733 = vmul.f32 %v255, %v731
    %v734 = vadd.f32 %v728, %v732
    %v735 = vadd.f32 %v729, %v733
    %s736 = sld [smem:[#allocation9 + $0xd5]]
    %v737 = vstv %s736
    %v738 = vmul.f32 %v276, %v737
    %v739 = vmul.f32 %v277, %v737
    %v740 = vadd.f32 %v734, %v738
    %v741 = vadd.f32 %v735, %v739
    %v742 = vrot.slane %v740, 1
    %v743 = vrot.slane %v741, 1
    %v744 = vsel %vm427, %v742, %v743
    %v745 = vsel %vm427, %v743, %v742
    %v746 = vsel %vm88, %v744, 0.0
    %v747 = vsel %vm89, %v745, 0.0
    %v748 = vadd.f32 %v694, %v746
    %v749 = vadd.f32 %v695, %v747
    %750 = vrot.lane.b32.xlu0 %v748, 127
    %v751 = vpop.permute.xlu0 %750
    %752 = vrot.lane.b32.xlu0 %v749, 127
    %v753 = vpop.permute.xlu0 %752
    %v754 = vsel %vm92, %v751, 0.0
    %v755 = vsel %vm92, %v753, 0.0
    %v756 = vadd.f32 %v594, %v754
    %v757 = vadd.f32 %v595, %v755
    %s758 = sld [smem:[#allocation10]]
    %v759 = vstv %s758
    %v760 = vadd.f32 %v756, %v759
    %v761 = vadd.f32 %v757, %v759
    %v762 = vtanh.pop %v760
    %v763 = vtanh.pop %v761
    %v764 = vadd.f32 %v762, %v94
    %v765 = vadd.f32 %v763, %v95
    %766 = vst [vmem:[#allocation12] sm:$0xff] %v764
    %767 = vst [vmem:[#allocation12 + $0x8] sm:$0xff] %v765
    %s768 = sld [smem:[#allocation9 + $0x1]]
    %v769 = vstv %s768
    %v770 = vmul.f32 %v122, %v769
    %v771 = vmul.f32 %v123, %v769
    %s772 = sld [smem:[#allocation9 + $0x4]]
    %v773 = vstv %s772
    %v774 = vmul.f32 %v144, %v773
    %v775 = vmul.f32 %v145, %v773
    %v776 = vadd.f32 %v770, %v774
    %v777 = vadd.f32 %v771, %v775
    %s778 = sld [smem:[#allocation9 + $0x7]]
    %v779 = vstv %s778
    %v780 = vmul.f32 %v166, %v779
    %v781 = vmul.f32 %v167, %v779
    %v782 = vadd.f32 %v776, %v780
    %v783 = vadd.f32 %v777, %v781
    %s784 = sld [smem:[#allocation9 + $0xa]]
    %v785 = vstv %s784
    %v786 = vmul.f32 %v188, %v785
    %v787 = vmul.f32 %v189, %v785
    %v788 = vadd.f32 %v782, %v786
    %v789 = vadd.f32 %v783, %v787
    %s790 = sld [smem:[#allocation9 + $0xd]]
    %v791 = vstv %s790
    %v792 = vmul.f32 %v210, %v791
    %v793 = vmul.f32 %v211, %v791
    %v794 = vadd.f32 %v788, %v792
    %v795 = vadd.f32 %v789, %v793
    %s796 = sld [smem:[#allocation9 + $0x10]]
    %v797 = vstv %s796
    %v798 = vmul.f32 %v232, %v797
    %v799 = vmul.f32 %v233, %v797
    %v800 = vadd.f32 %v794, %v798
    %v801 = vadd.f32 %v795, %v799
    %s802 = sld [smem:[#allocation9 + $0x13]]
    %v803 = vstv %s802
    %v804 = vmul.f32 %v254, %v803
    %v805 = vmul.f32 %v255, %v803
    %v806 = vadd.f32 %v800, %v804
    %v807 = vadd.f32 %v801, %v805
    %s808 = sld [smem:[#allocation9 + $0x16]]
    %v809 = vstv %s808
    %v810 = vmul.f32 %v276, %v809
    %v811 = vmul.f32 %v277, %v809
    %v812 = vadd.f32 %v806, %v810
    %v813 = vadd.f32 %v807, %v811
    %v814 = vrot.slane %v812, 7
    %v815 = vrot.slane %v813, 7
    %v816 = vsel %vm326, %v814, %v815
    %v817 = vsel %vm326, %v815, %v814
    %v818 = vsel %vm90, %v817, 0.0
    %v819 = vsel %vm91, %v816, 0.0
    %s820 = sld [smem:[#allocation9 + $0x49]]
    %v821 = vstv %s820
    %v822 = vmul.f32 %v122, %v821
    %v823 = vmul.f32 %v123, %v821
    %s824 = sld [smem:[#allocation9 + $0x4c]]
    %v825 = vstv %s824
    %v826 = vmul.f32 %v144, %v825
    %v827 = vmul.f32 %v145, %v825
    %v828 = vadd.f32 %v822, %v826
    %v829 = vadd.f32 %v823, %v827
    %s830 = sld [smem:[#allocation9 + $0x4f]]
    %v831 = vstv %s830
    %v832 = vmul.f32 %v166, %v831
    %v833 = vmul.f32 %v167, %v831
    %v834 = vadd.f32 %v828, %v832
    %v835 = vadd.f32 %v829, %v833
    %s836 = sld [smem:[#allocation9 + $0x52]]
    %v837 = vstv %s836
    %v838 = vmul.f32 %v188, %v837
    %v839 = vmul.f32 %v189, %v837
    %v840 = vadd.f32 %v834, %v838
    %v841 = vadd.f32 %v835, %v839
    %s842 = sld [smem:[#allocation9 + $0x55]]
    %v843 = vstv %s842
    %v844 = vmul.f32 %v210, %v843
    %v845 = vmul.f32 %v211, %v843
    %v846 = vadd.f32 %v840, %v844
    %v847 = vadd.f32 %v841, %v845
    %s848 = sld [smem:[#allocation9 + $0x58]]
    %v849 = vstv %s848
    %v850 = vmul.f32 %v232, %v849
    %v851 = vmul.f32 %v233, %v849
    %v852 = vadd.f32 %v846, %v850
    %v853 = vadd.f32 %v847, %v851
    %s854 = sld [smem:[#allocation9 + $0x5b]]
    %v855 = vstv %s854
    %v856 = vmul.f32 %v254, %v855
    %v857 = vmul.f32 %v255, %v855
    %v858 = vadd.f32 %v852, %v856
    %v859 = vadd.f32 %v853, %v857
    %s860 = sld [smem:[#allocation9 + $0x5e]]
    %v861 = vstv %s860
    %v862 = vmul.f32 %v276, %v861
    %v863 = vmul.f32 %v277, %v861
    %v864 = vadd.f32 %v858, %v862
    %v865 = vadd.f32 %v859, %v863
    %v866 = vadd.f32 %v818, %v864
    %v867 = vadd.f32 %v819, %v865
    %s868 = sld [smem:[#allocation9 + $0x91]]
    %v869 = vstv %s868
    %v870 = vmul.f32 %v122, %v869
    %v871 = vmul.f32 %v123, %v869
    %s872 = sld [smem:[#allocation9 + $0x94]]
    %v873 = vstv %s872
    %v874 = vmul.f32 %v144, %v873
    %v875 = vmul.f32 %v145, %v873
    %v876 = vadd.f32 %v870, %v874
    %v877 = vadd.f32 %v871, %v875
    %s878 = sld [smem:[#allocation9 + $0x97]]
    %v879 = vstv %s878
    %v880 = vmul.f32 %v166, %v879
    %v881 = vmul.f32 %v167, %v879
    %v882 = vadd.f32 %v876, %v880
    %v883 = vadd.f32 %v877, %v881
    %s884 = sld [smem:[#allocation9 + $0x9a]]
    %v885 = vstv %s884
    %v886 = vmul.f32 %v188, %v885
    %v887 = vmul.f32 %v189, %v885
    %v888 = vadd.f32 %v882, %v886
    %v889 = vadd.f32 %v883, %v887
    %s890 = sld [smem:[#allocation9 + $0x9d]]
    %v891 = vstv %s890
    %v892 = vmul.f32 %v210, %v891
    %v893 = vmul.f32 %v211, %v891
    %v894 = vadd.f32 %v888, %v892
    %v895 = vadd.f32 %v889, %v893
    %s896 = sld [smem:[#allocation9 + $0xa0]]
    %v897 = vstv %s896
    %v898 = vmul.f32 %v232, %v897
    %v899 = vmul.f32 %v233, %v897
    %v900 = vadd.f32 %v894, %v898
    %v901 = vadd.f32 %v895, %v899
    %s902 = sld [smem:[#allocation9 + $0xa3]]
    %v903 = vstv %s902
    %v904 = vmul.f32 %v254, %v903
    %v905 = vmul.f32 %v255, %v903
    %v906 = vadd.f32 %v900, %v904
    %v907 = vadd.f32 %v901, %v905
    %s908 = sld [smem:[#allocation9 + $0xa6]]
    %v909 = vstv %s908
    %v910 = vmul.f32 %v276, %v909
    %v911 = vmul.f32 %v277, %v909
    %v912 = vadd.f32 %v906, %v910
    %v913 = vadd.f32 %v907, %v911
    %v914 = vrot.slane %v912, 1
    %v915 = vrot.slane %v913, 1
    %v916 = vsel %vm427, %v914, %v915
    %v917 = vsel %vm427, %v915, %v914
    %v918 = vsel %vm88, %v916, 0.0
    %v919 = vsel %vm89, %v917, 0.0
    %v920 = vadd.f32 %v866, %v918
    %v921 = vadd.f32 %v867, %v919
    %922 = vrot.lane.b32.xlu0 %v920, 1
    %v923 = vpop.permute.xlu0 %922
    %924 = vrot.lane.b32.xlu0 %v921, 1
    %v925 = vpop.permute.xlu0 %924
    %v926 = vsel %vm93, %v923, 0.0
    %v927 = vsel %vm93, %v925, 0.0
    %s928 = sld [smem:[#allocation9 + $0x19]]
    %v929 = vstv %s928
    %v930 = vmul.f32 %v122, %v929
    %v931 = vmul.f32 %v123, %v929
    %s932 = sld [smem:[#allocation9 + $0x1c]]
    %v933 = vstv %s932
    %v934 = vmul.f32 %v144, %v933
    %v935 = vmul.f32 %v145, %v933
    %v936 = vadd.f32 %v930, %v934
    %v937 = vadd.f32 %v931, %v935
    %s938 = sld [smem:[#allocation9 + $0x1f]]
    %v939 = vstv %s938
    %v940 = vmul.f32 %v166, %v939
    %v941 = vmul.f32 %v167, %v939
    %v942 = vadd.f32 %v936, %v940
    %v943 = vadd.f32 %v937, %v941
    %s944 = sld [smem:[#allocation9 + $0x22]]
    %v945 = vstv %s944
    %v946 = vmul.f32 %v188, %v945
    %v947 = vmul.f32 %v189, %v945
    %v948 = vadd.f32 %v942, %v946
    %v949 = vadd.f32 %v943, %v947
    %s950 = sld [smem:[#allocation9 + $0x25]]
    %v951 = vstv %s950
    %v952 = vmul.f32 %v210, %v951
    %v953 = vmul.f32 %v211, %v951
    %v954 = vadd.f32 %v948, %v952
    %v955 = vadd.f32 %v949, %v953
    %s956 = sld [smem:[#allocation9 + $0x28]]
    %v957 = vstv %s956
    %v958 = vmul.f32 %v232, %v957
    %v959 = vmul.f32 %v233, %v957
    %v960 = vadd.f32 %v954, %v958
    %v961 = vadd.f32 %v955, %v959
    %s962 = sld [smem:[#allocation9 + $0x2b]]
    %v963 = vstv %s962
    %v964 = vmul.f32 %v254, %v963
    %v965 = vmul.f32 %v255, %v963
    %v966 = vadd.f32 %v960, %v964
    %v967 = vadd.f32 %v961, %v965
    %s968 = sld [smem:[#allocation9 + $0x2e]]
    %v969 = vstv %s968
    %v970 = vmul.f32 %v276, %v969
    %v971 = vmul.f32 %v277, %v969
    %v972 = vadd.f32 %v966, %v970
    %v973 = vadd.f32 %v967, %v971
    %v974 = vrot.slane %v972, 7
    %v975 = vrot.slane %v973, 7
    %v976 = vsel %vm326, %v974, %v975
    %v977 = vsel %vm326, %v975, %v974
    %v978 = vsel %vm90, %v977, 0.0
    %v979 = vsel %vm91, %v976, 0.0
    %s980 = sld [smem:[#allocation9 + $0x61]]
    %v981 = vstv %s980
    %v982 = vmul.f32 %v122, %v981
    %v983 = vmul.f32 %v123, %v981
    %s984 = sld [smem:[#allocation9 + $0x64]]
    %v985 = vstv %s984
    %v986 = vmul.f32 %v144, %v985
    %v987 = vmul.f32 %v145, %v985
    %v988 = vadd.f32 %v982, %v986
    %v989 = vadd.f32 %v983, %v987
    %s990 = sld [smem:[#allocation9 + $0x67]]
    %v991 = vstv %s990
    %v992 = vmul.f32 %v166, %v991
    %v993 = vmul.f32 %v167, %v991
    %v994 = vadd.f32 %v988, %v992
    %v995 = vadd.f32 %v989, %v993
    %s996 = sld [smem:[#allocation9 + $0x6a]]
    %v997 = vstv %s996
    %v998 = vmul.f32 %v188, %v997
    %v999 = vmul.f32 %v189, %v997
    %v1000 = vadd.f32 %v994, %v998
    %v1001 = vadd.f32 %v995, %v999
    %s1002 = sld [smem:[#allocation9 + $0x6d]]
    %v1003 = vstv %s1002
    %v1004 = vmul.f32 %v210, %v1003
    %v1005 = vmul.f32 %v211, %v1003
    %v1006 = vadd.f32 %v1000, %v1004
    %v1007 = vadd.f32 %v1001, %v1005
    %s1008 = sld [smem:[#allocation9 + $0x70]]
    %v1009 = vstv %s1008
    %v1010 = vmul.f32 %v232, %v1009
    %v1011 = vmul.f32 %v233, %v1009
    %v1012 = vadd.f32 %v1006, %v1010
    %v1013 = vadd.f32 %v1007, %v1011
    %s1014 = sld [smem:[#allocation9 + $0x73]]
    %v1015 = vstv %s1014
    %v1016 = vmul.f32 %v254, %v1015
    %v1017 = vmul.f32 %v255, %v1015
    %v1018 = vadd.f32 %v1012, %v1016
    %v1019 = vadd.f32 %v1013, %v1017
    %s1020 = sld [smem:[#allocation9 + $0x76]]
    %v1021 = vstv %s1020
    %v1022 = vmul.f32 %v276, %v1021
    %v1023 = vmul.f32 %v277, %v1021
    %v1024 = vadd.f32 %v1018, %v1022
    %v1025 = vadd.f32 %v1019, %v1023
    %v1026 = vadd.f32 %v978, %v1024
    %v1027 = vadd.f32 %v979, %v1025
    %s1028 = sld [smem:[#allocation9 + $0xa9]]
    %v1029 = vstv %s1028
    %v1030 = vmul.f32 %v122, %v1029
    %v1031 = vmul.f32 %v123, %v1029
    %s1032 = sld [smem:[#allocation9 + $0xac]]
    %v1033 = vstv %s1032
    %v1034 = vmul.f32 %v144, %v1033
    %v1035 = vmul.f32 %v145, %v1033
    %v1036 = vadd.f32 %v1030, %v1034
    %v1037 = vadd.f32 %v1031, %v1035
    %s1038 = sld [smem:[#allocation9 + $0xaf]]
    %v1039 = vstv %s1038
    %v1040 = vmul.f32 %v166, %v1039
    %v1041 = vmul.f32 %v167, %v1039
    %v1042 = vadd.f32 %v1036, %v1040
    %v1043 = vadd.f32 %v1037, %v1041
    %s1044 = sld [smem:[#allocation9 + $0xb2]]
    %v1045 = vstv %s1044
    %v1046 = vmul.f32 %v188, %v1045
    %v1047 = vmul.f32 %v189, %v1045
    %v1048 = vadd.f32 %v1042, %v1046
    %v1049 = vadd.f32 %v1043, %v1047
    %s1050 = sld [smem:[#allocation9 + $0xb5]]
    %v1051 = vstv %s1050
    %v1052 = vmul.f32 %v210, %v1051
    %v1053 = vmul.f32 %v211, %v1051
    %v1054 = vadd.f32 %v1048, %v1052
    %v1055 = vadd.f32 %v1049, %v1053
    %s1056 = sld [smem:[#allocation9 + $0xb8]]
    %v1057 = vstv %s1056
    %v1058 = vmul.f32 %v232, %v1057
    %v1059 = vmul.f32 %v233, %v1057
    %v1060 = vadd.f32 %v1054, %v1058
    %v1061 = vadd.f32 %v1055, %v1059
    %s1062 = sld [smem:[#allocation9 + $0xbb]]
    %v1063 = vstv %s1062
    %v1064 = vmul.f32 %v254, %v1063
    %v1065 = vmul.f32 %v255, %v1063
    %v1066 = vadd.f32 %v1060, %v1064
    %v1067 = vadd.f32 %v1061, %v1065
    %s1068 = sld [smem:[#allocation9 + $0xbe]]
    %v1069 = vstv %s1068
    %v1070 = vmul.f32 %v276, %v1069
    %v1071 = vmul.f32 %v277, %v1069
    %v1072 = vadd.f32 %v1066, %v1070
    %v1073 = vadd.f32 %v1067, %v1071
    %v1074 = vrot.slane %v1072, 1
    %v1075 = vrot.slane %v1073, 1
    %v1076 = vsel %vm427, %v1074, %v1075
    %v1077 = vsel %vm427, %v1075, %v1074
    %v1078 = vsel %vm88, %v1076, 0.0
    %v1079 = vsel %vm89, %v1077, 0.0
    %v1080 = vadd.f32 %v1026, %v1078
    %v1081 = vadd.f32 %v1027, %v1079
    %v1082 = vadd.f32 %v926, %v1080
    %v1083 = vadd.f32 %v927, %v1081
    %s1084 = sld [smem:[#allocation9 + $0x31]]
    %v1085 = vstv %s1084
    %v1086 = vmul.f32 %v122, %v1085
    %v1087 = vmul.f32 %v123, %v1085
    %s1088 = sld [smem:[#allocation9 + $0x34]]
    %v1089 = vstv %s1088
    %v1090 = vmul.f32 %v144, %v1089
    %v1091 = vmul.f32 %v145, %v1089
    %v1092 = vadd.f32 %v1086, %v1090
    %v1093 = vadd.f32 %v1087, %v1091
    %s1094 = sld [smem:[#allocation9 + $0x37]]
    %v1095 = vstv %s1094
    %v1096 = vmul.f32 %v166, %v1095
    %v1097 = vmul.f32 %v167, %v1095
    %v1098 = vadd.f32 %v1092, %v1096
    %v1099 = vadd.f32 %v1093, %v1097
    %s1100 = sld [smem:[#allocation9 + $0x3a]]
    %v1101 = vstv %s1100
    %v1102 = vmul.f32 %v188, %v1101
    %v1103 = vmul.f32 %v189, %v1101
    %v1104 = vadd.f32 %v1098, %v1102
    %v1105 = vadd.f32 %v1099, %v1103
    %s1106 = sld [smem:[#allocation9 + $0x3d]]
    %v1107 = vstv %s1106
    %v1108 = vmul.f32 %v210, %v1107
    %v1109 = vmul.f32 %v211, %v1107
    %v1110 = vadd.f32 %v1104, %v1108
    %v1111 = vadd.f32 %v1105, %v1109
    %s1112 = sld [smem:[#allocation9 + $0x40]]
    %v1113 = vstv %s1112
    %v1114 = vmul.f32 %v232, %v1113
    %v1115 = vmul.f32 %v233, %v1113
    %v1116 = vadd.f32 %v1110, %v1114
    %v1117 = vadd.f32 %v1111, %v1115
    %s1118 = sld [smem:[#allocation9 + $0x43]]
    %v1119 = vstv %s1118
    %v1120 = vmul.f32 %v254, %v1119
    %v1121 = vmul.f32 %v255, %v1119
    %v1122 = vadd.f32 %v1116, %v1120
    %v1123 = vadd.f32 %v1117, %v1121
    %s1124 = sld [smem:[#allocation9 + $0x46]]
    %v1125 = vstv %s1124
    %v1126 = vmul.f32 %v276, %v1125
    %v1127 = vmul.f32 %v277, %v1125
    %v1128 = vadd.f32 %v1122, %v1126
    %v1129 = vadd.f32 %v1123, %v1127
    %v1130 = vrot.slane %v1128, 7
    %v1131 = vrot.slane %v1129, 7
    %v1132 = vsel %vm326, %v1130, %v1131
    %v1133 = vsel %vm326, %v1131, %v1130
    %v1134 = vsel %vm90, %v1133, 0.0
    %v1135 = vsel %vm91, %v1132, 0.0
    %s1136 = sld [smem:[#allocation9 + $0x79]]
    %v1137 = vstv %s1136
    %v1138 = vmul.f32 %v122, %v1137
    %v1139 = vmul.f32 %v123, %v1137
    %s1140 = sld [smem:[#allocation9 + $0x7c]]
    %v1141 = vstv %s1140
    %v1142 = vmul.f32 %v144, %v1141
    %v1143 = vmul.f32 %v145, %v1141
    %v1144 = vadd.f32 %v1138, %v1142
    %v1145 = vadd.f32 %v1139, %v1143
    %s1146 = sld [smem:[#allocation9 + $0x7f]]
    %v1147 = vstv %s1146
    %v1148 = vmul.f32 %v166, %v1147
    %v1149 = vmul.f32 %v167, %v1147
    %v1150 = vadd.f32 %v1144, %v1148
    %v1151 = vadd.f32 %v1145, %v1149
    %s1152 = sld [smem:[#allocation9 + $0x82]]
    %v1153 = vstv %s1152
    %v1154 = vmul.f32 %v188, %v1153
    %v1155 = vmul.f32 %v189, %v1153
    %v1156 = vadd.f32 %v1150, %v1154
    %v1157 = vadd.f32 %v1151, %v1155
    %s1158 = sld [smem:[#allocation9 + $0x85]]
    %v1159 = vstv %s1158
    %v1160 = vmul.f32 %v210, %v1159
    %v1161 = vmul.f32 %v211, %v1159
    %v1162 = vadd.f32 %v1156, %v1160
    %v1163 = vadd.f32 %v1157, %v1161
    %s1164 = sld [smem:[#allocation9 + $0x88]]
    %v1165 = vstv %s1164
    %v1166 = vmul.f32 %v232, %v1165
    %v1167 = vmul.f32 %v233, %v1165
    %v1168 = vadd.f32 %v1162, %v1166
    %v1169 = vadd.f32 %v1163, %v1167
    %s1170 = sld [smem:[#allocation9 + $0x8b]]
    %v1171 = vstv %s1170
    %v1172 = vmul.f32 %v254, %v1171
    %v1173 = vmul.f32 %v255, %v1171
    %v1174 = vadd.f32 %v1168, %v1172
    %v1175 = vadd.f32 %v1169, %v1173
    %s1176 = sld [smem:[#allocation9 + $0x8e]]
    %v1177 = vstv %s1176
    %v1178 = vmul.f32 %v276, %v1177
    %v1179 = vmul.f32 %v277, %v1177
    %v1180 = vadd.f32 %v1174, %v1178
    %v1181 = vadd.f32 %v1175, %v1179
    %v1182 = vadd.f32 %v1134, %v1180
    %v1183 = vadd.f32 %v1135, %v1181
    %s1184 = sld [smem:[#allocation9 + $0xc1]]
    %v1185 = vstv %s1184
    %v1186 = vmul.f32 %v122, %v1185
    %v1187 = vmul.f32 %v123, %v1185
    %s1188 = sld [smem:[#allocation9 + $0xc4]]
    %v1189 = vstv %s1188
    %v1190 = vmul.f32 %v144, %v1189
    %v1191 = vmul.f32 %v145, %v1189
    %v1192 = vadd.f32 %v1186, %v1190
    %v1193 = vadd.f32 %v1187, %v1191
    %s1194 = sld [smem:[#allocation9 + $0xc7]]
    %v1195 = vstv %s1194
    %v1196 = vmul.f32 %v166, %v1195
    %v1197 = vmul.f32 %v167, %v1195
    %v1198 = vadd.f32 %v1192, %v1196
    %v1199 = vadd.f32 %v1193, %v1197
    %s1200 = sld [smem:[#allocation9 + $0xca]]
    %v1201 = vstv %s1200
    %v1202 = vmul.f32 %v188, %v1201
    %v1203 = vmul.f32 %v189, %v1201
    %v1204 = vadd.f32 %v1198, %v1202
    %v1205 = vadd.f32 %v1199, %v1203
    %s1206 = sld [smem:[#allocation9 + $0xcd]]
    %v1207 = vstv %s1206
    %v1208 = vmul.f32 %v210, %v1207
    %v1209 = vmul.f32 %v211, %v1207
    %v1210 = vadd.f32 %v1204, %v1208
    %v1211 = vadd.f32 %v1205, %v1209
    %s1212 = sld [smem:[#allocation9 + $0xd0]]
    %v1213 = vstv %s1212
    %v1214 = vmul.f32 %v232, %v1213
    %v1215 = vmul.f32 %v233, %v1213
    %v1216 = vadd.f32 %v1210, %v1214
    %v1217 = vadd.f32 %v1211, %v1215
    %s1218 = sld [smem:[#allocation9 + $0xd3]]
    %v1219 = vstv %s1218
    %v1220 = vmul.f32 %v254, %v1219
    %v1221 = vmul.f32 %v255, %v1219
    %v1222 = vadd.f32 %v1216, %v1220
    %v1223 = vadd.f32 %v1217, %v1221
    %s1224 = sld [smem:[#allocation9 + $0xd6]]
    %v1225 = vstv %s1224
    %v1226 = vmul.f32 %v276, %v1225
    %v1227 = vmul.f32 %v277, %v1225
    %v1228 = vadd.f32 %v1222, %v1226
    %v1229 = vadd.f32 %v1223, %v1227
    %v1230 = vrot.slane %v1228, 1
    %v1231 = vrot.slane %v1229, 1
    %v1232 = vsel %vm427, %v1230, %v1231
    %v1233 = vsel %vm427, %v1231, %v1230
    %v1234 = vsel %vm88, %v1232, 0.0
    %v1235 = vsel %vm89, %v1233, 0.0
    %v1236 = vadd.f32 %v1182, %v1234
    %v1237 = vadd.f32 %v1183, %v1235
    %1238 = vrot.lane.b32.xlu0 %v1236, 127
    %v1239 = vpop.permute.xlu0 %1238
    %1240 = vrot.lane.b32.xlu0 %v1237, 127
    %v1241 = vpop.permute.xlu0 %1240
    %v1242 = vsel %vm92, %v1239, 0.0
    %v1243 = vsel %vm92, %v1241, 0.0
    %v1244 = vadd.f32 %v1082, %v1242
    %v1245 = vadd.f32 %v1083, %v1243
    %s1246 = sld [smem:[#allocation10 + $0x1]]
    %v1247 = vstv %s1246
    %v1248 = vadd.f32 %v1244, %v1247
    %v1249 = vadd.f32 %v1245, %v1247
    %v1250 = vtanh.pop %v1248
    %v1251 = vtanh.pop %v1249
    %v1252 = vadd.f32 %v1250, %v97
    %v1253 = vadd.f32 %v1251, %v98
    %s1254 = scalar_lea.vmem [#allocation12], 16
    %1255 = vst [vmem:[%s1254] sm:$0xff] %v1252
    %1256 = vst [vmem:[%s1254 + $0x8] sm:$0xff] %v1253
    %s1257 = sld [smem:[#allocation9 + $0x2]]
    %v1258 = vstv %s1257
    %v1259 = vmul.f32 %v122, %v1258
    %v1260 = vmul.f32 %v123, %v1258
    %s1261 = sld [smem:[#allocation9 + $0x5]]
    %v1262 = vstv %s1261
    %v1263 = vmul.f32 %v144, %v1262
    %v1264 = vmul.f32 %v145, %v1262
    %v1265 = vadd.f32 %v1259, %v1263
    %v1266 = vadd.f32 %v1260, %v1264
    %s1267 = sld [smem:[#allocation9 + $0x8]]
    %v1268 = vstv %s1267
    %v1269 = vmul.f32 %v166, %v1268
    %v1270 = vmul.f32 %v167, %v1268
    %v1271 = vadd.f32 %v1265, %v1269
    %v1272 = vadd.f32 %v1266, %v1270
    %s1273 = sld [smem:[#allocation9 + $0xb]]
    %v1274 = vstv %s1273
    %v1275 = vmul.f32 %v188, %v1274
    %v1276 = vmul.f32 %v189, %v1274
    %v1277 = vadd.f32 %v1271, %v1275
    %v1278 = vadd.f32 %v1272, %v1276
    %s1279 = sld [smem:[#allocation9 + $0xe]]
    %v1280 = vstv %s1279
    %v1281 = vmul.f32 %v210, %v1280
    %v1282 = vmul.f32 %v211, %v1280
    %v1283 = vadd.f32 %v1277, %v1281
    %v1284 = vadd.f32 %v1278, %v1282
    %s1285 = sld [smem:[#allocation9 + $0x11]]
    %v1286 = vstv %s1285
    %v1287 = vmul.f32 %v232, %v1286
    %v1288 = vmul.f32 %v233, %v1286
    %v1289 = vadd.f32 %v1283, %v1287
    %v1290 = vadd.f32 %v1284, %v1288
    %s1291 = sld [smem:[#allocation9 + $0x14]]
    %v1292 = vstv %s1291
    %v1293 = vmul.f32 %v254, %v1292
    %v1294 = vmul.f32 %v255, %v1292
    %v1295 = vadd.f32 %v1289, %v1293
    %v1296 = vadd.f32 %v1290, %v1294
    %s1297 = sld [smem:[#allocation9 + $0x17]]
    %v1298 = vstv %s1297
    %v1299 = vmul.f32 %v276, %v1298
    %v1300 = vmul.f32 %v277, %v1298
    %v1301 = vadd.f32 %v1295, %v1299
    %v1302 = vadd.f32 %v1296, %v1300
    %v1303 = vrot.slane %v1301, 7
    %v1304 = vrot.slane %v1302, 7
    %v1305 = vsel %vm326, %v1303, %v1304
    %v1306 = vsel %vm326, %v1304, %v1303
    %v1307 = vsel %vm90, %v1306, 0.0
    %v1308 = vsel %vm91, %v1305, 0.0
    %s1309 = sld [smem:[#allocation9 + $0x4a]]
    %v1310 = vstv %s1309
    %v1311 = vmul.f32 %v122, %v1310
    %v1312 = vmul.f32 %v123, %v1310
    %s1313 = sld [smem:[#allocation9 + $0x4d]]
    %v1314 = vstv %s1313
    %v1315 = vmul.f32 %v144, %v1314
    %v1316 = vmul.f32 %v145, %v1314
    %v1317 = vadd.f32 %v1311, %v1315
    %v1318 = vadd.f32 %v1312, %v1316
    %s1319 = sld [smem:[#allocation9 + $0x50]]
    %v1320 = vstv %s1319
    %v1321 = vmul.f32 %v166, %v1320
    %v1322 = vmul.f32 %v167, %v1320
    %v1323 = vadd.f32 %v1317, %v1321
    %v1324 = vadd.f32 %v1318, %v1322
    %s1325 = sld [smem:[#allocation9 + $0x53]]
    %v1326 = vstv %s1325
    %v1327 = vmul.f32 %v188, %v1326
    %v1328 = vmul.f32 %v189, %v1326
    %v1329 = vadd.f32 %v1323, %v1327
    %v1330 = vadd.f32 %v1324, %v1328
    %s1331 = sld [smem:[#allocation9 + $0x56]]
    %v1332 = vstv %s1331
    %v1333 = vmul.f32 %v210, %v1332
    %v1334 = vmul.f32 %v211, %v1332
    %v1335 = vadd.f32 %v1329, %v1333
    %v1336 = vadd.f32 %v1330, %v1334
    %s1337 = sld [smem:[#allocation9 + $0x59]]
    %v1338 = vstv %s1337
    %v1339 = vmul.f32 %v232, %v1338
    %v1340 = vmul.f32 %v233, %v1338
    %v1341 = vadd.f32 %v1335, %v1339
    %v1342 = vadd.f32 %v1336, %v1340
    %s1343 = sld [smem:[#allocation9 + $0x5c]]
    %v1344 = vstv %s1343
    %v1345 = vmul.f32 %v254, %v1344
    %v1346 = vmul.f32 %v255, %v1344
    %v1347 = vadd.f32 %v1341, %v1345
    %v1348 = vadd.f32 %v1342, %v1346
    %s1349 = sld [smem:[#allocation9 + $0x5f]]
    %v1350 = vstv %s1349
    %v1351 = vmul.f32 %v276, %v1350
    %v1352 = vmul.f32 %v277, %v1350
    %v1353 = vadd.f32 %v1347, %v1351
    %v1354 = vadd.f32 %v1348, %v1352
    %v1355 = vadd.f32 %v1307, %v1353
    %v1356 = vadd.f32 %v1308, %v1354
    %s1357 = sld [smem:[#allocation9 + $0x92]]
    %v1358 = vstv %s1357
    %v1359 = vmul.f32 %v122, %v1358
    %v1360 = vmul.f32 %v123, %v1358
    %s1361 = sld [smem:[#allocation9 + $0x95]]
    %v1362 = vstv %s1361
    %v1363 = vmul.f32 %v144, %v1362
    %v1364 = vmul.f32 %v145, %v1362
    %v1365 = vadd.f32 %v1359, %v1363
    %v1366 = vadd.f32 %v1360, %v1364
    %s1367 = sld [smem:[#allocation9 + $0x98]]
    %v1368 = vstv %s1367
    %v1369 = vmul.f32 %v166, %v1368
    %v1370 = vmul.f32 %v167, %v1368
    %v1371 = vadd.f32 %v1365, %v1369
    %v1372 = vadd.f32 %v1366, %v1370
    %s1373 = sld [smem:[#allocation9 + $0x9b]]
    %v1374 = vstv %s1373
    %v1375 = vmul.f32 %v188, %v1374
    %v1376 = vmul.f32 %v189, %v1374
    %v1377 = vadd.f32 %v1371, %v1375
    %v1378 = vadd.f32 %v1372, %v1376
    %s1379 = sld [smem:[#allocation9 + $0x9e]]
    %v1380 = vstv %s1379
    %v1381 = vmul.f32 %v210, %v1380
    %v1382 = vmul.f32 %v211, %v1380
    %v1383 = vadd.f32 %v1377, %v1381
    %v1384 = vadd.f32 %v1378, %v1382
    %s1385 = sld [smem:[#allocation9 + $0xa1]]
    %v1386 = vstv %s1385
    %v1387 = vmul.f32 %v232, %v1386
    %v1388 = vmul.f32 %v233, %v1386
    %v1389 = vadd.f32 %v1383, %v1387
    %v1390 = vadd.f32 %v1384, %v1388
    %s1391 = sld [smem:[#allocation9 + $0xa4]]
    %v1392 = vstv %s1391
    %v1393 = vmul.f32 %v254, %v1392
    %v1394 = vmul.f32 %v255, %v1392
    %v1395 = vadd.f32 %v1389, %v1393
    %v1396 = vadd.f32 %v1390, %v1394
    %s1397 = sld [smem:[#allocation9 + $0xa7]]
    %v1398 = vstv %s1397
    %v1399 = vmul.f32 %v276, %v1398
    %v1400 = vmul.f32 %v277, %v1398
    %v1401 = vadd.f32 %v1395, %v1399
    %v1402 = vadd.f32 %v1396, %v1400
    %v1403 = vrot.slane %v1401, 1
    %v1404 = vrot.slane %v1402, 1
    %v1405 = vsel %vm427, %v1403, %v1404
    %v1406 = vsel %vm427, %v1404, %v1403
    %v1407 = vsel %vm88, %v1405, 0.0
    %v1408 = vsel %vm89, %v1406, 0.0
    %v1409 = vadd.f32 %v1355, %v1407
    %v1410 = vadd.f32 %v1356, %v1408
    %1411 = vrot.lane.b32.xlu0 %v1409, 1
    %v1412 = vpop.permute.xlu0 %1411
    %1413 = vrot.lane.b32.xlu0 %v1410, 1
    %v1414 = vpop.permute.xlu0 %1413
    %v1415 = vsel %vm93, %v1412, 0.0
    %v1416 = vsel %vm93, %v1414, 0.0
    %s1417 = sld [smem:[#allocation9 + $0x1a]]
    %v1418 = vstv %s1417
    %v1419 = vmul.f32 %v122, %v1418
    %v1420 = vmul.f32 %v123, %v1418
    %s1421 = sld [smem:[#allocation9 + $0x1d]]
    %v1422 = vstv %s1421
    %v1423 = vmul.f32 %v144, %v1422
    %v1424 = vmul.f32 %v145, %v1422
    %v1425 = vadd.f32 %v1419, %v1423
    %v1426 = vadd.f32 %v1420, %v1424
    %s1427 = sld [smem:[#allocation9 + $0x20]]
    %v1428 = vstv %s1427
    %v1429 = vmul.f32 %v166, %v1428
    %v1430 = vmul.f32 %v167, %v1428
    %v1431 = vadd.f32 %v1425, %v1429
    %v1432 = vadd.f32 %v1426, %v1430
    %s1433 = sld [smem:[#allocation9 + $0x23]]
    %v1434 = vstv %s1433
    %v1435 = vmul.f32 %v188, %v1434
    %v1436 = vmul.f32 %v189, %v1434
    %v1437 = vadd.f32 %v1431, %v1435
    %v1438 = vadd.f32 %v1432, %v1436
    %s1439 = sld [smem:[#allocation9 + $0x26]]
    %v1440 = vstv %s1439
    %v1441 = vmul.f32 %v210, %v1440
    %v1442 = vmul.f32 %v211, %v1440
    %v1443 = vadd.f32 %v1437, %v1441
    %v1444 = vadd.f32 %v1438, %v1442
    %s1445 = sld [smem:[#allocation9 + $0x29]]
    %v1446 = vstv %s1445
    %v1447 = vmul.f32 %v232, %v1446
    %v1448 = vmul.f32 %v233, %v1446
    %v1449 = vadd.f32 %v1443, %v1447
    %v1450 = vadd.f32 %v1444, %v1448
    %s1451 = sld [smem:[#allocation9 + $0x2c]]
    %v1452 = vstv %s1451
    %v1453 = vmul.f32 %v254, %v1452
    %v1454 = vmul.f32 %v255, %v1452
    %v1455 = vadd.f32 %v1449, %v1453
    %v1456 = vadd.f32 %v1450, %v1454
    %s1457 = sld [smem:[#allocation9 + $0x2f]]
    %v1458 = vstv %s1457
    %v1459 = vmul.f32 %v276, %v1458
    %v1460 = vmul.f32 %v277, %v1458
    %v1461 = vadd.f32 %v1455, %v1459
    %v1462 = vadd.f32 %v1456, %v1460
    %v1463 = vrot.slane %v1461, 7
    %v1464 = vrot.slane %v1462, 7
    %v1465 = vsel %vm326, %v1463, %v1464
    %v1466 = vsel %vm326, %v1464, %v1463
    %v1467 = vsel %vm90, %v1466, 0.0
    %v1468 = vsel %vm91, %v1465, 0.0
    %s1469 = sld [smem:[#allocation9 + $0x62]]
    %v1470 = vstv %s1469
    %v1471 = vmul.f32 %v122, %v1470
    %v1472 = vmul.f32 %v123, %v1470
    %s1473 = sld [smem:[#allocation9 + $0x65]]
    %v1474 = vstv %s1473
    %v1475 = vmul.f32 %v144, %v1474
    %v1476 = vmul.f32 %v145, %v1474
    %v1477 = vadd.f32 %v1471, %v1475
    %v1478 = vadd.f32 %v1472, %v1476
    %s1479 = sld [smem:[#allocation9 + $0x68]]
    %v1480 = vstv %s1479
    %v1481 = vmul.f32 %v166, %v1480
    %v1482 = vmul.f32 %v167, %v1480
    %v1483 = vadd.f32 %v1477, %v1481
    %v1484 = vadd.f32 %v1478, %v1482
    %s1485 = sld [smem:[#allocation9 + $0x6b]]
    %v1486 = vstv %s1485
    %v1487 = vmul.f32 %v188, %v1486
    %v1488 = vmul.f32 %v189, %v1486
    %v1489 = vadd.f32 %v1483, %v1487
    %v1490 = vadd.f32 %v1484, %v1488
    %s1491 = sld [smem:[#allocation9 + $0x6e]]
    %v1492 = vstv %s1491
    %v1493 = vmul.f32 %v210, %v1492
    %v1494 = vmul.f32 %v211, %v1492
    %v1495 = vadd.f32 %v1489, %v1493
    %v1496 = vadd.f32 %v1490, %v1494
    %s1497 = sld [smem:[#allocation9 + $0x71]]
    %v1498 = vstv %s1497
    %v1499 = vmul.f32 %v232, %v1498
    %v1500 = vmul.f32 %v233, %v1498
    %v1501 = vadd.f32 %v1495, %v1499
    %v1502 = vadd.f32 %v1496, %v1500
    %s1503 = sld [smem:[#allocation9 + $0x74]]
    %v1504 = vstv %s1503
    %v1505 = vmul.f32 %v254, %v1504
    %v1506 = vmul.f32 %v255, %v1504
    %v1507 = vadd.f32 %v1501, %v1505
    %v1508 = vadd.f32 %v1502, %v1506
    %s1509 = sld [smem:[#allocation9 + $0x77]]
    %v1510 = vstv %s1509
    %v1511 = vmul.f32 %v276, %v1510
    %v1512 = vmul.f32 %v277, %v1510
    %v1513 = vadd.f32 %v1507, %v1511
    %v1514 = vadd.f32 %v1508, %v1512
    %v1515 = vadd.f32 %v1467, %v1513
    %v1516 = vadd.f32 %v1468, %v1514
    %s1517 = sld [smem:[#allocation9 + $0xaa]]
    %v1518 = vstv %s1517
    %v1519 = vmul.f32 %v122, %v1518
    %v1520 = vmul.f32 %v123, %v1518
    %s1521 = sld [smem:[#allocation9 + $0xad]]
    %v1522 = vstv %s1521
    %v1523 = vmul.f32 %v144, %v1522
    %v1524 = vmul.f32 %v145, %v1522
    %v1525 = vadd.f32 %v1519, %v1523
    %v1526 = vadd.f32 %v1520, %v1524
    %s1527 = sld [smem:[#allocation9 + $0xb0]]
    %v1528 = vstv %s1527
    %v1529 = vmul.f32 %v166, %v1528
    %v1530 = vmul.f32 %v167, %v1528
    %v1531 = vadd.f32 %v1525, %v1529
    %v1532 = vadd.f32 %v1526, %v1530
    %s1533 = sld [smem:[#allocation9 + $0xb3]]
    %v1534 = vstv %s1533
    %v1535 = vmul.f32 %v188, %v1534
    %v1536 = vmul.f32 %v189, %v1534
    %v1537 = vadd.f32 %v1531, %v1535
    %v1538 = vadd.f32 %v1532, %v1536
    %s1539 = sld [smem:[#allocation9 + $0xb6]]
    %v1540 = vstv %s1539
    %v1541 = vmul.f32 %v210, %v1540
    %v1542 = vmul.f32 %v211, %v1540
    %v1543 = vadd.f32 %v1537, %v1541
    %v1544 = vadd.f32 %v1538, %v1542
    %s1545 = sld [smem:[#allocation9 + $0xb9]]
    %v1546 = vstv %s1545
    %v1547 = vmul.f32 %v232, %v1546
    %v1548 = vmul.f32 %v233, %v1546
    %v1549 = vadd.f32 %v1543, %v1547
    %v1550 = vadd.f32 %v1544, %v1548
    %s1551 = sld [smem:[#allocation9 + $0xbc]]
    %v1552 = vstv %s1551
    %v1553 = vmul.f32 %v254, %v1552
    %v1554 = vmul.f32 %v255, %v1552
    %v1555 = vadd.f32 %v1549, %v1553
    %v1556 = vadd.f32 %v1550, %v1554
    %s1557 = sld [smem:[#allocation9 + $0xbf]]
    %v1558 = vstv %s1557
    %v1559 = vmul.f32 %v276, %v1558
    %v1560 = vmul.f32 %v277, %v1558
    %v1561 = vadd.f32 %v1555, %v1559
    %v1562 = vadd.f32 %v1556, %v1560
    %v1563 = vrot.slane %v1561, 1
    %v1564 = vrot.slane %v1562, 1
    %v1565 = vsel %vm427, %v1563, %v1564
    %v1566 = vsel %vm427, %v1564, %v1563
    %v1567 = vsel %vm88, %v1565, 0.0
    %v1568 = vsel %vm89, %v1566, 0.0
    %v1569 = vadd.f32 %v1515, %v1567
    %v1570 = vadd.f32 %v1516, %v1568
    %v1571 = vadd.f32 %v1415, %v1569
    %v1572 = vadd.f32 %v1416, %v1570
    %s1573 = sld [smem:[#allocation9 + $0x32]]
    %v1574 = vstv %s1573
    %v1575 = vmul.f32 %v122, %v1574
    %v1576 = vmul.f32 %v123, %v1574
    %s1577 = sld [smem:[#allocation9 + $0x35]]
    %v1578 = vstv %s1577
    %v1579 = vmul.f32 %v144, %v1578
    %v1580 = vmul.f32 %v145, %v1578
    %v1581 = vadd.f32 %v1575, %v1579
    %v1582 = vadd.f32 %v1576, %v1580
    %s1583 = sld [smem:[#allocation9 + $0x38]]
    %v1584 = vstv %s1583
    %v1585 = vmul.f32 %v166, %v1584
    %v1586 = vmul.f32 %v167, %v1584
    %v1587 = vadd.f32 %v1581, %v1585
    %v1588 = vadd.f32 %v1582, %v1586
    %s1589 = sld [smem:[#allocation9 + $0x3b]]
    %v1590 = vstv %s1589
    %v1591 = vmul.f32 %v188, %v1590
    %v1592 = vmul.f32 %v189, %v1590
    %v1593 = vadd.f32 %v1587, %v1591
    %v1594 = vadd.f32 %v1588, %v1592
    %s1595 = sld [smem:[#allocation9 + $0x3e]]
    %v1596 = vstv %s1595
    %v1597 = vmul.f32 %v210, %v1596
    %v1598 = vmul.f32 %v211, %v1596
    %v1599 = vadd.f32 %v1593, %v1597
    %v1600 = vadd.f32 %v1594, %v1598
    %s1601 = sld [smem:[#allocation9 + $0x41]]
    %v1602 = vstv %s1601
    %v1603 = vmul.f32 %v232, %v1602
    %v1604 = vmul.f32 %v233, %v1602
    %v1605 = vadd.f32 %v1599, %v1603
    %v1606 = vadd.f32 %v1600, %v1604
    %s1607 = sld [smem:[#allocation9 + $0x44]]
    %v1608 = vstv %s1607
    %v1609 = vmul.f32 %v254, %v1608
    %v1610 = vmul.f32 %v255, %v1608
    %v1611 = vadd.f32 %v1605, %v1609
    %v1612 = vadd.f32 %v1606, %v1610
    %s1613 = sld [smem:[#allocation9 + $0x47]]
    %v1614 = vstv %s1613
    %v1615 = vmul.f32 %v276, %v1614
    %v1616 = vmul.f32 %v277, %v1614
    %v1617 = vadd.f32 %v1611, %v1615
    %v1618 = vadd.f32 %v1612, %v1616
    %v1619 = vrot.slane %v1617, 7
    %v1620 = vrot.slane %v1618, 7
    %v1621 = vsel %vm326, %v1619, %v1620
    %v1622 = vsel %vm326, %v1620, %v1619
    %v1623 = vsel %vm90, %v1622, 0.0
    %v1624 = vsel %vm91, %v1621, 0.0
    %s1625 = sld [smem:[#allocation9 + $0x7a]]
    %v1626 = vstv %s1625
    %v1627 = vmul.f32 %v122, %v1626
    %v1628 = vmul.f32 %v123, %v1626
    %s1629 = sld [smem:[#allocation9 + $0x7d]]
    %v1630 = vstv %s1629
    %v1631 = vmul.f32 %v144, %v1630
    %v1632 = vmul.f32 %v145, %v1630
    %v1633 = vadd.f32 %v1627, %v1631
    %v1634 = vadd.f32 %v1628, %v1632
    %s1635 = sld [smem:[#allocation9 + $0x80]]
    %v1636 = vstv %s1635
    %v1637 = vmul.f32 %v166, %v1636
    %v1638 = vmul.f32 %v167, %v1636
    %v1639 = vadd.f32 %v1633, %v1637
    %v1640 = vadd.f32 %v1634, %v1638
    %s1641 = sld [smem:[#allocation9 + $0x83]]
    %v1642 = vstv %s1641
    %v1643 = vmul.f32 %v188, %v1642
    %v1644 = vmul.f32 %v189, %v1642
    %v1645 = vadd.f32 %v1639, %v1643
    %v1646 = vadd.f32 %v1640, %v1644
    %s1647 = sld [smem:[#allocation9 + $0x86]]
    %v1648 = vstv %s1647
    %v1649 = vmul.f32 %v210, %v1648
    %v1650 = vmul.f32 %v211, %v1648
    %v1651 = vadd.f32 %v1645, %v1649
    %v1652 = vadd.f32 %v1646, %v1650
    %s1653 = sld [smem:[#allocation9 + $0x89]]
    %v1654 = vstv %s1653
    %v1655 = vmul.f32 %v232, %v1654
    %v1656 = vmul.f32 %v233, %v1654
    %v1657 = vadd.f32 %v1651, %v1655
    %v1658 = vadd.f32 %v1652, %v1656
    %s1659 = sld [smem:[#allocation9 + $0x8c]]
    %v1660 = vstv %s1659
    %v1661 = vmul.f32 %v254, %v1660
    %v1662 = vmul.f32 %v255, %v1660
    %v1663 = vadd.f32 %v1657, %v1661
    %v1664 = vadd.f32 %v1658, %v1662
    %s1665 = sld [smem:[#allocation9 + $0x8f]]
    %v1666 = vstv %s1665
    %v1667 = vmul.f32 %v276, %v1666
    %v1668 = vmul.f32 %v277, %v1666
    %v1669 = vadd.f32 %v1663, %v1667
    %v1670 = vadd.f32 %v1664, %v1668
    %v1671 = vadd.f32 %v1623, %v1669
    %v1672 = vadd.f32 %v1624, %v1670
    %s1673 = sld [smem:[#allocation9 + $0xc2]]
    %v1674 = vstv %s1673
    %v1675 = vmul.f32 %v122, %v1674
    %v1676 = vmul.f32 %v123, %v1674
    %s1677 = sld [smem:[#allocation9 + $0xc5]]
    %v1678 = vstv %s1677
    %v1679 = vmul.f32 %v144, %v1678
    %v1680 = vmul.f32 %v145, %v1678
    %v1681 = vadd.f32 %v1675, %v1679
    %v1682 = vadd.f32 %v1676, %v1680
    %s1683 = sld [smem:[#allocation9 + $0xc8]]
    %v1684 = vstv %s1683
    %v1685 = vmul.f32 %v166, %v1684
    %v1686 = vmul.f32 %v167, %v1684
    %v1687 = vadd.f32 %v1681, %v1685
    %v1688 = vadd.f32 %v1682, %v1686
    %s1689 = sld [smem:[#allocation9 + $0xcb]]
    %v1690 = vstv %s1689
    %v1691 = vmul.f32 %v188, %v1690
    %v1692 = vmul.f32 %v189, %v1690
    %v1693 = vadd.f32 %v1687, %v1691
    %v1694 = vadd.f32 %v1688, %v1692
    %s1695 = sld [smem:[#allocation9 + $0xce]]
    %v1696 = vstv %s1695
    %v1697 = vmul.f32 %v210, %v1696
    %v1698 = vmul.f32 %v211, %v1696
    %v1699 = vadd.f32 %v1693, %v1697
    %v1700 = vadd.f32 %v1694, %v1698
    %s1701 = sld [smem:[#allocation9 + $0xd1]]
    %v1702 = vstv %s1701
    %v1703 = vmul.f32 %v232, %v1702
    %v1704 = vmul.f32 %v233, %v1702
    %v1705 = vadd.f32 %v1699, %v1703
    %v1706 = vadd.f32 %v1700, %v1704
    %s1707 = sld [smem:[#allocation9 + $0xd4]]
    %v1708 = vstv %s1707
    %v1709 = vmul.f32 %v254, %v1708
    %v1710 = vmul.f32 %v255, %v1708
    %v1711 = vadd.f32 %v1705, %v1709
    %v1712 = vadd.f32 %v1706, %v1710
    %s1713 = sld [smem:[#allocation9 + $0xd7]]
    %v1714 = vstv %s1713
    %v1715 = vmul.f32 %v276, %v1714
    %v1716 = vmul.f32 %v277, %v1714
    %v1717 = vadd.f32 %v1711, %v1715
    %v1718 = vadd.f32 %v1712, %v1716
    %v1719 = vrot.slane %v1717, 1
    %v1720 = vrot.slane %v1718, 1
    %v1721 = vsel %vm427, %v1719, %v1720
    %v1722 = vsel %vm427, %v1720, %v1719
    %v1723 = vsel %vm88, %v1721, 0.0
    %v1724 = vsel %vm89, %v1722, 0.0
    %v1725 = vadd.f32 %v1671, %v1723
    %v1726 = vadd.f32 %v1672, %v1724
    %1727 = vrot.lane.b32.xlu0 %v1725, 127
    %v1728 = vpop.permute.xlu0 %1727
    %1729 = vrot.lane.b32.xlu0 %v1726, 127
    %v1730 = vpop.permute.xlu0 %1729
    %v1731 = vsel %vm92, %v1728, 0.0
    %v1732 = vsel %vm92, %v1730, 0.0
    %v1733 = vadd.f32 %v1571, %v1731
    %v1734 = vadd.f32 %v1572, %v1732
    %s1735 = sld [smem:[#allocation10 + $0x2]]
    %v1736 = vstv %s1735
    %v1737 = vadd.f32 %v1733, %v1736
    %v1738 = vadd.f32 %v1734, %v1736
    %v1739 = vtanh.pop %v1737
    %v1740 = vtanh.pop %v1738
    %v1741 = vadd.f32 %v1739, %v100
    %v1742 = vadd.f32 %v1740, %v101
    %s1743 = scalar_lea.vmem [#allocation12], 32
    %1744 = vst [vmem:[%s1743] sm:$0xff] %v1741
    %1745 = vst [vmem:[%s1743 + $0x8] sm:$0xff] %v1742
    %s1746 = scalar_lea.vmem [#allocation2], 48
    %v1747 = vld [vmem:[%s1746] sm:$0xff]
    %v1748 = vld [vmem:[%s1746 + $0x8] sm:$0xff]
    %s1749 = scalar_lea.vmem [#allocation2], 64
    %v1750 = vld [vmem:[%s1749] sm:$0xff]
    %v1751 = vld [vmem:[%s1749 + $0x8] sm:$0xff]
    %s1752 = scalar_lea.vmem [#allocation2], 80
    %v1753 = vld [vmem:[%s1752] sm:$0xff]
    %v1754 = vld [vmem:[%s1752 + $0x8] sm:$0xff]
    %s1755 = sld [smem:[#allocation6]]
    %v1756 = vstv %s1755
    %v1757 = vmul.f32 %v1747, %v1756
    %v1758 = vmul.f32 %v1748, %v1756
    %s1759 = sld [smem:[#allocation6 + $0x8]]
    %v1760 = vstv %s1759
    %v1761 = vmul.f32 %v1750, %v1760
    %v1762 = vmul.f32 %v1751, %v1760
    %v1763 = vadd.f32 %v1757, %v1761
    %v1764 = vadd.f32 %v1758, %v1762
    %s1765 = sld [smem:[#allocation6 + $0x10]]
    %v1766 = vstv %s1765
    %v1767 = vmul.f32 %v1753, %v1766
    %v1768 = vmul.f32 %v1754, %v1766
    %v1769 = vadd.f32 %v1763, %v1767
    %v1770 = vadd.f32 %v1764, %v1768
    %s1771 = sld [smem:[#allocation7]]
    %v1772 = vstv %s1771
    %v1773 = vadd.f32 %v1769, %v1772
    %v1774 = vadd.f32 %v1770, %v1772
    %v1775 = vmax.f32 %v1773, 0.0
    %v1776 = vmax.f32 %v1774, 0.0
    %s1777 = sld [smem:[#allocation6 + $0x1]]
    %v1778 = vstv %s1777
    %v1779 = vmul.f32 %v1747, %v1778
    %v1780 = vmul.f32 %v1748, %v1778
    %s1781 = sld [smem:[#allocation6 + $0x9]]
    %v1782 = vstv %s1781
    %v1783 = vmul.f32 %v1750, %v1782
    %v1784 = vmul.f32 %v1751, %v1782
    %v1785 = vadd.f32 %v1779, %v1783
    %v1786 = vadd.f32 %v1780, %v1784
    %s1787 = sld [smem:[#allocation6 + $0x11]]
    %v1788 = vstv %s1787
    %v1789 = vmul.f32 %v1753, %v1788
    %v1790 = vmul.f32 %v1754, %v1788
    %v1791 = vadd.f32 %v1785, %v1789
    %v1792 = vadd.f32 %v1786, %v1790
    %s1793 = sld [smem:[#allocation7 + $0x1]]
    %v1794 = vstv %s1793
    %v1795 = vadd.f32 %v1791, %v1794
    %v1796 = vadd.f32 %v1792, %v1794
    %v1797 = vmax.f32 %v1795, 0.0
    %v1798 = vmax.f32 %v1796, 0.0
    %s1799 = sld [smem:[#allocation6 + $0x2]]
    %v1800 = vstv %s1799
    %v1801 = vmul.f32 %v1747, %v1800
    %v1802 = vmul.f32 %v1748, %v1800
    %s1803 = sld [smem:[#allocation6 + $0xa]]
    %v1804 = vstv %s1803
    %v1805 = vmul.f32 %v1750, %v1804
    %v1806 = vmul.f32 %v1751, %v1804
    %v1807 = vadd.f32 %v1801, %v1805
    %v1808 = vadd.f32 %v1802, %v1806
    %s1809 = sld [smem:[#allocation6 + $0x12]]
    %v1810 = vstv %s1809
    %v1811 = vmul.f32 %v1753, %v1810
    %v1812 = vmul.f32 %v1754, %v1810
    %v1813 = vadd.f32 %v1807, %v1811
    %v1814 = vadd.f32 %v1808, %v1812
    %s1815 = sld [smem:[#allocation7 + $0x2]]
    %v1816 = vstv %s1815
    %v1817 = vadd.f32 %v1813, %v1816
    %v1818 = vadd.f32 %v1814, %v1816
    %v1819 = vmax.f32 %v1817, 0.0
    %v1820 = vmax.f32 %v1818, 0.0
    %s1821 = sld [smem:[#allocation6 + $0x3]]
    %v1822 = vstv %s1821
    %v1823 = vmul.f32 %v1747, %v1822
    %v1824 = vmul.f32 %v1748, %v1822
    %s1825 = sld [smem:[#allocation6 + $0xb]]
    %v1826 = vstv %s1825
    %v1827 = vmul.f32 %v1750, %v1826
    %v1828 = vmul.f32 %v1751, %v1826
    %v1829 = vadd.f32 %v1823, %v1827
    %v1830 = vadd.f32 %v1824, %v1828
    %s1831 = sld [smem:[#allocation6 + $0x13]]
    %v1832 = vstv %s1831
    %v1833 = vmul.f32 %v1753, %v1832
    %v1834 = vmul.f32 %v1754, %v1832
    %v1835 = vadd.f32 %v1829, %v1833
    %v1836 = vadd.f32 %v1830, %v1834
    %s1837 = sld [smem:[#allocation7 + $0x3]]
    %v1838 = vstv %s1837
    %v1839 = vadd.f32 %v1835, %v1838
    %v1840 = vadd.f32 %v1836, %v1838
    %v1841 = vmax.f32 %v1839, 0.0
    %v1842 = vmax.f32 %v1840, 0.0
    %s1843 = sld [smem:[#allocation6 + $0x4]]
    %v1844 = vstv %s1843
    %v1845 = vmul.f32 %v1747, %v1844
    %v1846 = vmul.f32 %v1748, %v1844
    %s1847 = sld [smem:[#allocation6 + $0xc]]
    %v1848 = vstv %s1847
    %v1849 = vmul.f32 %v1750, %v1848
    %v1850 = vmul.f32 %v1751, %v1848
    %v1851 = vadd.f32 %v1845, %v1849
    %v1852 = vadd.f32 %v1846, %v1850
    %s1853 = sld [smem:[#allocation6 + $0x14]]
    %v1854 = vstv %s1853
    %v1855 = vmul.f32 %v1753, %v1854
    %v1856 = vmul.f32 %v1754, %v1854
    %v1857 = vadd.f32 %v1851, %v1855
    %v1858 = vadd.f32 %v1852, %v1856
    %s1859 = sld [smem:[#allocation7 + $0x4]]
    %v1860 = vstv %s1859
    %v1861 = vadd.f32 %v1857, %v1860
    %v1862 = vadd.f32 %v1858, %v1860
    %v1863 = vmax.f32 %v1861, 0.0
    %v1864 = vmax.f32 %v1862, 0.0
    %s1865 = sld [smem:[#allocation6 + $0x5]]
    %v1866 = vstv %s1865
    %v1867 = vmul.f32 %v1747, %v1866
    %v1868 = vmul.f32 %v1748, %v1866
    %s1869 = sld [smem:[#allocation6 + $0xd]]
    %v1870 = vstv %s1869
    %v1871 = vmul.f32 %v1750, %v1870
    %v1872 = vmul.f32 %v1751, %v1870
    %v1873 = vadd.f32 %v1867, %v1871
    %v1874 = vadd.f32 %v1868, %v1872
    %s1875 = sld [smem:[#allocation6 + $0x15]]
    %v1876 = vstv %s1875
    %v1877 = vmul.f32 %v1753, %v1876
    %v1878 = vmul.f32 %v1754, %v1876
    %v1879 = vadd.f32 %v1873, %v1877
    %v1880 = vadd.f32 %v1874, %v1878
    %s1881 = sld [smem:[#allocation7 + $0x5]]
    %v1882 = vstv %s1881
    %v1883 = vadd.f32 %v1879, %v1882
    %v1884 = vadd.f32 %v1880, %v1882
    %v1885 = vmax.f32 %v1883, 0.0
    %v1886 = vmax.f32 %v1884, 0.0
    %s1887 = sld [smem:[#allocation6 + $0x6]]
    %v1888 = vstv %s1887
    %v1889 = vmul.f32 %v1747, %v1888
    %v1890 = vmul.f32 %v1748, %v1888
    %s1891 = sld [smem:[#allocation6 + $0xe]]
    %v1892 = vstv %s1891
    %v1893 = vmul.f32 %v1750, %v1892
    %v1894 = vmul.f32 %v1751, %v1892
    %v1895 = vadd.f32 %v1889, %v1893
    %v1896 = vadd.f32 %v1890, %v1894
    %s1897 = sld [smem:[#allocation6 + $0x16]]
    %v1898 = vstv %s1897
    %v1899 = vmul.f32 %v1753, %v1898
    %v1900 = vmul.f32 %v1754, %v1898
    %v1901 = vadd.f32 %v1895, %v1899
    %v1902 = vadd.f32 %v1896, %v1900
    %s1903 = sld [smem:[#allocation7 + $0x6]]
    %v1904 = vstv %s1903
    %v1905 = vadd.f32 %v1901, %v1904
    %v1906 = vadd.f32 %v1902, %v1904
    %v1907 = vmax.f32 %v1905, 0.0
    %v1908 = vmax.f32 %v1906, 0.0
    %s1909 = sld [smem:[#allocation6 + $0x7]]
    %v1910 = vstv %s1909
    %v1911 = vmul.f32 %v1747, %v1910
    %v1912 = vmul.f32 %v1748, %v1910
    %s1913 = sld [smem:[#allocation6 + $0xf]]
    %v1914 = vstv %s1913
    %v1915 = vmul.f32 %v1750, %v1914
    %v1916 = vmul.f32 %v1751, %v1914
    %v1917 = vadd.f32 %v1911, %v1915
    %v1918 = vadd.f32 %v1912, %v1916
    %s1919 = sld [smem:[#allocation6 + $0x17]]
    %v1920 = vstv %s1919
    %v1921 = vmul.f32 %v1753, %v1920
    %v1922 = vmul.f32 %v1754, %v1920
    %v1923 = vadd.f32 %v1917, %v1921
    %v1924 = vadd.f32 %v1918, %v1922
    %s1925 = sld [smem:[#allocation7 + $0x7]]
    %v1926 = vstv %s1925
    %v1927 = vadd.f32 %v1923, %v1926
    %v1928 = vadd.f32 %v1924, %v1926
    %v1929 = vmax.f32 %v1927, 0.0
    %v1930 = vmax.f32 %v1928, 0.0
    %s1931 = sld [smem:[#allocation9]]
    %v1932 = vstv %s1931
    %v1933 = vmul.f32 %v1775, %v1932
    %v1934 = vmul.f32 %v1776, %v1932
    %s1935 = sld [smem:[#allocation9 + $0x3]]
    %v1936 = vstv %s1935
    %v1937 = vmul.f32 %v1797, %v1936
    %v1938 = vmul.f32 %v1798, %v1936
    %v1939 = vadd.f32 %v1933, %v1937
    %v1940 = vadd.f32 %v1934, %v1938
    %s1941 = sld [smem:[#allocation9 + $0x6]]
    %v1942 = vstv %s1941
    %v1943 = vmul.f32 %v1819, %v1942
    %v1944 = vmul.f32 %v1820, %v1942
    %v1945 = vadd.f32 %v1939, %v1943
    %v1946 = vadd.f32 %v1940, %v1944
    %s1947 = sld [smem:[#allocation9 + $0x9]]
    %v1948 = vstv %s1947
    %v1949 = vmul.f32 %v1841, %v1948
    %v1950 = vmul.f32 %v1842, %v1948
    %v1951 = vadd.f32 %v1945, %v1949
    %v1952 = vadd.f32 %v1946, %v1950
    %s1953 = sld [smem:[#allocation9 + $0xc]]
    %v1954 = vstv %s1953
    %v1955 = vmul.f32 %v1863, %v1954
    %v1956 = vmul.f32 %v1864, %v1954
    %v1957 = vadd.f32 %v1951, %v1955
    %v1958 = vadd.f32 %v1952, %v1956
    %s1959 = sld [smem:[#allocation9 + $0xf]]
    %v1960 = vstv %s1959
    %v1961 = vmul.f32 %v1885, %v1960
    %v1962 = vmul.f32 %v1886, %v1960
    %v1963 = vadd.f32 %v1957, %v1961
    %v1964 = vadd.f32 %v1958, %v1962
    %s1965 = sld [smem:[#allocation9 + $0x12]]
    %v1966 = vstv %s1965
    %v1967 = vmul.f32 %v1907, %v1966
    %v1968 = vmul.f32 %v1908, %v1966
    %v1969 = vadd.f32 %v1963, %v1967
    %v1970 = vadd.f32 %v1964, %v1968
    %s1971 = sld [smem:[#allocation9 + $0x15]]
    %v1972 = vstv %s1971
    %v1973 = vmul.f32 %v1929, %v1972
    %v1974 = vmul.f32 %v1930, %v1972
    %v1975 = vadd.f32 %v1969, %v1973
    %v1976 = vadd.f32 %v1970, %v1974
    %v1977 = vrot.slane %v1975, 7
    %v1978 = vrot.slane %v1976, 7
    %v1979 = vsel %vm326, %v1977, %v1978
    %v1980 = vsel %vm326, %v1978, %v1977
    %v1981 = vsel %vm90, %v1980, 0.0
    %v1982 = vsel %vm91, %v1979, 0.0
    %s1983 = sld [smem:[#allocation9 + $0x48]]
    %v1984 = vstv %s1983
    %v1985 = vmul.f32 %v1775, %v1984
    %v1986 = vmul.f32 %v1776, %v1984
    %s1987 = sld [smem:[#allocation9 + $0x4b]]
    %v1988 = vstv %s1987
    %v1989 = vmul.f32 %v1797, %v1988
    %v1990 = vmul.f32 %v1798, %v1988
    %v1991 = vadd.f32 %v1985, %v1989
    %v1992 = vadd.f32 %v1986, %v1990
    %s1993 = sld [smem:[#allocation9 + $0x4e]]
    %v1994 = vstv %s1993
    %v1995 = vmul.f32 %v1819, %v1994
    %v1996 = vmul.f32 %v1820, %v1994
    %v1997 = vadd.f32 %v1991, %v1995
    %v1998 = vadd.f32 %v1992, %v1996
    %s1999 = sld [smem:[#allocation9 + $0x51]]
    %v2000 = vstv %s1999
    %v2001 = vmul.f32 %v1841, %v2000
    %v2002 = vmul.f32 %v1842, %v2000
    %v2003 = vadd.f32 %v1997, %v2001
    %v2004 = vadd.f32 %v1998, %v2002
    %s2005 = sld [smem:[#allocation9 + $0x54]]
    %v2006 = vstv %s2005
    %v2007 = vmul.f32 %v1863, %v2006
    %v2008 = vmul.f32 %v1864, %v2006
    %v2009 = vadd.f32 %v2003, %v2007
    %v2010 = vadd.f32 %v2004, %v2008
    %s2011 = sld [smem:[#allocation9 + $0x57]]
    %v2012 = vstv %s2011
    %v2013 = vmul.f32 %v1885, %v2012
    %v2014 = vmul.f32 %v1886, %v2012
    %v2015 = vadd.f32 %v2009, %v2013
    %v2016 = vadd.f32 %v2010, %v2014
    %s2017 = sld [smem:[#allocation9 + $0x5a]]
    %v2018 = vstv %s2017
    %v2019 = vmul.f32 %v1907, %v2018
    %v2020 = vmul.f32 %v1908, %v2018
    %v2021 = vadd.f32 %v2015, %v2019
    %v2022 = vadd.f32 %v2016, %v2020
    %s2023 = sld [smem:[#allocation9 + $0x5d]]
    %v2024 = vstv %s2023
    %v2025 = vmul.f32 %v1929, %v2024
    %v2026 = vmul.f32 %v1930, %v2024
    %v2027 = vadd.f32 %v2021, %v2025
    %v2028 = vadd.f32 %v2022, %v2026
    %v2029 = vadd.f32 %v1981, %v2027
    %v2030 = vadd.f32 %v1982, %v2028
    %s2031 = sld [smem:[#allocation9 + $0x90]]
    %v2032 = vstv %s2031
    %v2033 = vmul.f32 %v1775, %v2032
    %v2034 = vmul.f32 %v1776, %v2032
    %s2035 = sld [smem:[#allocation9 + $0x93]]
    %v2036 = vstv %s2035
    %v2037 = vmul.f32 %v1797, %v2036
    %v2038 = vmul.f32 %v1798, %v2036
    %v2039 = vadd.f32 %v2033, %v2037
    %v2040 = vadd.f32 %v2034, %v2038
    %s2041 = sld [smem:[#allocation9 + $0x96]]
    %v2042 = vstv %s2041
    %v2043 = vmul.f32 %v1819, %v2042
    %v2044 = vmul.f32 %v1820, %v2042
    %v2045 = vadd.f32 %v2039, %v2043
    %v2046 = vadd.f32 %v2040, %v2044
    %s2047 = sld [smem:[#allocation9 + $0x99]]
    %v2048 = vstv %s2047
    %v2049 = vmul.f32 %v1841, %v2048
    %v2050 = vmul.f32 %v1842, %v2048
    %v2051 = vadd.f32 %v2045, %v2049
    %v2052 = vadd.f32 %v2046, %v2050
    %s2053 = sld [smem:[#allocation9 + $0x9c]]
    %v2054 = vstv %s2053
    %v2055 = vmul.f32 %v1863, %v2054
    %v2056 = vmul.f32 %v1864, %v2054
    %v2057 = vadd.f32 %v2051, %v2055
    %v2058 = vadd.f32 %v2052, %v2056
    %s2059 = sld [smem:[#allocation9 + $0x9f]]
    %v2060 = vstv %s2059
    %v2061 = vmul.f32 %v1885, %v2060
    %v2062 = vmul.f32 %v1886, %v2060
    %v2063 = vadd.f32 %v2057, %v2061
    %v2064 = vadd.f32 %v2058, %v2062
    %s2065 = sld [smem:[#allocation9 + $0xa2]]
    %v2066 = vstv %s2065
    %v2067 = vmul.f32 %v1907, %v2066
    %v2068 = vmul.f32 %v1908, %v2066
    %v2069 = vadd.f32 %v2063, %v2067
    %v2070 = vadd.f32 %v2064, %v2068
    %s2071 = sld [smem:[#allocation9 + $0xa5]]
    %v2072 = vstv %s2071
    %v2073 = vmul.f32 %v1929, %v2072
    %v2074 = vmul.f32 %v1930, %v2072
    %v2075 = vadd.f32 %v2069, %v2073
    %v2076 = vadd.f32 %v2070, %v2074
    %v2077 = vrot.slane %v2075, 1
    %v2078 = vrot.slane %v2076, 1
    %v2079 = vsel %vm427, %v2077, %v2078
    %v2080 = vsel %vm427, %v2078, %v2077
    %v2081 = vsel %vm88, %v2079, 0.0
    %v2082 = vsel %vm89, %v2080, 0.0
    %v2083 = vadd.f32 %v2029, %v2081
    %v2084 = vadd.f32 %v2030, %v2082
    %2085 = vrot.lane.b32.xlu0 %v2083, 1
    %v2086 = vpop.permute.xlu0 %2085
    %2087 = vrot.lane.b32.xlu0 %v2084, 1
    %v2088 = vpop.permute.xlu0 %2087
    %v2089 = vsel %vm93, %v2086, 0.0
    %v2090 = vsel %vm93, %v2088, 0.0
    %s2091 = sld [smem:[#allocation9 + $0x18]]
    %v2092 = vstv %s2091
    %v2093 = vmul.f32 %v1775, %v2092
    %v2094 = vmul.f32 %v1776, %v2092
    %s2095 = sld [smem:[#allocation9 + $0x1b]]
    %v2096 = vstv %s2095
    %v2097 = vmul.f32 %v1797, %v2096
    %v2098 = vmul.f32 %v1798, %v2096
    %v2099 = vadd.f32 %v2093, %v2097
    %v2100 = vadd.f32 %v2094, %v2098
    %s2101 = sld [smem:[#allocation9 + $0x1e]]
    %v2102 = vstv %s2101
    %v2103 = vmul.f32 %v1819, %v2102
    %v2104 = vmul.f32 %v1820, %v2102
    %v2105 = vadd.f32 %v2099, %v2103
    %v2106 = vadd.f32 %v2100, %v2104
    %s2107 = sld [smem:[#allocation9 + $0x21]]
    %v2108 = vstv %s2107
    %v2109 = vmul.f32 %v1841, %v2108
    %v2110 = vmul.f32 %v1842, %v2108
    %v2111 = vadd.f32 %v2105, %v2109
    %v2112 = vadd.f32 %v2106, %v2110
    %s2113 = sld [smem:[#allocation9 + $0x24]]
    %v2114 = vstv %s2113
    %v2115 = vmul.f32 %v1863, %v2114
    %v2116 = vmul.f32 %v1864, %v2114
    %v2117 = vadd.f32 %v2111, %v2115
    %v2118 = vadd.f32 %v2112, %v2116
    %s2119 = sld [smem:[#allocation9 + $0x27]]
    %v2120 = vstv %s2119
    %v2121 = vmul.f32 %v1885, %v2120
    %v2122 = vmul.f32 %v1886, %v2120
    %v2123 = vadd.f32 %v2117, %v2121
    %v2124 = vadd.f32 %v2118, %v2122
    %s2125 = sld [smem:[#allocation9 + $0x2a]]
    %v2126 = vstv %s2125
    %v2127 = vmul.f32 %v1907, %v2126
    %v2128 = vmul.f32 %v1908, %v2126
    %v2129 = vadd.f32 %v2123, %v2127
    %v2130 = vadd.f32 %v2124, %v2128
    %s2131 = sld [smem:[#allocation9 + $0x2d]]
    %v2132 = vstv %s2131
    %v2133 = vmul.f32 %v1929, %v2132
    %v2134 = vmul.f32 %v1930, %v2132
    %v2135 = vadd.f32 %v2129, %v2133
    %v2136 = vadd.f32 %v2130, %v2134
    %v2137 = vrot.slane %v2135, 7
    %v2138 = vrot.slane %v2136, 7
    %v2139 = vsel %vm326, %v2137, %v2138
    %v2140 = vsel %vm326, %v2138, %v2137
    %v2141 = vsel %vm90, %v2140, 0.0
    %v2142 = vsel %vm91, %v2139, 0.0
    %s2143 = sld [smem:[#allocation9 + $0x60]]
    %v2144 = vstv %s2143
    %v2145 = vmul.f32 %v1775, %v2144
    %v2146 = vmul.f32 %v1776, %v2144
    %s2147 = sld [smem:[#allocation9 + $0x63]]
    %v2148 = vstv %s2147
    %v2149 = vmul.f32 %v1797, %v2148
    %v2150 = vmul.f32 %v1798, %v2148
    %v2151 = vadd.f32 %v2145, %v2149
    %v2152 = vadd.f32 %v2146, %v2150
    %s2153 = sld [smem:[#allocation9 + $0x66]]
    %v2154 = vstv %s2153
    %v2155 = vmul.f32 %v1819, %v2154
    %v2156 = vmul.f32 %v1820, %v2154
    %v2157 = vadd.f32 %v2151, %v2155
    %v2158 = vadd.f32 %v2152, %v2156
    %s2159 = sld [smem:[#allocation9 + $0x69]]
    %v2160 = vstv %s2159
    %v2161 = vmul.f32 %v1841, %v2160
    %v2162 = vmul.f32 %v1842, %v2160
    %v2163 = vadd.f32 %v2157, %v2161
    %v2164 = vadd.f32 %v2158, %v2162
    %s2165 = sld [smem:[#allocation9 + $0x6c]]
    %v2166 = vstv %s2165
    %v2167 = vmul.f32 %v1863, %v2166
    %v2168 = vmul.f32 %v1864, %v2166
    %v2169 = vadd.f32 %v2163, %v2167
    %v2170 = vadd.f32 %v2164, %v2168
    %s2171 = sld [smem:[#allocation9 + $0x6f]]
    %v2172 = vstv %s2171
    %v2173 = vmul.f32 %v1885, %v2172
    %v2174 = vmul.f32 %v1886, %v2172
    %v2175 = vadd.f32 %v2169, %v2173
    %v2176 = vadd.f32 %v2170, %v2174
    %s2177 = sld [smem:[#allocation9 + $0x72]]
    %v2178 = vstv %s2177
    %v2179 = vmul.f32 %v1907, %v2178
    %v2180 = vmul.f32 %v1908, %v2178
    %v2181 = vadd.f32 %v2175, %v2179
    %v2182 = vadd.f32 %v2176, %v2180
    %s2183 = sld [smem:[#allocation9 + $0x75]]
    %v2184 = vstv %s2183
    %v2185 = vmul.f32 %v1929, %v2184
    %v2186 = vmul.f32 %v1930, %v2184
    %v2187 = vadd.f32 %v2181, %v2185
    %v2188 = vadd.f32 %v2182, %v2186
    %v2189 = vadd.f32 %v2141, %v2187
    %v2190 = vadd.f32 %v2142, %v2188
    %s2191 = sld [smem:[#allocation9 + $0xa8]]
    %v2192 = vstv %s2191
    %v2193 = vmul.f32 %v1775, %v2192
    %v2194 = vmul.f32 %v1776, %v2192
    %s2195 = sld [smem:[#allocation9 + $0xab]]
    %v2196 = vstv %s2195
    %v2197 = vmul.f32 %v1797, %v2196
    %v2198 = vmul.f32 %v1798, %v2196
    %v2199 = vadd.f32 %v2193, %v2197
    %v2200 = vadd.f32 %v2194, %v2198
    %s2201 = sld [smem:[#allocation9 + $0xae]]
    %v2202 = vstv %s2201
    %v2203 = vmul.f32 %v1819, %v2202
    %v2204 = vmul.f32 %v1820, %v2202
    %v2205 = vadd.f32 %v2199, %v2203
    %v2206 = vadd.f32 %v2200, %v2204
    %s2207 = sld [smem:[#allocation9 + $0xb1]]
    %v2208 = vstv %s2207
    %v2209 = vmul.f32 %v1841, %v2208
    %v2210 = vmul.f32 %v1842, %v2208
    %v2211 = vadd.f32 %v2205, %v2209
    %v2212 = vadd.f32 %v2206, %v2210
    %s2213 = sld [smem:[#allocation9 + $0xb4]]
    %v2214 = vstv %s2213
    %v2215 = vmul.f32 %v1863, %v2214
    %v2216 = vmul.f32 %v1864, %v2214
    %v2217 = vadd.f32 %v2211, %v2215
    %v2218 = vadd.f32 %v2212, %v2216
    %s2219 = sld [smem:[#allocation9 + $0xb7]]
    %v2220 = vstv %s2219
    %v2221 = vmul.f32 %v1885, %v2220
    %v2222 = vmul.f32 %v1886, %v2220
    %v2223 = vadd.f32 %v2217, %v2221
    %v2224 = vadd.f32 %v2218, %v2222
    %s2225 = sld [smem:[#allocation9 + $0xba]]
    %v2226 = vstv %s2225
    %v2227 = vmul.f32 %v1907, %v2226
    %v2228 = vmul.f32 %v1908, %v2226
    %v2229 = vadd.f32 %v2223, %v2227
    %v2230 = vadd.f32 %v2224, %v2228
    %s2231 = sld [smem:[#allocation9 + $0xbd]]
    %v2232 = vstv %s2231
    %v2233 = vmul.f32 %v1929, %v2232
    %v2234 = vmul.f32 %v1930, %v2232
    %v2235 = vadd.f32 %v2229, %v2233
    %v2236 = vadd.f32 %v2230, %v2234
    %v2237 = vrot.slane %v2235, 1
    %v2238 = vrot.slane %v2236, 1
    %v2239 = vsel %vm427, %v2237, %v2238
    %v2240 = vsel %vm427, %v2238, %v2237
    %v2241 = vsel %vm88, %v2239, 0.0
    %v2242 = vsel %vm89, %v2240, 0.0
    %v2243 = vadd.f32 %v2189, %v2241
    %v2244 = vadd.f32 %v2190, %v2242
    %v2245 = vadd.f32 %v2089, %v2243
    %v2246 = vadd.f32 %v2090, %v2244
    %s2247 = sld [smem:[#allocation9 + $0x30]]
    %v2248 = vstv %s2247
    %v2249 = vmul.f32 %v1775, %v2248
    %v2250 = vmul.f32 %v1776, %v2248
    %s2251 = sld [smem:[#allocation9 + $0x33]]
    %v2252 = vstv %s2251
    %v2253 = vmul.f32 %v1797, %v2252
    %v2254 = vmul.f32 %v1798, %v2252
    %v2255 = vadd.f32 %v2249, %v2253
    %v2256 = vadd.f32 %v2250, %v2254
    %s2257 = sld [smem:[#allocation9 + $0x36]]
    %v2258 = vstv %s2257
    %v2259 = vmul.f32 %v1819, %v2258
    %v2260 = vmul.f32 %v1820, %v2258
    %v2261 = vadd.f32 %v2255, %v2259
    %v2262 = vadd.f32 %v2256, %v2260
    %s2263 = sld [smem:[#allocation9 + $0x39]]
    %v2264 = vstv %s2263
    %v2265 = vmul.f32 %v1841, %v2264
    %v2266 = vmul.f32 %v1842, %v2264
    %v2267 = vadd.f32 %v2261, %v2265
    %v2268 = vadd.f32 %v2262, %v2266
    %s2269 = sld [smem:[#allocation9 + $0x3c]]
    %v2270 = vstv %s2269
    %v2271 = vmul.f32 %v1863, %v2270
    %v2272 = vmul.f32 %v1864, %v2270
    %v2273 = vadd.f32 %v2267, %v2271
    %v2274 = vadd.f32 %v2268, %v2272
    %s2275 = sld [smem:[#allocation9 + $0x3f]]
    %v2276 = vstv %s2275
    %v2277 = vmul.f32 %v1885, %v2276
    %v2278 = vmul.f32 %v1886, %v2276
    %v2279 = vadd.f32 %v2273, %v2277
    %v2280 = vadd.f32 %v2274, %v2278
    %s2281 = sld [smem:[#allocation9 + $0x42]]
    %v2282 = vstv %s2281
    %v2283 = vmul.f32 %v1907, %v2282
    %v2284 = vmul.f32 %v1908, %v2282
    %v2285 = vadd.f32 %v2279, %v2283
    %v2286 = vadd.f32 %v2280, %v2284
    %s2287 = sld [smem:[#allocation9 + $0x45]]
    %v2288 = vstv %s2287
    %v2289 = vmul.f32 %v1929, %v2288
    %v2290 = vmul.f32 %v1930, %v2288
    %v2291 = vadd.f32 %v2285, %v2289
    %v2292 = vadd.f32 %v2286, %v2290
    %v2293 = vrot.slane %v2291, 7
    %v2294 = vrot.slane %v2292, 7
    %v2295 = vsel %vm326, %v2293, %v2294
    %v2296 = vsel %vm326, %v2294, %v2293
    %v2297 = vsel %vm90, %v2296, 0.0
    %v2298 = vsel %vm91, %v2295, 0.0
    %s2299 = sld [smem:[#allocation9 + $0x78]]
    %v2300 = vstv %s2299
    %v2301 = vmul.f32 %v1775, %v2300
    %v2302 = vmul.f32 %v1776, %v2300
    %s2303 = sld [smem:[#allocation9 + $0x7b]]
    %v2304 = vstv %s2303
    %v2305 = vmul.f32 %v1797, %v2304
    %v2306 = vmul.f32 %v1798, %v2304
    %v2307 = vadd.f32 %v2301, %v2305
    %v2308 = vadd.f32 %v2302, %v2306
    %s2309 = sld [smem:[#allocation9 + $0x7e]]
    %v2310 = vstv %s2309
    %v2311 = vmul.f32 %v1819, %v2310
    %v2312 = vmul.f32 %v1820, %v2310
    %v2313 = vadd.f32 %v2307, %v2311
    %v2314 = vadd.f32 %v2308, %v2312
    %s2315 = sld [smem:[#allocation9 + $0x81]]
    %v2316 = vstv %s2315
    %v2317 = vmul.f32 %v1841, %v2316
    %v2318 = vmul.f32 %v1842, %v2316
    %v2319 = vadd.f32 %v2313, %v2317
    %v2320 = vadd.f32 %v2314, %v2318
    %s2321 = sld [smem:[#allocation9 + $0x84]]
    %v2322 = vstv %s2321
    %v2323 = vmul.f32 %v1863, %v2322
    %v2324 = vmul.f32 %v1864, %v2322
    %v2325 = vadd.f32 %v2319, %v2323
    %v2326 = vadd.f32 %v2320, %v2324
    %s2327 = sld [smem:[#allocation9 + $0x87]]
    %v2328 = vstv %s2327
    %v2329 = vmul.f32 %v1885, %v2328
    %v2330 = vmul.f32 %v1886, %v2328
    %v2331 = vadd.f32 %v2325, %v2329
    %v2332 = vadd.f32 %v2326, %v2330
    %s2333 = sld [smem:[#allocation9 + $0x8a]]
    %v2334 = vstv %s2333
    %v2335 = vmul.f32 %v1907, %v2334
    %v2336 = vmul.f32 %v1908, %v2334
    %v2337 = vadd.f32 %v2331, %v2335
    %v2338 = vadd.f32 %v2332, %v2336
    %s2339 = sld [smem:[#allocation9 + $0x8d]]
    %v2340 = vstv %s2339
    %v2341 = vmul.f32 %v1929, %v2340
    %v2342 = vmul.f32 %v1930, %v2340
    %v2343 = vadd.f32 %v2337, %v2341
    %v2344 = vadd.f32 %v2338, %v2342
    %v2345 = vadd.f32 %v2297, %v2343
    %v2346 = vadd.f32 %v2298, %v2344
    %s2347 = sld [smem:[#allocation9 + $0xc0]]
    %v2348 = vstv %s2347
    %v2349 = vmul.f32 %v1775, %v2348
    %v2350 = vmul.f32 %v1776, %v2348
    %s2351 = sld [smem:[#allocation9 + $0xc3]]
    %v2352 = vstv %s2351
    %v2353 = vmul.f32 %v1797, %v2352
    %v2354 = vmul.f32 %v1798, %v2352
    %v2355 = vadd.f32 %v2349, %v2353
    %v2356 = vadd.f32 %v2350, %v2354
    %s2357 = sld [smem:[#allocation9 + $0xc6]]
    %v2358 = vstv %s2357
    %v2359 = vmul.f32 %v1819, %v2358
    %v2360 = vmul.f32 %v1820, %v2358
    %v2361 = vadd.f32 %v2355, %v2359
    %v2362 = vadd.f32 %v2356, %v2360
    %s2363 = sld [smem:[#allocation9 + $0xc9]]
    %v2364 = vstv %s2363
    %v2365 = vmul.f32 %v1841, %v2364
    %v2366 = vmul.f32 %v1842, %v2364
    %v2367 = vadd.f32 %v2361, %v2365
    %v2368 = vadd.f32 %v2362, %v2366
    %s2369 = sld [smem:[#allocation9 + $0xcc]]
    %v2370 = vstv %s2369
    %v2371 = vmul.f32 %v1863, %v2370
    %v2372 = vmul.f32 %v1864, %v2370
    %v2373 = vadd.f32 %v2367, %v2371
    %v2374 = vadd.f32 %v2368, %v2372
    %s2375 = sld [smem:[#allocation9 + $0xcf]]
    %v2376 = vstv %s2375
    %v2377 = vmul.f32 %v1885, %v2376
    %v2378 = vmul.f32 %v1886, %v2376
    %v2379 = vadd.f32 %v2373, %v2377
    %v2380 = vadd.f32 %v2374, %v2378
    %s2381 = sld [smem:[#allocation9 + $0xd2]]
    %v2382 = vstv %s2381
    %v2383 = vmul.f32 %v1907, %v2382
    %v2384 = vmul.f32 %v1908, %v2382
    %v2385 = vadd.f32 %v2379, %v2383
    %v2386 = vadd.f32 %v2380, %v2384
    %s2387 = sld [smem:[#allocation9 + $0xd5]]
    %v2388 = vstv %s2387
    %v2389 = vmul.f32 %v1929, %v2388
    %v2390 = vmul.f32 %v1930, %v2388
    %v2391 = vadd.f32 %v2385, %v2389
    %v2392 = vadd.f32 %v2386, %v2390
    %v2393 = vrot.slane %v2391, 1
    %v2394 = vrot.slane %v2392, 1
    %v2395 = vsel %vm427, %v2393, %v2394
    %v2396 = vsel %vm427, %v2394, %v2393
    %v2397 = vsel %vm88, %v2395, 0.0
    %v2398 = vsel %vm89, %v2396, 0.0
    %v2399 = vadd.f32 %v2345, %v2397
    %v2400 = vadd.f32 %v2346, %v2398
    %2401 = vrot.lane.b32.xlu0 %v2399, 127
    %v2402 = vpop.permute.xlu0 %2401
    %2403 = vrot.lane.b32.xlu0 %v2400, 127
    %v2404 = vpop.permute.xlu0 %2403
    %v2405 = vsel %vm92, %v2402, 0.0
    %v2406 = vsel %vm92, %v2404, 0.0
    %v2407 = vadd.f32 %v2245, %v2405
    %v2408 = vadd.f32 %v2246, %v2406
    %s2409 = sld [smem:[#allocation10]]
    %v2410 = vstv %s2409
    %v2411 = vadd.f32 %v2407, %v2410
    %v2412 = vadd.f32 %v2408, %v2410
    %v2413 = vtanh.pop %v2411
    %v2414 = vtanh.pop %v2412
    %v2415 = vadd.f32 %v2413, %v1747
    %v2416 = vadd.f32 %v2414, %v1748
    %s2417 = scalar_lea.vmem [#allocation12], 48
    %2418 = vst [vmem:[%s2417] sm:$0xff] %v2415
    %2419 = vst [vmem:[%s2417 + $0x8] sm:$0xff] %v2416
    %s2420 = sld [smem:[#allocation9 + $0x1]]
    %v2421 = vstv %s2420
    %v2422 = vmul.f32 %v1775, %v2421
    %v2423 = vmul.f32 %v1776, %v2421
    %s2424 = sld [smem:[#allocation9 + $0x4]]
    %v2425 = vstv %s2424
    %v2426 = vmul.f32 %v1797, %v2425
    %v2427 = vmul.f32 %v1798, %v2425
    %v2428 = vadd.f32 %v2422, %v2426
    %v2429 = vadd.f32 %v2423, %v2427
    %s2430 = sld [smem:[#allocation9 + $0x7]]
    %v2431 = vstv %s2430
    %v2432 = vmul.f32 %v1819, %v2431
    %v2433 = vmul.f32 %v1820, %v2431
    %v2434 = vadd.f32 %v2428, %v2432
    %v2435 = vadd.f32 %v2429, %v2433
    %s2436 = sld [smem:[#allocation9 + $0xa]]
    %v2437 = vstv %s2436
    %v2438 = vmul.f32 %v1841, %v2437
    %v2439 = vmul.f32 %v1842, %v2437
    %v2440 = vadd.f32 %v2434, %v2438
    %v2441 = vadd.f32 %v2435, %v2439
    %s2442 = sld [smem:[#allocation9 + $0xd]]
    %v2443 = vstv %s2442
    %v2444 = vmul.f32 %v1863, %v2443
    %v2445 = vmul.f32 %v1864, %v2443
    %v2446 = vadd.f32 %v2440, %v2444
    %v2447 = vadd.f32 %v2441, %v2445
    %s2448 = sld [smem:[#allocation9 + $0x10]]
    %v2449 = vstv %s2448
    %v2450 = vmul.f32 %v1885, %v2449
    %v2451 = vmul.f32 %v1886, %v2449
    %v2452 = vadd.f32 %v2446, %v2450
    %v2453 = vadd.f32 %v2447, %v2451
    %s2454 = sld [smem:[#allocation9 + $0x13]]
    %v2455 = vstv %s2454
    %v2456 = vmul.f32 %v1907, %v2455
    %v2457 = vmul.f32 %v1908, %v2455
    %v2458 = vadd.f32 %v2452, %v2456
    %v2459 = vadd.f32 %v2453, %v2457
    %s2460 = sld [smem:[#allocation9 + $0x16]]
    %v2461 = vstv %s2460
    %v2462 = vmul.f32 %v1929, %v2461
    %v2463 = vmul.f32 %v1930, %v2461
    %v2464 = vadd.f32 %v2458, %v2462
    %v2465 = vadd.f32 %v2459, %v2463
    %v2466 = vrot.slane %v2464, 7
    %v2467 = vrot.slane %v2465, 7
    %v2468 = vsel %vm326, %v2466, %v2467
    %v2469 = vsel %vm326, %v2467, %v2466
    %v2470 = vsel %vm90, %v2469, 0.0
    %v2471 = vsel %vm91, %v2468, 0.0
    %s2472 = sld [smem:[#allocation9 + $0x49]]
    %v2473 = vstv %s2472
    %v2474 = vmul.f32 %v1775, %v2473
    %v2475 = vmul.f32 %v1776, %v2473
    %s2476 = sld [smem:[#allocation9 + $0x4c]]
    %v2477 = vstv %s2476
    %v2478 = vmul.f32 %v1797, %v2477
    %v2479 = vmul.f32 %v1798, %v2477
    %v2480 = vadd.f32 %v2474, %v2478
    %v2481 = vadd.f32 %v2475, %v2479
    %s2482 = sld [smem:[#allocation9 + $0x4f]]
    %v2483 = vstv %s2482
    %v2484 = vmul.f32 %v1819, %v2483
    %v2485 = vmul.f32 %v1820, %v2483
    %v2486 = vadd.f32 %v2480, %v2484
    %v2487 = vadd.f32 %v2481, %v2485
    %s2488 = sld [smem:[#allocation9 + $0x52]]
    %v2489 = vstv %s2488
    %v2490 = vmul.f32 %v1841, %v2489
    %v2491 = vmul.f32 %v1842, %v2489
    %v2492 = vadd.f32 %v2486, %v2490
    %v2493 = vadd.f32 %v2487, %v2491
    %s2494 = sld [smem:[#allocation9 + $0x55]]
    %v2495 = vstv %s2494
    %v2496 = vmul.f32 %v1863, %v2495
    %v2497 = vmul.f32 %v1864, %v2495
    %v2498 = vadd.f32 %v2492, %v2496
    %v2499 = vadd.f32 %v2493, %v2497
    %s2500 = sld [smem:[#allocation9 + $0x58]]
    %v2501 = vstv %s2500
    %v2502 = vmul.f32 %v1885, %v2501
    %v2503 = vmul.f32 %v1886, %v2501
    %v2504 = vadd.f32 %v2498, %v2502
    %v2505 = vadd.f32 %v2499, %v2503
    %s2506 = sld [smem:[#allocation9 + $0x5b]]
    %v2507 = vstv %s2506
    %v2508 = vmul.f32 %v1907, %v2507
    %v2509 = vmul.f32 %v1908, %v2507
    %v2510 = vadd.f32 %v2504, %v2508
    %v2511 = vadd.f32 %v2505, %v2509
    %s2512 = sld [smem:[#allocation9 + $0x5e]]
    %v2513 = vstv %s2512
    %v2514 = vmul.f32 %v1929, %v2513
    %v2515 = vmul.f32 %v1930, %v2513
    %v2516 = vadd.f32 %v2510, %v2514
    %v2517 = vadd.f32 %v2511, %v2515
    %v2518 = vadd.f32 %v2470, %v2516
    %v2519 = vadd.f32 %v2471, %v2517
    %s2520 = sld [smem:[#allocation9 + $0x91]]
    %v2521 = vstv %s2520
    %v2522 = vmul.f32 %v1775, %v2521
    %v2523 = vmul.f32 %v1776, %v2521
    %s2524 = sld [smem:[#allocation9 + $0x94]]
    %v2525 = vstv %s2524
    %v2526 = vmul.f32 %v1797, %v2525
    %v2527 = vmul.f32 %v1798, %v2525
    %v2528 = vadd.f32 %v2522, %v2526
    %v2529 = vadd.f32 %v2523, %v2527
    %s2530 = sld [smem:[#allocation9 + $0x97]]
    %v2531 = vstv %s2530
    %v2532 = vmul.f32 %v1819, %v2531
    %v2533 = vmul.f32 %v1820, %v2531
    %v2534 = vadd.f32 %v2528, %v2532
    %v2535 = vadd.f32 %v2529, %v2533
    %s2536 = sld [smem:[#allocation9 + $0x9a]]
    %v2537 = vstv %s2536
    %v2538 = vmul.f32 %v1841, %v2537
    %v2539 = vmul.f32 %v1842, %v2537
    %v2540 = vadd.f32 %v2534, %v2538
    %v2541 = vadd.f32 %v2535, %v2539
    %s2542 = sld [smem:[#allocation9 + $0x9d]]
    %v2543 = vstv %s2542
    %v2544 = vmul.f32 %v1863, %v2543
    %v2545 = vmul.f32 %v1864, %v2543
    %v2546 = vadd.f32 %v2540, %v2544
    %v2547 = vadd.f32 %v2541, %v2545
    %s2548 = sld [smem:[#allocation9 + $0xa0]]
    %v2549 = vstv %s2548
    %v2550 = vmul.f32 %v1885, %v2549
    %v2551 = vmul.f32 %v1886, %v2549
    %v2552 = vadd.f32 %v2546, %v2550
    %v2553 = vadd.f32 %v2547, %v2551
    %s2554 = sld [smem:[#allocation9 + $0xa3]]
    %v2555 = vstv %s2554
    %v2556 = vmul.f32 %v1907, %v2555
    %v2557 = vmul.f32 %v1908, %v2555
    %v2558 = vadd.f32 %v2552, %v2556
    %v2559 = vadd.f32 %v2553, %v2557
    %s2560 = sld [smem:[#allocation9 + $0xa6]]
    %v2561 = vstv %s2560
    %v2562 = vmul.f32 %v1929, %v2561
    %v2563 = vmul.f32 %v1930, %v2561
    %v2564 = vadd.f32 %v2558, %v2562
    %v2565 = vadd.f32 %v2559, %v2563
    %v2566 = vrot.slane %v2564, 1
    %v2567 = vrot.slane %v2565, 1
    %v2568 = vsel %vm427, %v2566, %v2567
    %v2569 = vsel %vm427, %v2567, %v2566
    %v2570 = vsel %vm88, %v2568, 0.0
    %v2571 = vsel %vm89, %v2569, 0.0
    %v2572 = vadd.f32 %v2518, %v2570
    %v2573 = vadd.f32 %v2519, %v2571
    %2574 = vrot.lane.b32.xlu0 %v2572, 1
    %v2575 = vpop.permute.xlu0 %2574
    %2576 = vrot.lane.b32.xlu0 %v2573, 1
    %v2577 = vpop.permute.xlu0 %2576
    %v2578 = vsel %vm93, %v2575, 0.0
    %v2579 = vsel %vm93, %v2577, 0.0
    %s2580 = sld [smem:[#allocation9 + $0x19]]
    %v2581 = vstv %s2580
    %v2582 = vmul.f32 %v1775, %v2581
    %v2583 = vmul.f32 %v1776, %v2581
    %s2584 = sld [smem:[#allocation9 + $0x1c]]
    %v2585 = vstv %s2584
    %v2586 = vmul.f32 %v1797, %v2585
    %v2587 = vmul.f32 %v1798, %v2585
    %v2588 = vadd.f32 %v2582, %v2586
    %v2589 = vadd.f32 %v2583, %v2587
    %s2590 = sld [smem:[#allocation9 + $0x1f]]
    %v2591 = vstv %s2590
    %v2592 = vmul.f32 %v1819, %v2591
    %v2593 = vmul.f32 %v1820, %v2591
    %v2594 = vadd.f32 %v2588, %v2592
    %v2595 = vadd.f32 %v2589, %v2593
    %s2596 = sld [smem:[#allocation9 + $0x22]]
    %v2597 = vstv %s2596
    %v2598 = vmul.f32 %v1841, %v2597
    %v2599 = vmul.f32 %v1842, %v2597
    %v2600 = vadd.f32 %v2594, %v2598
    %v2601 = vadd.f32 %v2595, %v2599
    %s2602 = sld [smem:[#allocation9 + $0x25]]
    %v2603 = vstv %s2602
    %v2604 = vmul.f32 %v1863, %v2603
    %v2605 = vmul.f32 %v1864, %v2603
    %v2606 = vadd.f32 %v2600, %v2604
    %v2607 = vadd.f32 %v2601, %v2605
    %s2608 = sld [smem:[#allocation9 + $0x28]]
    %v2609 = vstv %s2608
    %v2610 = vmul.f32 %v1885, %v2609
    %v2611 = vmul.f32 %v1886, %v2609
    %v2612 = vadd.f32 %v2606, %v2610
    %v2613 = vadd.f32 %v2607, %v2611
    %s2614 = sld [smem:[#allocation9 + $0x2b]]
    %v2615 = vstv %s2614
    %v2616 = vmul.f32 %v1907, %v2615
    %v2617 = vmul.f32 %v1908, %v2615
    %v2618 = vadd.f32 %v2612, %v2616
    %v2619 = vadd.f32 %v2613, %v2617
    %s2620 = sld [smem:[#allocation9 + $0x2e]]
    %v2621 = vstv %s2620
    %v2622 = vmul.f32 %v1929, %v2621
    %v2623 = vmul.f32 %v1930, %v2621
    %v2624 = vadd.f32 %v2618, %v2622
    %v2625 = vadd.f32 %v2619, %v2623
    %v2626 = vrot.slane %v2624, 7
    %v2627 = vrot.slane %v2625, 7
    %v2628 = vsel %vm326, %v2626, %v2627
    %v2629 = vsel %vm326, %v2627, %v2626
    %v2630 = vsel %vm90, %v2629, 0.0
    %v2631 = vsel %vm91, %v2628, 0.0
    %s2632 = sld [smem:[#allocation9 + $0x61]]
    %v2633 = vstv %s2632
    %v2634 = vmul.f32 %v1775, %v2633
    %v2635 = vmul.f32 %v1776, %v2633
    %s2636 = sld [smem:[#allocation9 + $0x64]]
    %v2637 = vstv %s2636
    %v2638 = vmul.f32 %v1797, %v2637
    %v2639 = vmul.f32 %v1798, %v2637
    %v2640 = vadd.f32 %v2634, %v2638
    %v2641 = vadd.f32 %v2635, %v2639
    %s2642 = sld [smem:[#allocation9 + $0x67]]
    %v2643 = vstv %s2642
    %v2644 = vmul.f32 %v1819, %v2643
    %v2645 = vmul.f32 %v1820, %v2643
    %v2646 = vadd.f32 %v2640, %v2644
    %v2647 = vadd.f32 %v2641, %v2645
    %s2648 = sld [smem:[#allocation9 + $0x6a]]
    %v2649 = vstv %s2648
    %v2650 = vmul.f32 %v1841, %v2649
    %v2651 = vmul.f32 %v1842, %v2649
    %v2652 = vadd.f32 %v2646, %v2650
    %v2653 = vadd.f32 %v2647, %v2651
    %s2654 = sld [smem:[#allocation9 + $0x6d]]
    %v2655 = vstv %s2654
    %v2656 = vmul.f32 %v1863, %v2655
    %v2657 = vmul.f32 %v1864, %v2655
    %v2658 = vadd.f32 %v2652, %v2656
    %v2659 = vadd.f32 %v2653, %v2657
    %s2660 = sld [smem:[#allocation9 + $0x70]]
    %v2661 = vstv %s2660
    %v2662 = vmul.f32 %v1885, %v2661
    %v2663 = vmul.f32 %v1886, %v2661
    %v2664 = vadd.f32 %v2658, %v2662
    %v2665 = vadd.f32 %v2659, %v2663
    %s2666 = sld [smem:[#allocation9 + $0x73]]
    %v2667 = vstv %s2666
    %v2668 = vmul.f32 %v1907, %v2667
    %v2669 = vmul.f32 %v1908, %v2667
    %v2670 = vadd.f32 %v2664, %v2668
    %v2671 = vadd.f32 %v2665, %v2669
    %s2672 = sld [smem:[#allocation9 + $0x76]]
    %v2673 = vstv %s2672
    %v2674 = vmul.f32 %v1929, %v2673
    %v2675 = vmul.f32 %v1930, %v2673
    %v2676 = vadd.f32 %v2670, %v2674
    %v2677 = vadd.f32 %v2671, %v2675
    %v2678 = vadd.f32 %v2630, %v2676
    %v2679 = vadd.f32 %v2631, %v2677
    %s2680 = sld [smem:[#allocation9 + $0xa9]]
    %v2681 = vstv %s2680
    %v2682 = vmul.f32 %v1775, %v2681
    %v2683 = vmul.f32 %v1776, %v2681
    %s2684 = sld [smem:[#allocation9 + $0xac]]
    %v2685 = vstv %s2684
    %v2686 = vmul.f32 %v1797, %v2685
    %v2687 = vmul.f32 %v1798, %v2685
    %v2688 = vadd.f32 %v2682, %v2686
    %v2689 = vadd.f32 %v2683, %v2687
    %s2690 = sld [smem:[#allocation9 + $0xaf]]
    %v2691 = vstv %s2690
    %v2692 = vmul.f32 %v1819, %v2691
    %v2693 = vmul.f32 %v1820, %v2691
    %v2694 = vadd.f32 %v2688, %v2692
    %v2695 = vadd.f32 %v2689, %v2693
    %s2696 = sld [smem:[#allocation9 + $0xb2]]
    %v2697 = vstv %s2696
    %v2698 = vmul.f32 %v1841, %v2697
    %v2699 = vmul.f32 %v1842, %v2697
    %v2700 = vadd.f32 %v2694, %v2698
    %v2701 = vadd.f32 %v2695, %v2699
    %s2702 = sld [smem:[#allocation9 + $0xb5]]
    %v2703 = vstv %s2702
    %v2704 = vmul.f32 %v1863, %v2703
    %v2705 = vmul.f32 %v1864, %v2703
    %v2706 = vadd.f32 %v2700, %v2704
    %v2707 = vadd.f32 %v2701, %v2705
    %s2708 = sld [smem:[#allocation9 + $0xb8]]
    %v2709 = vstv %s2708
    %v2710 = vmul.f32 %v1885, %v2709
    %v2711 = vmul.f32 %v1886, %v2709
    %v2712 = vadd.f32 %v2706, %v2710
    %v2713 = vadd.f32 %v2707, %v2711
    %s2714 = sld [smem:[#allocation9 + $0xbb]]
    %v2715 = vstv %s2714
    %v2716 = vmul.f32 %v1907, %v2715
    %v2717 = vmul.f32 %v1908, %v2715
    %v2718 = vadd.f32 %v2712, %v2716
    %v2719 = vadd.f32 %v2713, %v2717
    %s2720 = sld [smem:[#allocation9 + $0xbe]]
    %v2721 = vstv %s2720
    %v2722 = vmul.f32 %v1929, %v2721
    %v2723 = vmul.f32 %v1930, %v2721
    %v2724 = vadd.f32 %v2718, %v2722
    %v2725 = vadd.f32 %v2719, %v2723
    %v2726 = vrot.slane %v2724, 1
    %v2727 = vrot.slane %v2725, 1
    %v2728 = vsel %vm427, %v2726, %v2727
    %v2729 = vsel %vm427, %v2727, %v2726
    %v2730 = vsel %vm88, %v2728, 0.0
    %v2731 = vsel %vm89, %v2729, 0.0
    %v2732 = vadd.f32 %v2678, %v2730
    %v2733 = vadd.f32 %v2679, %v2731
    %v2734 = vadd.f32 %v2578, %v2732
    %v2735 = vadd.f32 %v2579, %v2733
    %s2736 = sld [smem:[#allocation9 + $0x31]]
    %v2737 = vstv %s2736
    %v2738 = vmul.f32 %v1775, %v2737
    %v2739 = vmul.f32 %v1776, %v2737
    %s2740 = sld [smem:[#allocation9 + $0x34]]
    %v2741 = vstv %s2740
    %v2742 = vmul.f32 %v1797, %v2741
    %v2743 = vmul.f32 %v1798, %v2741
    %v2744 = vadd.f32 %v2738, %v2742
    %v2745 = vadd.f32 %v2739, %v2743
    %s2746 = sld [smem:[#allocation9 + $0x37]]
    %v2747 = vstv %s2746
    %v2748 = vmul.f32 %v1819, %v2747
    %v2749 = vmul.f32 %v1820, %v2747
    %v2750 = vadd.f32 %v2744, %v2748
    %v2751 = vadd.f32 %v2745, %v2749
    %s2752 = sld [smem:[#allocation9 + $0x3a]]
    %v2753 = vstv %s2752
    %v2754 = vmul.f32 %v1841, %v2753
    %v2755 = vmul.f32 %v1842, %v2753
    %v2756 = vadd.f32 %v2750, %v2754
    %v2757 = vadd.f32 %v2751, %v2755
    %s2758 = sld [smem:[#allocation9 + $0x3d]]
    %v2759 = vstv %s2758
    %v2760 = vmul.f32 %v1863, %v2759
    %v2761 = vmul.f32 %v1864, %v2759
    %v2762 = vadd.f32 %v2756, %v2760
    %v2763 = vadd.f32 %v2757, %v2761
    %s2764 = sld [smem:[#allocation9 + $0x40]]
    %v2765 = vstv %s2764
    %v2766 = vmul.f32 %v1885, %v2765
    %v2767 = vmul.f32 %v1886, %v2765
    %v2768 = vadd.f32 %v2762, %v2766
    %v2769 = vadd.f32 %v2763, %v2767
    %s2770 = sld [smem:[#allocation9 + $0x43]]
    %v2771 = vstv %s2770
    %v2772 = vmul.f32 %v1907, %v2771
    %v2773 = vmul.f32 %v1908, %v2771
    %v2774 = vadd.f32 %v2768, %v2772
    %v2775 = vadd.f32 %v2769, %v2773
    %s2776 = sld [smem:[#allocation9 + $0x46]]
    %v2777 = vstv %s2776
    %v2778 = vmul.f32 %v1929, %v2777
    %v2779 = vmul.f32 %v1930, %v2777
    %v2780 = vadd.f32 %v2774, %v2778
    %v2781 = vadd.f32 %v2775, %v2779
    %v2782 = vrot.slane %v2780, 7
    %v2783 = vrot.slane %v2781, 7
    %v2784 = vsel %vm326, %v2782, %v2783
    %v2785 = vsel %vm326, %v2783, %v2782
    %v2786 = vsel %vm90, %v2785, 0.0
    %v2787 = vsel %vm91, %v2784, 0.0
    %s2788 = sld [smem:[#allocation9 + $0x79]]
    %v2789 = vstv %s2788
    %v2790 = vmul.f32 %v1775, %v2789
    %v2791 = vmul.f32 %v1776, %v2789
    %s2792 = sld [smem:[#allocation9 + $0x7c]]
    %v2793 = vstv %s2792
    %v2794 = vmul.f32 %v1797, %v2793
    %v2795 = vmul.f32 %v1798, %v2793
    %v2796 = vadd.f32 %v2790, %v2794
    %v2797 = vadd.f32 %v2791, %v2795
    %s2798 = sld [smem:[#allocation9 + $0x7f]]
    %v2799 = vstv %s2798
    %v2800 = vmul.f32 %v1819, %v2799
    %v2801 = vmul.f32 %v1820, %v2799
    %v2802 = vadd.f32 %v2796, %v2800
    %v2803 = vadd.f32 %v2797, %v2801
    %s2804 = sld [smem:[#allocation9 + $0x82]]
    %v2805 = vstv %s2804
    %v2806 = vmul.f32 %v1841, %v2805
    %v2807 = vmul.f32 %v1842, %v2805
    %v2808 = vadd.f32 %v2802, %v2806
    %v2809 = vadd.f32 %v2803, %v2807
    %s2810 = sld [smem:[#allocation9 + $0x85]]
    %v2811 = vstv %s2810
    %v2812 = vmul.f32 %v1863, %v2811
    %v2813 = vmul.f32 %v1864, %v2811
    %v2814 = vadd.f32 %v2808, %v2812
    %v2815 = vadd.f32 %v2809, %v2813
    %s2816 = sld [smem:[#allocation9 + $0x88]]
    %v2817 = vstv %s2816
    %v2818 = vmul.f32 %v1885, %v2817
    %v2819 = vmul.f32 %v1886, %v2817
    %v2820 = vadd.f32 %v2814, %v2818
    %v2821 = vadd.f32 %v2815, %v2819
    %s2822 = sld [smem:[#allocation9 + $0x8b]]
    %v2823 = vstv %s2822
    %v2824 = vmul.f32 %v1907, %v2823
    %v2825 = vmul.f32 %v1908, %v2823
    %v2826 = vadd.f32 %v2820, %v2824
    %v2827 = vadd.f32 %v2821, %v2825
    %s2828 = sld [smem:[#allocation9 + $0x8e]]
    %v2829 = vstv %s2828
    %v2830 = vmul.f32 %v1929, %v2829
    %v2831 = vmul.f32 %v1930, %v2829
    %v2832 = vadd.f32 %v2826, %v2830
    %v2833 = vadd.f32 %v2827, %v2831
    %v2834 = vadd.f32 %v2786, %v2832
    %v2835 = vadd.f32 %v2787, %v2833
    %s2836 = sld [smem:[#allocation9 + $0xc1]]
    %v2837 = vstv %s2836
    %v2838 = vmul.f32 %v1775, %v2837
    %v2839 = vmul.f32 %v1776, %v2837
    %s2840 = sld [smem:[#allocation9 + $0xc4]]
    %v2841 = vstv %s2840
    %v2842 = vmul.f32 %v1797, %v2841
    %v2843 = vmul.f32 %v1798, %v2841
    %v2844 = vadd.f32 %v2838, %v2842
    %v2845 = vadd.f32 %v2839, %v2843
    %s2846 = sld [smem:[#allocation9 + $0xc7]]
    %v2847 = vstv %s2846
    %v2848 = vmul.f32 %v1819, %v2847
    %v2849 = vmul.f32 %v1820, %v2847
    %v2850 = vadd.f32 %v2844, %v2848
    %v2851 = vadd.f32 %v2845, %v2849
    %s2852 = sld [smem:[#allocation9 + $0xca]]
    %v2853 = vstv %s2852
    %v2854 = vmul.f32 %v1841, %v2853
    %v2855 = vmul.f32 %v1842, %v2853
    %v2856 = vadd.f32 %v2850, %v2854
    %v2857 = vadd.f32 %v2851, %v2855
    %s2858 = sld [smem:[#allocation9 + $0xcd]]
    %v2859 = vstv %s2858
    %v2860 = vmul.f32 %v1863, %v2859
    %v2861 = vmul.f32 %v1864, %v2859
    %v2862 = vadd.f32 %v2856, %v2860
    %v2863 = vadd.f32 %v2857, %v2861
    %s2864 = sld [smem:[#allocation9 + $0xd0]]
    %v2865 = vstv %s2864
    %v2866 = vmul.f32 %v1885, %v2865
    %v2867 = vmul.f32 %v1886, %v2865
    %v2868 = vadd.f32 %v2862, %v2866
    %v2869 = vadd.f32 %v2863, %v2867
    %s2870 = sld [smem:[#allocation9 + $0xd3]]
    %v2871 = vstv %s2870
    %v2872 = vmul.f32 %v1907, %v2871
    %v2873 = vmul.f32 %v1908, %v2871
    %v2874 = vadd.f32 %v2868, %v2872
    %v2875 = vadd.f32 %v2869, %v2873
    %s2876 = sld [smem:[#allocation9 + $0xd6]]
    %v2877 = vstv %s2876
    %v2878 = vmul.f32 %v1929, %v2877
    %v2879 = vmul.f32 %v1930, %v2877
    %v2880 = vadd.f32 %v2874, %v2878
    %v2881 = vadd.f32 %v2875, %v2879
    %v2882 = vrot.slane %v2880, 1
    %v2883 = vrot.slane %v2881, 1
    %v2884 = vsel %vm427, %v2882, %v2883
    %v2885 = vsel %vm427, %v2883, %v2882
    %v2886 = vsel %vm88, %v2884, 0.0
    %v2887 = vsel %vm89, %v2885, 0.0
    %v2888 = vadd.f32 %v2834, %v2886
    %v2889 = vadd.f32 %v2835, %v2887
    %2890 = vrot.lane.b32.xlu0 %v2888, 127
    %v2891 = vpop.permute.xlu0 %2890
    %2892 = vrot.lane.b32.xlu0 %v2889, 127
    %v2893 = vpop.permute.xlu0 %2892
    %v2894 = vsel %vm92, %v2891, 0.0
    %v2895 = vsel %vm92, %v2893, 0.0
    %v2896 = vadd.f32 %v2734, %v2894
    %v2897 = vadd.f32 %v2735, %v2895
    %s2898 = sld [smem:[#allocation10 + $0x1]]
    %v2899 = vstv %s2898
    %v2900 = vadd.f32 %v2896, %v2899
    %v2901 = vadd.f32 %v2897, %v2899
    %v2902 = vtanh.pop %v2900
    %v2903 = vtanh.pop %v2901
    %v2904 = vadd.f32 %v2902, %v1750
    %v2905 = vadd.f32 %v2903, %v1751
    %s2906 = scalar_lea.vmem [#allocation12], 64
    %2907 = vst [vmem:[%s2906] sm:$0xff] %v2904
    %2908 = vst [vmem:[%s2906 + $0x8] sm:$0xff] %v2905
    %s2909 = sld [smem:[#allocation9 + $0x2]]
    %v2910 = vstv %s2909
    %v2911 = vmul.f32 %v1775, %v2910
    %v2912 = vmul.f32 %v1776, %v2910
    %s2913 = sld [smem:[#allocation9 + $0x5]]
    %v2914 = vstv %s2913
    %v2915 = vmul.f32 %v1797, %v2914
    %v2916 = vmul.f32 %v1798, %v2914
    %v2917 = vadd.f32 %v2911, %v2915
    %v2918 = vadd.f32 %v2912, %v2916
    %s2919 = sld [smem:[#allocation9 + $0x8]]
    %v2920 = vstv %s2919
    %v2921 = vmul.f32 %v1819, %v2920
    %v2922 = vmul.f32 %v1820, %v2920
    %v2923 = vadd.f32 %v2917, %v2921
    %v2924 = vadd.f32 %v2918, %v2922
    %s2925 = sld [smem:[#allocation9 + $0xb]]
    %v2926 = vstv %s2925
    %v2927 = vmul.f32 %v1841, %v2926
    %v2928 = vmul.f32 %v1842, %v2926
    %v2929 = vadd.f32 %v2923, %v2927
    %v2930 = vadd.f32 %v2924, %v2928
    %s2931 = sld [smem:[#allocation9 + $0xe]]
    %v2932 = vstv %s2931
    %v2933 = vmul.f32 %v1863, %v2932
    %v2934 = vmul.f32 %v1864, %v2932
    %v2935 = vadd.f32 %v2929, %v2933
    %v2936 = vadd.f32 %v2930, %v2934
    %s2937 = sld [smem:[#allocation9 + $0x11]]
    %v2938 = vstv %s2937
    %v2939 = vmul.f32 %v1885, %v2938
    %v2940 = vmul.f32 %v1886, %v2938
    %v2941 = vadd.f32 %v2935, %v2939
    %v2942 = vadd.f32 %v2936, %v2940
    %s2943 = sld [smem:[#allocation9 + $0x14]]
    %v2944 = vstv %s2943
    %v2945 = vmul.f32 %v1907, %v2944
    %v2946 = vmul.f32 %v1908, %v2944
    %v2947 = vadd.f32 %v2941, %v2945
    %v2948 = vadd.f32 %v2942, %v2946
    %s2949 = sld [smem:[#allocation9 + $0x17]]
    %v2950 = vstv %s2949
    %v2951 = vmul.f32 %v1929, %v2950
    %v2952 = vmul.f32 %v1930, %v2950
    %v2953 = vadd.f32 %v2947, %v2951
    %v2954 = vadd.f32 %v2948, %v2952
    %v2955 = vrot.slane %v2953, 7
    %v2956 = vrot.slane %v2954, 7
    %v2957 = vsel %vm326, %v2955, %v2956
    %v2958 = vsel %vm326, %v2956, %v2955
    %v2959 = vsel %vm90, %v2958, 0.0
    %v2960 = vsel %vm91, %v2957, 0.0
    %s2961 = sld [smem:[#allocation9 + $0x4a]]
    %v2962 = vstv %s2961
    %v2963 = vmul.f32 %v1775, %v2962
    %v2964 = vmul.f32 %v1776, %v2962
    %s2965 = sld [smem:[#allocation9 + $0x4d]]
    %v2966 = vstv %s2965
    %v2967 = vmul.f32 %v1797, %v2966
    %v2968 = vmul.f32 %v1798, %v2966
    %v2969 = vadd.f32 %v2963, %v2967
    %v2970 = vadd.f32 %v2964, %v2968
    %s2971 = sld [smem:[#allocation9 + $0x50]]
    %v2972 = vstv %s2971
    %v2973 = vmul.f32 %v1819, %v2972
    %v2974 = vmul.f32 %v1820, %v2972
    %v2975 = vadd.f32 %v2969, %v2973
    %v2976 = vadd.f32 %v2970, %v2974
    %s2977 = sld [smem:[#allocation9 + $0x53]]
    %v2978 = vstv %s2977
    %v2979 = vmul.f32 %v1841, %v2978
    %v2980 = vmul.f32 %v1842, %v2978
    %v2981 = vadd.f32 %v2975, %v2979
    %v2982 = vadd.f32 %v2976, %v2980
    %s2983 = sld [smem:[#allocation9 + $0x56]]
    %v2984 = vstv %s2983
    %v2985 = vmul.f32 %v1863, %v2984
    %v2986 = vmul.f32 %v1864, %v2984
    %v2987 = vadd.f32 %v2981, %v2985
    %v2988 = vadd.f32 %v2982, %v2986
    %s2989 = sld [smem:[#allocation9 + $0x59]]
    %v2990 = vstv %s2989
    %v2991 = vmul.f32 %v1885, %v2990
    %v2992 = vmul.f32 %v1886, %v2990
    %v2993 = vadd.f32 %v2987, %v2991
    %v2994 = vadd.f32 %v2988, %v2992
    %s2995 = sld [smem:[#allocation9 + $0x5c]]
    %v2996 = vstv %s2995
    %v2997 = vmul.f32 %v1907, %v2996
    %v2998 = vmul.f32 %v1908, %v2996
    %v2999 = vadd.f32 %v2993, %v2997
    %v3000 = vadd.f32 %v2994, %v2998
    %s3001 = sld [smem:[#allocation9 + $0x5f]]
    %v3002 = vstv %s3001
    %v3003 = vmul.f32 %v1929, %v3002
    %v3004 = vmul.f32 %v1930, %v3002
    %v3005 = vadd.f32 %v2999, %v3003
    %v3006 = vadd.f32 %v3000, %v3004
    %v3007 = vadd.f32 %v2959, %v3005
    %v3008 = vadd.f32 %v2960, %v3006
    %s3009 = sld [smem:[#allocation9 + $0x92]]
    %v3010 = vstv %s3009
    %v3011 = vmul.f32 %v1775, %v3010
    %v3012 = vmul.f32 %v1776, %v3010
    %s3013 = sld [smem:[#allocation9 + $0x95]]
    %v3014 = vstv %s3013
    %v3015 = vmul.f32 %v1797, %v3014
    %v3016 = vmul.f32 %v1798, %v3014
    %v3017 = vadd.f32 %v3011, %v3015
    %v3018 = vadd.f32 %v3012, %v3016
    %s3019 = sld [smem:[#allocation9 + $0x98]]
    %v3020 = vstv %s3019
    %v3021 = vmul.f32 %v1819, %v3020
    %v3022 = vmul.f32 %v1820, %v3020
    %v3023 = vadd.f32 %v3017, %v3021
    %v3024 = vadd.f32 %v3018, %v3022
    %s3025 = sld [smem:[#allocation9 + $0x9b]]
    %v3026 = vstv %s3025
    %v3027 = vmul.f32 %v1841, %v3026
    %v3028 = vmul.f32 %v1842, %v3026
    %v3029 = vadd.f32 %v3023, %v3027
    %v3030 = vadd.f32 %v3024, %v3028
    %s3031 = sld [smem:[#allocation9 + $0x9e]]
    %v3032 = vstv %s3031
    %v3033 = vmul.f32 %v1863, %v3032
    %v3034 = vmul.f32 %v1864, %v3032
    %v3035 = vadd.f32 %v3029, %v3033
    %v3036 = vadd.f32 %v3030, %v3034
    %s3037 = sld [smem:[#allocation9 + $0xa1]]
    %v3038 = vstv %s3037
    %v3039 = vmul.f32 %v1885, %v3038
    %v3040 = vmul.f32 %v1886, %v3038
    %v3041 = vadd.f32 %v3035, %v3039
    %v3042 = vadd.f32 %v3036, %v3040
    %s3043 = sld [smem:[#allocation9 + $0xa4]]
    %v3044 = vstv %s3043
    %v3045 = vmul.f32 %v1907, %v3044
    %v3046 = vmul.f32 %v1908, %v3044
    %v3047 = vadd.f32 %v3041, %v3045
    %v3048 = vadd.f32 %v3042, %v3046
    %s3049 = sld [smem:[#allocation9 + $0xa7]]
    %v3050 = vstv %s3049
    %v3051 = vmul.f32 %v1929, %v3050
    %v3052 = vmul.f32 %v1930, %v3050
    %v3053 = vadd.f32 %v3047, %v3051
    %v3054 = vadd.f32 %v3048, %v3052
    %v3055 = vrot.slane %v3053, 1
    %v3056 = vrot.slane %v3054, 1
    %v3057 = vsel %vm427, %v3055, %v3056
    %v3058 = vsel %vm427, %v3056, %v3055
    %v3059 = vsel %vm88, %v3057, 0.0
    %v3060 = vsel %vm89, %v3058, 0.0
    %v3061 = vadd.f32 %v3007, %v3059
    %v3062 = vadd.f32 %v3008, %v3060
    %3063 = vrot.lane.b32.xlu0 %v3061, 1
    %v3064 = vpop.permute.xlu0 %3063
    %3065 = vrot.lane.b32.xlu0 %v3062, 1
    %v3066 = vpop.permute.xlu0 %3065
    %v3067 = vsel %vm93, %v3064, 0.0
    %v3068 = vsel %vm93, %v3066, 0.0
    %s3069 = sld [smem:[#allocation9 + $0x1a]]
    %v3070 = vstv %s3069
    %v3071 = vmul.f32 %v1775, %v3070
    %v3072 = vmul.f32 %v1776, %v3070
    %s3073 = sld [smem:[#allocation9 + $0x1d]]
    %v3074 = vstv %s3073
    %v3075 = vmul.f32 %v1797, %v3074
    %v3076 = vmul.f32 %v1798, %v3074
    %v3077 = vadd.f32 %v3071, %v3075
    %v3078 = vadd.f32 %v3072, %v3076
    %s3079 = sld [smem:[#allocation9 + $0x20]]
    %v3080 = vstv %s3079
    %v3081 = vmul.f32 %v1819, %v3080
    %v3082 = vmul.f32 %v1820, %v3080
    %v3083 = vadd.f32 %v3077, %v3081
    %v3084 = vadd.f32 %v3078, %v3082
    %s3085 = sld [smem:[#allocation9 + $0x23]]
    %v3086 = vstv %s3085
    %v3087 = vmul.f32 %v1841, %v3086
    %v3088 = vmul.f32 %v1842, %v3086
    %v3089 = vadd.f32 %v3083, %v3087
    %v3090 = vadd.f32 %v3084, %v3088
    %s3091 = sld [smem:[#allocation9 + $0x26]]
    %v3092 = vstv %s3091
    %v3093 = vmul.f32 %v1863, %v3092
    %v3094 = vmul.f32 %v1864, %v3092
    %v3095 = vadd.f32 %v3089, %v3093
    %v3096 = vadd.f32 %v3090, %v3094
    %s3097 = sld [smem:[#allocation9 + $0x29]]
    %v3098 = vstv %s3097
    %v3099 = vmul.f32 %v1885, %v3098
    %v3100 = vmul.f32 %v1886, %v3098
    %v3101 = vadd.f32 %v3095, %v3099
    %v3102 = vadd.f32 %v3096, %v3100
    %s3103 = sld [smem:[#allocation9 + $0x2c]]
    %v3104 = vstv %s3103
    %v3105 = vmul.f32 %v1907, %v3104
    %v3106 = vmul.f32 %v1908, %v3104
    %v3107 = vadd.f32 %v3101, %v3105
    %v3108 = vadd.f32 %v3102, %v3106
    %s3109 = sld [smem:[#allocation9 + $0x2f]]
    %v3110 = vstv %s3109
    %v3111 = vmul.f32 %v1929, %v3110
    %v3112 = vmul.f32 %v1930, %v3110
    %v3113 = vadd.f32 %v3107, %v3111
    %v3114 = vadd.f32 %v3108, %v3112
    %v3115 = vrot.slane %v3113, 7
    %v3116 = vrot.slane %v3114, 7
    %v3117 = vsel %vm326, %v3115, %v3116
    %v3118 = vsel %vm326, %v3116, %v3115
    %v3119 = vsel %vm90, %v3118, 0.0
    %v3120 = vsel %vm91, %v3117, 0.0
    %s3121 = sld [smem:[#allocation9 + $0x62]]
    %v3122 = vstv %s3121
    %v3123 = vmul.f32 %v1775, %v3122
    %v3124 = vmul.f32 %v1776, %v3122
    %s3125 = sld [smem:[#allocation9 + $0x65]]
    %v3126 = vstv %s3125
    %v3127 = vmul.f32 %v1797, %v3126
    %v3128 = vmul.f32 %v1798, %v3126
    %v3129 = vadd.f32 %v3123, %v3127
    %v3130 = vadd.f32 %v3124, %v3128
    %s3131 = sld [smem:[#allocation9 + $0x68]]
    %v3132 = vstv %s3131
    %v3133 = vmul.f32 %v1819, %v3132
    %v3134 = vmul.f32 %v1820, %v3132
    %v3135 = vadd.f32 %v3129, %v3133
    %v3136 = vadd.f32 %v3130, %v3134
    %s3137 = sld [smem:[#allocation9 + $0x6b]]
    %v3138 = vstv %s3137
    %v3139 = vmul.f32 %v1841, %v3138
    %v3140 = vmul.f32 %v1842, %v3138
    %v3141 = vadd.f32 %v3135, %v3139
    %v3142 = vadd.f32 %v3136, %v3140
    %s3143 = sld [smem:[#allocation9 + $0x6e]]
    %v3144 = vstv %s3143
    %v3145 = vmul.f32 %v1863, %v3144
    %v3146 = vmul.f32 %v1864, %v3144
    %v3147 = vadd.f32 %v3141, %v3145
    %v3148 = vadd.f32 %v3142, %v3146
    %s3149 = sld [smem:[#allocation9 + $0x71]]
    %v3150 = vstv %s3149
    %v3151 = vmul.f32 %v1885, %v3150
    %v3152 = vmul.f32 %v1886, %v3150
    %v3153 = vadd.f32 %v3147, %v3151
    %v3154 = vadd.f32 %v3148, %v3152
    %s3155 = sld [smem:[#allocation9 + $0x74]]
    %v3156 = vstv %s3155
    %v3157 = vmul.f32 %v1907, %v3156
    %v3158 = vmul.f32 %v1908, %v3156
    %v3159 = vadd.f32 %v3153, %v3157
    %v3160 = vadd.f32 %v3154, %v3158
    %s3161 = sld [smem:[#allocation9 + $0x77]]
    %v3162 = vstv %s3161
    %v3163 = vmul.f32 %v1929, %v3162
    %v3164 = vmul.f32 %v1930, %v3162
    %v3165 = vadd.f32 %v3159, %v3163
    %v3166 = vadd.f32 %v3160, %v3164
    %v3167 = vadd.f32 %v3119, %v3165
    %v3168 = vadd.f32 %v3120, %v3166
    %s3169 = sld [smem:[#allocation9 + $0xaa]]
    %v3170 = vstv %s3169
    %v3171 = vmul.f32 %v1775, %v3170
    %v3172 = vmul.f32 %v1776, %v3170
    %s3173 = sld [smem:[#allocation9 + $0xad]]
    %v3174 = vstv %s3173
    %v3175 = vmul.f32 %v1797, %v3174
    %v3176 = vmul.f32 %v1798, %v3174
    %v3177 = vadd.f32 %v3171, %v3175
    %v3178 = vadd.f32 %v3172, %v3176
    %s3179 = sld [smem:[#allocation9 + $0xb0]]
    %v3180 = vstv %s3179
    %v3181 = vmul.f32 %v1819, %v3180
    %v3182 = vmul.f32 %v1820, %v3180
    %v3183 = vadd.f32 %v3177, %v3181
    %v3184 = vadd.f32 %v3178, %v3182
    %s3185 = sld [smem:[#allocation9 + $0xb3]]
    %v3186 = vstv %s3185
    %v3187 = vmul.f32 %v1841, %v3186
    %v3188 = vmul.f32 %v1842, %v3186
    %v3189 = vadd.f32 %v3183, %v3187
    %v3190 = vadd.f32 %v3184, %v3188
    %s3191 = sld [smem:[#allocation9 + $0xb6]]
    %v3192 = vstv %s3191
    %v3193 = vmul.f32 %v1863, %v3192
    %v3194 = vmul.f32 %v1864, %v3192
    %v3195 = vadd.f32 %v3189, %v3193
    %v3196 = vadd.f32 %v3190, %v3194
    %s3197 = sld [smem:[#allocation9 + $0xb9]]
    %v3198 = vstv %s3197
    %v3199 = vmul.f32 %v1885, %v3198
    %v3200 = vmul.f32 %v1886, %v3198
    %v3201 = vadd.f32 %v3195, %v3199
    %v3202 = vadd.f32 %v3196, %v3200
    %s3203 = sld [smem:[#allocation9 + $0xbc]]
    %v3204 = vstv %s3203
    %v3205 = vmul.f32 %v1907, %v3204
    %v3206 = vmul.f32 %v1908, %v3204
    %v3207 = vadd.f32 %v3201, %v3205
    %v3208 = vadd.f32 %v3202, %v3206
    %s3209 = sld [smem:[#allocation9 + $0xbf]]
    %v3210 = vstv %s3209
    %v3211 = vmul.f32 %v1929, %v3210
    %v3212 = vmul.f32 %v1930, %v3210
    %v3213 = vadd.f32 %v3207, %v3211
    %v3214 = vadd.f32 %v3208, %v3212
    %v3215 = vrot.slane %v3213, 1
    %v3216 = vrot.slane %v3214, 1
    %v3217 = vsel %vm427, %v3215, %v3216
    %v3218 = vsel %vm427, %v3216, %v3215
    %v3219 = vsel %vm88, %v3217, 0.0
    %v3220 = vsel %vm89, %v3218, 0.0
    %v3221 = vadd.f32 %v3167, %v3219
    %v3222 = vadd.f32 %v3168, %v3220
    %v3223 = vadd.f32 %v3067, %v3221
    %v3224 = vadd.f32 %v3068, %v3222
    %s3225 = sld [smem:[#allocation9 + $0x32]]
    %v3226 = vstv %s3225
    %v3227 = vmul.f32 %v1775, %v3226
    %v3228 = vmul.f32 %v1776, %v3226
    %s3229 = sld [smem:[#allocation9 + $0x35]]
    %v3230 = vstv %s3229
    %v3231 = vmul.f32 %v1797, %v3230
    %v3232 = vmul.f32 %v1798, %v3230
    %v3233 = vadd.f32 %v3227, %v3231
    %v3234 = vadd.f32 %v3228, %v3232
    %s3235 = sld [smem:[#allocation9 + $0x38]]
    %v3236 = vstv %s3235
    %v3237 = vmul.f32 %v1819, %v3236
    %v3238 = vmul.f32 %v1820, %v3236
    %v3239 = vadd.f32 %v3233, %v3237
    %v3240 = vadd.f32 %v3234, %v3238
    %s3241 = sld [smem:[#allocation9 + $0x3b]]
    %v3242 = vstv %s3241
    %v3243 = vmul.f32 %v1841, %v3242
    %v3244 = vmul.f32 %v1842, %v3242
    %v3245 = vadd.f32 %v3239, %v3243
    %v3246 = vadd.f32 %v3240, %v3244
    %s3247 = sld [smem:[#allocation9 + $0x3e]]
    %v3248 = vstv %s3247
    %v3249 = vmul.f32 %v1863, %v3248
    %v3250 = vmul.f32 %v1864, %v3248
    %v3251 = vadd.f32 %v3245, %v3249
    %v3252 = vadd.f32 %v3246, %v3250
    %s3253 = sld [smem:[#allocation9 + $0x41]]
    %v3254 = vstv %s3253
    %v3255 = vmul.f32 %v1885, %v3254
    %v3256 = vmul.f32 %v1886, %v3254
    %v3257 = vadd.f32 %v3251, %v3255
    %v3258 = vadd.f32 %v3252, %v3256
    %s3259 = sld [smem:[#allocation9 + $0x44]]
    %v3260 = vstv %s3259
    %v3261 = vmul.f32 %v1907, %v3260
    %v3262 = vmul.f32 %v1908, %v3260
    %v3263 = vadd.f32 %v3257, %v3261
    %v3264 = vadd.f32 %v3258, %v3262
    %s3265 = sld [smem:[#allocation9 + $0x47]]
    %v3266 = vstv %s3265
    %v3267 = vmul.f32 %v1929, %v3266
    %v3268 = vmul.f32 %v1930, %v3266
    %v3269 = vadd.f32 %v3263, %v3267
    %v3270 = vadd.f32 %v3264, %v3268
    %v3271 = vrot.slane %v3269, 7
    %v3272 = vrot.slane %v3270, 7
    %v3273 = vsel %vm326, %v3271, %v3272
    %v3274 = vsel %vm326, %v3272, %v3271
    %v3275 = vsel %vm90, %v3274, 0.0
    %v3276 = vsel %vm91, %v3273, 0.0
    %s3277 = sld [smem:[#allocation9 + $0x7a]]
    %v3278 = vstv %s3277
    %v3279 = vmul.f32 %v1775, %v3278
    %v3280 = vmul.f32 %v1776, %v3278
    %s3281 = sld [smem:[#allocation9 + $0x7d]]
    %v3282 = vstv %s3281
    %v3283 = vmul.f32 %v1797, %v3282
    %v3284 = vmul.f32 %v1798, %v3282
    %v3285 = vadd.f32 %v3279, %v3283
    %v3286 = vadd.f32 %v3280, %v3284
    %s3287 = sld [smem:[#allocation9 + $0x80]]
    %v3288 = vstv %s3287
    %v3289 = vmul.f32 %v1819, %v3288
    %v3290 = vmul.f32 %v1820, %v3288
    %v3291 = vadd.f32 %v3285, %v3289
    %v3292 = vadd.f32 %v3286, %v3290
    %s3293 = sld [smem:[#allocation9 + $0x83]]
    %v3294 = vstv %s3293
    %v3295 = vmul.f32 %v1841, %v3294
    %v3296 = vmul.f32 %v1842, %v3294
    %v3297 = vadd.f32 %v3291, %v3295
    %v3298 = vadd.f32 %v3292, %v3296
    %s3299 = sld [smem:[#allocation9 + $0x86]]
    %v3300 = vstv %s3299
    %v3301 = vmul.f32 %v1863, %v3300
    %v3302 = vmul.f32 %v1864, %v3300
    %v3303 = vadd.f32 %v3297, %v3301
    %v3304 = vadd.f32 %v3298, %v3302
    %s3305 = sld [smem:[#allocation9 + $0x89]]
    %v3306 = vstv %s3305
    %v3307 = vmul.f32 %v1885, %v3306
    %v3308 = vmul.f32 %v1886, %v3306
    %v3309 = vadd.f32 %v3303, %v3307
    %v3310 = vadd.f32 %v3304, %v3308
    %s3311 = sld [smem:[#allocation9 + $0x8c]]
    %v3312 = vstv %s3311
    %v3313 = vmul.f32 %v1907, %v3312
    %v3314 = vmul.f32 %v1908, %v3312
    %v3315 = vadd.f32 %v3309, %v3313
    %v3316 = vadd.f32 %v3310, %v3314
    %s3317 = sld [smem:[#allocation9 + $0x8f]]
    %v3318 = vstv %s3317
    %v3319 = vmul.f32 %v1929, %v3318
    %v3320 = vmul.f32 %v1930, %v3318
    %v3321 = vadd.f32 %v3315, %v3319
    %v3322 = vadd.f32 %v3316, %v3320
    %v3323 = vadd.f32 %v3275, %v3321
    %v3324 = vadd.f32 %v3276, %v3322
    %s3325 = sld [smem:[#allocation9 + $0xc2]]
    %v3326 = vstv %s3325
    %v3327 = vmul.f32 %v1775, %v3326
    %v3328 = vmul.f32 %v1776, %v3326
    %s3329 = sld [smem:[#allocation9 + $0xc5]]
    %v3330 = vstv %s3329
    %v3331 = vmul.f32 %v1797, %v3330
    %v3332 = vmul.f32 %v1798, %v3330
    %v3333 = vadd.f32 %v3327, %v3331
    %v3334 = vadd.f32 %v3328, %v3332
    %s3335 = sld [smem:[#allocation9 + $0xc8]]
    %v3336 = vstv %s3335
    %v3337 = vmul.f32 %v1819, %v3336
    %v3338 = vmul.f32 %v1820, %v3336
    %v3339 = vadd.f32 %v3333, %v3337
    %v3340 = vadd.f32 %v3334, %v3338
    %s3341 = sld [smem:[#allocation9 + $0xcb]]
    %v3342 = vstv %s3341
    %v3343 = vmul.f32 %v1841, %v3342
    %v3344 = vmul.f32 %v1842, %v3342
    %v3345 = vadd.f32 %v3339, %v3343
    %v3346 = vadd.f32 %v3340, %v3344
    %s3347 = sld [smem:[#allocation9 + $0xce]]
    %v3348 = vstv %s3347
    %v3349 = vmul.f32 %v1863, %v3348
    %v3350 = vmul.f32 %v1864, %v3348
    %v3351 = vadd.f32 %v3345, %v3349
    %v3352 = vadd.f32 %v3346, %v3350
    %s3353 = sld [smem:[#allocation9 + $0xd1]]
    %v3354 = vstv %s3353
    %v3355 = vmul.f32 %v1885, %v3354
    %v3356 = vmul.f32 %v1886, %v3354
    %v3357 = vadd.f32 %v3351, %v3355
    %v3358 = vadd.f32 %v3352, %v3356
    %s3359 = sld [smem:[#allocation9 + $0xd4]]
    %v3360 = vstv %s3359
    %v3361 = vmul.f32 %v1907, %v3360
    %v3362 = vmul.f32 %v1908, %v3360
    %v3363 = vadd.f32 %v3357, %v3361
    %v3364 = vadd.f32 %v3358, %v3362
    %s3365 = sld [smem:[#allocation9 + $0xd7]]
    %v3366 = vstv %s3365
    %v3367 = vmul.f32 %v1929, %v3366
    %v3368 = vmul.f32 %v1930, %v3366
    %v3369 = vadd.f32 %v3363, %v3367
    %v3370 = vadd.f32 %v3364, %v3368
    %v3371 = vrot.slane %v3369, 1
    %v3372 = vrot.slane %v3370, 1
    %v3373 = vsel %vm427, %v3371, %v3372
    %v3374 = vsel %vm427, %v3372, %v3371
    %v3375 = vsel %vm88, %v3373, 0.0
    %v3376 = vsel %vm89, %v3374, 0.0
    %v3377 = vadd.f32 %v3323, %v3375
    %v3378 = vadd.f32 %v3324, %v3376
    %3379 = vrot.lane.b32.xlu0 %v3377, 127
    %v3380 = vpop.permute.xlu0 %3379
    %3381 = vrot.lane.b32.xlu0 %v3378, 127
    %v3382 = vpop.permute.xlu0 %3381
    %v3383 = vsel %vm92, %v3380, 0.0
    %v3384 = vsel %vm92, %v3382, 0.0
    %v3385 = vadd.f32 %v3223, %v3383
    %v3386 = vadd.f32 %v3224, %v3384
    %s3387 = sld [smem:[#allocation10 + $0x2]]
    %v3388 = vstv %s3387
    %v3389 = vadd.f32 %v3385, %v3388
    %v3390 = vadd.f32 %v3386, %v3388
    %v3391 = vtanh.pop %v3389
    %v3392 = vtanh.pop %v3390
    %v3393 = vadd.f32 %v3391, %v1753
    %v3394 = vadd.f32 %v3392, %v1754
    %s3395 = scalar_lea.vmem [#allocation12], 80
    %3396 = vst [vmem:[%s3395] sm:$0xff] %v3393
    %3397 = vst [vmem:[%s3395 + $0x8] sm:$0xff] %v3394
    // Predicated region
    $region42: #{tpu_custom_call.1} parent=1 // pred_check
      _
    $region43: #{tpu_custom_call.1} parent=1 // pred_check_branch
      %3399 = sbr.rel (0) target = $region45
    $region44: #{tpu_custom_call.1} parent=1 // pred_region
      %s3401 = ssub.s32 1536, 1536
      %3402 = vsyncadd [#allocation4], %s3401
      %s3403 = sshll.u32 [#allocation12], 4
      %s3404 = int_to_ptr.vmem [resolvable:$true] %s3403
      %3409 = dma.vmem_to_hbm [thread:$0]  %s3404, 1536, %s5, [#allocation4], 128, 128, 8
    $region45: #{tpu_custom_call.1} parent=1 // pred_fallthru
      _
    // Predicated region
    $region46: #{tpu_custom_call.1} parent=1 // pred_check
      _
    $region47: #{tpu_custom_call.1} parent=1 // pred_check_branch
      %3411 = sbr.rel (0) target = $region49
    $region48: #{tpu_custom_call.1} parent=1 // pred_region
      %3412 = dma.done [#allocation4], 1536
    $region49: #{tpu_custom_call.1} parent=1 // pred_fallthru
      _
    %3413 = vsyncpa [#allocation3], 1
    %3414 = vsyncpa [#allocation4], 1
    %3415 = vsyncpa [#allocation5], 1
    %3416 = vsyncpa [#allocation8], 1
    %3417 = vsyncpa [#allocation11], 1

</llo_original>
